<compile_context>
chip_gen: v7x
topology: tpu7x:2x2x1
jax: 0.10.0
libtpu: 0.0.40
codegen_flags: <defaults>
</compile_context>

<pallas_src>
import math

import jax
import jax.numpy as jnp
from jax import lax
from jax.experimental import pallas as pl
from jax.experimental.pallas import tpu as pltpu

LATENT_DIM = 100
LATENT_PAD = 128              # first-layer K zero-padded to a 128-lane boundary
BN_EPS = 0.8
LEAKY_SLOPE = 0.2
IMG_FEATURES = 3 * 64 * 64    # 12288
HIDDEN = (128, 256, 512, 1024)
VMEM_LIMIT = 32 * 1024 * 1024
MAX_FUSED_BATCH = 1024        # BN needs the whole batch resident in one block


def _pick_final_tile():
    """Final-layer N tile: 4096 on 128 MiB-VMEM chips, 2048 on v7x (64 MiB)."""
    try:
        vmem_bytes = pltpu.get_tpu_info().vmem_capacity_bytes
    except Exception:
        return 2048                       # safe on every generation
    return 2048 if vmem_bytes <= 64 * 1024 * 1024 else 4096


FINAL_TN = _pick_final_tile()


def _leaky_relu(y):
    return jnp.where(y > 0, y, LEAKY_SLOPE * y)


# --------------------------------------------------------------------------
# Fused generator kernel
# --------------------------------------------------------------------------
def _generator_kernel(n_ref,                         # SMEM scalar: real batch
                      z_ref,                         # (Bp, 128) f32
                      w1_ref, b1_ref,                # Linear 1 (no BN)
                      w2_ref, g2_ref, be2_ref,       # Linear 2 + BN
                      w3_ref, g3_ref, be3_ref,       # Linear 3 + BN
                      w4_ref, g4_ref, be4_ref,       # Linear 4 + BN
                      w5_ref, s5_ref, b5_ref,        # final layer tile (int8)
                      o_ref,                         # (Bp, tn) f32 output tile
                      h_ref):                        # VMEM scratch (Bp,1024) bf16

    # ---- front MLP: computed once, lives in VMEM for all grid steps -------
    @pl.when(pl.program_id(0) == 0)
    def _front():
        n = n_ref[0]
        n_f = n.astype(jnp.float32)
        rows = lax.broadcasted_iota(jnp.int32, (z_ref.shape[0], 1), 0)
        valid = (rows < n).astype(jnp.float32)       # (Bp, 1) real-row mask

        def dot(x, w_ref):
            # bf16 x bf16 on the MXU, f32 accumulation.
            return jnp.dot(x.astype(jnp.bfloat16), w_ref[...],
                           preferred_element_type=jnp.float32)

        def bn(y, g_ref, be_ref):
            # Training-mode BatchNorm1d: biased stats over the valid rows only.
            mean = jnp.sum(y * valid, axis=0, keepdims=True) / n_f
            d = (y - mean) * valid
            var = jnp.sum(d * d, axis=0, keepdims=True) / n_f
            return (y - mean) * lax.rsqrt(var + BN_EPS) * g_ref[...] + be_ref[...]

        h = _leaky_relu(dot(z_ref[...], w1_ref) + b1_ref[...])
        # Pre-BN linear biases are a no-op (mean-subtracted) -> omitted.
        h = _leaky_relu(bn(dot(h, w2_ref), g2_ref, be2_ref))
        h = _leaky_relu(bn(dot(h, w3_ref), g3_ref, be3_ref))
        h = _leaky_relu(bn(dot(h, w4_ref), g4_ref, be4_ref))
        h_ref[...] = h.astype(jnp.bfloat16)

    # ---- final Linear(1024, N) tile + dequant epilogue + tanh -------------
    w_tile = w5_ref[...].astype(jnp.bfloat16)        # int8 -> bf16 (exact)
    y = jnp.dot(h_ref[...], w_tile, preferred_element_type=jnp.float32)
    o_ref[...] = jnp.tanh(y * s5_ref[...] + b5_ref[...])


def _full_map(j, n_ref):   # whole array, fetched once (constant block index)
    return (0, 0)


def _tile_map(j, n_ref):   # tiled along the final layer's N axis
    return (0, j)


def generator_pallas(z_pad, n_valid_arr, params, *, tn):
    Bp, k0 = z_pad.shape
    assert Bp % 8 == 0 and k0 == LATENT_PAD
    w1, b1 = params["l1"]
    w2, g2, be2 = params["l2"]
    w3, g3, be3 = params["l3"]
    w4, g4, be4 = params["l4"]
    w5q, s5, b5 = params["l5"]
    K, N = w5q.shape
    assert K == HIDDEN[-1] and N % tn == 0

    inputs = (z_pad, w1, b1, w2, g2, be2, w3, g3, be3, w4, g4, be4, w5q, s5, b5)
    in_specs = (
        [pl.BlockSpec(a.shape, _full_map) for a in inputs[:12]]
        + [pl.BlockSpec((K, tn), _tile_map),     # int8 weight tile
           pl.BlockSpec((1, tn), _tile_map),     # per-channel scale tile
           pl.BlockSpec((1, tn), _tile_map)]     # bias tile
    )

    weight_bytes = sum(int(w.size) * w.dtype.itemsize for w in (w1, w2, w3, w4, w5q))
    cost = pl.CostEstimate(
        flops=2 * Bp * (LATENT_PAD * HIDDEN[0] + HIDDEN[0] * HIDDEN[1]
                        + HIDDEN[1] * HIDDEN[2] + HIDDEN[2] * HIDDEN[3]
                        + HIDDEN[3] * N),
        transcendentals=Bp * N,
        bytes_accessed=(weight_bytes + z_pad.size * 4 + (s5.size + b5.size) * 4
                        + Bp * N * 4),
    )

    return pl.pallas_call(
        _generator_kernel,
        out_shape=jax.ShapeDtypeStruct((Bp, N), jnp.float32),
        grid_spec=pltpu.PrefetchScalarGridSpec(
            num_scalar_prefetch=1,               # n_valid -> SMEM
            grid=(N // tn,),
            in_specs=in_specs,
            out_specs=pl.BlockSpec((Bp, tn), _tile_map),
            scratch_shapes=[pltpu.VMEM((Bp, HIDDEN[-1]), jnp.bfloat16)],
        ),
        compiler_params=pltpu.CompilerParams(
            # "arbitrary": the j==0 step must run (and run first) on the core
            # that executes the rest of the grid — required by the
            # compute-front-once-into-scratch pattern.  DMA-bound anyway.
            dimension_semantics=("arbitrary",),
            vmem_limit_bytes=VMEM_LIMIT),
        cost_estimate=cost,
    )(n_valid_arr, *inputs)


# --------------------------------------------------------------------------
# Parameters (PyTorch-default Linear init; BN gamma=1, beta=0)
#   front weights bf16; final weight int8 + per-output-channel f32 scales
# --------------------------------------------------------------------------
def _linear_init(key, fan_in, fan_out):
    kw, kb = jax.random.split(key)
    bound = 1.0 / math.sqrt(fan_in)
    w = jax.random.uniform(kw, (fan_in, fan_out), jnp.float32, -bound, bound)
    b = jax.random.uniform(kb, (1, fan_out), jnp.float32, -bound, bound)
    return w, b


def init_generator_params(key):
    params = {}

    # Layer 1: Linear(100, 128) + LeakyReLU (no BN) — bias kept.
    key, k = jax.random.split(key)
    w1, b1 = _linear_init(k, LATENT_DIM, HIDDEN[0])
    w1 = jnp.concatenate(                      # zero rows for padded latent dims
        [w1, jnp.zeros((LATENT_PAD - LATENT_DIM, HIDDEN[0]), jnp.float32)], axis=0)
    params["l1"] = (w1.astype(jnp.bfloat16), b1)

    # Layers 2-4: Linear + BatchNorm1d(eps=0.8) + LeakyReLU.
    # The Linear bias is dropped: training-mode BN subtracts the batch mean
    # immediately after the linear, so a pre-BN bias has zero output effect.
    for name, din, dout in (("l2", HIDDEN[0], HIDDEN[1]),
                            ("l3", HIDDEN[1], HIDDEN[2]),
                            ("l4", HIDDEN[2], HIDDEN[3])):
        key, k = jax.random.split(key)
        w, _ = _linear_init(k, din, dout)
        params[name] = (w.astype(jnp.bfloat16),
                        jnp.ones((1, dout), jnp.float32),     # BN gamma
                        jnp.zeros((1, dout), jnp.float32))    # BN beta

    # Layer 5: Linear(1024, 12288) -> int8 weight, per-output-channel scale.
    key, k = jax.random.split(key)
    w5, b5 = _linear_init(k, HIDDEN[3], IMG_FEATURES)
    s5 = jnp.max(jnp.abs(w5), axis=0, keepdims=True) / 127.0
    w5q = jnp.clip(jnp.round(w5 / s5), -127, 127).astype(jnp.int8)
    params["l5"] = (w5q, s5, b5)
    return params


# --------------------------------------------------------------------------
# Forward wrapper
# --------------------------------------------------------------------------
@jax.jit
def _generator_forward_jit(z, params):
    B, latent = z.shape
    Bp = max(8, pl.cdiv(B, 8) * 8)            # pad batch to a sublane multiple
    # Masked BN is only exact with the whole batch in one block (never tiled).
    assert Bp <= MAX_FUSED_BATCH, (
        "batch too large for the fused single-block BatchNorm; a two-pass / "
        "Welford batch-tiled BN path would be required")
    z_pad = jnp.pad(z, ((0, Bp - B), (0, LATENT_PAD - latent)))
    n_arr = jnp.array([B], jnp.int32)          # real-row count -> SMEM scalar
    out = generator_pallas(z_pad, n_arr, params, tn=FINAL_TN)
    return out[:B].reshape(B, 3, 64, 64)


def generator_forward(z, params):
    assert z.ndim == 2 and z.shape[1] == LATENT_DIM
    assert z.shape[0] >= 1, "empty batch: training-mode BatchNorm is undefined"
    return _generator_forward_jit(z, params)


# --------------------------------------------------------------------------
# Pure-JAX reference mirroring the kernel's numerics (bf16 matmul inputs,
# f32 accumulation, int8+scale final weight) for validation
# --------------------------------------------------------------------------
def reference_forward(z, params):
    w1, b1 = params["l1"]
    w2, g2, be2 = params["l2"]
    w3, g3, be3 = params["l3"]
    w4, g4, be4 = params["l4"]
    w5q, s5, b5 = params["l5"]

    x = jnp.pad(z, ((0, 0), (0, LATENT_PAD - LATENT_DIM)))

    def dot(x, w):
        return jnp.dot(x.astype(jnp.bfloat16), w,
                       preferred_element_type=jnp.float32)

    def bn(y, g, be):
        m = jnp.mean(y, axis=0, keepdims=True)
        v = jnp.mean((y - m) ** 2, axis=0, keepdims=True)
        return (y - m) * lax.rsqrt(v + BN_EPS) * g + be

    h = _leaky_relu(dot(x, w1) + b1)
    h = _leaky_relu(bn(dot(h, w2), g2, be2))
    h = _leaky_relu(bn(dot(h, w3), g3, be3))
    h = _leaky_relu(bn(dot(h, w4), g4, be4))
    h = h.astype(jnp.bfloat16)
    y = jnp.dot(h, w5q.astype(jnp.bfloat16), preferred_element_type=jnp.float32)
    y = jnp.tanh(y * s5 + b5)
    return y.reshape(z.shape[0], 3, 64, 64)


if __name__ == "__main__":
    key = jax.random.PRNGKey(0)
    key_z, key_p = jax.random.split(key)

    B = 4
    z = jax.random.normal(key_z, (B, LATENT_DIM), jnp.float32)
    params = init_generator_params(key_p)

    img = generator_forward(z, params)
    jax.block_until_ready(img)

    assert img.shape == (B, 3, 64, 64)
    assert img.dtype == jnp.float32
    # tanh output range sanity check
    assert bool(jnp.all(jnp.abs(img) <= 1.0 + 1e-6))

    # Reference mirrors the kernel's numerics exactly -> tight tolerance.
    ref = reference_forward(z, params)
    err = float(jnp.max(jnp.abs(img - ref)))
    assert err < 5e-2, f"max abs error {err}"

    print("KERNEL_OK")
</pallas_src>

<mosaic_0001>
module attributes {stable_mosaic.version = 11 : i64} {
  func.func @_generator_kernel(%arg0: i32, %arg1: memref<1xi32, #tpu.memory_space<smem>>, %arg2: memref<8x128xf32, #tpu.memory_space<vmem>>, %arg3: memref<128x128xbf16, #tpu.memory_space<vmem>>, %arg4: memref<1x128xf32, #tpu.memory_space<vmem>>, %arg5: memref<128x256xbf16, #tpu.memory_space<vmem>>, %arg6: memref<1x256xf32, #tpu.memory_space<vmem>>, %arg7: memref<1x256xf32, #tpu.memory_space<vmem>>, %arg8: memref<256x512xbf16, #tpu.memory_space<vmem>>, %arg9: memref<1x512xf32, #tpu.memory_space<vmem>>, %arg10: memref<1x512xf32, #tpu.memory_space<vmem>>, %arg11: memref<512x1024xbf16, #tpu.memory_space<vmem>>, %arg12: memref<1x1024xf32, #tpu.memory_space<vmem>>, %arg13: memref<1x1024xf32, #tpu.memory_space<vmem>>, %arg14: memref<1024x2048xi8, #tpu.memory_space<vmem>>, %arg15: memref<1x2048xf32, #tpu.memory_space<vmem>>, %arg16: memref<1x2048xf32, #tpu.memory_space<vmem>>, %arg17: memref<8x2048xf32, #tpu.memory_space<vmem>>, %arg18: memref<8x1024xbf16, #tpu.memory_space<vmem>>) attributes {dimension_semantics = [#tpu.dimension_semantics<arbitrary>], iteration_bounds = array<i64: 6>, scalar_prefetch = 1 : i64, scratch_operands = 1 : i64, tpu.core_type = #tpu.core_type<tc>, window_params = [{pipeline_mode = #tpu.pipeline_mode<synchronous>, transform_indices = @transform_0, window_bounds = array<i64: 8, 128>}, {pipeline_mode = #tpu.pipeline_mode<synchronous>, transform_indices = @transform_1, window_bounds = array<i64: 128, 128>}, {pipeline_mode = #tpu.pipeline_mode<synchronous>, transform_indices = @transform_2, window_bounds = array<i64: 1, 128>}, {pipeline_mode = #tpu.pipeline_mode<synchronous>, transform_indices = @transform_3, window_bounds = array<i64: 128, 256>}, {pipeline_mode = #tpu.pipeline_mode<synchronous>, transform_indices = @transform_4, window_bounds = array<i64: 1, 256>}, {pipeline_mode = #tpu.pipeline_mode<synchronous>, transform_indices = @transform_5, window_bounds = array<i64: 1, 256>}, {pipeline_mode = #tpu.pipeline_mode<synchronous>, transform_indices = @transform_6, window_bounds = array<i64: 256, 512>}, {pipeline_mode = #tpu.pipeline_mode<synchronous>, transform_indices = @transform_7, window_bounds = array<i64: 1, 512>}, {pipeline_mode = #tpu.pipeline_mode<synchronous>, transform_indices = @transform_8, window_bounds = array<i64: 1, 512>}, {pipeline_mode = #tpu.pipeline_mode<synchronous>, transform_indices = @transform_9, window_bounds = array<i64: 512, 1024>}, {pipeline_mode = #tpu.pipeline_mode<synchronous>, transform_indices = @transform_10, window_bounds = array<i64: 1, 1024>}, {pipeline_mode = #tpu.pipeline_mode<synchronous>, transform_indices = @transform_11, window_bounds = array<i64: 1, 1024>}, {transform_indices = @transform_12, window_bounds = array<i64: 1024, 2048>}, {transform_indices = @transform_13, window_bounds = array<i64: 1, 2048>}, {transform_indices = @transform_14, window_bounds = array<i64: 1, 2048>}, {transform_indices = @transform_15, window_bounds = array<i64: 8, 2048>}]} {
    %c0_i32 = arith.constant 0 : i32
    %0 = arith.cmpi eq, %arg0, %c0_i32 : i32
    %1 = arith.extui %0 : i1 to i32
    %c0_i32_0 = arith.constant 0 : i32
    %2 = arith.cmpi ne, %1, %c0_i32_0 : i32
    scf.if %2 {
      %c0_10 = arith.constant 0 : index
      %15 = memref.load %arg1[%c0_10] : memref<1xi32, #tpu.memory_space<smem>>
      %16 = arith.sitofp %15 : i32 to f32
      %17 = tpu.iota {dimensions = array<i32: 0>} : vector<8x1xi32>
      %18 = vector.broadcast %15 : i32 to vector<8x1xi32>
      %19 = arith.cmpi slt, %17, %18 : vector<8x1xi32>
      %20 = arith.extui %19 : vector<8x1xi1> to vector<8x1xi32>
      %21 = arith.sitofp %20 : vector<8x1xi32> to vector<8x1xf32>
      %c0_11 = arith.constant 0 : index
      %c0_12 = arith.constant 0 : index
      %22 = vector.load %arg2[%c0_11, %c0_12] : memref<8x128xf32, #tpu.memory_space<vmem>>, vector<8x128xf32>
      %23 = arith.truncf %22 : vector<8x128xf32> to vector<8x128xbf16>
      %c0_13 = arith.constant 0 : index
      %c0_14 = arith.constant 0 : index
      %24 = vector.load %arg3[%c0_13, %c0_14] : memref<128x128xbf16, #tpu.memory_space<vmem>>, vector<128x128xbf16>
      %cst_15 = arith.constant dense<0.000000e+00> : vector<8x128xf32>
      %25 = tpu.matmul %23, %24, %cst_15 {dimension_numbers = #tpu.dot_dimension_numbers<[1], [0], [0], [1], [0, 0, 1, 1], [], []>} : vector<8x128xbf16>, vector<128x128xbf16>, vector<8x128xf32> -> vector<8x128xf32>
      %c0_16 = arith.constant 0 : index
      %c0_17 = arith.constant 0 : index
      %26 = vector.load %arg4[%c0_16, %c0_17] : memref<1x128xf32, #tpu.memory_space<vmem>>, vector<1x128xf32>
      %27 = vector.broadcast %26 : vector<1x128xf32> to vector<8x128xf32>
      %28 = arith.addf %25, %27 : vector<8x128xf32>
      %cst_18 = arith.constant 0.000000e+00 : f32
      %29 = vector.broadcast %cst_18 : f32 to vector<8x128xf32>
      %30 = arith.cmpf ogt, %28, %29 : vector<8x128xf32>
      %cst_19 = arith.constant 2.000000e-01 : f32
      %31 = vector.broadcast %cst_19 : f32 to vector<8x128xf32>
      %32 = arith.mulf %31, %28 : vector<8x128xf32>
      %33 = arith.select %30, %28, %32 : vector<8x128xi1>, vector<8x128xf32>
      %34 = arith.truncf %33 : vector<8x128xf32> to vector<8x128xbf16>
      %c0_20 = arith.constant 0 : index
      %c0_21 = arith.constant 0 : index
      %35 = vector.load %arg5[%c0_20, %c0_21] : memref<128x256xbf16, #tpu.memory_space<vmem>>, vector<128x256xbf16>
      %cst_22 = arith.constant dense<0.000000e+00> : vector<8x256xf32>
      %36 = tpu.matmul %34, %35, %cst_22 {dimension_numbers = #tpu.dot_dimension_numbers<[1], [0], [0], [1], [0, 0, 1, 1], [], []>} : vector<8x128xbf16>, vector<128x256xbf16>, vector<8x256xf32> -> vector<8x256xf32>
      %37 = vector.broadcast %21 : vector<8x1xf32> to vector<8x256xf32>
      %38 = arith.mulf %36, %37 : vector<8x256xf32>
      %cst_23 = arith.constant dense<0.000000e+00> : vector<256xf32>
      %39 = vector.multi_reduction <add>, %38, %cst_23 [0] : vector<8x256xf32> to vector<256xf32>
      %40 = vector.shape_cast %39 : vector<256xf32> to vector<1x256xf32>
      %41 = vector.broadcast %16 : f32 to vector<1x256xf32>
      %42 = arith.divf %40, %41 : vector<1x256xf32>
      %43 = vector.broadcast %42 : vector<1x256xf32> to vector<8x256xf32>
      %44 = arith.subf %36, %43 : vector<8x256xf32>
      %45 = vector.broadcast %21 : vector<8x1xf32> to vector<8x256xf32>
      %46 = arith.mulf %44, %45 : vector<8x256xf32>
      %47 = arith.mulf %46, %46 : vector<8x256xf32>
      %cst_24 = arith.constant dense<0.000000e+00> : vector<256xf32>
      %48 = vector.multi_reduction <add>, %47, %cst_24 [0] : vector<8x256xf32> to vector<256xf32>
      %49 = vector.shape_cast %48 : vector<256xf32> to vector<1x256xf32>
      %50 = vector.broadcast %16 : f32 to vector<1x256xf32>
      %51 = arith.divf %49, %50 : vector<1x256xf32>
      %52 = vector.broadcast %42 : vector<1x256xf32> to vector<8x256xf32>
      %53 = arith.subf %36, %52 : vector<8x256xf32>
      %cst_25 = arith.constant 8.000000e-01 : f32
      %54 = vector.broadcast %cst_25 : f32 to vector<1x256xf32>
      %55 = arith.addf %51, %54 : vector<1x256xf32>
      %56 = math.rsqrt %55 : vector<1x256xf32>
      %57 = vector.broadcast %56 : vector<1x256xf32> to vector<8x256xf32>
      %58 = arith.mulf %53, %57 : vector<8x256xf32>
      %c0_26 = arith.constant 0 : index
      %c0_27 = arith.constant 0 : index
      %59 = vector.load %arg6[%c0_26, %c0_27] : memref<1x256xf32, #tpu.memory_space<vmem>>, vector<1x256xf32>
      %60 = vector.broadcast %59 : vector<1x256xf32> to vector<8x256xf32>
      %61 = arith.mulf %58, %60 : vector<8x256xf32>
      %c0_28 = arith.constant 0 : index
      %c0_29 = arith.constant 0 : index
      %62 = vector.load %arg7[%c0_28, %c0_29] : memref<1x256xf32, #tpu.memory_space<vmem>>, vector<1x256xf32>
      %63 = vector.broadcast %62 : vector<1x256xf32> to vector<8x256xf32>
      %64 = arith.addf %61, %63 : vector<8x256xf32>
      %cst_30 = arith.constant 0.000000e+00 : f32
      %65 = vector.broadcast %cst_30 : f32 to vector<8x256xf32>
      %66 = arith.cmpf ogt, %64, %65 : vector<8x256xf32>
      %cst_31 = arith.constant 2.000000e-01 : f32
      %67 = vector.broadcast %cst_31 : f32 to vector<8x256xf32>
      %68 = arith.mulf %67, %64 : vector<8x256xf32>
      %69 = arith.select %66, %64, %68 : vector<8x256xi1>, vector<8x256xf32>
      %70 = arith.truncf %69 : vector<8x256xf32> to vector<8x256xbf16>
      %c0_32 = arith.constant 0 : index
      %c0_33 = arith.constant 0 : index
      %71 = vector.load %arg8[%c0_32, %c0_33] : memref<256x512xbf16, #tpu.memory_space<vmem>>, vector<256x512xbf16>
      %cst_34 = arith.constant dense<0.000000e+00> : vector<8x512xf32>
      %72 = tpu.matmul %70, %71, %cst_34 {dimension_numbers = #tpu.dot_dimension_numbers<[1], [0], [0], [1], [0, 0, 1, 1], [], []>} : vector<8x256xbf16>, vector<256x512xbf16>, vector<8x512xf32> -> vector<8x512xf32>
      %73 = vector.broadcast %21 : vector<8x1xf32> to vector<8x512xf32>
      %74 = arith.mulf %72, %73 : vector<8x512xf32>
      %cst_35 = arith.constant dense<0.000000e+00> : vector<512xf32>
      %75 = vector.multi_reduction <add>, %74, %cst_35 [0] : vector<8x512xf32> to vector<512xf32>
      %76 = vector.shape_cast %75 : vector<512xf32> to vector<1x512xf32>
      %77 = vector.broadcast %16 : f32 to vector<1x512xf32>
      %78 = arith.divf %76, %77 : vector<1x512xf32>
      %79 = vector.broadcast %78 : vector<1x512xf32> to vector<8x512xf32>
      %80 = arith.subf %72, %79 : vector<8x512xf32>
      %81 = vector.broadcast %21 : vector<8x1xf32> to vector<8x512xf32>
      %82 = arith.mulf %80, %81 : vector<8x512xf32>
      %83 = arith.mulf %82, %82 : vector<8x512xf32>
      %cst_36 = arith.constant dense<0.000000e+00> : vector<512xf32>
      %84 = vector.multi_reduction <add>, %83, %cst_36 [0] : vector<8x512xf32> to vector<512xf32>
      %85 = vector.shape_cast %84 : vector<512xf32> to vector<1x512xf32>
      %86 = vector.broadcast %16 : f32 to vector<1x512xf32>
      %87 = arith.divf %85, %86 : vector<1x512xf32>
      %88 = vector.broadcast %78 : vector<1x512xf32> to vector<8x512xf32>
      %89 = arith.subf %72, %88 : vector<8x512xf32>
      %cst_37 = arith.constant 8.000000e-01 : f32
      %90 = vector.broadcast %cst_37 : f32 to vector<1x512xf32>
      %91 = arith.addf %87, %90 : vector<1x512xf32>
      %92 = math.rsqrt %91 : vector<1x512xf32>
      %93 = vector.broadcast %92 : vector<1x512xf32> to vector<8x512xf32>
      %94 = arith.mulf %89, %93 : vector<8x512xf32>
      %c0_38 = arith.constant 0 : index
      %c0_39 = arith.constant 0 : index
      %95 = vector.load %arg9[%c0_38, %c0_39] : memref<1x512xf32, #tpu.memory_space<vmem>>, vector<1x512xf32>
      %96 = vector.broadcast %95 : vector<1x512xf32> to vector<8x512xf32>
      %97 = arith.mulf %94, %96 : vector<8x512xf32>
      %c0_40 = arith.constant 0 : index
      %c0_41 = arith.constant 0 : index
      %98 = vector.load %arg10[%c0_40, %c0_41] : memref<1x512xf32, #tpu.memory_space<vmem>>, vector<1x512xf32>
      %99 = vector.broadcast %98 : vector<1x512xf32> to vector<8x512xf32>
      %100 = arith.addf %97, %99 : vector<8x512xf32>
      %cst_42 = arith.constant 0.000000e+00 : f32
      %101 = vector.broadcast %cst_42 : f32 to vector<8x512xf32>
      %102 = arith.cmpf ogt, %100, %101 : vector<8x512xf32>
      %cst_43 = arith.constant 2.000000e-01 : f32
      %103 = vector.broadcast %cst_43 : f32 to vector<8x512xf32>
      %104 = arith.mulf %103, %100 : vector<8x512xf32>
      %105 = arith.select %102, %100, %104 : vector<8x512xi1>, vector<8x512xf32>
      %106 = arith.truncf %105 : vector<8x512xf32> to vector<8x512xbf16>
      %c0_44 = arith.constant 0 : index
      %c0_45 = arith.constant 0 : index
      %107 = vector.load %arg11[%c0_44, %c0_45] : memref<512x1024xbf16, #tpu.memory_space<vmem>>, vector<512x1024xbf16>
      %cst_46 = arith.constant dense<0.000000e+00> : vector<8x1024xf32>
      %108 = tpu.matmul %106, %107, %cst_46 {dimension_numbers = #tpu.dot_dimension_numbers<[1], [0], [0], [1], [0, 0, 1, 1], [], []>} : vector<8x512xbf16>, vector<512x1024xbf16>, vector<8x1024xf32> -> vector<8x1024xf32>
      %109 = vector.broadcast %21 : vector<8x1xf32> to vector<8x1024xf32>
      %110 = arith.mulf %108, %109 : vector<8x1024xf32>
      %cst_47 = arith.constant dense<0.000000e+00> : vector<1024xf32>
      %111 = vector.multi_reduction <add>, %110, %cst_47 [0] : vector<8x1024xf32> to vector<1024xf32>
      %112 = vector.shape_cast %111 : vector<1024xf32> to vector<1x1024xf32>
      %113 = vector.broadcast %16 : f32 to vector<1x1024xf32>
      %114 = arith.divf %112, %113 : vector<1x1024xf32>
      %115 = vector.broadcast %114 : vector<1x1024xf32> to vector<8x1024xf32>
      %116 = arith.subf %108, %115 : vector<8x1024xf32>
      %117 = vector.broadcast %21 : vector<8x1xf32> to vector<8x1024xf32>
      %118 = arith.mulf %116, %117 : vector<8x1024xf32>
      %119 = arith.mulf %118, %118 : vector<8x1024xf32>
      %cst_48 = arith.constant dense<0.000000e+00> : vector<1024xf32>
      %120 = vector.multi_reduction <add>, %119, %cst_48 [0] : vector<8x1024xf32> to vector<1024xf32>
      %121 = vector.shape_cast %120 : vector<1024xf32> to vector<1x1024xf32>
      %122 = vector.broadcast %16 : f32 to vector<1x1024xf32>
      %123 = arith.divf %121, %122 : vector<1x1024xf32>
      %124 = vector.broadcast %114 : vector<1x1024xf32> to vector<8x1024xf32>
      %125 = arith.subf %108, %124 : vector<8x1024xf32>
      %cst_49 = arith.constant 8.000000e-01 : f32
      %126 = vector.broadcast %cst_49 : f32 to vector<1x1024xf32>
      %127 = arith.addf %123, %126 : vector<1x1024xf32>
      %128 = math.rsqrt %127 : vector<1x1024xf32>
      %129 = vector.broadcast %128 : vector<1x1024xf32> to vector<8x1024xf32>
      %130 = arith.mulf %125, %129 : vector<8x1024xf32>
      %c0_50 = arith.constant 0 : index
      %c0_51 = arith.constant 0 : index
      %131 = vector.load %arg12[%c0_50, %c0_51] : memref<1x1024xf32, #tpu.memory_space<vmem>>, vector<1x1024xf32>
      %132 = vector.broadcast %131 : vector<1x1024xf32> to vector<8x1024xf32>
      %133 = arith.mulf %130, %132 : vector<8x1024xf32>
      %c0_52 = arith.constant 0 : index
      %c0_53 = arith.constant 0 : index
      %134 = vector.load %arg13[%c0_52, %c0_53] : memref<1x1024xf32, #tpu.memory_space<vmem>>, vector<1x1024xf32>
      %135 = vector.broadcast %134 : vector<1x1024xf32> to vector<8x1024xf32>
      %136 = arith.addf %133, %135 : vector<8x1024xf32>
      %cst_54 = arith.constant 0.000000e+00 : f32
      %137 = vector.broadcast %cst_54 : f32 to vector<8x1024xf32>
      %138 = arith.cmpf ogt, %136, %137 : vector<8x1024xf32>
      %cst_55 = arith.constant 2.000000e-01 : f32
      %139 = vector.broadcast %cst_55 : f32 to vector<8x1024xf32>
      %140 = arith.mulf %139, %136 : vector<8x1024xf32>
      %141 = arith.select %138, %136, %140 : vector<8x1024xi1>, vector<8x1024xf32>
      %142 = arith.truncf %141 : vector<8x1024xf32> to vector<8x1024xbf16>
      %c0_56 = arith.constant 0 : index
      %c0_57 = arith.constant 0 : index
      %143 = vector.load %arg18[%c0_56, %c0_57] : memref<8x1024xbf16, #tpu.memory_space<vmem>>, vector<8x1024xbf16>
      tpu.vector_store %arg18[%c0_56, %c0_57], %142 {strides = array<i32>} : memref<8x1024xbf16, #tpu.memory_space<vmem>>, vector<8x1024xbf16>,
    } else {
    }
    %c0 = arith.constant 0 : index
    %c0_1 = arith.constant 0 : index
    %3 = vector.load %arg14[%c0, %c0_1] : memref<1024x2048xi8, #tpu.memory_space<vmem>>, vector<1024x2048xi8>
    %4 = arith.sitofp %3 : vector<1024x2048xi8> to vector<1024x2048xbf16>
    %c0_2 = arith.constant 0 : index
    %c0_3 = arith.constant 0 : index
    %5 = vector.load %arg18[%c0_2, %c0_3] : memref<8x1024xbf16, #tpu.memory_space<vmem>>, vector<8x1024xbf16>
    %cst = arith.constant dense<0.000000e+00> : vector<8x2048xf32>
    %6 = tpu.matmul %5, %4, %cst {dimension_numbers = #tpu.dot_dimension_numbers<[1], [0], [0], [1], [0, 0, 1, 1], [], []>} : vector<8x1024xbf16>, vector<1024x2048xbf16>, vector<8x2048xf32> -> vector<8x2048xf32>
    %c0_4 = arith.constant 0 : index
    %c0_5 = arith.constant 0 : index
    %7 = vector.load %arg15[%c0_4, %c0_5] : memref<1x2048xf32, #tpu.memory_space<vmem>>, vector<1x2048xf32>
    %8 = vector.broadcast %7 : vector<1x2048xf32> to vector<8x2048xf32>
    %9 = arith.mulf %6, %8 : vector<8x2048xf32>
    %c0_6 = arith.constant 0 : index
    %c0_7 = arith.constant 0 : index
    %10 = vector.load %arg16[%c0_6, %c0_7] : memref<1x2048xf32, #tpu.memory_space<vmem>>, vector<1x2048xf32>
    %11 = vector.broadcast %10 : vector<1x2048xf32> to vector<8x2048xf32>
    %12 = arith.addf %9, %11 : vector<8x2048xf32>
    %13 = math.tanh %12 : vector<8x2048xf32>
    %c0_8 = arith.constant 0 : index
    %c0_9 = arith.constant 0 : index
    %14 = vector.load %arg17[%c0_8, %c0_9] : memref<8x2048xf32, #tpu.memory_space<vmem>>, vector<8x2048xf32>
    tpu.vector_store %arg17[%c0_8, %c0_9], %13 {strides = array<i32>} : memref<8x2048xf32, #tpu.memory_space<vmem>>, vector<8x2048xf32>,
    return
  }
  func.func @transform_0(%arg0: i32, %arg1: memref<1xi32, #tpu.memory_space<smem>>) -> (i32, i32) {
    %c0_i32 = arith.constant 0 : i32
    %c0_i32_0 = arith.constant 0 : i32
    %c0_i32_1 = arith.constant 0 : i32
    return %c0_i32, %c0_i32_0 : i32, i32
  }
  func.func @transform_1(%arg0: i32, %arg1: memref<1xi32, #tpu.memory_space<smem>>) -> (i32, i32) {
    %c0_i32 = arith.constant 0 : i32
    %c0_i32_0 = arith.constant 0 : i32
    %c0_i32_1 = arith.constant 0 : i32
    return %c0_i32, %c0_i32_0 : i32, i32
  }
  func.func @transform_2(%arg0: i32, %arg1: memref<1xi32, #tpu.memory_space<smem>>) -> (i32, i32) {
    %c0_i32 = arith.constant 0 : i32
    %c0_i32_0 = arith.constant 0 : i32
    %c0_i32_1 = arith.constant 0 : i32
    return %c0_i32, %c0_i32_0 : i32, i32
  }
  func.func @transform_3(%arg0: i32, %arg1: memref<1xi32, #tpu.memory_space<smem>>) -> (i32, i32) {
    %c0_i32 = arith.constant 0 : i32
    %c0_i32_0 = arith.constant 0 : i32
    %c0_i32_1 = arith.constant 0 : i32
    return %c0_i32, %c0_i32_0 : i32, i32
  }
  func.func @transform_4(%arg0: i32, %arg1: memref<1xi32, #tpu.memory_space<smem>>) -> (i32, i32) {
    %c0_i32 = arith.constant 0 : i32
    %c0_i32_0 = arith.constant 0 : i32
    %c0_i32_1 = arith.constant 0 : i32
    return %c0_i32, %c0_i32_0 : i32, i32
  }
  func.func @transform_5(%arg0: i32, %arg1: memref<1xi32, #tpu.memory_space<smem>>) -> (i32, i32) {
    %c0_i32 = arith.constant 0 : i32
    %c0_i32_0 = arith.constant 0 : i32
    %c0_i32_1 = arith.constant 0 : i32
    return %c0_i32, %c0_i32_0 : i32, i32
  }
  func.func @transform_6(%arg0: i32, %arg1: memref<1xi32, #tpu.memory_space<smem>>) -> (i32, i32) {
    %c0_i32 = arith.constant 0 : i32
    %c0_i32_0 = arith.constant 0 : i32
    %c0_i32_1 = arith.constant 0 : i32
    return %c0_i32, %c0_i32_0 : i32, i32
  }
  func.func @transform_7(%arg0: i32, %arg1: memref<1xi32, #tpu.memory_space<smem>>) -> (i32, i32) {
    %c0_i32 = arith.constant 0 : i32
    %c0_i32_0 = arith.constant 0 : i32
    %c0_i32_1 = arith.constant 0 : i32
    return %c0_i32, %c0_i32_0 : i32, i32
  }
  func.func @transform_8(%arg0: i32, %arg1: memref<1xi32, #tpu.memory_space<smem>>) -> (i32, i32) {
    %c0_i32 = arith.constant 0 : i32
    %c0_i32_0 = arith.constant 0 : i32
    %c0_i32_1 = arith.constant 0 : i32
    return %c0_i32, %c0_i32_0 : i32, i32
  }
  func.func @transform_9(%arg0: i32, %arg1: memref<1xi32, #tpu.memory_space<smem>>) -> (i32, i32) {
    %c0_i32 = arith.constant 0 : i32
    %c0_i32_0 = arith.constant 0 : i32
    %c0_i32_1 = arith.constant 0 : i32
    return %c0_i32, %c0_i32_0 : i32, i32
  }
  func.func @transform_10(%arg0: i32, %arg1: memref<1xi32, #tpu.memory_space<smem>>) -> (i32, i32) {
    %c0_i32 = arith.constant 0 : i32
    %c0_i32_0 = arith.constant 0 : i32
    %c0_i32_1 = arith.constant 0 : i32
    return %c0_i32, %c0_i32_0 : i32, i32
  }
  func.func @transform_11(%arg0: i32, %arg1: memref<1xi32, #tpu.memory_space<smem>>) -> (i32, i32) {
    %c0_i32 = arith.constant 0 : i32
    %c0_i32_0 = arith.constant 0 : i32
    %c0_i32_1 = arith.constant 0 : i32
    return %c0_i32, %c0_i32_0 : i32, i32
  }
  func.func @transform_12(%arg0: i32, %arg1: memref<1xi32, #tpu.memory_space<smem>>) -> (i32, i32) {
    %c0_i32 = arith.constant 0 : i32
    %c0_i32_0 = arith.constant 0 : i32
    return %c0_i32, %arg0 : i32, i32
  }
  func.func @transform_13(%arg0: i32, %arg1: memref<1xi32, #tpu.memory_space<smem>>) -> (i32, i32) {
    %c0_i32 = arith.constant 0 : i32
    %c0_i32_0 = arith.constant 0 : i32
    return %c0_i32, %arg0 : i32, i32
  }
  func.func @transform_14(%arg0: i32, %arg1: memref<1xi32, #tpu.memory_space<smem>>) -> (i32, i32) {
    %c0_i32 = arith.constant 0 : i32
    %c0_i32_0 = arith.constant 0 : i32
    return %c0_i32, %arg0 : i32, i32
  }
  func.func @transform_15(%arg0: i32, %arg1: memref<1xi32, #tpu.memory_space<smem>>) -> (i32, i32) {
    %c0_i32 = arith.constant 0 : i32
    %c0_i32_0 = arith.constant 0 : i32
    return %c0_i32, %arg0 : i32, i32
  }
}

</mosaic_0001>

<llo_original>
// kernel: _generator_forward_jit.1
$region0: #{_generator_forward_jit.1}
  #allocation0 [shape = 'u32[]', space=smem, size = 0x4, offset = 0x4, fixed_abs, tag = 'smem constant byte address 0x4 - core index']
  #allocation1 [shape = 'u32[144,128]{1,0:T(1,128)}', space=vmem, size = 0x12000, scoped, tag = 'internal scratch']
  #allocation2 [shape = 'bf16[8,1024]{1,0:T(8,128)(2,1)}', space=vmem, size = 0x4000, scoped, tag = 'scratch operand']
  #allocation3 [shape = 's32[1]{0}', space=sflag, size = 0x4, scoped, tag = 'scoped memory for _generator_forward_jit.1']
  #allocation4 [shape = 's32[1]{0:T(128)S(6)}', space=smem, size = 0x200, scoped, tag = 'prefetched SMEM operand 0']
  %s0 = inlined_call_operand.<no memory space> [shape: s32[1], index: 0, kind: input, shape index: {}]
  %s1 = inlined_call_operand.vmem [shape: f32[8,128], index: 1, kind: input, shape index: {}]
  %s2 = inlined_call_operand.hbm [shape: bf16[128,128], index: 2, kind: input, shape index: {}]
  %s3 = inlined_call_operand.hbm [shape: f32[1,128], index: 3, kind: input, shape index: {}]
  %s4 = inlined_call_operand.hbm [shape: bf16[128,256], index: 4, kind: input, shape index: {}]
  %s5 = inlined_call_operand.hbm [shape: f32[1,256], index: 5, kind: input, shape index: {}]
  %s6 = inlined_call_operand.hbm [shape: f32[1,256], index: 6, kind: input, shape index: {}]
  %s7 = inlined_call_operand.hbm [shape: bf16[256,512], index: 7, kind: input, shape index: {}]
  %s8 = inlined_call_operand.hbm [shape: f32[1,512], index: 8, kind: input, shape index: {}]
  %s9 = inlined_call_operand.hbm [shape: f32[1,512], index: 9, kind: input, shape index: {}]
  %s10 = inlined_call_operand.hbm [shape: bf16[512,1024], index: 10, kind: input, shape index: {}]
  %s11 = inlined_call_operand.hbm [shape: f32[1,1024], index: 11, kind: input, shape index: {}]
  %s12 = inlined_call_operand.hbm [shape: f32[1,1024], index: 12, kind: input, shape index: {}]
  %s13 = inlined_call_operand.hbm [shape: s8[1024,12288], index: 13, kind: input, shape index: {}]
  %s14 = inlined_call_operand.hbm [shape: f32[1,12288], index: 14, kind: input, shape index: {}]
  %s15 = inlined_call_operand.hbm [shape: f32[1,12288], index: 15, kind: input, shape index: {}]
  %s16 = inlined_call_operand.vmem [shape: f32[8,12288], index: 16, kind: output, shape index: {}]
  %s17 = sld [smem:[#allocation0]]
  $region153: #{_generator_forward_jit.1} parent=0
    _
  %s19 = ssub.s32 1, %s17
  %s20 = scalar_select 0, %s19, %s17
  %21 = sst [smem:[#allocation4]] %s0
  $region1: #{_generator_forward_jit.1} parent=0
    #allocation5 [shape = 'u8[32768]{0}', space=vmem, size = 0x8000, scoped, tag = 'input window, operand 2, single buffered']
    #allocation6 [shape = 's32[2]{0}', space=sflag, size = 0x8, scoped, tag = 'scoped memory for _generator_forward_jit.1']
    #allocation7 [shape = 'u8[512]{0}', space=vmem, size = 0x400, scoped, tag = 'input window, operand 3, single buffered']
    #allocation8 [shape = 's32[1]{0}', space=sflag, size = 0x4, scoped, tag = 'scoped memory for _generator_forward_jit.1']
    #allocation9 [shape = 'u8[65536]{0}', space=vmem, size = 0x10000, scoped, tag = 'input window, operand 4, single buffered']
    #allocation10 [shape = 'u8[1024]{0}', space=vmem, size = 0x400, scoped, tag = 'input window, operand 5, single buffered']
    #allocation11 [shape = 's32[1]{0}', space=sflag, size = 0x4, scoped, tag = 'scoped memory for _generator_forward_jit.1']
    #allocation12 [shape = 'u8[1024]{0}', space=vmem, size = 0x400, scoped, tag = 'input window, operand 6, single buffered']
    #allocation13 [shape = 'u8[262144]{0}', space=vmem, size = 0x40000, scoped, tag = 'input window, operand 7, single buffered']
    #allocation14 [shape = 's32[1]{0}', space=sflag, size = 0x4, scoped, tag = 'scoped memory for _generator_forward_jit.1']
    #allocation15 [shape = 'u8[2048]{0}', space=vmem, size = 0x800, scoped, tag = 'input window, operand 8, single buffered']
    #allocation16 [shape = 'u8[2048]{0}', space=vmem, size = 0x800, scoped, tag = 'input window, operand 9, single buffered']
    #allocation17 [shape = 's32[1]{0}', space=sflag, size = 0x4, scoped, tag = 'scoped memory for _generator_forward_jit.1']
    #allocation18 [shape = 'u8[1048576]{0}', space=vmem, size = 0x100000, scoped, tag = 'input window, operand 10, single buffered']
    #allocation19 [shape = 'u8[4096]{0}', space=vmem, size = 0x1000, scoped, tag = 'input window, operand 11, single buffered']
    #allocation20 [shape = 's32[1]{0}', space=sflag, size = 0x4, scoped, tag = 'scoped memory for _generator_forward_jit.1']
    #allocation21 [shape = 'u8[4096]{0}', space=vmem, size = 0x1000, scoped, tag = 'input window, operand 12, single buffered']
    #allocation22 [shape = 'u8[4194304]{0}', space=vmem, size = 0x400000, scoped, tag = 'input window, operand 13']
    #allocation23 [shape = 's32[2]{0}', space=sflag, size = 0x8, scoped, tag = 'scoped memory for _generator_forward_jit.1']
    #allocation24 [shape = 'u8[16384]{0}', space=vmem, size = 0x4000, scoped, tag = 'input window, operand 14']
    #allocation25 [shape = 'u8[16384]{0}', space=vmem, size = 0x4000, scoped, tag = 'input window, operand 15']
    #allocation26 [shape = 's32[2]{0}', space=sflag, size = 0x8, scoped, tag = 'scoped memory for _generator_forward_jit.1']
    %22 = vsyncpa [#allocation6], 0
    %23 = vsyncpa [#allocation8], 0
    %24 = vsyncpa [#allocation11], 0
    %25 = vsyncpa [#allocation14], 0
    %26 = vsyncpa [#allocation17], 0
    %27 = vsyncpa [#allocation20], 0
    %28 = vsyncpa [#allocation23], 0
    %s29 = scalar_lea.sflag [#allocation23], 1
    %30 = vsyncpa %s29, 0
    %31 = vsyncpa [#allocation26], 0
    %s32 = scalar_lea.sflag [#allocation26], 1
    %33 = vsyncpa %s32, 0
    loop: start=0, step=1, limit=8
    $region2: #{_generator_forward_jit.1} parent=1 // loop_pre_header
      _
    $region3: #{_generator_forward_jit.1} parent=1 // loop_header
      %s35 = sphi 0, %s39
      %p36 = scmp.ge.s32.totalorder %s35, 8
      %s43 = sphi 0, %s43
      %s45 = sphi 0, %s43
      %s46 = sphi 0, %s45
      %s60 = sphi 0, %s46
      %s64 = sphi 0, %s64
      %s66 = sphi 0, %s64
      %s67 = sphi 0, %s66
      %s81 = sphi 0, %s67
      %s85 = sphi 0, %s85
      %s87 = sphi 0, %s85
      %s88 = sphi 0, %s87
      %s102 = sphi 0, %s88
      %s106 = sphi 0, %s106
      %s108 = sphi 0, %s106
      %s109 = sphi 0, %s108
      %s123 = sphi 0, %s109
      %s127 = sphi 0, %s127
      %s129 = sphi 0, %s127
      %s130 = sphi 0, %s129
      %s144 = sphi 0, %s130
      %s148 = sphi 0, %s148
      %s150 = sphi 0, %s148
      %s151 = sphi 0, %s150
      %s165 = sphi 0, %s151
      %s169 = sphi 0, %s169
      %s171 = sphi 0, %s169
      %s172 = sphi 0, %s171
      %s186 = sphi 0, %s172
      %s190 = sphi 0, %s190
      %s192 = sphi 0, %s190
      %s193 = sphi 0, %s192
      %s207 = sphi 0, %s193
      %s211 = sphi 0, %s211
      %s213 = sphi 0, %s211
      %s214 = sphi 0, %s213
      %s228 = sphi 0, %s214
      %s232 = sphi 0, %s232
      %s234 = sphi 0, %s232
      %s235 = sphi 0, %s234
      %s249 = sphi 0, %s235
      %s253 = sphi 0, %s253
      %s255 = sphi 0, %s253
      %s256 = sphi 0, %s255
      %s270 = sphi 0, %s256
      %s274 = sphi 0, %s274
      %s276 = sphi 0, %s274
      %s277 = sphi 0, %s276
      %s291 = sphi 0, %s277
      %s297 = sphi 0, %s299
      %s300 = sphi 0, %s297
      %s301 = sphi 0, %s300
      %s317 = sphi 0, %s301
      %s323 = sphi 0, %s325
      %s326 = sphi 0, %s323
      %s327 = sphi 0, %s326
      %s343 = sphi 0, %s327
      %s349 = sphi 0, %s351
      %s352 = sphi 0, %s349
      %s353 = sphi 0, %s352
      %s369 = sphi 0, %s353
      %s375 = sphi 0, %s377
      %s378 = sphi 0, %s375
      %s379 = sphi 0, %s378
      %s395 = sphi 0, %s379
    $region4: #{_generator_forward_jit.1} parent=1 // loop_header_branch
      %38 = sbr.rel (%p36) target = $region8
    $region5: #{_generator_forward_jit.1} parent=1 // loop_body
      %s40 = ssub.s32 %s35, 1
      %s41 = ssub.s32 %s35, 2
      %s42 = sadd.s32 %s35, 1
      %s44 = sadd.s32 %s43, 1
      %p47 = scmp.eq.s32.totalorder %s35, 5
      %p48 = scmp.ne.s32.totalorder %s43, %s45
      %p49 = scmp.eq.s32.totalorder %s35, 0
      %p50 = por %p48, %p49
      %p51 = scmp.ne.s32.totalorder %s43, %s45
      %p52 = scmp.eq.s32.totalorder %s40, 5
      %p53 = por %p51, %p52
      %p54 = scmp.ne.s32.totalorder %s45, %s46
      %p55 = scmp.eq.s32.totalorder %s40, 0
      %p56 = por %p54, %p55
      %p57 = scmp.ne.s32.totalorder %s45, %s46
      %p58 = scmp.eq.s32.totalorder %s41, 5
      %p59 = por %p57, %p58
      %p61 = scmp.ne.s32.totalorder %s46, %s60
      %p62 = scmp.eq.s32.totalorder %s41, 0
      %p63 = por %p61, %p62
      %s65 = sadd.s32 %s64, 1
      %p68 = scmp.eq.s32.totalorder %s35, 5
      %p69 = scmp.ne.s32.totalorder %s64, %s66
      %p70 = scmp.eq.s32.totalorder %s35, 0
      %p71 = por %p69, %p70
      %p72 = scmp.ne.s32.totalorder %s64, %s66
      %p73 = scmp.eq.s32.totalorder %s40, 5
      %p74 = por %p72, %p73
      %p75 = scmp.ne.s32.totalorder %s66, %s67
      %p76 = scmp.eq.s32.totalorder %s40, 0
      %p77 = por %p75, %p76
      %p78 = scmp.ne.s32.totalorder %s66, %s67
      %p79 = scmp.eq.s32.totalorder %s41, 5
      %p80 = por %p78, %p79
      %p82 = scmp.ne.s32.totalorder %s67, %s81
      %p83 = scmp.eq.s32.totalorder %s41, 0
      %p84 = por %p82, %p83
      %s86 = sadd.s32 %s85, 1
      %p89 = scmp.eq.s32.totalorder %s35, 5
      %p90 = scmp.ne.s32.totalorder %s85, %s87
      %p91 = scmp.eq.s32.totalorder %s35, 0
      %p92 = por %p90, %p91
      %p93 = scmp.ne.s32.totalorder %s85, %s87
      %p94 = scmp.eq.s32.totalorder %s40, 5
      %p95 = por %p93, %p94
      %p96 = scmp.ne.s32.totalorder %s87, %s88
      %p97 = scmp.eq.s32.totalorder %s40, 0
      %p98 = por %p96, %p97
      %p99 = scmp.ne.s32.totalorder %s87, %s88
      %p100 = scmp.eq.s32.totalorder %s41, 5
      %p101 = por %p99, %p100
      %p103 = scmp.ne.s32.totalorder %s88, %s102
      %p104 = scmp.eq.s32.totalorder %s41, 0
      %p105 = por %p103, %p104
      %s107 = sadd.s32 %s106, 1
      %p110 = scmp.eq.s32.totalorder %s35, 5
      %p111 = scmp.ne.s32.totalorder %s106, %s108
      %p112 = scmp.eq.s32.totalorder %s35, 0
      %p113 = por %p111, %p112
      %p114 = scmp.ne.s32.totalorder %s106, %s108
      %p115 = scmp.eq.s32.totalorder %s40, 5
      %p116 = por %p114, %p115
      %p117 = scmp.ne.s32.totalorder %s108, %s109
      %p118 = scmp.eq.s32.totalorder %s40, 0
      %p119 = por %p117, %p118
      %p120 = scmp.ne.s32.totalorder %s108, %s109
      %p121 = scmp.eq.s32.totalorder %s41, 5
      %p122 = por %p120, %p121
      %p124 = scmp.ne.s32.totalorder %s109, %s123
      %p125 = scmp.eq.s32.totalorder %s41, 0
      %p126 = por %p124, %p125
      %s128 = sadd.s32 %s127, 1
      %p131 = scmp.eq.s32.totalorder %s35, 5
      %p132 = scmp.ne.s32.totalorder %s127, %s129
      %p133 = scmp.eq.s32.totalorder %s35, 0
      %p134 = por %p132, %p133
      %p135 = scmp.ne.s32.totalorder %s127, %s129
      %p136 = scmp.eq.s32.totalorder %s40, 5
      %p137 = por %p135, %p136
      %p138 = scmp.ne.s32.totalorder %s129, %s130
      %p139 = scmp.eq.s32.totalorder %s40, 0
      %p140 = por %p138, %p139
      %p141 = scmp.ne.s32.totalorder %s129, %s130
      %p142 = scmp.eq.s32.totalorder %s41, 5
      %p143 = por %p141, %p142
      %p145 = scmp.ne.s32.totalorder %s130, %s144
      %p146 = scmp.eq.s32.totalorder %s41, 0
      %p147 = por %p145, %p146
      %s149 = sadd.s32 %s148, 1
      %p152 = scmp.eq.s32.totalorder %s35, 5
      %p153 = scmp.ne.s32.totalorder %s148, %s150
      %p154 = scmp.eq.s32.totalorder %s35, 0
      %p155 = por %p153, %p154
      %p156 = scmp.ne.s32.totalorder %s148, %s150
      %p157 = scmp.eq.s32.totalorder %s40, 5
      %p158 = por %p156, %p157
      %p159 = scmp.ne.s32.totalorder %s150, %s151
      %p160 = scmp.eq.s32.totalorder %s40, 0
      %p161 = por %p159, %p160
      %p162 = scmp.ne.s32.totalorder %s150, %s151
      %p163 = scmp.eq.s32.totalorder %s41, 5
      %p164 = por %p162, %p163
      %p166 = scmp.ne.s32.totalorder %s151, %s165
      %p167 = scmp.eq.s32.totalorder %s41, 0
      %p168 = por %p166, %p167
      %s170 = sadd.s32 %s169, 1
      %p173 = scmp.eq.s32.totalorder %s35, 5
      %p174 = scmp.ne.s32.totalorder %s169, %s171
      %p175 = scmp.eq.s32.totalorder %s35, 0
      %p176 = por %p174, %p175
      %p177 = scmp.ne.s32.totalorder %s169, %s171
      %p178 = scmp.eq.s32.totalorder %s40, 5
      %p179 = por %p177, %p178
      %p180 = scmp.ne.s32.totalorder %s171, %s172
      %p181 = scmp.eq.s32.totalorder %s40, 0
      %p182 = por %p180, %p181
      %p183 = scmp.ne.s32.totalorder %s171, %s172
      %p184 = scmp.eq.s32.totalorder %s41, 5
      %p185 = por %p183, %p184
      %p187 = scmp.ne.s32.totalorder %s172, %s186
      %p188 = scmp.eq.s32.totalorder %s41, 0
      %p189 = por %p187, %p188
      %s191 = sadd.s32 %s190, 1
      %p194 = scmp.eq.s32.totalorder %s35, 5
      %p195 = scmp.ne.s32.totalorder %s190, %s192
      %p196 = scmp.eq.s32.totalorder %s35, 0
      %p197 = por %p195, %p196
      %p198 = scmp.ne.s32.totalorder %s190, %s192
      %p199 = scmp.eq.s32.totalorder %s40, 5
      %p200 = por %p198, %p199
      %p201 = scmp.ne.s32.totalorder %s192, %s193
      %p202 = scmp.eq.s32.totalorder %s40, 0
      %p203 = por %p201, %p202
      %p204 = scmp.ne.s32.totalorder %s192, %s193
      %p205 = scmp.eq.s32.totalorder %s41, 5
      %p206 = por %p204, %p205
      %p208 = scmp.ne.s32.totalorder %s193, %s207
      %p209 = scmp.eq.s32.totalorder %s41, 0
      %p210 = por %p208, %p209
      %s212 = sadd.s32 %s211, 1
      %p215 = scmp.eq.s32.totalorder %s35, 5
      %p216 = scmp.ne.s32.totalorder %s211, %s213
      %p217 = scmp.eq.s32.totalorder %s35, 0
      %p218 = por %p216, %p217
      %p219 = scmp.ne.s32.totalorder %s211, %s213
      %p220 = scmp.eq.s32.totalorder %s40, 5
      %p221 = por %p219, %p220
      %p222 = scmp.ne.s32.totalorder %s213, %s214
      %p223 = scmp.eq.s32.totalorder %s40, 0
      %p224 = por %p222, %p223
      %p225 = scmp.ne.s32.totalorder %s213, %s214
      %p226 = scmp.eq.s32.totalorder %s41, 5
      %p227 = por %p225, %p226
      %p229 = scmp.ne.s32.totalorder %s214, %s228
      %p230 = scmp.eq.s32.totalorder %s41, 0
      %p231 = por %p229, %p230
      %s233 = sadd.s32 %s232, 1
      %p236 = scmp.eq.s32.totalorder %s35, 5
      %p237 = scmp.ne.s32.totalorder %s232, %s234
      %p238 = scmp.eq.s32.totalorder %s35, 0
      %p239 = por %p237, %p238
      %p240 = scmp.ne.s32.totalorder %s232, %s234
      %p241 = scmp.eq.s32.totalorder %s40, 5
      %p242 = por %p240, %p241
      %p243 = scmp.ne.s32.totalorder %s234, %s235
      %p244 = scmp.eq.s32.totalorder %s40, 0
      %p245 = por %p243, %p244
      %p246 = scmp.ne.s32.totalorder %s234, %s235
      %p247 = scmp.eq.s32.totalorder %s41, 5
      %p248 = por %p246, %p247
      %p250 = scmp.ne.s32.totalorder %s235, %s249
      %p251 = scmp.eq.s32.totalorder %s41, 0
      %p252 = por %p250, %p251
      %s254 = sadd.s32 %s253, 1
      %p257 = scmp.eq.s32.totalorder %s35, 5
      %p258 = scmp.ne.s32.totalorder %s253, %s255
      %p259 = scmp.eq.s32.totalorder %s35, 0
      %p260 = por %p258, %p259
      %p261 = scmp.ne.s32.totalorder %s253, %s255
      %p262 = scmp.eq.s32.totalorder %s40, 5
      %p263 = por %p261, %p262
      %p264 = scmp.ne.s32.totalorder %s255, %s256
      %p265 = scmp.eq.s32.totalorder %s40, 0
      %p266 = por %p264, %p265
      %p267 = scmp.ne.s32.totalorder %s255, %s256
      %p268 = scmp.eq.s32.totalorder %s41, 5
      %p269 = por %p267, %p268
      %p271 = scmp.ne.s32.totalorder %s256, %s270
      %p272 = scmp.eq.s32.totalorder %s41, 0
      %p273 = por %p271, %p272
      %s275 = sadd.s32 %s274, 1
      %p278 = scmp.eq.s32.totalorder %s35, 5
      %p279 = scmp.ne.s32.totalorder %s274, %s276
      %p280 = scmp.eq.s32.totalorder %s35, 0
      %p281 = por %p279, %p280
      %p282 = scmp.ne.s32.totalorder %s274, %s276
      %p283 = scmp.eq.s32.totalorder %s40, 5
      %p284 = por %p282, %p283
      %p285 = scmp.ne.s32.totalorder %s276, %s277
      %p286 = scmp.eq.s32.totalorder %s40, 0
      %p287 = por %p285, %p286
      %p288 = scmp.ne.s32.totalorder %s276, %s277
      %p289 = scmp.eq.s32.totalorder %s41, 5
      %p290 = por %p288, %p289
      %p292 = scmp.ne.s32.totalorder %s277, %s291
      %p293 = scmp.eq.s32.totalorder %s41, 0
      %p294 = por %p292, %p293
      %s295 = ssub.s32 %s35, %s42
      %p296 = scmp.eq.s32.totalorder %s295, 0
      %s298 = sadd.s32 %s297, 1
      %s299 = scalar_select %p296, %s297, %s298
      %p302 = pneg %p296
      %p303 = scmp.eq.s32.totalorder %s35, 5
      %p304 = por %p302, %p303
      %p305 = scmp.ne.s32.totalorder %s297, %s300
      %p306 = scmp.eq.s32.totalorder %s35, 0
      %p307 = por %p305, %p306
      %p308 = scmp.ne.s32.totalorder %s297, %s300
      %p309 = scmp.eq.s32.totalorder %s40, 5
      %p310 = por %p308, %p309
      %p311 = scmp.ne.s32.totalorder %s300, %s301
      %p312 = scmp.eq.s32.totalorder %s40, 0
      %p313 = por %p311, %p312
      %p314 = scmp.ne.s32.totalorder %s300, %s301
      %p315 = scmp.eq.s32.totalorder %s41, 5
      %p316 = por %p314, %p315
      %p318 = scmp.ne.s32.totalorder %s301, %s317
      %p319 = scmp.eq.s32.totalorder %s41, 0
      %p320 = por %p318, %p319
      %s321 = ssub.s32 %s35, %s42
      %p322 = scmp.eq.s32.totalorder %s321, 0
      %s324 = sadd.s32 %s323, 1
      %s325 = scalar_select %p322, %s323, %s324
      %p328 = pneg %p322
      %p329 = scmp.eq.s32.totalorder %s35, 5
      %p330 = por %p328, %p329
      %p331 = scmp.ne.s32.totalorder %s323, %s326
      %p332 = scmp.eq.s32.totalorder %s35, 0
      %p333 = por %p331, %p332
      %p334 = scmp.ne.s32.totalorder %s323, %s326
      %p335 = scmp.eq.s32.totalorder %s40, 5
      %p336 = por %p334, %p335
      %p337 = scmp.ne.s32.totalorder %s326, %s327
      %p338 = scmp.eq.s32.totalorder %s40, 0
      %p339 = por %p337, %p338
      %p340 = scmp.ne.s32.totalorder %s326, %s327
      %p341 = scmp.eq.s32.totalorder %s41, 5
      %p342 = por %p340, %p341
      %p344 = scmp.ne.s32.totalorder %s327, %s343
      %p345 = scmp.eq.s32.totalorder %s41, 0
      %p346 = por %p344, %p345
      %s347 = ssub.s32 %s35, %s42
      %p348 = scmp.eq.s32.totalorder %s347, 0
      %s350 = sadd.s32 %s349, 1
      %s351 = scalar_select %p348, %s349, %s350
      %p354 = pneg %p348
      %p355 = scmp.eq.s32.totalorder %s35, 5
      %p356 = por %p354, %p355
      %p357 = scmp.ne.s32.totalorder %s349, %s352
      %p358 = scmp.eq.s32.totalorder %s35, 0
      %p359 = por %p357, %p358
      %p360 = scmp.ne.s32.totalorder %s349, %s352
      %p361 = scmp.eq.s32.totalorder %s40, 5
      %p362 = por %p360, %p361
      %p363 = scmp.ne.s32.totalorder %s352, %s353
      %p364 = scmp.eq.s32.totalorder %s40, 0
      %p365 = por %p363, %p364
      %p366 = scmp.ne.s32.totalorder %s352, %s353
      %p367 = scmp.eq.s32.totalorder %s41, 5
      %p368 = por %p366, %p367
      %p370 = scmp.ne.s32.totalorder %s353, %s369
      %p371 = scmp.eq.s32.totalorder %s41, 0
      %p372 = por %p370, %p371
      %s373 = ssub.s32 %s35, %s42
      %p374 = scmp.eq.s32.totalorder %s373, 0
      %s376 = sadd.s32 %s375, 1
      %s377 = scalar_select %p374, %s375, %s376
      %p380 = pneg %p374
      %p381 = scmp.eq.s32.totalorder %s35, 5
      %p382 = por %p380, %p381
      %p383 = scmp.ne.s32.totalorder %s375, %s378
      %p384 = scmp.eq.s32.totalorder %s35, 0
      %p385 = por %p383, %p384
      %p386 = scmp.ne.s32.totalorder %s375, %s378
      %p387 = scmp.eq.s32.totalorder %s40, 5
      %p388 = por %p386, %p387
      %p389 = scmp.ne.s32.totalorder %s378, %s379
      %p390 = scmp.eq.s32.totalorder %s40, 0
      %p391 = por %p389, %p390
      %p392 = scmp.ne.s32.totalorder %s378, %s379
      %p393 = scmp.eq.s32.totalorder %s41, 5
      %p394 = por %p392, %p393
      %p396 = scmp.ne.s32.totalorder %s379, %s395
      %p397 = scmp.eq.s32.totalorder %s41, 0
      %p398 = por %p396, %p397
      %p399 = scmp.le.s32.totalorder 1, %s35
      %p400 = scmp.lt.s32.totalorder %s35, 7
      %p401 = pnand %p399, %p400
      %p402 = pneg %p401
      // Predicated region
      $region9: #{_generator_forward_jit.1} parent=5 // pred_check
        _
      $region10: #{_generator_forward_jit.1} parent=5 // pred_check_branch
        %404 = sbr.rel (%p401) target = $region12
      $region11: #{_generator_forward_jit.1} parent=5 // pred_region
        %s405 = ssub.s32 %s35, 1
        // Predicated region
        $region13: #{_generator_forward_jit.1} parent=11 // pred_check
          %p406 = pneg %p56
        $region14: #{_generator_forward_jit.1} parent=11 // pred_check_branch
          %408 = sbr.rel (%p406) target = $region16
        $region15: #{_generator_forward_jit.1} parent=11 // pred_region
          _
        $region16: #{_generator_forward_jit.1} parent=11 // pred_fallthru
          _
        // Predicated region
        $region17: #{_generator_forward_jit.1} parent=11 // pred_check
          %p409 = pneg %p77
        $region18: #{_generator_forward_jit.1} parent=11 // pred_check_branch
          %411 = sbr.rel (%p409) target = $region20
        $region19: #{_generator_forward_jit.1} parent=11 // pred_region
          %s413 = ssub.s32 1024, 1024
          %414 = vsyncadd [#allocation6], %s413
          %s415 = sshll.u32 [#allocation5], 4
          %s416 = int_to_ptr.vmem [resolvable:$true] %s415
          %421 = dma.hbm_to_vmem [thread:$0]  %s2, 1024, %s416, [#allocation6], 64, 64, 4
        $region20: #{_generator_forward_jit.1} parent=11 // pred_fallthru
          _
        // Predicated region
        $region21: #{_generator_forward_jit.1} parent=11 // pred_check
          %p422 = pneg %p98
        $region22: #{_generator_forward_jit.1} parent=11 // pred_check_branch
          %424 = sbr.rel (%p422) target = $region24
        $region23: #{_generator_forward_jit.1} parent=11 // pred_region
          %s426 = ssub.s32 16, 16
          %427 = vsyncadd [#allocation8], %s426
          %s429 = sshll.u32 [#allocation7], 4
          %s430 = int_to_ptr.vmem [resolvable:$true] %s429
          %432 = dma.hbm_to_vmem [thread:$0]  %s3, 16, %s430, [#allocation8]
        $region24: #{_generator_forward_jit.1} parent=11 // pred_fallthru
          _
        // Predicated region
        $region25: #{_generator_forward_jit.1} parent=11 // pred_check
          %p433 = pneg %p119
        $region26: #{_generator_forward_jit.1} parent=11 // pred_check_branch
          %435 = sbr.rel (%p433) target = $region28
        $region27: #{_generator_forward_jit.1} parent=11 // pred_region
          %s437 = ssub.s32 2048, 2048
          %438 = vsyncadd [#allocation8], %s437
          %s439 = sshll.u32 [#allocation9], 4
          %s440 = int_to_ptr.vmem [resolvable:$true] %s439
          %445 = dma.hbm_to_vmem [thread:$0]  %s4, 2048, %s440, [#allocation8], 128, 128, 8
        $region28: #{_generator_forward_jit.1} parent=11 // pred_fallthru
          _
        // Predicated region
        $region29: #{_generator_forward_jit.1} parent=11 // pred_check
          %p446 = pneg %p140
        $region30: #{_generator_forward_jit.1} parent=11 // pred_check_branch
          %448 = sbr.rel (%p446) target = $region32
        $region31: #{_generator_forward_jit.1} parent=11 // pred_region
          %s450 = ssub.s32 32, 32
          %451 = vsyncadd [#allocation11], %s450
          %s453 = sshll.u32 [#allocation10], 4
          %s454 = int_to_ptr.vmem [resolvable:$true] %s453
          %456 = dma.hbm_to_vmem [thread:$0]  %s5, 32, %s454, [#allocation11]
        $region32: #{_generator_forward_jit.1} parent=11 // pred_fallthru
          _
        // Predicated region
        $region33: #{_generator_forward_jit.1} parent=11 // pred_check
          %p457 = pneg %p161
        $region34: #{_generator_forward_jit.1} parent=11 // pred_check_branch
          %459 = sbr.rel (%p457) target = $region36
        $region35: #{_generator_forward_jit.1} parent=11 // pred_region
          %s461 = ssub.s32 32, 32
          %462 = vsyncadd [#allocation11], %s461
          %s464 = sshll.u32 [#allocation12], 4
          %s465 = int_to_ptr.vmem [resolvable:$true] %s464
          %467 = dma.hbm_to_vmem [thread:$0]  %s6, 32, %s465, [#allocation11]
        $region36: #{_generator_forward_jit.1} parent=11 // pred_fallthru
          _
        // Predicated region
        $region37: #{_generator_forward_jit.1} parent=11 // pred_check
          %p468 = pneg %p182
        $region38: #{_generator_forward_jit.1} parent=11 // pred_check_branch
          %470 = sbr.rel (%p468) target = $region40
        $region39: #{_generator_forward_jit.1} parent=11 // pred_region
          %s472 = ssub.s32 8192, 8192
          %473 = vsyncadd [#allocation14], %s472
          %s474 = sshll.u32 [#allocation13], 4
          %s475 = int_to_ptr.vmem [resolvable:$true] %s474
          %480 = dma.hbm_to_vmem [thread:$0]  %s7, 8192, %s475, [#allocation14], 256, 256, 16
        $region40: #{_generator_forward_jit.1} parent=11 // pred_fallthru
          _
        // Predicated region
        $region41: #{_generator_forward_jit.1} parent=11 // pred_check
          %p481 = pneg %p203
        $region42: #{_generator_forward_jit.1} parent=11 // pred_check_branch
          %483 = sbr.rel (%p481) target = $region44
        $region43: #{_generator_forward_jit.1} parent=11 // pred_region
          %s485 = ssub.s32 64, 64
          %486 = vsyncadd [#allocation14], %s485
          %s488 = sshll.u32 [#allocation15], 4
          %s489 = int_to_ptr.vmem [resolvable:$true] %s488
          %491 = dma.hbm_to_vmem [thread:$0]  %s8, 64, %s489, [#allocation14]
        $region44: #{_generator_forward_jit.1} parent=11 // pred_fallthru
          _
        // Predicated region
        $region45: #{_generator_forward_jit.1} parent=11 // pred_check
          %p492 = pneg %p224
        $region46: #{_generator_forward_jit.1} parent=11 // pred_check_branch
          %494 = sbr.rel (%p492) target = $region48
        $region47: #{_generator_forward_jit.1} parent=11 // pred_region
          %s496 = ssub.s32 64, 64
          %497 = vsyncadd [#allocation17], %s496
          %s499 = sshll.u32 [#allocation16], 4
          %s500 = int_to_ptr.vmem [resolvable:$true] %s499
          %502 = dma.hbm_to_vmem [thread:$0]  %s9, 64, %s500, [#allocation17]
        $region48: #{_generator_forward_jit.1} parent=11 // pred_fallthru
          _
        // Predicated region
        $region49: #{_generator_forward_jit.1} parent=11 // pred_check
          %p503 = pneg %p245
        $region50: #{_generator_forward_jit.1} parent=11 // pred_check_branch
          %505 = sbr.rel (%p503) target = $region52
        $region51: #{_generator_forward_jit.1} parent=11 // pred_region
          %s507 = ssub.s32 32768, 32768
          %508 = vsyncadd [#allocation17], %s507
          %s509 = sshll.u32 [#allocation18], 4
          %s510 = int_to_ptr.vmem [resolvable:$true] %s509
          %515 = dma.hbm_to_vmem [thread:$0]  %s10, 32768, %s510, [#allocation17], 512, 512, 32
        $region52: #{_generator_forward_jit.1} parent=11 // pred_fallthru
          _
        // Predicated region
        $region53: #{_generator_forward_jit.1} parent=11 // pred_check
          %p516 = pneg %p266
        $region54: #{_generator_forward_jit.1} parent=11 // pred_check_branch
          %518 = sbr.rel (%p516) target = $region56
        $region55: #{_generator_forward_jit.1} parent=11 // pred_region
          %s520 = ssub.s32 128, 128
          %521 = vsyncadd [#allocation20], %s520
          %s523 = sshll.u32 [#allocation19], 4
          %s524 = int_to_ptr.vmem [resolvable:$true] %s523
          %526 = dma.hbm_to_vmem [thread:$0]  %s11, 128, %s524, [#allocation20]
        $region56: #{_generator_forward_jit.1} parent=11 // pred_fallthru
          _
        // Predicated region
        $region57: #{_generator_forward_jit.1} parent=11 // pred_check
          %p527 = pneg %p287
        $region58: #{_generator_forward_jit.1} parent=11 // pred_check_branch
          %529 = sbr.rel (%p527) target = $region60
        $region59: #{_generator_forward_jit.1} parent=11 // pred_region
          %s531 = ssub.s32 128, 128
          %532 = vsyncadd [#allocation20], %s531
          %s534 = sshll.u32 [#allocation21], 4
          %s535 = int_to_ptr.vmem [resolvable:$true] %s534
          %537 = dma.hbm_to_vmem [thread:$0]  %s12, 128, %s535, [#allocation20]
        $region60: #{_generator_forward_jit.1} parent=11 // pred_fallthru
          _
      $region12: #{_generator_forward_jit.1} parent=5 // pred_fallthru
        _
      %p538 = scmp.lt.s32.totalorder %s35, 6
      // Predicated region
      $region61: #{_generator_forward_jit.1} parent=5 // pred_check
        %p539 = pneg %p538
      $region62: #{_generator_forward_jit.1} parent=5 // pred_check_branch
        %541 = sbr.rel (%p539) target = $region64
      $region63: #{_generator_forward_jit.1} parent=5 // pred_region
        // Predicated region
        $region65: #{_generator_forward_jit.1} parent=63 // pred_check
          %p542 = pneg %p307
        $region66: #{_generator_forward_jit.1} parent=63 // pred_check_branch
          %544 = sbr.rel (%p542) target = $region68
        $region67: #{_generator_forward_jit.1} parent=63 // pred_region
          %s545 = sand.u32 %s35, 1
          %s546 = scalar_lea.sflag [#allocation23], %s545
          %s547 = sand.u32 %s297, 1
          %s548 = smul.addr %s547, 4096
          %s549 = scalar_lea.vmem [#allocation22], %s548
          %s550 = smul.u32 16, %s35
          %s552 = ssub.s32 65536, 65536
          %553 = vsyncadd %s546, %s552
          %s554 = smul.addr %s550, 128
          %s555 = scalar_lea.hbm %s13, %s554
          %s556 = sshll.u32 %s549, 4
          %s557 = int_to_ptr.vmem [resolvable:$true] %s556
          %562 = dma.hbm_to_vmem [thread:$0]  %s555, 65536, %s557, %s546, 12288, 2048, 128
        $region68: #{_generator_forward_jit.1} parent=63 // pred_fallthru
          _
        // Predicated region
        $region69: #{_generator_forward_jit.1} parent=63 // pred_check
          %p563 = pneg %p333
        $region70: #{_generator_forward_jit.1} parent=63 // pred_check_branch
          %565 = sbr.rel (%p563) target = $region72
        $region71: #{_generator_forward_jit.1} parent=63 // pred_region
          %s566 = sand.u32 %s35, 1
          %s567 = scalar_lea.sflag [#allocation23], %s566
          %s568 = sand.u32 %s323, 1
          %s569 = smul.addr %s568, 16
          %s570 = scalar_lea.vmem [#allocation24], %s569
          %s571 = smul.u32 16, %s35
          %s573 = ssub.s32 256, 256
          %574 = vsyncadd %s567, %s573
          %s575 = smul.addr %s571, 16
          %s576 = scalar_lea.hbm %s14, %s575
          %s578 = sshll.u32 %s570, 4
          %s579 = int_to_ptr.vmem [resolvable:$true] %s578
          %581 = dma.hbm_to_vmem [thread:$0]  %s576, 256, %s579, %s567
        $region72: #{_generator_forward_jit.1} parent=63 // pred_fallthru
          _
        // Predicated region
        $region73: #{_generator_forward_jit.1} parent=63 // pred_check
          %p582 = pneg %p359
        $region74: #{_generator_forward_jit.1} parent=63 // pred_check_branch
          %584 = sbr.rel (%p582) target = $region76
        $region75: #{_generator_forward_jit.1} parent=63 // pred_region
          %s585 = sand.u32 %s349, 1
          %s586 = scalar_lea.sflag [#allocation26], %s585
          %s587 = sand.u32 %s349, 1
          %s588 = smul.addr %s587, 16
          %s589 = scalar_lea.vmem [#allocation25], %s588
          %s590 = smul.u32 16, %s35
          %s592 = ssub.s32 256, 256
          %593 = vsyncadd %s586, %s592
          %s594 = smul.addr %s590, 16
          %s595 = scalar_lea.hbm %s15, %s594
          %s597 = sshll.u32 %s589, 4
          %s598 = int_to_ptr.vmem [resolvable:$true] %s597
          %600 = dma.hbm_to_vmem [thread:$0]  %s595, 256, %s598, %s586
        $region76: #{_generator_forward_jit.1} parent=63 // pred_fallthru
          _
      $region64: #{_generator_forward_jit.1} parent=5 // pred_fallthru
        _
      %p601 = scmp.le.s32.totalorder 1, %s35
      %p602 = scmp.lt.s32.totalorder %s35, 7
      %p603 = pnand %p601, %p602
      %p604 = pneg %p603
      // Predicated region
      $region77: #{_generator_forward_jit.1} parent=5 // pred_check
        _
      $region78: #{_generator_forward_jit.1} parent=5 // pred_check_branch
        %606 = sbr.rel (%p603) target = $region80
      $region79: #{_generator_forward_jit.1} parent=5 // pred_region
        %s607 = ssub.s32 %s35, 1
        // Predicated region
        $region81: #{_generator_forward_jit.1} parent=79 // pred_check
          %p608 = pneg %p77
        $region82: #{_generator_forward_jit.1} parent=79 // pred_check_branch
          %610 = sbr.rel (%p608) target = $region84
        $region83: #{_generator_forward_jit.1} parent=79 // pred_region
          %611 = dma.done [#allocation6], 1024
        $region84: #{_generator_forward_jit.1} parent=79 // pred_fallthru
          _
        // Predicated region
        $region85: #{_generator_forward_jit.1} parent=79 // pred_check
          %p612 = pneg %p98
        $region86: #{_generator_forward_jit.1} parent=79 // pred_check_branch
          %614 = sbr.rel (%p612) target = $region88
        $region87: #{_generator_forward_jit.1} parent=79 // pred_region
          %615 = dma.done [#allocation8], 16
        $region88: #{_generator_forward_jit.1} parent=79 // pred_fallthru
          _
        // Predicated region
        $region89: #{_generator_forward_jit.1} parent=79 // pred_check
          %p616 = pneg %p119
        $region90: #{_generator_forward_jit.1} parent=79 // pred_check_branch
          %618 = sbr.rel (%p616) target = $region92
        $region91: #{_generator_forward_jit.1} parent=79 // pred_region
          %619 = dma.done [#allocation8], 2048
        $region92: #{_generator_forward_jit.1} parent=79 // pred_fallthru
          _
        // Predicated region
        $region93: #{_generator_forward_jit.1} parent=79 // pred_check
          %p620 = pneg %p140
        $region94: #{_generator_forward_jit.1} parent=79 // pred_check_branch
          %622 = sbr.rel (%p620) target = $region96
        $region95: #{_generator_forward_jit.1} parent=79 // pred_region
          %623 = dma.done [#allocation11], 32
        $region96: #{_generator_forward_jit.1} parent=79 // pred_fallthru
          _
        // Predicated region
        $region97: #{_generator_forward_jit.1} parent=79 // pred_check
          %p624 = pneg %p161
        $region98: #{_generator_forward_jit.1} parent=79 // pred_check_branch
          %626 = sbr.rel (%p624) target = $region100
        $region99: #{_generator_forward_jit.1} parent=79 // pred_region
          %627 = dma.done [#allocation11], 32
        $region100: #{_generator_forward_jit.1} parent=79 // pred_fallthru
          _
        // Predicated region
        $region101: #{_generator_forward_jit.1} parent=79 // pred_check
          %p628 = pneg %p182
        $region102: #{_generator_forward_jit.1} parent=79 // pred_check_branch
          %630 = sbr.rel (%p628) target = $region104
        $region103: #{_generator_forward_jit.1} parent=79 // pred_region
          %631 = dma.done [#allocation14], 8192
        $region104: #{_generator_forward_jit.1} parent=79 // pred_fallthru
          _
        // Predicated region
        $region105: #{_generator_forward_jit.1} parent=79 // pred_check
          %p632 = pneg %p203
        $region106: #{_generator_forward_jit.1} parent=79 // pred_check_branch
          %634 = sbr.rel (%p632) target = $region108
        $region107: #{_generator_forward_jit.1} parent=79 // pred_region
          %635 = dma.done [#allocation14], 64
        $region108: #{_generator_forward_jit.1} parent=79 // pred_fallthru
          _
        // Predicated region
        $region109: #{_generator_forward_jit.1} parent=79 // pred_check
          %p636 = pneg %p224
        $region110: #{_generator_forward_jit.1} parent=79 // pred_check_branch
          %638 = sbr.rel (%p636) target = $region112
        $region111: #{_generator_forward_jit.1} parent=79 // pred_region
          %639 = dma.done [#allocation17], 64
        $region112: #{_generator_forward_jit.1} parent=79 // pred_fallthru
          _
        // Predicated region
        $region113: #{_generator_forward_jit.1} parent=79 // pred_check
          %p640 = pneg %p245
        $region114: #{_generator_forward_jit.1} parent=79 // pred_check_branch
          %642 = sbr.rel (%p640) target = $region116
        $region115: #{_generator_forward_jit.1} parent=79 // pred_region
          %643 = dma.done [#allocation17], 32768
        $region116: #{_generator_forward_jit.1} parent=79 // pred_fallthru
          _
        // Predicated region
        $region117: #{_generator_forward_jit.1} parent=79 // pred_check
          %p644 = pneg %p266
        $region118: #{_generator_forward_jit.1} parent=79 // pred_check_branch
          %646 = sbr.rel (%p644) target = $region120
        $region119: #{_generator_forward_jit.1} parent=79 // pred_region
          %647 = dma.done [#allocation20], 128
        $region120: #{_generator_forward_jit.1} parent=79 // pred_fallthru
          _
        // Predicated region
        $region121: #{_generator_forward_jit.1} parent=79 // pred_check
          %p648 = pneg %p287
        $region122: #{_generator_forward_jit.1} parent=79 // pred_check_branch
          %650 = sbr.rel (%p648) target = $region124
        $region123: #{_generator_forward_jit.1} parent=79 // pred_region
          %651 = dma.done [#allocation20], 128
        $region124: #{_generator_forward_jit.1} parent=79 // pred_fallthru
          _
        %s652 = sand.u32 %s40, 1
        %s653 = scalar_lea.sflag [#allocation23], %s652
        %s654 = sand.u32 %s300, 1
        %s655 = smul.addr %s654, 4096
        %s656 = scalar_lea.vmem [#allocation22], %s655
        // Predicated region
        $region125: #{_generator_forward_jit.1} parent=79 // pred_check
          %p657 = pneg %p313
        $region126: #{_generator_forward_jit.1} parent=79 // pred_check_branch
          %659 = sbr.rel (%p657) target = $region128
        $region127: #{_generator_forward_jit.1} parent=79 // pred_region
          %660 = dma.done %s653, 65536
        $region128: #{_generator_forward_jit.1} parent=79 // pred_fallthru
          _
        %s661 = sand.u32 %s40, 1
        %s662 = scalar_lea.sflag [#allocation23], %s661
        %s663 = sand.u32 %s326, 1
        %s664 = smul.addr %s663, 16
        %s665 = scalar_lea.vmem [#allocation24], %s664
        // Predicated region
        $region129: #{_generator_forward_jit.1} parent=79 // pred_check
          %p666 = pneg %p339
        $region130: #{_generator_forward_jit.1} parent=79 // pred_check_branch
          %668 = sbr.rel (%p666) target = $region132
        $region131: #{_generator_forward_jit.1} parent=79 // pred_region
          %669 = dma.done %s662, 256
        $region132: #{_generator_forward_jit.1} parent=79 // pred_fallthru
          _
        %s670 = sand.u32 %s352, 1
        %s671 = scalar_lea.sflag [#allocation26], %s670
        %s672 = sand.u32 %s352, 1
        %s673 = smul.addr %s672, 16
        %s674 = scalar_lea.vmem [#allocation25], %s673
        // Predicated region
        $region133: #{_generator_forward_jit.1} parent=79 // pred_check
          %p675 = pneg %p365
        $region134: #{_generator_forward_jit.1} parent=79 // pred_check_branch
          %677 = sbr.rel (%p675) target = $region136
        $region135: #{_generator_forward_jit.1} parent=79 // pred_region
          %678 = dma.done %s671, 256
        $region136: #{_generator_forward_jit.1} parent=79 // pred_fallthru
          _
        %p679 = pneg %p56
        %p680 = pneg %p53
        %p681 = pneg %p77
        %p682 = pneg %p74
        %p683 = pneg %p98
        %p684 = pneg %p95
        %p685 = pneg %p119
        %p686 = pneg %p116
        %p687 = pneg %p140
        %p688 = pneg %p137
        %p689 = pneg %p161
        %p690 = pneg %p158
        %p691 = pneg %p182
        %p692 = pneg %p179
        %p693 = pneg %p203
        %p694 = pneg %p200
        %p695 = pneg %p224
        %p696 = pneg %p221
        %p697 = pneg %p245
        %p698 = pneg %p242
        %p699 = pneg %p266
        %p700 = pneg %p263
        %p701 = pneg %p287
        %p702 = pneg %p284
        %s703 = sand.u32 %s40, 1
        %s704 = scalar_lea.sflag [#allocation23], %s703
        %s705 = sand.u32 %s300, 1
        %s706 = smul.addr %s705, 4096
        %s707 = scalar_lea.vmem [#allocation22], %s706
        %p708 = pneg %p313
        %p709 = pneg %p310
        %s710 = sand.u32 %s40, 1
        %s711 = scalar_lea.sflag [#allocation23], %s710
        %s712 = sand.u32 %s326, 1
        %s713 = smul.addr %s712, 16
        %s714 = scalar_lea.vmem [#allocation24], %s713
        %p715 = pneg %p339
        %p716 = pneg %p336
        %s717 = sand.u32 %s352, 1
        %s718 = scalar_lea.sflag [#allocation26], %s717
        %s719 = sand.u32 %s352, 1
        %s720 = smul.addr %s719, 16
        %s721 = scalar_lea.vmem [#allocation25], %s720
        %p722 = pneg %p365
        %p723 = pneg %p362
        %p724 = pneg %p391
        %p725 = pneg %p388
        %s726 = smul.u32 16, %s40
        %p727 = scmp.lt.s32.totalorder %s726, 95
        %s728 = scalar_select %p727, %s726, 95
        %s729 = smul.addr %s728, 8
        %s730 = scalar_lea.vmem %s16, %s729
        %s731 = smul.u32 16, %s40
        %s732 = smul.u32 16, %s40
        %s733 = smul.u32 16, %s40
        %s734 = smul.u32 16, %s40
        %p735 = scmp.lt.s32.totalorder %s734, 95
        %s736 = scalar_select %p735, %s734, 95
        %s737 = smul.addr %s736, 8
        %s738 = scalar_lea.vmem %s16, %s737
        %s739 = smul.u32 16, %s40
        %p741 = scmp.eq.s32.totalorder %s40, 0
        // Predicated region
        $region137: #{_generator_forward_jit.1} parent=79 // pred_check
          %p742 = pneg %p741
        $region138: #{_generator_forward_jit.1} parent=79 // pred_check_branch
          %744 = sbr.rel (%p742) target = $region140
        $region139: #{_generator_forward_jit.1} parent=79 // pred_region
          %s745 = sld [smem:[#allocation4]]
          %s746 = scvt.s32.f32 %s745
          %v747 = vlaneseq
          %v748 = vshrl.u32 %v747, 7
          %v749 = vstv %s745
          %vm750 = vcmp.lt.s32.totalorder %v748, %v749
          %v751 = vsel %vm750, 1, 0
          %v752 = vcvt.s32.f32 %v751
          %v753 = vld [vmem:[%s1] sm:$0xff]
          %v754 = vpack.c.bf16 %v753, %v753
          %v755 = vld [vmem:[#allocation5] sm:$0xf]
          %v756 = vld [vmem:[#allocation5 + $0x4] sm:$0xf]
          %v757 = vld [vmem:[#allocation5 + $0x8] sm:$0xf]
          %v758 = vld [vmem:[#allocation5 + $0xc] sm:$0xf]
          %v759 = vld [vmem:[#allocation5 + $0x10] sm:$0xf]
          %v760 = vld [vmem:[#allocation5 + $0x14] sm:$0xf]
          %v761 = vld [vmem:[#allocation5 + $0x18] sm:$0xf]
          %v762 = vld [vmem:[#allocation5 + $0x1c] sm:$0xf]
          %v763 = vld [vmem:[#allocation5 + $0x20] sm:$0xf]
          %v764 = vld [vmem:[#allocation5 + $0x24] sm:$0xf]
          %v765 = vld [vmem:[#allocation5 + $0x28] sm:$0xf]
          %v766 = vld [vmem:[#allocation5 + $0x2c] sm:$0xf]
          %v767 = vld [vmem:[#allocation5 + $0x30] sm:$0xf]
          %v768 = vld [vmem:[#allocation5 + $0x34] sm:$0xf]
          %v769 = vld [vmem:[#allocation5 + $0x38] sm:$0xf]
          %v770 = vld [vmem:[#allocation5 + $0x3c] sm:$0xf]
          %v771 = vld [vmem:[#allocation7] sm:$0x1]
          %v773 = vlaneseq
          %v774 = vshrl.u32 %v773, 7
          %v775 = vsub.s32 0, %v774
          %v776 = vrot.slane %v771, %v775
          %v794 = vunpack.c.l.b16 %v755
          %v795 = vunpack.c.l.b16 %v756
          %v796 = vunpack.c.l.b16 %v757
          %v797 = vunpack.c.l.b16 %v758
          %v798 = vunpack.c.l.b16 %v759
          %v799 = vunpack.c.l.b16 %v760
          %v800 = vunpack.c.l.b16 %v761
          %v801 = vunpack.c.l.b16 %v762
          %v802 = vunpack.c.l.b16 %v763
          %v803 = vunpack.c.l.b16 %v764
          %v804 = vunpack.c.l.b16 %v765
          %v805 = vunpack.c.l.b16 %v766
          %v806 = vunpack.c.l.b16 %v767
          %v807 = vunpack.c.l.b16 %v768
          %v808 = vunpack.c.l.b16 %v769
          %v809 = vunpack.c.l.b16 %v770
          %v810 = vpack.c.b16 %v795, %v794
          %v811 = vpack.c.b16 %v797, %v796
          %v812 = vpack.c.b16 %v799, %v798
          %v813 = vpack.c.b16 %v801, %v800
          %v814 = vpack.c.b16 %v803, %v802
          %v815 = vpack.c.b16 %v805, %v804
          %v816 = vpack.c.b16 %v807, %v806
          %v817 = vpack.c.b16 %v809, %v808
          %826 = vmatprep.subr.bf16.mxu0 0
          %827 = vmatpush1.bf16.msra.mxu0 %v810
          %828 = vmatprep.subr.bf16.mxu0 0
          %829 = vmatpush1.bf16.msra.mxu0 %v811
          %830 = vmatprep.subr.bf16.mxu0 0
          %831 = vmatpush1.bf16.msra.mxu0 %v812
          %832 = vmatprep.subr.bf16.mxu0 0
          %833 = vmatpush1.bf16.msra.mxu0 %v813
          %834 = vmatprep.subr.bf16.mxu0 0
          %835 = vmatpush1.bf16.msra.mxu0 %v814
          %836 = vmatprep.subr.bf16.mxu0 0
          %837 = vmatpush1.bf16.msra.mxu0 %v815
          %838 = vmatprep.subr.bf16.mxu0 0
          %839 = vmatpush1.bf16.msra.mxu0 %v816
          %840 = vmatprep.subr.bf16.mxu0 0
          %841 = vmatpush1.bf16.msra.mxu0 %v817
          %842 = vmatprep.subr.bf16.mxu0 0
          %843 = vmatpush1.bf16.msra.mxu0 0
          %844 = vmatprep.subr.bf16.mxu0 0
          %845 = vmatpush1.bf16.msra.mxu0 0
          %846 = vmatprep.subr.bf16.mxu0 0
          %847 = vmatpush1.bf16.msra.mxu0 0
          %848 = vmatprep.subr.bf16.mxu0 0
          %849 = vmatpush1.bf16.msra.mxu0 0
          %850 = vmatprep.subr.bf16.mxu0 0
          %851 = vmatpush1.bf16.msra.mxu0 0
          %852 = vmatprep.subr.bf16.mxu0 0
          %853 = vmatpush1.bf16.msra.mxu0 0
          %854 = vmatprep.subr.bf16.mxu0 0
          %855 = vmatpush1.bf16.msra.mxu0 0
          %856 = vmatprep.subr.bf16.mxu0 0
          %857 = vmatpush1.bf16.msra.mxu0 0
          %858 = vmatprep.mubr.bf16.mxu0 0
          %859 = vmatmul.mubr.bf16.gmra.mrb[0].mxu0 %v754
          %v860 = vpop.f32.mrb[0].mxu0
          %v861 = vadd.f32 %v776, %v860
          %v862 = vpop.f32.mrb[0].mxu0
          %v863 = vpop.f32.mrb[0].mxu0
          %v864 = vpop.f32.mrb[0].mxu0
          %865 = vdwg.mxu0
          %vm866 = vcmp.gt.f32.partialorder %v861, 0.0
          %v867 = vmul.f32 %v861, 0.2
          %v868 = vsel %vm866, %v861, %v867
          %v869 = vpack.c.bf16 %v868, %v868
          %v870 = vld [vmem:[#allocation9] sm:$0xff]
          %v871 = vld [vmem:[#allocation9 + $0x8] sm:$0xff]
          %v872 = vld [vmem:[#allocation9 + $0x10] sm:$0xff]
          %v873 = vld [vmem:[#allocation9 + $0x18] sm:$0xff]
          %v874 = vld [vmem:[#allocation9 + $0x20] sm:$0xff]
          %v875 = vld [vmem:[#allocation9 + $0x28] sm:$0xff]
          %v876 = vld [vmem:[#allocation9 + $0x30] sm:$0xff]
          %v877 = vld [vmem:[#allocation9 + $0x38] sm:$0xff]
          %v878 = vld [vmem:[#allocation9 + $0x40] sm:$0xff]
          %v879 = vld [vmem:[#allocation9 + $0x48] sm:$0xff]
          %v880 = vld [vmem:[#allocation9 + $0x50] sm:$0xff]
          %v881 = vld [vmem:[#allocation9 + $0x58] sm:$0xff]
          %v882 = vld [vmem:[#allocation9 + $0x60] sm:$0xff]
          %v883 = vld [vmem:[#allocation9 + $0x68] sm:$0xff]
          %v884 = vld [vmem:[#allocation9 + $0x70] sm:$0xff]
          %v885 = vld [vmem:[#allocation9 + $0x78] sm:$0xff]
          %v902 = vunpack.c.l.b16 %v870
          %v903 = vunpack.c.h.b16 %v870
          %v904 = vunpack.c.l.b16 %v871
          %v905 = vunpack.c.h.b16 %v871
          %v906 = vunpack.c.l.b16 %v872
          %v907 = vunpack.c.h.b16 %v872
          %v908 = vunpack.c.l.b16 %v873
          %v909 = vunpack.c.h.b16 %v873
          %v910 = vunpack.c.l.b16 %v874
          %v911 = vunpack.c.h.b16 %v874
          %v912 = vunpack.c.l.b16 %v875
          %v913 = vunpack.c.h.b16 %v875
          %v914 = vunpack.c.l.b16 %v876
          %v915 = vunpack.c.h.b16 %v876
          %v916 = vunpack.c.l.b16 %v877
          %v917 = vunpack.c.h.b16 %v877
          %v918 = vunpack.c.l.b16 %v878
          %v919 = vunpack.c.h.b16 %v878
          %v920 = vunpack.c.l.b16 %v879
          %v921 = vunpack.c.h.b16 %v879
          %v922 = vunpack.c.l.b16 %v880
          %v923 = vunpack.c.h.b16 %v880
          %v924 = vunpack.c.l.b16 %v881
          %v925 = vunpack.c.h.b16 %v881
          %v926 = vunpack.c.l.b16 %v882
          %v927 = vunpack.c.h.b16 %v882
          %v928 = vunpack.c.l.b16 %v883
          %v929 = vunpack.c.h.b16 %v883
          %v930 = vunpack.c.l.b16 %v884
          %v931 = vunpack.c.h.b16 %v884
          %v932 = vunpack.c.l.b16 %v885
          %v933 = vunpack.c.h.b16 %v885
          %v934 = vpack.c.b16 %v904, %v902
          %v935 = vpack.c.b16 %v905, %v903
          %v936 = vpack.c.b16 %v908, %v906
          %v937 = vpack.c.b16 %v909, %v907
          %v938 = vpack.c.b16 %v912, %v910
          %v939 = vpack.c.b16 %v913, %v911
          %v940 = vpack.c.b16 %v916, %v914
          %v941 = vpack.c.b16 %v917, %v915
          %v942 = vpack.c.b16 %v920, %v918
          %v943 = vpack.c.b16 %v921, %v919
          %v944 = vpack.c.b16 %v924, %v922
          %v945 = vpack.c.b16 %v925, %v923
          %v946 = vpack.c.b16 %v928, %v926
          %v947 = vpack.c.b16 %v929, %v927
          %v948 = vpack.c.b16 %v932, %v930
          %v949 = vpack.c.b16 %v933, %v931
          %966 = vmatprep.subr.bf16.mxu0 %v935
          %967 = vmatpush1.bf16.msra.mxu0 %v934
          %968 = vmatprep.subr.bf16.mxu0 %v937
          %969 = vmatpush1.bf16.msra.mxu0 %v936
          %970 = vmatprep.subr.bf16.mxu0 %v939
          %971 = vmatpush1.bf16.msra.mxu0 %v938
          %972 = vmatprep.subr.bf16.mxu0 %v941
          %973 = vmatpush1.bf16.msra.mxu0 %v940
          %974 = vmatprep.subr.bf16.mxu0 %v943
          %975 = vmatpush1.bf16.msra.mxu0 %v942
          %976 = vmatprep.subr.bf16.mxu0 %v945
          %977 = vmatpush1.bf16.msra.mxu0 %v944
          %978 = vmatprep.subr.bf16.mxu0 %v947
          %979 = vmatpush1.bf16.msra.mxu0 %v946
          %980 = vmatprep.subr.bf16.mxu0 %v949
          %981 = vmatpush1.bf16.msra.mxu0 %v948
          %982 = vmatprep.subr.bf16.mxu0 0
          %983 = vmatpush1.bf16.msra.mxu0 0
          %984 = vmatprep.subr.bf16.mxu0 0
          %985 = vmatpush1.bf16.msra.mxu0 0
          %986 = vmatprep.subr.bf16.mxu0 0
          %987 = vmatpush1.bf16.msra.mxu0 0
          %988 = vmatprep.subr.bf16.mxu0 0
          %989 = vmatpush1.bf16.msra.mxu0 0
          %990 = vmatprep.subr.bf16.mxu0 0
          %991 = vmatpush1.bf16.msra.mxu0 0
          %992 = vmatprep.subr.bf16.mxu0 0
          %993 = vmatpush1.bf16.msra.mxu0 0
          %994 = vmatprep.subr.bf16.mxu0 0
          %995 = vmatpush1.bf16.msra.mxu0 0
          %996 = vmatprep.subr.bf16.mxu0 0
          %997 = vmatpush1.bf16.msra.mxu0 0
          %998 = vmatprep.mubr.bf16.mxu0 0
          %999 = vmatmul.mubr.bf16.gmra.mrb[0].mxu0 %v869
          %v1000 = vpop.f32.mrb[0].mxu0
          %v1001 = vadd.f32 0.0, %v1000
          %v1002 = vpop.f32.mrb[0].mxu0
          %v1003 = vadd.f32 0.0, %v1002
          %v1004 = vpop.f32.mrb[0].mxu0
          %v1005 = vpop.f32.mrb[0].mxu0
          %1006 = vdwg.mxu0
          %v1007 = vmul.f32 %v1001, %v752
          %v1008 = vmul.f32 %v1003, %v752
          %v1009 = vrot.slane %v1007, 4
          %v1010 = vadd.f32 %v1007, %v1009
          %v1011 = vrot.slane %v1010, 2
          %v1012 = vadd.f32 %v1010, %v1011
          %v1013 = vrot.slane %v1012, 1
          %v1014 = vadd.f32 %v1012, %v1013
          %v1015 = vrot.slane %v1008, 4
          %v1016 = vadd.f32 %v1008, %v1015
          %v1017 = vrot.slane %v1016, 2
          %v1018 = vadd.f32 %v1016, %v1017
          %v1019 = vrot.slane %v1018, 1
          %v1020 = vadd.f32 %v1018, %v1019
          %v1021 = vstv %s746
          %v1022 = vrcp.pop %v1021
          %v1023 = vmul.f32 %v1014, %v1022
          %v1024 = vmul.f32 %v1020, %v1022
          %v1025 = vsub.f32 %v1001, %v1023
          %v1026 = vsub.f32 %v1003, %v1024
          %v1027 = vmul.f32 %v1025, %v752
          %v1028 = vmul.f32 %v1026, %v752
          %v1029 = vmul.f32 %v1027, %v1027
          %v1030 = vmul.f32 %v1028, %v1028
          %v1031 = vrot.slane %v1029, 4
          %v1032 = vadd.f32 %v1029, %v1031
          %v1033 = vrot.slane %v1032, 2
          %v1034 = vadd.f32 %v1032, %v1033
          %v1035 = vrot.slane %v1034, 1
          %v1036 = vadd.f32 %v1034, %v1035
          %v1037 = vrot.slane %v1030, 4
          %v1038 = vadd.f32 %v1030, %v1037
          %v1039 = vrot.slane %v1038, 2
          %v1040 = vadd.f32 %v1038, %v1039
          %v1041 = vrot.slane %v1040, 1
          %v1042 = vadd.f32 %v1040, %v1041
          %v1043 = vmul.f32 %v1036, %v1022
          %v1044 = vmul.f32 %v1042, %v1022
          %v1045 = vadd.f32 %v1043, 0.8
          %v1046 = vadd.f32 %v1044, 0.8
          %v1047 = vrsqrt.pop %v1045
          %v1048 = vrsqrt.pop %v1046
          %v1049 = vmul.f32 %v1025, %v1047
          %v1050 = vmul.f32 %v1026, %v1048
          %v1051 = vld [vmem:[#allocation10] sm:$0x3]
          %v1053 = vlaneseq
          %v1054 = vshrl.u32 %v1053, 7
          %v1055 = vsub.s32 0, %v1054
          %v1056 = vrot.slane %v1051, %v1055
          %v1057 = vlaneseq
          %v1058 = vshrl.u32 %v1057, 7
          %v1059 = vsub.s32 1, %v1058
          %v1060 = vrot.slane %v1051, %v1059
          %v1063 = vmul.f32 %v1049, %v1056
          %v1064 = vmul.f32 %v1050, %v1060
          %v1065 = vld [vmem:[#allocation12] sm:$0x3]
          %v1067 = vlaneseq
          %v1068 = vshrl.u32 %v1067, 7
          %v1069 = vsub.s32 0, %v1068
          %v1070 = vrot.slane %v1065, %v1069
          %v1071 = vlaneseq
          %v1072 = vshrl.u32 %v1071, 7
          %v1073 = vsub.s32 1, %v1072
          %v1074 = vrot.slane %v1065, %v1073
          %v1077 = vadd.f32 %v1063, %v1070
          %v1078 = vadd.f32 %v1064, %v1074
          %vm1079 = vcmp.gt.f32.partialorder %v1077, 0.0
          %vm1080 = vcmp.gt.f32.partialorder %v1078, 0.0
          %v1081 = vmul.f32 %v1077, 0.2
          %v1082 = vmul.f32 %v1078, 0.2
          %v1083 = vsel %vm1079, %v1077, %v1081
          %v1084 = vsel %vm1080, %v1078, %v1082
          %v1085 = vpack.c.bf16 %v1083, %v1083
          %v1086 = vpack.c.bf16 %v1084, %v1084
          %v1087 = vld [vmem:[#allocation13] sm:$0xff]
          %v1088 = vld [vmem:[#allocation13 + $0x8] sm:$0xff]
          %v1089 = vld [vmem:[#allocation13 + $0x10] sm:$0xff]
          %v1090 = vld [vmem:[#allocation13 + $0x18] sm:$0xff]
          %v1091 = vld [vmem:[#allocation13 + $0x20] sm:$0xff]
          %v1092 = vld [vmem:[#allocation13 + $0x28] sm:$0xff]
          %v1093 = vld [vmem:[#allocation13 + $0x30] sm:$0xff]
          %v1094 = vld [vmem:[#allocation13 + $0x38] sm:$0xff]
          %v1095 = vld [vmem:[#allocation13 + $0x40] sm:$0xff]
          %v1096 = vld [vmem:[#allocation13 + $0x48] sm:$0xff]
          %v1097 = vld [vmem:[#allocation13 + $0x50] sm:$0xff]
          %v1098 = vld [vmem:[#allocation13 + $0x58] sm:$0xff]
          %v1099 = vld [vmem:[#allocation13 + $0x60] sm:$0xff]
          %v1100 = vld [vmem:[#allocation13 + $0x68] sm:$0xff]
          %v1101 = vld [vmem:[#allocation13 + $0x70] sm:$0xff]
          %v1102 = vld [vmem:[#allocation13 + $0x78] sm:$0xff]
          %v1103 = vld [vmem:[#allocation13 + $0x80] sm:$0xff]
          %v1104 = vld [vmem:[#allocation13 + $0x88] sm:$0xff]
          %v1105 = vld [vmem:[#allocation13 + $0x90] sm:$0xff]
          %v1106 = vld [vmem:[#allocation13 + $0x98] sm:$0xff]
          %v1107 = vld [vmem:[#allocation13 + $0xa0] sm:$0xff]
          %v1108 = vld [vmem:[#allocation13 + $0xa8] sm:$0xff]
          %v1109 = vld [vmem:[#allocation13 + $0xb0] sm:$0xff]
          %v1110 = vld [vmem:[#allocation13 + $0xb8] sm:$0xff]
          %v1111 = vld [vmem:[#allocation13 + $0xc0] sm:$0xff]
          %v1112 = vld [vmem:[#allocation13 + $0xc8] sm:$0xff]
          %v1113 = vld [vmem:[#allocation13 + $0xd0] sm:$0xff]
          %v1114 = vld [vmem:[#allocation13 + $0xd8] sm:$0xff]
          %v1115 = vld [vmem:[#allocation13 + $0xe0] sm:$0xff]
          %v1116 = vld [vmem:[#allocation13 + $0xe8] sm:$0xff]
          %v1117 = vld [vmem:[#allocation13 + $0xf0] sm:$0xff]
          %v1118 = vld [vmem:[#allocation13 + $0xf8] sm:$0xff]
          %v1119 = vld [vmem:[#allocation13 + $0x100] sm:$0xff]
          %v1120 = vld [vmem:[#allocation13 + $0x108] sm:$0xff]
          %v1121 = vld [vmem:[#allocation13 + $0x110] sm:$0xff]
          %v1122 = vld [vmem:[#allocation13 + $0x118] sm:$0xff]
          %v1123 = vld [vmem:[#allocation13 + $0x120] sm:$0xff]
          %v1124 = vld [vmem:[#allocation13 + $0x128] sm:$0xff]
          %v1125 = vld [vmem:[#allocation13 + $0x130] sm:$0xff]
          %v1126 = vld [vmem:[#allocation13 + $0x138] sm:$0xff]
          %v1127 = vld [vmem:[#allocation13 + $0x140] sm:$0xff]
          %v1128 = vld [vmem:[#allocation13 + $0x148] sm:$0xff]
          %v1129 = vld [vmem:[#allocation13 + $0x150] sm:$0xff]
          %v1130 = vld [vmem:[#allocation13 + $0x158] sm:$0xff]
          %v1131 = vld [vmem:[#allocation13 + $0x160] sm:$0xff]
          %v1132 = vld [vmem:[#allocation13 + $0x168] sm:$0xff]
          %v1133 = vld [vmem:[#allocation13 + $0x170] sm:$0xff]
          %v1134 = vld [vmem:[#allocation13 + $0x178] sm:$0xff]
          %v1135 = vld [vmem:[#allocation13 + $0x180] sm:$0xff]
          %v1136 = vld [vmem:[#allocation13 + $0x188] sm:$0xff]
          %v1137 = vld [vmem:[#allocation13 + $0x190] sm:$0xff]
          %v1138 = vld [vmem:[#allocation13 + $0x198] sm:$0xff]
          %v1139 = vld [vmem:[#allocation13 + $0x1a0] sm:$0xff]
          %v1140 = vld [vmem:[#allocation13 + $0x1a8] sm:$0xff]
          %v1141 = vld [vmem:[#allocation13 + $0x1b0] sm:$0xff]
          %v1142 = vld [vmem:[#allocation13 + $0x1b8] sm:$0xff]
          %v1143 = vld [vmem:[#allocation13 + $0x1c0] sm:$0xff]
          %v1144 = vld [vmem:[#allocation13 + $0x1c8] sm:$0xff]
          %v1145 = vld [vmem:[#allocation13 + $0x1d0] sm:$0xff]
          %v1146 = vld [vmem:[#allocation13 + $0x1d8] sm:$0xff]
          %v1147 = vld [vmem:[#allocation13 + $0x1e0] sm:$0xff]
          %v1148 = vld [vmem:[#allocation13 + $0x1e8] sm:$0xff]
          %v1149 = vld [vmem:[#allocation13 + $0x1f0] sm:$0xff]
          %v1150 = vld [vmem:[#allocation13 + $0x1f8] sm:$0xff]
          %v1215 = vunpack.c.l.b16 %v1087
          %v1216 = vunpack.c.h.b16 %v1087
          %v1217 = vunpack.c.l.b16 %v1088
          %v1218 = vunpack.c.h.b16 %v1088
          %v1219 = vunpack.c.l.b16 %v1089
          %v1220 = vunpack.c.h.b16 %v1089
          %v1221 = vunpack.c.l.b16 %v1090
          %v1222 = vunpack.c.h.b16 %v1090
          %v1223 = vunpack.c.l.b16 %v1091
          %v1224 = vunpack.c.h.b16 %v1091
          %v1225 = vunpack.c.l.b16 %v1092
          %v1226 = vunpack.c.h.b16 %v1092
          %v1227 = vunpack.c.l.b16 %v1093
          %v1228 = vunpack.c.h.b16 %v1093
          %v1229 = vunpack.c.l.b16 %v1094
          %v1230 = vunpack.c.h.b16 %v1094
          %v1231 = vunpack.c.l.b16 %v1095
          %v1232 = vunpack.c.h.b16 %v1095
          %v1233 = vunpack.c.l.b16 %v1096
          %v1234 = vunpack.c.h.b16 %v1096
          %v1235 = vunpack.c.l.b16 %v1097
          %v1236 = vunpack.c.h.b16 %v1097
          %v1237 = vunpack.c.l.b16 %v1098
          %v1238 = vunpack.c.h.b16 %v1098
          %v1239 = vunpack.c.l.b16 %v1099
          %v1240 = vunpack.c.h.b16 %v1099
          %v1241 = vunpack.c.l.b16 %v1100
          %v1242 = vunpack.c.h.b16 %v1100
          %v1243 = vunpack.c.l.b16 %v1101
          %v1244 = vunpack.c.h.b16 %v1101
          %v1245 = vunpack.c.l.b16 %v1102
          %v1246 = vunpack.c.h.b16 %v1102
          %v1247 = vunpack.c.l.b16 %v1103
          %v1248 = vunpack.c.h.b16 %v1103
          %v1249 = vunpack.c.l.b16 %v1104
          %v1250 = vunpack.c.h.b16 %v1104
          %v1251 = vunpack.c.l.b16 %v1105
          %v1252 = vunpack.c.h.b16 %v1105
          %v1253 = vunpack.c.l.b16 %v1106
          %v1254 = vunpack.c.h.b16 %v1106
          %v1255 = vunpack.c.l.b16 %v1107
          %v1256 = vunpack.c.h.b16 %v1107
          %v1257 = vunpack.c.l.b16 %v1108
          %v1258 = vunpack.c.h.b16 %v1108
          %v1259 = vunpack.c.l.b16 %v1109
          %v1260 = vunpack.c.h.b16 %v1109
          %v1261 = vunpack.c.l.b16 %v1110
          %v1262 = vunpack.c.h.b16 %v1110
          %v1263 = vunpack.c.l.b16 %v1111
          %v1264 = vunpack.c.h.b16 %v1111
          %v1265 = vunpack.c.l.b16 %v1112
          %v1266 = vunpack.c.h.b16 %v1112
          %v1267 = vunpack.c.l.b16 %v1113
          %v1268 = vunpack.c.h.b16 %v1113
          %v1269 = vunpack.c.l.b16 %v1114
          %v1270 = vunpack.c.h.b16 %v1114
          %v1271 = vunpack.c.l.b16 %v1115
          %v1272 = vunpack.c.h.b16 %v1115
          %v1273 = vunpack.c.l.b16 %v1116
          %v1274 = vunpack.c.h.b16 %v1116
          %v1275 = vunpack.c.l.b16 %v1117
          %v1276 = vunpack.c.h.b16 %v1117
          %v1277 = vunpack.c.l.b16 %v1118
          %v1278 = vunpack.c.h.b16 %v1118
          %v1279 = vunpack.c.l.b16 %v1119
          %v1280 = vunpack.c.h.b16 %v1119
          %v1281 = vunpack.c.l.b16 %v1120
          %v1282 = vunpack.c.h.b16 %v1120
          %v1283 = vunpack.c.l.b16 %v1121
          %v1284 = vunpack.c.h.b16 %v1121
          %v1285 = vunpack.c.l.b16 %v1122
          %v1286 = vunpack.c.h.b16 %v1122
          %v1287 = vunpack.c.l.b16 %v1123
          %v1288 = vunpack.c.h.b16 %v1123
          %v1289 = vunpack.c.l.b16 %v1124
          %v1290 = vunpack.c.h.b16 %v1124
          %v1291 = vunpack.c.l.b16 %v1125
          %v1292 = vunpack.c.h.b16 %v1125
          %v1293 = vunpack.c.l.b16 %v1126
          %v1294 = vunpack.c.h.b16 %v1126
          %v1295 = vunpack.c.l.b16 %v1127
          %v1296 = vunpack.c.h.b16 %v1127
          %v1297 = vunpack.c.l.b16 %v1128
          %v1298 = vunpack.c.h.b16 %v1128
          %v1299 = vunpack.c.l.b16 %v1129
          %v1300 = vunpack.c.h.b16 %v1129
          %v1301 = vunpack.c.l.b16 %v1130
          %v1302 = vunpack.c.h.b16 %v1130
          %v1303 = vunpack.c.l.b16 %v1131
          %v1304 = vunpack.c.h.b16 %v1131
          %v1305 = vunpack.c.l.b16 %v1132
          %v1306 = vunpack.c.h.b16 %v1132
          %v1307 = vunpack.c.l.b16 %v1133
          %v1308 = vunpack.c.h.b16 %v1133
          %v1309 = vunpack.c.l.b16 %v1134
          %v1310 = vunpack.c.h.b16 %v1134
          %v1311 = vunpack.c.l.b16 %v1135
          %v1312 = vunpack.c.h.b16 %v1135
          %v1313 = vunpack.c.l.b16 %v1136
          %v1314 = vunpack.c.h.b16 %v1136
          %v1315 = vunpack.c.l.b16 %v1137
          %v1316 = vunpack.c.h.b16 %v1137
          %v1317 = vunpack.c.l.b16 %v1138
          %v1318 = vunpack.c.h.b16 %v1138
          %v1319 = vunpack.c.l.b16 %v1139
          %v1320 = vunpack.c.h.b16 %v1139
          %v1321 = vunpack.c.l.b16 %v1140
          %v1322 = vunpack.c.h.b16 %v1140
          %v1323 = vunpack.c.l.b16 %v1141
          %v1324 = vunpack.c.h.b16 %v1141
          %v1325 = vunpack.c.l.b16 %v1142
          %v1326 = vunpack.c.h.b16 %v1142
          %v1327 = vunpack.c.l.b16 %v1143
          %v1328 = vunpack.c.h.b16 %v1143
          %v1329 = vunpack.c.l.b16 %v1144
          %v1330 = vunpack.c.h.b16 %v1144
          %v1331 = vunpack.c.l.b16 %v1145
          %v1332 = vunpack.c.h.b16 %v1145
          %v1333 = vunpack.c.l.b16 %v1146
          %v1334 = vunpack.c.h.b16 %v1146
          %v1335 = vunpack.c.l.b16 %v1147
          %v1336 = vunpack.c.h.b16 %v1147
          %v1337 = vunpack.c.l.b16 %v1148
          %v1338 = vunpack.c.h.b16 %v1148
          %v1339 = vunpack.c.l.b16 %v1149
          %v1340 = vunpack.c.h.b16 %v1149
          %v1341 = vunpack.c.l.b16 %v1150
          %v1342 = vunpack.c.h.b16 %v1150
          %v1343 = vpack.c.b16 %v1219, %v1215
          %v1344 = vpack.c.b16 %v1220, %v1216
          %v1345 = vpack.c.b16 %v1221, %v1217
          %v1346 = vpack.c.b16 %v1222, %v1218
          %v1347 = vpack.c.b16 %v1227, %v1223
          %v1348 = vpack.c.b16 %v1228, %v1224
          %v1349 = vpack.c.b16 %v1229, %v1225
          %v1350 = vpack.c.b16 %v1230, %v1226
          %v1351 = vpack.c.b16 %v1235, %v1231
          %v1352 = vpack.c.b16 %v1236, %v1232
          %v1353 = vpack.c.b16 %v1237, %v1233
          %v1354 = vpack.c.b16 %v1238, %v1234
          %v1355 = vpack.c.b16 %v1243, %v1239
          %v1356 = vpack.c.b16 %v1244, %v1240
          %v1357 = vpack.c.b16 %v1245, %v1241
          %v1358 = vpack.c.b16 %v1246, %v1242
          %v1359 = vpack.c.b16 %v1251, %v1247
          %v1360 = vpack.c.b16 %v1252, %v1248
          %v1361 = vpack.c.b16 %v1253, %v1249
          %v1362 = vpack.c.b16 %v1254, %v1250
          %v1363 = vpack.c.b16 %v1259, %v1255
          %v1364 = vpack.c.b16 %v1260, %v1256
          %v1365 = vpack.c.b16 %v1261, %v1257
          %v1366 = vpack.c.b16 %v1262, %v1258
          %v1367 = vpack.c.b16 %v1267, %v1263
          %v1368 = vpack.c.b16 %v1268, %v1264
          %v1369 = vpack.c.b16 %v1269, %v1265
          %v1370 = vpack.c.b16 %v1270, %v1266
          %v1371 = vpack.c.b16 %v1275, %v1271
          %v1372 = vpack.c.b16 %v1276, %v1272
          %v1373 = vpack.c.b16 %v1277, %v1273
          %v1374 = vpack.c.b16 %v1278, %v1274
          %v1375 = vpack.c.b16 %v1283, %v1279
          %v1376 = vpack.c.b16 %v1284, %v1280
          %v1377 = vpack.c.b16 %v1285, %v1281
          %v1378 = vpack.c.b16 %v1286, %v1282
          %v1379 = vpack.c.b16 %v1291, %v1287
          %v1380 = vpack.c.b16 %v1292, %v1288
          %v1381 = vpack.c.b16 %v1293, %v1289
          %v1382 = vpack.c.b16 %v1294, %v1290
          %v1383 = vpack.c.b16 %v1299, %v1295
          %v1384 = vpack.c.b16 %v1300, %v1296
          %v1385 = vpack.c.b16 %v1301, %v1297
          %v1386 = vpack.c.b16 %v1302, %v1298
          %v1387 = vpack.c.b16 %v1307, %v1303
          %v1388 = vpack.c.b16 %v1308, %v1304
          %v1389 = vpack.c.b16 %v1309, %v1305
          %v1390 = vpack.c.b16 %v1310, %v1306
          %v1391 = vpack.c.b16 %v1315, %v1311
          %v1392 = vpack.c.b16 %v1316, %v1312
          %v1393 = vpack.c.b16 %v1317, %v1313
          %v1394 = vpack.c.b16 %v1318, %v1314
          %v1395 = vpack.c.b16 %v1323, %v1319
          %v1396 = vpack.c.b16 %v1324, %v1320
          %v1397 = vpack.c.b16 %v1325, %v1321
          %v1398 = vpack.c.b16 %v1326, %v1322
          %v1399 = vpack.c.b16 %v1331, %v1327
          %v1400 = vpack.c.b16 %v1332, %v1328
          %v1401 = vpack.c.b16 %v1333, %v1329
          %v1402 = vpack.c.b16 %v1334, %v1330
          %v1403 = vpack.c.b16 %v1339, %v1335
          %v1404 = vpack.c.b16 %v1340, %v1336
          %v1405 = vpack.c.b16 %v1341, %v1337
          %v1406 = vpack.c.b16 %v1342, %v1338
          %1471 = vmatprep.subr.bf16.mxu0 %v1344
          %1472 = vmatpush1.bf16.msra.mxu0 %v1343
          %1473 = vmatprep.subr.bf16.mxu0 %v1348
          %1474 = vmatpush1.bf16.msra.mxu0 %v1347
          %1475 = vmatprep.subr.bf16.mxu0 %v1352
          %1476 = vmatpush1.bf16.msra.mxu0 %v1351
          %1477 = vmatprep.subr.bf16.mxu0 %v1356
          %1478 = vmatpush1.bf16.msra.mxu0 %v1355
          %1479 = vmatprep.subr.bf16.mxu0 %v1360
          %1480 = vmatpush1.bf16.msra.mxu0 %v1359
          %1481 = vmatprep.subr.bf16.mxu0 %v1364
          %1482 = vmatpush1.bf16.msra.mxu0 %v1363
          %1483 = vmatprep.subr.bf16.mxu0 %v1368
          %1484 = vmatpush1.bf16.msra.mxu0 %v1367
          %1485 = vmatprep.subr.bf16.mxu0 %v1372
          %1486 = vmatpush1.bf16.msra.mxu0 %v1371
          %1487 = vmatprep.subr.bf16.mxu0 %v1376
          %1488 = vmatpush1.bf16.msra.mxu0 %v1375
          %1489 = vmatprep.subr.bf16.mxu0 %v1380
          %1490 = vmatpush1.bf16.msra.mxu0 %v1379
          %1491 = vmatprep.subr.bf16.mxu0 %v1384
          %1492 = vmatpush1.bf16.msra.mxu0 %v1383
          %1493 = vmatprep.subr.bf16.mxu0 %v1388
          %1494 = vmatpush1.bf16.msra.mxu0 %v1387
          %1495 = vmatprep.subr.bf16.mxu0 %v1392
          %1496 = vmatpush1.bf16.msra.mxu0 %v1391
          %1497 = vmatprep.subr.bf16.mxu0 %v1396
          %1498 = vmatpush1.bf16.msra.mxu0 %v1395
          %1499 = vmatprep.subr.bf16.mxu0 %v1400
          %1500 = vmatpush1.bf16.msra.mxu0 %v1399
          %1501 = vmatprep.subr.bf16.mxu0 %v1404
          %1502 = vmatpush1.bf16.msra.mxu0 %v1403
          %1503 = vmatprep.mubr.bf16.mxu0 %v1086
          %1504 = vmatmul.mubr.bf16.gmra.mrb[0].mxu0 %v1085
          %v1505 = vpop.f32.mrb[0].mxu0
          %v1506 = vadd.f32 0.0, %v1505
          %v1507 = vpop.f32.mrb[0].mxu0
          %v1508 = vadd.f32 0.0, %v1507
          %v1509 = vpop.f32.mrb[0].mxu0
          %v1510 = vpop.f32.mrb[0].mxu0
          %1511 = vdwg.mxu0
          %1512 = vmatprep.subr.bf16.mxu0 %v1346
          %1513 = vmatpush1.bf16.msra.mxu0 %v1345
          %1514 = vmatprep.subr.bf16.mxu0 %v1350
          %1515 = vmatpush1.bf16.msra.mxu0 %v1349
          %1516 = vmatprep.subr.bf16.mxu0 %v1354
          %1517 = vmatpush1.bf16.msra.mxu0 %v1353
          %1518 = vmatprep.subr.bf16.mxu0 %v1358
          %1519 = vmatpush1.bf16.msra.mxu0 %v1357
          %1520 = vmatprep.subr.bf16.mxu0 %v1362
          %1521 = vmatpush1.bf16.msra.mxu0 %v1361
          %1522 = vmatprep.subr.bf16.mxu0 %v1366
          %1523 = vmatpush1.bf16.msra.mxu0 %v1365
          %1524 = vmatprep.subr.bf16.mxu0 %v1370
          %1525 = vmatpush1.bf16.msra.mxu0 %v1369
          %1526 = vmatprep.subr.bf16.mxu0 %v1374
          %1527 = vmatpush1.bf16.msra.mxu0 %v1373
          %1528 = vmatprep.subr.bf16.mxu0 %v1378
          %1529 = vmatpush1.bf16.msra.mxu0 %v1377
          %1530 = vmatprep.subr.bf16.mxu0 %v1382
          %1531 = vmatpush1.bf16.msra.mxu0 %v1381
          %1532 = vmatprep.subr.bf16.mxu0 %v1386
          %1533 = vmatpush1.bf16.msra.mxu0 %v1385
          %1534 = vmatprep.subr.bf16.mxu0 %v1390
          %1535 = vmatpush1.bf16.msra.mxu0 %v1389
          %1536 = vmatprep.subr.bf16.mxu0 %v1394
          %1537 = vmatpush1.bf16.msra.mxu0 %v1393
          %1538 = vmatprep.subr.bf16.mxu0 %v1398
          %1539 = vmatpush1.bf16.msra.mxu0 %v1397
          %1540 = vmatprep.subr.bf16.mxu0 %v1402
          %1541 = vmatpush1.bf16.msra.mxu0 %v1401
          %1542 = vmatprep.subr.bf16.mxu0 %v1406
          %1543 = vmatpush1.bf16.msra.mxu0 %v1405
          %1544 = vmatprep.mubr.bf16.mxu0 %v1086
          %1545 = vmatmul.mubr.bf16.gmra.mrb[0].mxu0 %v1085
          %v1546 = vpop.f32.mrb[0].mxu0
          %v1547 = vadd.f32 0.0, %v1546
          %v1548 = vpop.f32.mrb[0].mxu0
          %v1549 = vadd.f32 0.0, %v1548
          %v1550 = vpop.f32.mrb[0].mxu0
          %v1551 = vpop.f32.mrb[0].mxu0
          %1552 = vdwg.mxu0
          %v1553 = vmul.f32 %v1506, %v752
          %v1554 = vmul.f32 %v1508, %v752
          %v1555 = vmul.f32 %v1547, %v752
          %v1556 = vmul.f32 %v1549, %v752
          %v1557 = vrot.slane %v1553, 4
          %v1558 = vadd.f32 %v1553, %v1557
          %v1559 = vrot.slane %v1558, 2
          %v1560 = vadd.f32 %v1558, %v1559
          %v1561 = vrot.slane %v1560, 1
          %v1562 = vadd.f32 %v1560, %v1561
          %v1563 = vrot.slane %v1554, 4
          %v1564 = vadd.f32 %v1554, %v1563
          %v1565 = vrot.slane %v1564, 2
          %v1566 = vadd.f32 %v1564, %v1565
          %v1567 = vrot.slane %v1566, 1
          %v1568 = vadd.f32 %v1566, %v1567
          %v1569 = vrot.slane %v1555, 4
          %v1570 = vadd.f32 %v1555, %v1569
          %v1571 = vrot.slane %v1570, 2
          %v1572 = vadd.f32 %v1570, %v1571
          %v1573 = vrot.slane %v1572, 1
          %v1574 = vadd.f32 %v1572, %v1573
          %v1575 = vrot.slane %v1556, 4
          %v1576 = vadd.f32 %v1556, %v1575
          %v1577 = vrot.slane %v1576, 2
          %v1578 = vadd.f32 %v1576, %v1577
          %v1579 = vrot.slane %v1578, 1
          %v1580 = vadd.f32 %v1578, %v1579
          %v1581 = vmul.f32 %v1562, %v1022
          %v1582 = vmul.f32 %v1568, %v1022
          %v1583 = vmul.f32 %v1574, %v1022
          %v1584 = vmul.f32 %v1580, %v1022
          %v1585 = vsub.f32 %v1506, %v1581
          %v1586 = vsub.f32 %v1508, %v1582
          %v1587 = vsub.f32 %v1547, %v1583
          %v1588 = vsub.f32 %v1549, %v1584
          %v1589 = vmul.f32 %v1585, %v752
          %v1590 = vmul.f32 %v1586, %v752
          %v1591 = vmul.f32 %v1587, %v752
          %v1592 = vmul.f32 %v1588, %v752
          %v1593 = vmul.f32 %v1589, %v1589
          %v1594 = vmul.f32 %v1590, %v1590
          %v1595 = vmul.f32 %v1591, %v1591
          %v1596 = vmul.f32 %v1592, %v1592
          %v1597 = vrot.slane %v1593, 4
          %v1598 = vadd.f32 %v1593, %v1597
          %v1599 = vrot.slane %v1598, 2
          %v1600 = vadd.f32 %v1598, %v1599
          %v1601 = vrot.slane %v1600, 1
          %v1602 = vadd.f32 %v1600, %v1601
          %v1603 = vrot.slane %v1594, 4
          %v1604 = vadd.f32 %v1594, %v1603
          %v1605 = vrot.slane %v1604, 2
          %v1606 = vadd.f32 %v1604, %v1605
          %v1607 = vrot.slane %v1606, 1
          %v1608 = vadd.f32 %v1606, %v1607
          %v1609 = vrot.slane %v1595, 4
          %v1610 = vadd.f32 %v1595, %v1609
          %v1611 = vrot.slane %v1610, 2
          %v1612 = vadd.f32 %v1610, %v1611
          %v1613 = vrot.slane %v1612, 1
          %v1614 = vadd.f32 %v1612, %v1613
          %v1615 = vrot.slane %v1596, 4
          %v1616 = vadd.f32 %v1596, %v1615
          %v1617 = vrot.slane %v1616, 2
          %v1618 = vadd.f32 %v1616, %v1617
          %v1619 = vrot.slane %v1618, 1
          %v1620 = vadd.f32 %v1618, %v1619
          %v1621 = vmul.f32 %v1602, %v1022
          %v1622 = vmul.f32 %v1608, %v1022
          %v1623 = vmul.f32 %v1614, %v1022
          %v1624 = vmul.f32 %v1620, %v1022
          %v1625 = vadd.f32 %v1621, 0.8
          %v1626 = vadd.f32 %v1622, 0.8
          %v1627 = vadd.f32 %v1623, 0.8
          %v1628 = vadd.f32 %v1624, 0.8
          %v1629 = vrsqrt.pop %v1625
          %v1630 = vrsqrt.pop %v1626
          %v1631 = vrsqrt.pop %v1627
          %v1632 = vrsqrt.pop %v1628
          %v1633 = vmul.f32 %v1585, %v1629
          %v1634 = vmul.f32 %v1586, %v1630
          %v1635 = vmul.f32 %v1587, %v1631
          %v1636 = vmul.f32 %v1588, %v1632
          %v1637 = vld [vmem:[#allocation15] sm:$0xf]
          %v1639 = vlaneseq
          %v1640 = vshrl.u32 %v1639, 7
          %v1641 = vsub.s32 0, %v1640
          %v1642 = vrot.slane %v1637, %v1641
          %v1643 = vlaneseq
          %v1644 = vshrl.u32 %v1643, 7
          %v1645 = vsub.s32 1, %v1644
          %v1646 = vrot.slane %v1637, %v1645
          %v1647 = vlaneseq
          %v1648 = vshrl.u32 %v1647, 7
          %v1649 = vsub.s32 2, %v1648
          %v1650 = vrot.slane %v1637, %v1649
          %v1651 = vlaneseq
          %v1652 = vshrl.u32 %v1651, 7
          %v1653 = vsub.s32 3, %v1652
          %v1654 = vrot.slane %v1637, %v1653
          %v1659 = vmul.f32 %v1633, %v1642
          %v1660 = vmul.f32 %v1634, %v1646
          %v1661 = vmul.f32 %v1635, %v1650
          %v1662 = vmul.f32 %v1636, %v1654
          %v1663 = vld [vmem:[#allocation16] sm:$0xf]
          %v1665 = vlaneseq
          %v1666 = vshrl.u32 %v1665, 7
          %v1667 = vsub.s32 0, %v1666
          %v1668 = vrot.slane %v1663, %v1667
          %v1669 = vlaneseq
          %v1670 = vshrl.u32 %v1669, 7
          %v1671 = vsub.s32 1, %v1670
          %v1672 = vrot.slane %v1663, %v1671
          %v1673 = vlaneseq
          %v1674 = vshrl.u32 %v1673, 7
          %v1675 = vsub.s32 2, %v1674
          %v1676 = vrot.slane %v1663, %v1675
          %v1677 = vlaneseq
          %v1678 = vshrl.u32 %v1677, 7
          %v1679 = vsub.s32 3, %v1678
          %v1680 = vrot.slane %v1663, %v1679
          %v1685 = vadd.f32 %v1659, %v1668
          %v1686 = vadd.f32 %v1660, %v1672
          %v1687 = vadd.f32 %v1661, %v1676
          %v1688 = vadd.f32 %v1662, %v1680
          %vm1689 = vcmp.gt.f32.partialorder %v1685, 0.0
          %vm1690 = vcmp.gt.f32.partialorder %v1686, 0.0
          %vm1691 = vcmp.gt.f32.partialorder %v1687, 0.0
          %vm1692 = vcmp.gt.f32.partialorder %v1688, 0.0
          %v1693 = vmul.f32 %v1685, 0.2
          %v1694 = vmul.f32 %v1686, 0.2
          %v1695 = vmul.f32 %v1687, 0.2
          %v1696 = vmul.f32 %v1688, 0.2
          %v1697 = vsel %vm1689, %v1685, %v1693
          %v1698 = vsel %vm1690, %v1686, %v1694
          %v1699 = vsel %vm1691, %v1687, %v1695
          %v1700 = vsel %vm1692, %v1688, %v1696
          %v1701 = vpack.c.bf16 %v1697, %v1697
          %v1702 = vpack.c.bf16 %v1698, %v1698
          %v1703 = vpack.c.bf16 %v1699, %v1699
          %v1704 = vpack.c.bf16 %v1700, %v1700
          %v1705 = vld [vmem:[#allocation18] sm:$0xff]
          %v1706 = vld [vmem:[#allocation18 + $0x8] sm:$0xff]
          %v1707 = vld [vmem:[#allocation18 + $0x10] sm:$0xff]
          %v1708 = vld [vmem:[#allocation18 + $0x18] sm:$0xff]
          %v1709 = vld [vmem:[#allocation18 + $0x20] sm:$0xff]
          %v1710 = vld [vmem:[#allocation18 + $0x28] sm:$0xff]
          %v1711 = vld [vmem:[#allocation18 + $0x30] sm:$0xff]
          %v1712 = vld [vmem:[#allocation18 + $0x38] sm:$0xff]
          %v1713 = vld [vmem:[#allocation18 + $0x40] sm:$0xff]
          %v1714 = vld [vmem:[#allocation18 + $0x48] sm:$0xff]
          %v1715 = vld [vmem:[#allocation18 + $0x50] sm:$0xff]
          %v1716 = vld [vmem:[#allocation18 + $0x58] sm:$0xff]
          %v1717 = vld [vmem:[#allocation18 + $0x60] sm:$0xff]
          %v1718 = vld [vmem:[#allocation18 + $0x68] sm:$0xff]
          %v1719 = vld [vmem:[#allocation18 + $0x70] sm:$0xff]
          %v1720 = vld [vmem:[#allocation18 + $0x78] sm:$0xff]
          %v1721 = vld [vmem:[#allocation18 + $0x80] sm:$0xff]
          %v1722 = vld [vmem:[#allocation18 + $0x88] sm:$0xff]
          %v1723 = vld [vmem:[#allocation18 + $0x90] sm:$0xff]
          %v1724 = vld [vmem:[#allocation18 + $0x98] sm:$0xff]
          %v1725 = vld [vmem:[#allocation18 + $0xa0] sm:$0xff]
          %v1726 = vld [vmem:[#allocation18 + $0xa8] sm:$0xff]
          %v1727 = vld [vmem:[#allocation18 + $0xb0] sm:$0xff]
          %v1728 = vld [vmem:[#allocation18 + $0xb8] sm:$0xff]
          %v1729 = vld [vmem:[#allocation18 + $0xc0] sm:$0xff]
          %v1730 = vld [vmem:[#allocation18 + $0xc8] sm:$0xff]
          %v1731 = vld [vmem:[#allocation18 + $0xd0] sm:$0xff]
          %v1732 = vld [vmem:[#allocation18 + $0xd8] sm:$0xff]
          %v1733 = vld [vmem:[#allocation18 + $0xe0] sm:$0xff]
          %v1734 = vld [vmem:[#allocation18 + $0xe8] sm:$0xff]
          %v1735 = vld [vmem:[#allocation18 + $0xf0] sm:$0xff]
          %v1736 = vld [vmem:[#allocation18 + $0xf8] sm:$0xff]
          %v1737 = vld [vmem:[#allocation18 + $0x100] sm:$0xff]
          %v1738 = vld [vmem:[#allocation18 + $0x108] sm:$0xff]
          %v1739 = vld [vmem:[#allocation18 + $0x110] sm:$0xff]
          %v1740 = vld [vmem:[#allocation18 + $0x118] sm:$0xff]
          %v1741 = vld [vmem:[#allocation18 + $0x120] sm:$0xff]
          %v1742 = vld [vmem:[#allocation18 + $0x128] sm:$0xff]
          %v1743 = vld [vmem:[#allocation18 + $0x130] sm:$0xff]
          %v1744 = vld [vmem:[#allocation18 + $0x138] sm:$0xff]
          %v1745 = vld [vmem:[#allocation18 + $0x140] sm:$0xff]
          %v1746 = vld [vmem:[#allocation18 + $0x148] sm:$0xff]
          %v1747 = vld [vmem:[#allocation18 + $0x150] sm:$0xff]
          %v1748 = vld [vmem:[#allocation18 + $0x158] sm:$0xff]
          %v1749 = vld [vmem:[#allocation18 + $0x160] sm:$0xff]
          %v1750 = vld [vmem:[#allocation18 + $0x168] sm:$0xff]
          %v1751 = vld [vmem:[#allocation18 + $0x170] sm:$0xff]
          %v1752 = vld [vmem:[#allocation18 + $0x178] sm:$0xff]
          %v1753 = vld [vmem:[#allocation18 + $0x180] sm:$0xff]
          %v1754 = vld [vmem:[#allocation18 + $0x188] sm:$0xff]
          %v1755 = vld [vmem:[#allocation18 + $0x190] sm:$0xff]
          %v1756 = vld [vmem:[#allocation18 + $0x198] sm:$0xff]
          %v1757 = vld [vmem:[#allocation18 + $0x1a0] sm:$0xff]
          %v1758 = vld [vmem:[#allocation18 + $0x1a8] sm:$0xff]
          %v1759 = vld [vmem:[#allocation18 + $0x1b0] sm:$0xff]
          %v1760 = vld [vmem:[#allocation18 + $0x1b8] sm:$0xff]
          %v1761 = vld [vmem:[#allocation18 + $0x1c0] sm:$0xff]
          %v1762 = vld [vmem:[#allocation18 + $0x1c8] sm:$0xff]
          %v1763 = vld [vmem:[#allocation18 + $0x1d0] sm:$0xff]
          %v1764 = vld [vmem:[#allocation18 + $0x1d8] sm:$0xff]
          %v1765 = vld [vmem:[#allocation18 + $0x1e0] sm:$0xff]
          %v1766 = vld [vmem:[#allocation18 + $0x1e8] sm:$0xff]
          %v1767 = vld [vmem:[#allocation18 + $0x1f0] sm:$0xff]
          %v1768 = vld [vmem:[#allocation18 + $0x1f8] sm:$0xff]
          %v1769 = vld [vmem:[#allocation18 + $0x200] sm:$0xff]
          %v1770 = vld [vmem:[#allocation18 + $0x208] sm:$0xff]
          %v1771 = vld [vmem:[#allocation18 + $0x210] sm:$0xff]
          %v1772 = vld [vmem:[#allocation18 + $0x218] sm:$0xff]
          %v1773 = vld [vmem:[#allocation18 + $0x220] sm:$0xff]
          %v1774 = vld [vmem:[#allocation18 + $0x228] sm:$0xff]
          %v1775 = vld [vmem:[#allocation18 + $0x230] sm:$0xff]
          %v1776 = vld [vmem:[#allocation18 + $0x238] sm:$0xff]
          %v1777 = vld [vmem:[#allocation18 + $0x240] sm:$0xff]
          %v1778 = vld [vmem:[#allocation18 + $0x248] sm:$0xff]
          %v1779 = vld [vmem:[#allocation18 + $0x250] sm:$0xff]
          %v1780 = vld [vmem:[#allocation18 + $0x258] sm:$0xff]
          %v1781 = vld [vmem:[#allocation18 + $0x260] sm:$0xff]
          %v1782 = vld [vmem:[#allocation18 + $0x268] sm:$0xff]
          %v1783 = vld [vmem:[#allocation18 + $0x270] sm:$0xff]
          %v1784 = vld [vmem:[#allocation18 + $0x278] sm:$0xff]
          %v1785 = vld [vmem:[#allocation18 + $0x280] sm:$0xff]
          %v1786 = vld [vmem:[#allocation18 + $0x288] sm:$0xff]
          %v1787 = vld [vmem:[#allocation18 + $0x290] sm:$0xff]
          %v1788 = vld [vmem:[#allocation18 + $0x298] sm:$0xff]
          %v1789 = vld [vmem:[#allocation18 + $0x2a0] sm:$0xff]
          %v1790 = vld [vmem:[#allocation18 + $0x2a8] sm:$0xff]
          %v1791 = vld [vmem:[#allocation18 + $0x2b0] sm:$0xff]
          %v1792 = vld [vmem:[#allocation18 + $0x2b8] sm:$0xff]
          %v1793 = vld [vmem:[#allocation18 + $0x2c0] sm:$0xff]
          %v1794 = vld [vmem:[#allocation18 + $0x2c8] sm:$0xff]
          %v1795 = vld [vmem:[#allocation18 + $0x2d0] sm:$0xff]
          %v1796 = vld [vmem:[#allocation18 + $0x2d8] sm:$0xff]
          %v1797 = vld [vmem:[#allocation18 + $0x2e0] sm:$0xff]
          %v1798 = vld [vmem:[#allocation18 + $0x2e8] sm:$0xff]
          %v1799 = vld [vmem:[#allocation18 + $0x2f0] sm:$0xff]
          %v1800 = vld [vmem:[#allocation18 + $0x2f8] sm:$0xff]
          %v1801 = vld [vmem:[#allocation18 + $0x300] sm:$0xff]
          %v1802 = vld [vmem:[#allocation18 + $0x308] sm:$0xff]
          %v1803 = vld [vmem:[#allocation18 + $0x310] sm:$0xff]
          %v1804 = vld [vmem:[#allocation18 + $0x318] sm:$0xff]
          %v1805 = vld [vmem:[#allocation18 + $0x320] sm:$0xff]
          %v1806 = vld [vmem:[#allocation18 + $0x328] sm:$0xff]
          %v1807 = vld [vmem:[#allocation18 + $0x330] sm:$0xff]
          %v1808 = vld [vmem:[#allocation18 + $0x338] sm:$0xff]
          %v1809 = vld [vmem:[#allocation18 + $0x340] sm:$0xff]
          %v1810 = vld [vmem:[#allocation18 + $0x348] sm:$0xff]
          %v1811 = vld [vmem:[#allocation18 + $0x350] sm:$0xff]
          %v1812 = vld [vmem:[#allocation18 + $0x358] sm:$0xff]
          %v1813 = vld [vmem:[#allocation18 + $0x360] sm:$0xff]
          %v1814 = vld [vmem:[#allocation18 + $0x368] sm:$0xff]
          %v1815 = vld [vmem:[#allocation18 + $0x370] sm:$0xff]
          %v1816 = vld [vmem:[#allocation18 + $0x378] sm:$0xff]
          %v1817 = vld [vmem:[#allocation18 + $0x380] sm:$0xff]
          %v1818 = vld [vmem:[#allocation18 + $0x388] sm:$0xff]
          %v1819 = vld [vmem:[#allocation18 + $0x390] sm:$0xff]
          %v1820 = vld [vmem:[#allocation18 + $0x398] sm:$0xff]
          %v1821 = vld [vmem:[#allocation18 + $0x3a0] sm:$0xff]
          %v1822 = vld [vmem:[#allocation18 + $0x3a8] sm:$0xff]
          %v1823 = vld [vmem:[#allocation18 + $0x3b0] sm:$0xff]
          %v1824 = vld [vmem:[#allocation18 + $0x3b8] sm:$0xff]
          %v1825 = vld [vmem:[#allocation18 + $0x3c0] sm:$0xff]
          %v1826 = vld [vmem:[#allocation18 + $0x3c8] sm:$0xff]
          %v1827 = vld [vmem:[#allocation18 + $0x3d0] sm:$0xff]
          %v1828 = vld [vmem:[#allocation18 + $0x3d8] sm:$0xff]
          %v1829 = vld [vmem:[#allocation18 + $0x3e0] sm:$0xff]
          %v1830 = vld [vmem:[#allocation18 + $0x3e8] sm:$0xff]
          %v1831 = vld [vmem:[#allocation18 + $0x3f0] sm:$0xff]
          %v1832 = vld [vmem:[#allocation18 + $0x3f8] sm:$0xff]
          %v1833 = vld [vmem:[#allocation18 + $0x400] sm:$0xff]
          %v1834 = vld [vmem:[#allocation18 + $0x408] sm:$0xff]
          %v1835 = vld [vmem:[#allocation18 + $0x410] sm:$0xff]
          %v1836 = vld [vmem:[#allocation18 + $0x418] sm:$0xff]
          %v1837 = vld [vmem:[#allocation18 + $0x420] sm:$0xff]
          %v1838 = vld [vmem:[#allocation18 + $0x428] sm:$0xff]
          %v1839 = vld [vmem:[#allocation18 + $0x430] sm:$0xff]
          %v1840 = vld [vmem:[#allocation18 + $0x438] sm:$0xff]
          %v1841 = vld [vmem:[#allocation18 + $0x440] sm:$0xff]
          %v1842 = vld [vmem:[#allocation18 + $0x448] sm:$0xff]
          %v1843 = vld [vmem:[#allocation18 + $0x450] sm:$0xff]
          %v1844 = vld [vmem:[#allocation18 + $0x458] sm:$0xff]
          %v1845 = vld [vmem:[#allocation18 + $0x460] sm:$0xff]
          %v1846 = vld [vmem:[#allocation18 + $0x468] sm:$0xff]
          %v1847 = vld [vmem:[#allocation18 + $0x470] sm:$0xff]
          %v1848 = vld [vmem:[#allocation18 + $0x478] sm:$0xff]
          %v1849 = vld [vmem:[#allocation18 + $0x480] sm:$0xff]
          %v1850 = vld [vmem:[#allocation18 + $0x488] sm:$0xff]
          %v1851 = vld [vmem:[#allocation18 + $0x490] sm:$0xff]
          %v1852 = vld [vmem:[#allocation18 + $0x498] sm:$0xff]
          %v1853 = vld [vmem:[#allocation18 + $0x4a0] sm:$0xff]
          %v1854 = vld [vmem:[#allocation18 + $0x4a8] sm:$0xff]
          %v1855 = vld [vmem:[#allocation18 + $0x4b0] sm:$0xff]
          %v1856 = vld [vmem:[#allocation18 + $0x4b8] sm:$0xff]
          %v1857 = vld [vmem:[#allocation18 + $0x4c0] sm:$0xff]
          %v1858 = vld [vmem:[#allocation18 + $0x4c8] sm:$0xff]
          %v1859 = vld [vmem:[#allocation18 + $0x4d0] sm:$0xff]
          %v1860 = vld [vmem:[#allocation18 + $0x4d8] sm:$0xff]
          %v1861 = vld [vmem:[#allocation18 + $0x4e0] sm:$0xff]
          %v1862 = vld [vmem:[#allocation18 + $0x4e8] sm:$0xff]
          %v1863 = vld [vmem:[#allocation18 + $0x4f0] sm:$0xff]
          %v1864 = vld [vmem:[#allocation18 + $0x4f8] sm:$0xff]
          %v1865 = vld [vmem:[#allocation18 + $0x500] sm:$0xff]
          %v1866 = vld [vmem:[#allocation18 + $0x508] sm:$0xff]
          %v1867 = vld [vmem:[#allocation18 + $0x510] sm:$0xff]
          %v1868 = vld [vmem:[#allocation18 + $0x518] sm:$0xff]
          %v1869 = vld [vmem:[#allocation18 + $0x520] sm:$0xff]
          %v1870 = vld [vmem:[#allocation18 + $0x528] sm:$0xff]
          %v1871 = vld [vmem:[#allocation18 + $0x530] sm:$0xff]
          %v1872 = vld [vmem:[#allocation18 + $0x538] sm:$0xff]
          %v1873 = vld [vmem:[#allocation18 + $0x540] sm:$0xff]
          %v1874 = vld [vmem:[#allocation18 + $0x548] sm:$0xff]
          %v1875 = vld [vmem:[#allocation18 + $0x550] sm:$0xff]
          %v1876 = vld [vmem:[#allocation18 + $0x558] sm:$0xff]
          %v1877 = vld [vmem:[#allocation18 + $0x560] sm:$0xff]
          %v1878 = vld [vmem:[#allocation18 + $0x568] sm:$0xff]
          %v1879 = vld [vmem:[#allocation18 + $0x570] sm:$0xff]
          %v1880 = vld [vmem:[#allocation18 + $0x578] sm:$0xff]
          %v1881 = vld [vmem:[#allocation18 + $0x580] sm:$0xff]
          %v1882 = vld [vmem:[#allocation18 + $0x588] sm:$0xff]
          %v1883 = vld [vmem:[#allocation18 + $0x590] sm:$0xff]
          %v1884 = vld [vmem:[#allocation18 + $0x598] sm:$0xff]
          %v1885 = vld [vmem:[#allocation18 + $0x5a0] sm:$0xff]
          %v1886 = vld [vmem:[#allocation18 + $0x5a8] sm:$0xff]
          %v1887 = vld [vmem:[#allocation18 + $0x5b0] sm:$0xff]
          %v1888 = vld [vmem:[#allocation18 + $0x5b8] sm:$0xff]
          %v1889 = vld [vmem:[#allocation18 + $0x5c0] sm:$0xff]
          %v1890 = vld [vmem:[#allocation18 + $0x5c8] sm:$0xff]
          %v1891 = vld [vmem:[#allocation18 + $0x5d0] sm:$0xff]
          %v1892 = vld [vmem:[#allocation18 + $0x5d8] sm:$0xff]
          %v1893 = vld [vmem:[#allocation18 + $0x5e0] sm:$0xff]
          %v1894 = vld [vmem:[#allocation18 + $0x5e8] sm:$0xff]
          %v1895 = vld [vmem:[#allocation18 + $0x5f0] sm:$0xff]
          %v1896 = vld [vmem:[#allocation18 + $0x5f8] sm:$0xff]
          %v1897 = vld [vmem:[#allocation18 + $0x600] sm:$0xff]
          %v1898 = vld [vmem:[#allocation18 + $0x608] sm:$0xff]
          %v1899 = vld [vmem:[#allocation18 + $0x610] sm:$0xff]
          %v1900 = vld [vmem:[#allocation18 + $0x618] sm:$0xff]
          %v1901 = vld [vmem:[#allocation18 + $0x620] sm:$0xff]
          %v1902 = vld [vmem:[#allocation18 + $0x628] sm:$0xff]
          %v1903 = vld [vmem:[#allocation18 + $0x630] sm:$0xff]
          %v1904 = vld [vmem:[#allocation18 + $0x638] sm:$0xff]
          %v1905 = vld [vmem:[#allocation18 + $0x640] sm:$0xff]
          %v1906 = vld [vmem:[#allocation18 + $0x648] sm:$0xff]
          %v1907 = vld [vmem:[#allocation18 + $0x650] sm:$0xff]
          %v1908 = vld [vmem:[#allocation18 + $0x658] sm:$0xff]
          %v1909 = vld [vmem:[#allocation18 + $0x660] sm:$0xff]
          %v1910 = vld [vmem:[#allocation18 + $0x668] sm:$0xff]
          %v1911 = vld [vmem:[#allocation18 + $0x670] sm:$0xff]
          %v1912 = vld [vmem:[#allocation18 + $0x678] sm:$0xff]
          %v1913 = vld [vmem:[#allocation18 + $0x680] sm:$0xff]
          %v1914 = vld [vmem:[#allocation18 + $0x688] sm:$0xff]
          %v1915 = vld [vmem:[#allocation18 + $0x690] sm:$0xff]
          %v1916 = vld [vmem:[#allocation18 + $0x698] sm:$0xff]
          %v1917 = vld [vmem:[#allocation18 + $0x6a0] sm:$0xff]
          %v1918 = vld [vmem:[#allocation18 + $0x6a8] sm:$0xff]
          %v1919 = vld [vmem:[#allocation18 + $0x6b0] sm:$0xff]
          %v1920 = vld [vmem:[#allocation18 + $0x6b8] sm:$0xff]
          %v1921 = vld [vmem:[#allocation18 + $0x6c0] sm:$0xff]
          %v1922 = vld [vmem:[#allocation18 + $0x6c8] sm:$0xff]
          %v1923 = vld [vmem:[#allocation18 + $0x6d0] sm:$0xff]
          %v1924 = vld [vmem:[#allocation18 + $0x6d8] sm:$0xff]
          %v1925 = vld [vmem:[#allocation18 + $0x6e0] sm:$0xff]
          %v1926 = vld [vmem:[#allocation18 + $0x6e8] sm:$0xff]
          %v1927 = vld [vmem:[#allocation18 + $0x6f0] sm:$0xff]
          %v1928 = vld [vmem:[#allocation18 + $0x6f8] sm:$0xff]
          %v1929 = vld [vmem:[#allocation18 + $0x700] sm:$0xff]
          %v1930 = vld [vmem:[#allocation18 + $0x708] sm:$0xff]
          %v1931 = vld [vmem:[#allocation18 + $0x710] sm:$0xff]
          %v1932 = vld [vmem:[#allocation18 + $0x718] sm:$0xff]
          %v1933 = vld [vmem:[#allocation18 + $0x720] sm:$0xff]
          %v1934 = vld [vmem:[#allocation18 + $0x728] sm:$0xff]
          %v1935 = vld [vmem:[#allocation18 + $0x730] sm:$0xff]
          %v1936 = vld [vmem:[#allocation18 + $0x738] sm:$0xff]
          %v1937 = vld [vmem:[#allocation18 + $0x740] sm:$0xff]
          %v1938 = vld [vmem:[#allocation18 + $0x748] sm:$0xff]
          %v1939 = vld [vmem:[#allocation18 + $0x750] sm:$0xff]
          %v1940 = vld [vmem:[#allocation18 + $0x758] sm:$0xff]
          %v1941 = vld [vmem:[#allocation18 + $0x760] sm:$0xff]
          %v1942 = vld [vmem:[#allocation18 + $0x768] sm:$0xff]
          %v1943 = vld [vmem:[#allocation18 + $0x770] sm:$0xff]
          %v1944 = vld [vmem:[#allocation18 + $0x778] sm:$0xff]
          %v1945 = vld [vmem:[#allocation18 + $0x780] sm:$0xff]
          %v1946 = vld [vmem:[#allocation18 + $0x788] sm:$0xff]
          %v1947 = vld [vmem:[#allocation18 + $0x790] sm:$0xff]
          %v1948 = vld [vmem:[#allocation18 + $0x798] sm:$0xff]
          %v1949 = vld [vmem:[#allocation18 + $0x7a0] sm:$0xff]
          %v1950 = vld [vmem:[#allocation18 + $0x7a8] sm:$0xff]
          %v1951 = vld [vmem:[#allocation18 + $0x7b0] sm:$0xff]
          %v1952 = vld [vmem:[#allocation18 + $0x7b8] sm:$0xff]
          %v1953 = vld [vmem:[#allocation18 + $0x7c0] sm:$0xff]
          %v1954 = vld [vmem:[#allocation18 + $0x7c8] sm:$0xff]
          %v1955 = vld [vmem:[#allocation18 + $0x7d0] sm:$0xff]
          %v1956 = vld [vmem:[#allocation18 + $0x7d8] sm:$0xff]
          %v1957 = vld [vmem:[#allocation18 + $0x7e0] sm:$0xff]
          %v1958 = vld [vmem:[#allocation18 + $0x7e8] sm:$0xff]
          %v1959 = vld [vmem:[#allocation18 + $0x7f0] sm:$0xff]
          %v1960 = vld [vmem:[#allocation18 + $0x7f8] sm:$0xff]
          %v2217 = vunpack.c.l.b16 %v1705
          %v2218 = vunpack.c.h.b16 %v1705
          %v2219 = vunpack.c.l.b16 %v1706
          %v2220 = vunpack.c.h.b16 %v1706
          %v2221 = vunpack.c.l.b16 %v1707
          %v2222 = vunpack.c.h.b16 %v1707
          %v2223 = vunpack.c.l.b16 %v1708
          %v2224 = vunpack.c.h.b16 %v1708
          %v2225 = vunpack.c.l.b16 %v1709
          %v2226 = vunpack.c.h.b16 %v1709
          %v2227 = vunpack.c.l.b16 %v1710
          %v2228 = vunpack.c.h.b16 %v1710
          %v2229 = vunpack.c.l.b16 %v1711
          %v2230 = vunpack.c.h.b16 %v1711
          %v2231 = vunpack.c.l.b16 %v1712
          %v2232 = vunpack.c.h.b16 %v1712
          %v2233 = vunpack.c.l.b16 %v1713
          %v2234 = vunpack.c.h.b16 %v1713
          %v2235 = vunpack.c.l.b16 %v1714
          %v2236 = vunpack.c.h.b16 %v1714
          %v2237 = vunpack.c.l.b16 %v1715
          %v2238 = vunpack.c.h.b16 %v1715
          %v2239 = vunpack.c.l.b16 %v1716
          %v2240 = vunpack.c.h.b16 %v1716
          %v2241 = vunpack.c.l.b16 %v1717
          %v2242 = vunpack.c.h.b16 %v1717
          %v2243 = vunpack.c.l.b16 %v1718
          %v2244 = vunpack.c.h.b16 %v1718
          %v2245 = vunpack.c.l.b16 %v1719
          %v2246 = vunpack.c.h.b16 %v1719
          %v2247 = vunpack.c.l.b16 %v1720
          %v2248 = vunpack.c.h.b16 %v1720
          %v2249 = vunpack.c.l.b16 %v1721
          %v2250 = vunpack.c.h.b16 %v1721
          %v2251 = vunpack.c.l.b16 %v1722
          %v2252 = vunpack.c.h.b16 %v1722
          %v2253 = vunpack.c.l.b16 %v1723
          %v2254 = vunpack.c.h.b16 %v1723
          %v2255 = vunpack.c.l.b16 %v1724
          %v2256 = vunpack.c.h.b16 %v1724
          %v2257 = vunpack.c.l.b16 %v1725
          %v2258 = vunpack.c.h.b16 %v1725
          %v2259 = vunpack.c.l.b16 %v1726
          %v2260 = vunpack.c.h.b16 %v1726
          %v2261 = vunpack.c.l.b16 %v1727
          %v2262 = vunpack.c.h.b16 %v1727
          %v2263 = vunpack.c.l.b16 %v1728
          %v2264 = vunpack.c.h.b16 %v1728
          %v2265 = vunpack.c.l.b16 %v1729
          %v2266 = vunpack.c.h.b16 %v1729
          %v2267 = vunpack.c.l.b16 %v1730
          %v2268 = vunpack.c.h.b16 %v1730
          %v2269 = vunpack.c.l.b16 %v1731
          %v2270 = vunpack.c.h.b16 %v1731
          %v2271 = vunpack.c.l.b16 %v1732
          %v2272 = vunpack.c.h.b16 %v1732
          %v2273 = vunpack.c.l.b16 %v1733
          %v2274 = vunpack.c.h.b16 %v1733
          %v2275 = vunpack.c.l.b16 %v1734
          %v2276 = vunpack.c.h.b16 %v1734
          %v2277 = vunpack.c.l.b16 %v1735
          %v2278 = vunpack.c.h.b16 %v1735
          %v2279 = vunpack.c.l.b16 %v1736
          %v2280 = vunpack.c.h.b16 %v1736
          %v2281 = vunpack.c.l.b16 %v1737
          %v2282 = vunpack.c.h.b16 %v1737
          %v2283 = vunpack.c.l.b16 %v1738
          %v2284 = vunpack.c.h.b16 %v1738
          %v2285 = vunpack.c.l.b16 %v1739
          %v2286 = vunpack.c.h.b16 %v1739
          %v2287 = vunpack.c.l.b16 %v1740
          %v2288 = vunpack.c.h.b16 %v1740
          %v2289 = vunpack.c.l.b16 %v1741
          %v2290 = vunpack.c.h.b16 %v1741
          %v2291 = vunpack.c.l.b16 %v1742
          %v2292 = vunpack.c.h.b16 %v1742
          %v2293 = vunpack.c.l.b16 %v1743
          %v2294 = vunpack.c.h.b16 %v1743
          %v2295 = vunpack.c.l.b16 %v1744
          %v2296 = vunpack.c.h.b16 %v1744
          %v2297 = vunpack.c.l.b16 %v1745
          %v2298 = vunpack.c.h.b16 %v1745
          %v2299 = vunpack.c.l.b16 %v1746
          %v2300 = vunpack.c.h.b16 %v1746
          %v2301 = vunpack.c.l.b16 %v1747
          %v2302 = vunpack.c.h.b16 %v1747
          %v2303 = vunpack.c.l.b16 %v1748
          %v2304 = vunpack.c.h.b16 %v1748
          %v2305 = vunpack.c.l.b16 %v1749
          %v2306 = vunpack.c.h.b16 %v1749
          %v2307 = vunpack.c.l.b16 %v1750
          %v2308 = vunpack.c.h.b16 %v1750
          %v2309 = vunpack.c.l.b16 %v1751
          %v2310 = vunpack.c.h.b16 %v1751
          %v2311 = vunpack.c.l.b16 %v1752
          %v2312 = vunpack.c.h.b16 %v1752
          %v2313 = vunpack.c.l.b16 %v1753
          %v2314 = vunpack.c.h.b16 %v1753
          %v2315 = vunpack.c.l.b16 %v1754
          %v2316 = vunpack.c.h.b16 %v1754
          %v2317 = vunpack.c.l.b16 %v1755
          %v2318 = vunpack.c.h.b16 %v1755
          %v2319 = vunpack.c.l.b16 %v1756
          %v2320 = vunpack.c.h.b16 %v1756
          %v2321 = vunpack.c.l.b16 %v1757
          %v2322 = vunpack.c.h.b16 %v1757
          %v2323 = vunpack.c.l.b16 %v1758
          %v2324 = vunpack.c.h.b16 %v1758
          %v2325 = vunpack.c.l.b16 %v1759
          %v2326 = vunpack.c.h.b16 %v1759
          %v2327 = vunpack.c.l.b16 %v1760
          %v2328 = vunpack.c.h.b16 %v1760
          %v2329 = vunpack.c.l.b16 %v1761
          %v2330 = vunpack.c.h.b16 %v1761
          %v2331 = vunpack.c.l.b16 %v1762
          %v2332 = vunpack.c.h.b16 %v1762
          %v2333 = vunpack.c.l.b16 %v1763
          %v2334 = vunpack.c.h.b16 %v1763
          %v2335 = vunpack.c.l.b16 %v1764
          %v2336 = vunpack.c.h.b16 %v1764
          %v2337 = vunpack.c.l.b16 %v1765
          %v2338 = vunpack.c.h.b16 %v1765
          %v2339 = vunpack.c.l.b16 %v1766
          %v2340 = vunpack.c.h.b16 %v1766
          %v2341 = vunpack.c.l.b16 %v1767
          %v2342 = vunpack.c.h.b16 %v1767
          %v2343 = vunpack.c.l.b16 %v1768
          %v2344 = vunpack.c.h.b16 %v1768
          %v2345 = vunpack.c.l.b16 %v1769
          %v2346 = vunpack.c.h.b16 %v1769
          %v2347 = vunpack.c.l.b16 %v1770
          %v2348 = vunpack.c.h.b16 %v1770
          %v2349 = vunpack.c.l.b16 %v1771
          %v2350 = vunpack.c.h.b16 %v1771
          %v2351 = vunpack.c.l.b16 %v1772
          %v2352 = vunpack.c.h.b16 %v1772
          %v2353 = vunpack.c.l.b16 %v1773
          %v2354 = vunpack.c.h.b16 %v1773
          %v2355 = vunpack.c.l.b16 %v1774
          %v2356 = vunpack.c.h.b16 %v1774
          %v2357 = vunpack.c.l.b16 %v1775
          %v2358 = vunpack.c.h.b16 %v1775
          %v2359 = vunpack.c.l.b16 %v1776
          %v2360 = vunpack.c.h.b16 %v1776
          %v2361 = vunpack.c.l.b16 %v1777
          %v2362 = vunpack.c.h.b16 %v1777
          %v2363 = vunpack.c.l.b16 %v1778
          %v2364 = vunpack.c.h.b16 %v1778
          %v2365 = vunpack.c.l.b16 %v1779
          %v2366 = vunpack.c.h.b16 %v1779
          %v2367 = vunpack.c.l.b16 %v1780
          %v2368 = vunpack.c.h.b16 %v1780
          %v2369 = vunpack.c.l.b16 %v1781
          %v2370 = vunpack.c.h.b16 %v1781
          %v2371 = vunpack.c.l.b16 %v1782
          %v2372 = vunpack.c.h.b16 %v1782
          %v2373 = vunpack.c.l.b16 %v1783
          %v2374 = vunpack.c.h.b16 %v1783
          %v2375 = vunpack.c.l.b16 %v1784
          %v2376 = vunpack.c.h.b16 %v1784
          %v2377 = vunpack.c.l.b16 %v1785
          %v2378 = vunpack.c.h.b16 %v1785
          %v2379 = vunpack.c.l.b16 %v1786
          %v2380 = vunpack.c.h.b16 %v1786
          %v2381 = vunpack.c.l.b16 %v1787
          %v2382 = vunpack.c.h.b16 %v1787
          %v2383 = vunpack.c.l.b16 %v1788
          %v2384 = vunpack.c.h.b16 %v1788
          %v2385 = vunpack.c.l.b16 %v1789
          %v2386 = vunpack.c.h.b16 %v1789
          %v2387 = vunpack.c.l.b16 %v1790
          %v2388 = vunpack.c.h.b16 %v1790
          %v2389 = vunpack.c.l.b16 %v1791
          %v2390 = vunpack.c.h.b16 %v1791
          %v2391 = vunpack.c.l.b16 %v1792
          %v2392 = vunpack.c.h.b16 %v1792
          %v2393 = vunpack.c.l.b16 %v1793
          %v2394 = vunpack.c.h.b16 %v1793
          %v2395 = vunpack.c.l.b16 %v1794
          %v2396 = vunpack.c.h.b16 %v1794
          %v2397 = vunpack.c.l.b16 %v1795
          %v2398 = vunpack.c.h.b16 %v1795
          %v2399 = vunpack.c.l.b16 %v1796
          %v2400 = vunpack.c.h.b16 %v1796
          %v2401 = vunpack.c.l.b16 %v1797
          %v2402 = vunpack.c.h.b16 %v1797
          %v2403 = vunpack.c.l.b16 %v1798
          %v2404 = vunpack.c.h.b16 %v1798
          %v2405 = vunpack.c.l.b16 %v1799
          %v2406 = vunpack.c.h.b16 %v1799
          %v2407 = vunpack.c.l.b16 %v1800
          %v2408 = vunpack.c.h.b16 %v1800
          %v2409 = vunpack.c.l.b16 %v1801
          %v2410 = vunpack.c.h.b16 %v1801
          %v2411 = vunpack.c.l.b16 %v1802
          %v2412 = vunpack.c.h.b16 %v1802
          %v2413 = vunpack.c.l.b16 %v1803
          %v2414 = vunpack.c.h.b16 %v1803
          %v2415 = vunpack.c.l.b16 %v1804
          %v2416 = vunpack.c.h.b16 %v1804
          %v2417 = vunpack.c.l.b16 %v1805
          %v2418 = vunpack.c.h.b16 %v1805
          %v2419 = vunpack.c.l.b16 %v1806
          %v2420 = vunpack.c.h.b16 %v1806
          %v2421 = vunpack.c.l.b16 %v1807
          %v2422 = vunpack.c.h.b16 %v1807
          %v2423 = vunpack.c.l.b16 %v1808
          %v2424 = vunpack.c.h.b16 %v1808
          %v2425 = vunpack.c.l.b16 %v1809
          %v2426 = vunpack.c.h.b16 %v1809
          %v2427 = vunpack.c.l.b16 %v1810
          %v2428 = vunpack.c.h.b16 %v1810
          %v2429 = vunpack.c.l.b16 %v1811
          %v2430 = vunpack.c.h.b16 %v1811
          %v2431 = vunpack.c.l.b16 %v1812
          %v2432 = vunpack.c.h.b16 %v1812
          %v2433 = vunpack.c.l.b16 %v1813
          %v2434 = vunpack.c.h.b16 %v1813
          %v2435 = vunpack.c.l.b16 %v1814
          %v2436 = vunpack.c.h.b16 %v1814
          %v2437 = vunpack.c.l.b16 %v1815
          %v2438 = vunpack.c.h.b16 %v1815
          %v2439 = vunpack.c.l.b16 %v1816
          %v2440 = vunpack.c.h.b16 %v1816
          %v2441 = vunpack.c.l.b16 %v1817
          %v2442 = vunpack.c.h.b16 %v1817
          %v2443 = vunpack.c.l.b16 %v1818
          %v2444 = vunpack.c.h.b16 %v1818
          %v2445 = vunpack.c.l.b16 %v1819
          %v2446 = vunpack.c.h.b16 %v1819
          %v2447 = vunpack.c.l.b16 %v1820
          %v2448 = vunpack.c.h.b16 %v1820
          %v2449 = vunpack.c.l.b16 %v1821
          %v2450 = vunpack.c.h.b16 %v1821
          %v2451 = vunpack.c.l.b16 %v1822
          %v2452 = vunpack.c.h.b16 %v1822
          %v2453 = vunpack.c.l.b16 %v1823
          %v2454 = vunpack.c.h.b16 %v1823
          %v2455 = vunpack.c.l.b16 %v1824
          %v2456 = vunpack.c.h.b16 %v1824
          %v2457 = vunpack.c.l.b16 %v1825
          %v2458 = vunpack.c.h.b16 %v1825
          %v2459 = vunpack.c.l.b16 %v1826
          %v2460 = vunpack.c.h.b16 %v1826
          %v2461 = vunpack.c.l.b16 %v1827
          %v2462 = vunpack.c.h.b16 %v1827
          %v2463 = vunpack.c.l.b16 %v1828
          %v2464 = vunpack.c.h.b16 %v1828
          %v2465 = vunpack.c.l.b16 %v1829
          %v2466 = vunpack.c.h.b16 %v1829
          %v2467 = vunpack.c.l.b16 %v1830
          %v2468 = vunpack.c.h.b16 %v1830
          %v2469 = vunpack.c.l.b16 %v1831
          %v2470 = vunpack.c.h.b16 %v1831
          %v2471 = vunpack.c.l.b16 %v1832
          %v2472 = vunpack.c.h.b16 %v1832
          %v2473 = vunpack.c.l.b16 %v1833
          %v2474 = vunpack.c.h.b16 %v1833
          %v2475 = vunpack.c.l.b16 %v1834
          %v2476 = vunpack.c.h.b16 %v1834
          %v2477 = vunpack.c.l.b16 %v1835
          %v2478 = vunpack.c.h.b16 %v1835
          %v2479 = vunpack.c.l.b16 %v1836
          %v2480 = vunpack.c.h.b16 %v1836
          %v2481 = vunpack.c.l.b16 %v1837
          %v2482 = vunpack.c.h.b16 %v1837
          %v2483 = vunpack.c.l.b16 %v1838
          %v2484 = vunpack.c.h.b16 %v1838
          %v2485 = vunpack.c.l.b16 %v1839
          %v2486 = vunpack.c.h.b16 %v1839
          %v2487 = vunpack.c.l.b16 %v1840
          %v2488 = vunpack.c.h.b16 %v1840
          %v2489 = vunpack.c.l.b16 %v1841
          %v2490 = vunpack.c.h.b16 %v1841
          %v2491 = vunpack.c.l.b16 %v1842
          %v2492 = vunpack.c.h.b16 %v1842
          %v2493 = vunpack.c.l.b16 %v1843
          %v2494 = vunpack.c.h.b16 %v1843
          %v2495 = vunpack.c.l.b16 %v1844
          %v2496 = vunpack.c.h.b16 %v1844
          %v2497 = vunpack.c.l.b16 %v1845
          %v2498 = vunpack.c.h.b16 %v1845
          %v2499 = vunpack.c.l.b16 %v1846
          %v2500 = vunpack.c.h.b16 %v1846
          %v2501 = vunpack.c.l.b16 %v1847
          %v2502 = vunpack.c.h.b16 %v1847
          %v2503 = vunpack.c.l.b16 %v1848
          %v2504 = vunpack.c.h.b16 %v1848
          %v2505 = vunpack.c.l.b16 %v1849
          %v2506 = vunpack.c.h.b16 %v1849
          %v2507 = vunpack.c.l.b16 %v1850
          %v2508 = vunpack.c.h.b16 %v1850
          %v2509 = vunpack.c.l.b16 %v1851
          %v2510 = vunpack.c.h.b16 %v1851
          %v2511 = vunpack.c.l.b16 %v1852
          %v2512 = vunpack.c.h.b16 %v1852
          %v2513 = vunpack.c.l.b16 %v1853
          %v2514 = vunpack.c.h.b16 %v1853
          %v2515 = vunpack.c.l.b16 %v1854
          %v2516 = vunpack.c.h.b16 %v1854
          %v2517 = vunpack.c.l.b16 %v1855
          %v2518 = vunpack.c.h.b16 %v1855
          %v2519 = vunpack.c.l.b16 %v1856
          %v2520 = vunpack.c.h.b16 %v1856
          %v2521 = vunpack.c.l.b16 %v1857
          %v2522 = vunpack.c.h.b16 %v1857
          %v2523 = vunpack.c.l.b16 %v1858
          %v2524 = vunpack.c.h.b16 %v1858
          %v2525 = vunpack.c.l.b16 %v1859
          %v2526 = vunpack.c.h.b16 %v1859
          %v2527 = vunpack.c.l.b16 %v1860
          %v2528 = vunpack.c.h.b16 %v1860
          %v2529 = vunpack.c.l.b16 %v1861
          %v2530 = vunpack.c.h.b16 %v1861
          %v2531 = vunpack.c.l.b16 %v1862
          %v2532 = vunpack.c.h.b16 %v1862
          %v2533 = vunpack.c.l.b16 %v1863
          %v2534 = vunpack.c.h.b16 %v1863
          %v2535 = vunpack.c.l.b16 %v1864
          %v2536 = vunpack.c.h.b16 %v1864
          %v2537 = vunpack.c.l.b16 %v1865
          %v2538 = vunpack.c.h.b16 %v1865
          %v2539 = vunpack.c.l.b16 %v1866
          %v2540 = vunpack.c.h.b16 %v1866
          %v2541 = vunpack.c.l.b16 %v1867
          %v2542 = vunpack.c.h.b16 %v1867
          %v2543 = vunpack.c.l.b16 %v1868
          %v2544 = vunpack.c.h.b16 %v1868
          %v2545 = vunpack.c.l.b16 %v1869
          %v2546 = vunpack.c.h.b16 %v1869
          %v2547 = vunpack.c.l.b16 %v1870
          %v2548 = vunpack.c.h.b16 %v1870
          %v2549 = vunpack.c.l.b16 %v1871
          %v2550 = vunpack.c.h.b16 %v1871
          %v2551 = vunpack.c.l.b16 %v1872
          %v2552 = vunpack.c.h.b16 %v1872
          %v2553 = vunpack.c.l.b16 %v1873
          %v2554 = vunpack.c.h.b16 %v1873
          %v2555 = vunpack.c.l.b16 %v1874
          %v2556 = vunpack.c.h.b16 %v1874
          %v2557 = vunpack.c.l.b16 %v1875
          %v2558 = vunpack.c.h.b16 %v1875
          %v2559 = vunpack.c.l.b16 %v1876
          %v2560 = vunpack.c.h.b16 %v1876
          %v2561 = vunpack.c.l.b16 %v1877
          %v2562 = vunpack.c.h.b16 %v1877
          %v2563 = vunpack.c.l.b16 %v1878
          %v2564 = vunpack.c.h.b16 %v1878
          %v2565 = vunpack.c.l.b16 %v1879
          %v2566 = vunpack.c.h.b16 %v1879
          %v2567 = vunpack.c.l.b16 %v1880
          %v2568 = vunpack.c.h.b16 %v1880
          %v2569 = vunpack.c.l.b16 %v1881
          %v2570 = vunpack.c.h.b16 %v1881
          %v2571 = vunpack.c.l.b16 %v1882
          %v2572 = vunpack.c.h.b16 %v1882
          %v2573 = vunpack.c.l.b16 %v1883
          %v2574 = vunpack.c.h.b16 %v1883
          %v2575 = vunpack.c.l.b16 %v1884
          %v2576 = vunpack.c.h.b16 %v1884
          %v2577 = vunpack.c.l.b16 %v1885
          %v2578 = vunpack.c.h.b16 %v1885
          %v2579 = vunpack.c.l.b16 %v1886
          %v2580 = vunpack.c.h.b16 %v1886
          %v2581 = vunpack.c.l.b16 %v1887
          %v2582 = vunpack.c.h.b16 %v1887
          %v2583 = vunpack.c.l.b16 %v1888
          %v2584 = vunpack.c.h.b16 %v1888
          %v2585 = vunpack.c.l.b16 %v1889
          %v2586 = vunpack.c.h.b16 %v1889
          %v2587 = vunpack.c.l.b16 %v1890
          %v2588 = vunpack.c.h.b16 %v1890
          %v2589 = vunpack.c.l.b16 %v1891
          %v2590 = vunpack.c.h.b16 %v1891
          %v2591 = vunpack.c.l.b16 %v1892
          %v2592 = vunpack.c.h.b16 %v1892
          %v2593 = vunpack.c.l.b16 %v1893
          %v2594 = vunpack.c.h.b16 %v1893
          %v2595 = vunpack.c.l.b16 %v1894
          %v2596 = vunpack.c.h.b16 %v1894
          %v2597 = vunpack.c.l.b16 %v1895
          %v2598 = vunpack.c.h.b16 %v1895
          %v2599 = vunpack.c.l.b16 %v1896
          %v2600 = vunpack.c.h.b16 %v1896
          %v2601 = vunpack.c.l.b16 %v1897
          %v2602 = vunpack.c.h.b16 %v1897
          %v2603 = vunpack.c.l.b16 %v1898
          %v2604 = vunpack.c.h.b16 %v1898
          %v2605 = vunpack.c.l.b16 %v1899
          %v2606 = vunpack.c.h.b16 %v1899
          %v2607 = vunpack.c.l.b16 %v1900
          %v2608 = vunpack.c.h.b16 %v1900
          %v2609 = vunpack.c.l.b16 %v1901
          %v2610 = vunpack.c.h.b16 %v1901
          %v2611 = vunpack.c.l.b16 %v1902
          %v2612 = vunpack.c.h.b16 %v1902
          %v2613 = vunpack.c.l.b16 %v1903
          %v2614 = vunpack.c.h.b16 %v1903
          %v2615 = vunpack.c.l.b16 %v1904
          %v2616 = vunpack.c.h.b16 %v1904
          %v2617 = vunpack.c.l.b16 %v1905
          %v2618 = vunpack.c.h.b16 %v1905
          %v2619 = vunpack.c.l.b16 %v1906
          %v2620 = vunpack.c.h.b16 %v1906
          %v2621 = vunpack.c.l.b16 %v1907
          %v2622 = vunpack.c.h.b16 %v1907
          %v2623 = vunpack.c.l.b16 %v1908
          %v2624 = vunpack.c.h.b16 %v1908
          %v2625 = vunpack.c.l.b16 %v1909
          %v2626 = vunpack.c.h.b16 %v1909
          %v2627 = vunpack.c.l.b16 %v1910
          %v2628 = vunpack.c.h.b16 %v1910
          %v2629 = vunpack.c.l.b16 %v1911
          %v2630 = vunpack.c.h.b16 %v1911
          %v2631 = vunpack.c.l.b16 %v1912
          %v2632 = vunpack.c.h.b16 %v1912
          %v2633 = vunpack.c.l.b16 %v1913
          %v2634 = vunpack.c.h.b16 %v1913
          %v2635 = vunpack.c.l.b16 %v1914
          %v2636 = vunpack.c.h.b16 %v1914
          %v2637 = vunpack.c.l.b16 %v1915
          %v2638 = vunpack.c.h.b16 %v1915
          %v2639 = vunpack.c.l.b16 %v1916
          %v2640 = vunpack.c.h.b16 %v1916
          %v2641 = vunpack.c.l.b16 %v1917
          %v2642 = vunpack.c.h.b16 %v1917
          %v2643 = vunpack.c.l.b16 %v1918
          %v2644 = vunpack.c.h.b16 %v1918
          %v2645 = vunpack.c.l.b16 %v1919
          %v2646 = vunpack.c.h.b16 %v1919
          %v2647 = vunpack.c.l.b16 %v1920
          %v2648 = vunpack.c.h.b16 %v1920
          %v2649 = vunpack.c.l.b16 %v1921
          %v2650 = vunpack.c.h.b16 %v1921
          %v2651 = vunpack.c.l.b16 %v1922
          %v2652 = vunpack.c.h.b16 %v1922
          %v2653 = vunpack.c.l.b16 %v1923
          %v2654 = vunpack.c.h.b16 %v1923
          %v2655 = vunpack.c.l.b16 %v1924
          %v2656 = vunpack.c.h.b16 %v1924
          %v2657 = vunpack.c.l.b16 %v1925
          %v2658 = vunpack.c.h.b16 %v1925
          %v2659 = vunpack.c.l.b16 %v1926
          %v2660 = vunpack.c.h.b16 %v1926
          %v2661 = vunpack.c.l.b16 %v1927
          %v2662 = vunpack.c.h.b16 %v1927
          %v2663 = vunpack.c.l.b16 %v1928
          %v2664 = vunpack.c.h.b16 %v1928
          %v2665 = vunpack.c.l.b16 %v1929
          %v2666 = vunpack.c.h.b16 %v1929
          %v2667 = vunpack.c.l.b16 %v1930
          %v2668 = vunpack.c.h.b16 %v1930
          %v2669 = vunpack.c.l.b16 %v1931
          %v2670 = vunpack.c.h.b16 %v1931
          %v2671 = vunpack.c.l.b16 %v1932
          %v2672 = vunpack.c.h.b16 %v1932
          %v2673 = vunpack.c.l.b16 %v1933
          %v2674 = vunpack.c.h.b16 %v1933
          %v2675 = vunpack.c.l.b16 %v1934
          %v2676 = vunpack.c.h.b16 %v1934
          %v2677 = vunpack.c.l.b16 %v1935
          %v2678 = vunpack.c.h.b16 %v1935
          %v2679 = vunpack.c.l.b16 %v1936
          %v2680 = vunpack.c.h.b16 %v1936
          %v2681 = vunpack.c.l.b16 %v1937
          %v2682 = vunpack.c.h.b16 %v1937
          %v2683 = vunpack.c.l.b16 %v1938
          %v2684 = vunpack.c.h.b16 %v1938
          %v2685 = vunpack.c.l.b16 %v1939
          %v2686 = vunpack.c.h.b16 %v1939
          %v2687 = vunpack.c.l.b16 %v1940
          %v2688 = vunpack.c.h.b16 %v1940
          %v2689 = vunpack.c.l.b16 %v1941
          %v2690 = vunpack.c.h.b16 %v1941
          %v2691 = vunpack.c.l.b16 %v1942
          %v2692 = vunpack.c.h.b16 %v1942
          %v2693 = vunpack.c.l.b16 %v1943
          %v2694 = vunpack.c.h.b16 %v1943
          %v2695 = vunpack.c.l.b16 %v1944
          %v2696 = vunpack.c.h.b16 %v1944
          %v2697 = vunpack.c.l.b16 %v1945
          %v2698 = vunpack.c.h.b16 %v1945
          %v2699 = vunpack.c.l.b16 %v1946
          %v2700 = vunpack.c.h.b16 %v1946
          %v2701 = vunpack.c.l.b16 %v1947
          %v2702 = vunpack.c.h.b16 %v1947
          %v2703 = vunpack.c.l.b16 %v1948
          %v2704 = vunpack.c.h.b16 %v1948
          %v2705 = vunpack.c.l.b16 %v1949
          %v2706 = vunpack.c.h.b16 %v1949
          %v2707 = vunpack.c.l.b16 %v1950
          %v2708 = vunpack.c.h.b16 %v1950
          %v2709 = vunpack.c.l.b16 %v1951
          %v2710 = vunpack.c.h.b16 %v1951
          %v2711 = vunpack.c.l.b16 %v1952
          %v2712 = vunpack.c.h.b16 %v1952
          %v2713 = vunpack.c.l.b16 %v1953
          %v2714 = vunpack.c.h.b16 %v1953
          %v2715 = vunpack.c.l.b16 %v1954
          %v2716 = vunpack.c.h.b16 %v1954
          %v2717 = vunpack.c.l.b16 %v1955
          %v2718 = vunpack.c.h.b16 %v1955
          %v2719 = vunpack.c.l.b16 %v1956
          %v2720 = vunpack.c.h.b16 %v1956
          %v2721 = vunpack.c.l.b16 %v1957
          %v2722 = vunpack.c.h.b16 %v1957
          %v2723 = vunpack.c.l.b16 %v1958
          %v2724 = vunpack.c.h.b16 %v1958
          %v2725 = vunpack.c.l.b16 %v1959
          %v2726 = vunpack.c.h.b16 %v1959
          %v2727 = vunpack.c.l.b16 %v1960
          %v2728 = vunpack.c.h.b16 %v1960
          %v2729 = vpack.c.b16 %v2225, %v2217
          %v2730 = vpack.c.b16 %v2226, %v2218
          %v2731 = vpack.c.b16 %v2227, %v2219
          %v2732 = vpack.c.b16 %v2228, %v2220
          %v2733 = vpack.c.b16 %v2229, %v2221
          %v2734 = vpack.c.b16 %v2230, %v2222
          %v2735 = vpack.c.b16 %v2231, %v2223
          %v2736 = vpack.c.b16 %v2232, %v2224
          %v2737 = vpack.c.b16 %v2241, %v2233
          %v2738 = vpack.c.b16 %v2242, %v2234
          %v2739 = vpack.c.b16 %v2243, %v2235
          %v2740 = vpack.c.b16 %v2244, %v2236
          %v2741 = vpack.c.b16 %v2245, %v2237
          %v2742 = vpack.c.b16 %v2246, %v2238
          %v2743 = vpack.c.b16 %v2247, %v2239
          %v2744 = vpack.c.b16 %v2248, %v2240
          %v2745 = vpack.c.b16 %v2257, %v2249
          %v2746 = vpack.c.b16 %v2258, %v2250
          %v2747 = vpack.c.b16 %v2259, %v2251
          %v2748 = vpack.c.b16 %v2260, %v2252
          %v2749 = vpack.c.b16 %v2261, %v2253
          %v2750 = vpack.c.b16 %v2262, %v2254
          %v2751 = vpack.c.b16 %v2263, %v2255
          %v2752 = vpack.c.b16 %v2264, %v2256
          %v2753 = vpack.c.b16 %v2273, %v2265
          %v2754 = vpack.c.b16 %v2274, %v2266
          %v2755 = vpack.c.b16 %v2275, %v2267
          %v2756 = vpack.c.b16 %v2276, %v2268
          %v2757 = vpack.c.b16 %v2277, %v2269
          %v2758 = vpack.c.b16 %v2278, %v2270
          %v2759 = vpack.c.b16 %v2279, %v2271
          %v2760 = vpack.c.b16 %v2280, %v2272
          %v2761 = vpack.c.b16 %v2289, %v2281
          %v2762 = vpack.c.b16 %v2290, %v2282
          %v2763 = vpack.c.b16 %v2291, %v2283
          %v2764 = vpack.c.b16 %v2292, %v2284
          %v2765 = vpack.c.b16 %v2293, %v2285
          %v2766 = vpack.c.b16 %v2294, %v2286
          %v2767 = vpack.c.b16 %v2295, %v2287
          %v2768 = vpack.c.b16 %v2296, %v2288
          %v2769 = vpack.c.b16 %v2305, %v2297
          %v2770 = vpack.c.b16 %v2306, %v2298
          %v2771 = vpack.c.b16 %v2307, %v2299
          %v2772 = vpack.c.b16 %v2308, %v2300
          %v2773 = vpack.c.b16 %v2309, %v2301
          %v2774 = vpack.c.b16 %v2310, %v2302
          %v2775 = vpack.c.b16 %v2311, %v2303
          %v2776 = vpack.c.b16 %v2312, %v2304
          %v2777 = vpack.c.b16 %v2321, %v2313
          %v2778 = vpack.c.b16 %v2322, %v2314
          %v2779 = vpack.c.b16 %v2323, %v2315
          %v2780 = vpack.c.b16 %v2324, %v2316
          %v2781 = vpack.c.b16 %v2325, %v2317
          %v2782 = vpack.c.b16 %v2326, %v2318
          %v2783 = vpack.c.b16 %v2327, %v2319
          %v2784 = vpack.c.b16 %v2328, %v2320
          %v2785 = vpack.c.b16 %v2337, %v2329
          %v2786 = vpack.c.b16 %v2338, %v2330
          %v2787 = vpack.c.b16 %v2339, %v2331
          %v2788 = vpack.c.b16 %v2340, %v2332
          %v2789 = vpack.c.b16 %v2341, %v2333
          %v2790 = vpack.c.b16 %v2342, %v2334
          %v2791 = vpack.c.b16 %v2343, %v2335
          %v2792 = vpack.c.b16 %v2344, %v2336
          %v2793 = vpack.c.b16 %v2353, %v2345
          %v2794 = vpack.c.b16 %v2354, %v2346
          %v2795 = vpack.c.b16 %v2355, %v2347
          %v2796 = vpack.c.b16 %v2356, %v2348
          %v2797 = vpack.c.b16 %v2357, %v2349
          %v2798 = vpack.c.b16 %v2358, %v2350
          %v2799 = vpack.c.b16 %v2359, %v2351
          %v2800 = vpack.c.b16 %v2360, %v2352
          %v2801 = vpack.c.b16 %v2369, %v2361
          %v2802 = vpack.c.b16 %v2370, %v2362
          %v2803 = vpack.c.b16 %v2371, %v2363
          %v2804 = vpack.c.b16 %v2372, %v2364
          %v2805 = vpack.c.b16 %v2373, %v2365
          %v2806 = vpack.c.b16 %v2374, %v2366
          %v2807 = vpack.c.b16 %v2375, %v2367
          %v2808 = vpack.c.b16 %v2376, %v2368
          %v2809 = vpack.c.b16 %v2385, %v2377
          %v2810 = vpack.c.b16 %v2386, %v2378
          %v2811 = vpack.c.b16 %v2387, %v2379
          %v2812 = vpack.c.b16 %v2388, %v2380
          %v2813 = vpack.c.b16 %v2389, %v2381
          %v2814 = vpack.c.b16 %v2390, %v2382
          %v2815 = vpack.c.b16 %v2391, %v2383
          %v2816 = vpack.c.b16 %v2392, %v2384
          %v2817 = vpack.c.b16 %v2401, %v2393
          %v2818 = vpack.c.b16 %v2402, %v2394
          %v2819 = vpack.c.b16 %v2403, %v2395
          %v2820 = vpack.c.b16 %v2404, %v2396
          %v2821 = vpack.c.b16 %v2405, %v2397
          %v2822 = vpack.c.b16 %v2406, %v2398
          %v2823 = vpack.c.b16 %v2407, %v2399
          %v2824 = vpack.c.b16 %v2408, %v2400
          %v2825 = vpack.c.b16 %v2417, %v2409
          %v2826 = vpack.c.b16 %v2418, %v2410
          %v2827 = vpack.c.b16 %v2419, %v2411
          %v2828 = vpack.c.b16 %v2420, %v2412
          %v2829 = vpack.c.b16 %v2421, %v2413
          %v2830 = vpack.c.b16 %v2422, %v2414
          %v2831 = vpack.c.b16 %v2423, %v2415
          %v2832 = vpack.c.b16 %v2424, %v2416
          %v2833 = vpack.c.b16 %v2433, %v2425
          %v2834 = vpack.c.b16 %v2434, %v2426
          %v2835 = vpack.c.b16 %v2435, %v2427
          %v2836 = vpack.c.b16 %v2436, %v2428
          %v2837 = vpack.c.b16 %v2437, %v2429
          %v2838 = vpack.c.b16 %v2438, %v2430
          %v2839 = vpack.c.b16 %v2439, %v2431
          %v2840 = vpack.c.b16 %v2440, %v2432
          %v2841 = vpack.c.b16 %v2449, %v2441
          %v2842 = vpack.c.b16 %v2450, %v2442
          %v2843 = vpack.c.b16 %v2451, %v2443
          %v2844 = vpack.c.b16 %v2452, %v2444
          %v2845 = vpack.c.b16 %v2453, %v2445
          %v2846 = vpack.c.b16 %v2454, %v2446
          %v2847 = vpack.c.b16 %v2455, %v2447
          %v2848 = vpack.c.b16 %v2456, %v2448
          %v2849 = vpack.c.b16 %v2465, %v2457
          %v2850 = vpack.c.b16 %v2466, %v2458
          %v2851 = vpack.c.b16 %v2467, %v2459
          %v2852 = vpack.c.b16 %v2468, %v2460
          %v2853 = vpack.c.b16 %v2469, %v2461
          %v2854 = vpack.c.b16 %v2470, %v2462
          %v2855 = vpack.c.b16 %v2471, %v2463
          %v2856 = vpack.c.b16 %v2472, %v2464
          %v2857 = vpack.c.b16 %v2481, %v2473
          %v2858 = vpack.c.b16 %v2482, %v2474
          %v2859 = vpack.c.b16 %v2483, %v2475
          %v2860 = vpack.c.b16 %v2484, %v2476
          %v2861 = vpack.c.b16 %v2485, %v2477
          %v2862 = vpack.c.b16 %v2486, %v2478
          %v2863 = vpack.c.b16 %v2487, %v2479
          %v2864 = vpack.c.b16 %v2488, %v2480
          %v2865 = vpack.c.b16 %v2497, %v2489
          %v2866 = vpack.c.b16 %v2498, %v2490
          %v2867 = vpack.c.b16 %v2499, %v2491
          %v2868 = vpack.c.b16 %v2500, %v2492
          %v2869 = vpack.c.b16 %v2501, %v2493
          %v2870 = vpack.c.b16 %v2502, %v2494
          %v2871 = vpack.c.b16 %v2503, %v2495
          %v2872 = vpack.c.b16 %v2504, %v2496
          %v2873 = vpack.c.b16 %v2513, %v2505
          %v2874 = vpack.c.b16 %v2514, %v2506
          %v2875 = vpack.c.b16 %v2515, %v2507
          %v2876 = vpack.c.b16 %v2516, %v2508
          %v2877 = vpack.c.b16 %v2517, %v2509
          %v2878 = vpack.c.b16 %v2518, %v2510
          %v2879 = vpack.c.b16 %v2519, %v2511
          %v2880 = vpack.c.b16 %v2520, %v2512
          %v2881 = vpack.c.b16 %v2529, %v2521
          %v2882 = vpack.c.b16 %v2530, %v2522
          %v2883 = vpack.c.b16 %v2531, %v2523
          %v2884 = vpack.c.b16 %v2532, %v2524
          %v2885 = vpack.c.b16 %v2533, %v2525
          %v2886 = vpack.c.b16 %v2534, %v2526
          %v2887 = vpack.c.b16 %v2535, %v2527
          %v2888 = vpack.c.b16 %v2536, %v2528
          %v2889 = vpack.c.b16 %v2545, %v2537
          %v2890 = vpack.c.b16 %v2546, %v2538
          %v2891 = vpack.c.b16 %v2547, %v2539
          %v2892 = vpack.c.b16 %v2548, %v2540
          %v2893 = vpack.c.b16 %v2549, %v2541
          %v2894 = vpack.c.b16 %v2550, %v2542
          %v2895 = vpack.c.b16 %v2551, %v2543
          %v2896 = vpack.c.b16 %v2552, %v2544
          %v2897 = vpack.c.b16 %v2561, %v2553
          %v2898 = vpack.c.b16 %v2562, %v2554
          %v2899 = vpack.c.b16 %v2563, %v2555
          %v2900 = vpack.c.b16 %v2564, %v2556
          %v2901 = vpack.c.b16 %v2565, %v2557
          %v2902 = vpack.c.b16 %v2566, %v2558
          %v2903 = vpack.c.b16 %v2567, %v2559
          %v2904 = vpack.c.b16 %v2568, %v2560
          %v2905 = vpack.c.b16 %v2577, %v2569
          %v2906 = vpack.c.b16 %v2578, %v2570
          %v2907 = vpack.c.b16 %v2579, %v2571
          %v2908 = vpack.c.b16 %v2580, %v2572
          %v2909 = vpack.c.b16 %v2581, %v2573
          %v2910 = vpack.c.b16 %v2582, %v2574
          %v2911 = vpack.c.b16 %v2583, %v2575
          %v2912 = vpack.c.b16 %v2584, %v2576
          %v2913 = vpack.c.b16 %v2593, %v2585
          %v2914 = vpack.c.b16 %v2594, %v2586
          %v2915 = vpack.c.b16 %v2595, %v2587
          %v2916 = vpack.c.b16 %v2596, %v2588
          %v2917 = vpack.c.b16 %v2597, %v2589
          %v2918 = vpack.c.b16 %v2598, %v2590
          %v2919 = vpack.c.b16 %v2599, %v2591
          %v2920 = vpack.c.b16 %v2600, %v2592
          %v2921 = vpack.c.b16 %v2609, %v2601
          %v2922 = vpack.c.b16 %v2610, %v2602
          %v2923 = vpack.c.b16 %v2611, %v2603
          %v2924 = vpack.c.b16 %v2612, %v2604
          %v2925 = vpack.c.b16 %v2613, %v2605
          %v2926 = vpack.c.b16 %v2614, %v2606
          %v2927 = vpack.c.b16 %v2615, %v2607
          %v2928 = vpack.c.b16 %v2616, %v2608
          %v2929 = vpack.c.b16 %v2625, %v2617
          %v2930 = vpack.c.b16 %v2626, %v2618
          %v2931 = vpack.c.b16 %v2627, %v2619
          %v2932 = vpack.c.b16 %v2628, %v2620
          %v2933 = vpack.c.b16 %v2629, %v2621
          %v2934 = vpack.c.b16 %v2630, %v2622
          %v2935 = vpack.c.b16 %v2631, %v2623
          %v2936 = vpack.c.b16 %v2632, %v2624
          %v2937 = vpack.c.b16 %v2641, %v2633
          %v2938 = vpack.c.b16 %v2642, %v2634
          %v2939 = vpack.c.b16 %v2643, %v2635
          %v2940 = vpack.c.b16 %v2644, %v2636
          %v2941 = vpack.c.b16 %v2645, %v2637
          %v2942 = vpack.c.b16 %v2646, %v2638
          %v2943 = vpack.c.b16 %v2647, %v2639
          %v2944 = vpack.c.b16 %v2648, %v2640
          %v2945 = vpack.c.b16 %v2657, %v2649
          %v2946 = vpack.c.b16 %v2658, %v2650
          %v2947 = vpack.c.b16 %v2659, %v2651
          %v2948 = vpack.c.b16 %v2660, %v2652
          %v2949 = vpack.c.b16 %v2661, %v2653
          %v2950 = vpack.c.b16 %v2662, %v2654
          %v2951 = vpack.c.b16 %v2663, %v2655
          %v2952 = vpack.c.b16 %v2664, %v2656
          %v2953 = vpack.c.b16 %v2673, %v2665
          %v2954 = vpack.c.b16 %v2674, %v2666
          %v2955 = vpack.c.b16 %v2675, %v2667
          %v2956 = vpack.c.b16 %v2676, %v2668
          %v2957 = vpack.c.b16 %v2677, %v2669
          %v2958 = vpack.c.b16 %v2678, %v2670
          %v2959 = vpack.c.b16 %v2679, %v2671
          %v2960 = vpack.c.b16 %v2680, %v2672
          %v2961 = vpack.c.b16 %v2689, %v2681
          %v2962 = vpack.c.b16 %v2690, %v2682
          %v2963 = vpack.c.b16 %v2691, %v2683
          %v2964 = vpack.c.b16 %v2692, %v2684
          %v2965 = vpack.c.b16 %v2693, %v2685
          %v2966 = vpack.c.b16 %v2694, %v2686
          %v2967 = vpack.c.b16 %v2695, %v2687
          %v2968 = vpack.c.b16 %v2696, %v2688
          %v2969 = vpack.c.b16 %v2705, %v2697
          %v2970 = vpack.c.b16 %v2706, %v2698
          %v2971 = vpack.c.b16 %v2707, %v2699
          %v2972 = vpack.c.b16 %v2708, %v2700
          %v2973 = vpack.c.b16 %v2709, %v2701
          %v2974 = vpack.c.b16 %v2710, %v2702
          %v2975 = vpack.c.b16 %v2711, %v2703
          %v2976 = vpack.c.b16 %v2712, %v2704
          %v2977 = vpack.c.b16 %v2721, %v2713
          %v2978 = vpack.c.b16 %v2722, %v2714
          %v2979 = vpack.c.b16 %v2723, %v2715
          %v2980 = vpack.c.b16 %v2724, %v2716
          %v2981 = vpack.c.b16 %v2725, %v2717
          %v2982 = vpack.c.b16 %v2726, %v2718
          %v2983 = vpack.c.b16 %v2727, %v2719
          %v2984 = vpack.c.b16 %v2728, %v2720
          %3241 = vmatprep.subr.bf16.mxu0 %v2730
          %3242 = vmatpush1.bf16.msra.mxu0 %v2729
          %3243 = vmatprep.subr.bf16.mxu0 %v2738
          %3244 = vmatpush1.bf16.msra.mxu0 %v2737
          %3245 = vmatprep.subr.bf16.mxu0 %v2746
          %3246 = vmatpush1.bf16.msra.mxu0 %v2745
          %3247 = vmatprep.subr.bf16.mxu0 %v2754
          %3248 = vmatpush1.bf16.msra.mxu0 %v2753
          %3249 = vmatprep.subr.bf16.mxu0 %v2762
          %3250 = vmatpush1.bf16.msra.mxu0 %v2761
          %3251 = vmatprep.subr.bf16.mxu0 %v2770
          %3252 = vmatpush1.bf16.msra.mxu0 %v2769
          %3253 = vmatprep.subr.bf16.mxu0 %v2778
          %3254 = vmatpush1.bf16.msra.mxu0 %v2777
          %3255 = vmatprep.subr.bf16.mxu0 %v2786
          %3256 = vmatpush1.bf16.msra.mxu0 %v2785
          %3257 = vmatprep.subr.bf16.mxu0 %v2794
          %3258 = vmatpush1.bf16.msra.mxu0 %v2793
          %3259 = vmatprep.subr.bf16.mxu0 %v2802
          %3260 = vmatpush1.bf16.msra.mxu0 %v2801
          %3261 = vmatprep.subr.bf16.mxu0 %v2810
          %3262 = vmatpush1.bf16.msra.mxu0 %v2809
          %3263 = vmatprep.subr.bf16.mxu0 %v2818
          %3264 = vmatpush1.bf16.msra.mxu0 %v2817
          %3265 = vmatprep.subr.bf16.mxu0 %v2826
          %3266 = vmatpush1.bf16.msra.mxu0 %v2825
          %3267 = vmatprep.subr.bf16.mxu0 %v2834
          %3268 = vmatpush1.bf16.msra.mxu0 %v2833
          %3269 = vmatprep.subr.bf16.mxu0 %v2842
          %3270 = vmatpush1.bf16.msra.mxu0 %v2841
          %3271 = vmatprep.subr.bf16.mxu0 %v2850
          %3272 = vmatpush1.bf16.msra.mxu0 %v2849
          %3273 = vmatprep.mubr.bf16.mxu0 %v1702
          %3274 = vmatmul.mubr.bf16.gmra.mrb[0].mxu0 %v1701
          %v3275 = vpop.f32.mrb[0].mxu0
          %v3276 = vadd.f32 0.0, %v3275
          %v3277 = vpop.f32.mrb[0].mxu0
          %v3278 = vadd.f32 0.0, %v3277
          %v3279 = vpop.f32.mrb[0].mxu0
          %v3280 = vpop.f32.mrb[0].mxu0
          %3281 = vdwg.mxu0
          %3282 = vmatprep.subr.bf16.mxu0 %v2858
          %3283 = vmatpush1.bf16.msra.mxu0 %v2857
          %3284 = vmatprep.subr.bf16.mxu0 %v2866
          %3285 = vmatpush1.bf16.msra.mxu0 %v2865
          %3286 = vmatprep.subr.bf16.mxu0 %v2874
          %3287 = vmatpush1.bf16.msra.mxu0 %v2873
          %3288 = vmatprep.subr.bf16.mxu0 %v2882
          %3289 = vmatpush1.bf16.msra.mxu0 %v2881
          %3290 = vmatprep.subr.bf16.mxu0 %v2890
          %3291 = vmatpush1.bf16.msra.mxu0 %v2889
          %3292 = vmatprep.subr.bf16.mxu0 %v2898
          %3293 = vmatpush1.bf16.msra.mxu0 %v2897
          %3294 = vmatprep.subr.bf16.mxu0 %v2906
          %3295 = vmatpush1.bf16.msra.mxu0 %v2905
          %3296 = vmatprep.subr.bf16.mxu0 %v2914
          %3297 = vmatpush1.bf16.msra.mxu0 %v2913
          %3298 = vmatprep.subr.bf16.mxu0 %v2922
          %3299 = vmatpush1.bf16.msra.mxu0 %v2921
          %3300 = vmatprep.subr.bf16.mxu0 %v2930
          %3301 = vmatpush1.bf16.msra.mxu0 %v2929
          %3302 = vmatprep.subr.bf16.mxu0 %v2938
          %3303 = vmatpush1.bf16.msra.mxu0 %v2937
          %3304 = vmatprep.subr.bf16.mxu0 %v2946
          %3305 = vmatpush1.bf16.msra.mxu0 %v2945
          %3306 = vmatprep.subr.bf16.mxu0 %v2954
          %3307 = vmatpush1.bf16.msra.mxu0 %v2953
          %3308 = vmatprep.subr.bf16.mxu0 %v2962
          %3309 = vmatpush1.bf16.msra.mxu0 %v2961
          %3310 = vmatprep.subr.bf16.mxu0 %v2970
          %3311 = vmatpush1.bf16.msra.mxu0 %v2969
          %3312 = vmatprep.subr.bf16.mxu0 %v2978
          %3313 = vmatpush1.bf16.msra.mxu0 %v2977
          %3314 = vmatprep.mubr.bf16.mxu0 %v1704
          %3315 = vmatmul.mubr.bf16.gmra.mrb[0].mxu0 %v1703
          %v3316 = vpop.f32.mrb[0].mxu0
          %v3317 = vadd.f32 %v3276, %v3316
          %v3318 = vpop.f32.mrb[0].mxu0
          %v3319 = vadd.f32 %v3278, %v3318
          %v3320 = vpop.f32.mrb[0].mxu0
          %v3321 = vpop.f32.mrb[0].mxu0
          %3322 = vdwg.mxu0
          %3323 = vmatprep.subr.bf16.mxu0 %v2732
          %3324 = vmatpush1.bf16.msra.mxu0 %v2731
          %3325 = vmatprep.subr.bf16.mxu0 %v2740
          %3326 = vmatpush1.bf16.msra.mxu0 %v2739
          %3327 = vmatprep.subr.bf16.mxu0 %v2748
          %3328 = vmatpush1.bf16.msra.mxu0 %v2747
          %3329 = vmatprep.subr.bf16.mxu0 %v2756
          %3330 = vmatpush1.bf16.msra.mxu0 %v2755
          %3331 = vmatprep.subr.bf16.mxu0 %v2764
          %3332 = vmatpush1.bf16.msra.mxu0 %v2763
          %3333 = vmatprep.subr.bf16.mxu0 %v2772
          %3334 = vmatpush1.bf16.msra.mxu0 %v2771
          %3335 = vmatprep.subr.bf16.mxu0 %v2780
          %3336 = vmatpush1.bf16.msra.mxu0 %v2779
          %3337 = vmatprep.subr.bf16.mxu0 %v2788
          %3338 = vmatpush1.bf16.msra.mxu0 %v2787
          %3339 = vmatprep.subr.bf16.mxu0 %v2796
          %3340 = vmatpush1.bf16.msra.mxu0 %v2795
          %3341 = vmatprep.subr.bf16.mxu0 %v2804
          %3342 = vmatpush1.bf16.msra.mxu0 %v2803
          %3343 = vmatprep.subr.bf16.mxu0 %v2812
          %3344 = vmatpush1.bf16.msra.mxu0 %v2811
          %3345 = vmatprep.subr.bf16.mxu0 %v2820
          %3346 = vmatpush1.bf16.msra.mxu0 %v2819
          %3347 = vmatprep.subr.bf16.mxu0 %v2828
          %3348 = vmatpush1.bf16.msra.mxu0 %v2827
          %3349 = vmatprep.subr.bf16.mxu0 %v2836
          %3350 = vmatpush1.bf16.msra.mxu0 %v2835
          %3351 = vmatprep.subr.bf16.mxu0 %v2844
          %3352 = vmatpush1.bf16.msra.mxu0 %v2843
          %3353 = vmatprep.subr.bf16.mxu0 %v2852
          %3354 = vmatpush1.bf16.msra.mxu0 %v2851
          %3355 = vmatprep.mubr.bf16.mxu0 %v1702
          %3356 = vmatmul.mubr.bf16.gmra.mrb[0].mxu0 %v1701
          %v3357 = vpop.f32.mrb[0].mxu0
          %v3358 = vadd.f32 0.0, %v3357
          %v3359 = vpop.f32.mrb[0].mxu0
          %v3360 = vadd.f32 0.0, %v3359
          %v3361 = vpop.f32.mrb[0].mxu0
          %v3362 = vpop.f32.mrb[0].mxu0
          %3363 = vdwg.mxu0
          %3364 = vmatprep.subr.bf16.mxu0 %v2860
          %3365 = vmatpush1.bf16.msra.mxu0 %v2859
          %3366 = vmatprep.subr.bf16.mxu0 %v2868
          %3367 = vmatpush1.bf16.msra.mxu0 %v2867
          %3368 = vmatprep.subr.bf16.mxu0 %v2876
          %3369 = vmatpush1.bf16.msra.mxu0 %v2875
          %3370 = vmatprep.subr.bf16.mxu0 %v2884
          %3371 = vmatpush1.bf16.msra.mxu0 %v2883
          %3372 = vmatprep.subr.bf16.mxu0 %v2892
          %3373 = vmatpush1.bf16.msra.mxu0 %v2891
          %3374 = vmatprep.subr.bf16.mxu0 %v2900
          %3375 = vmatpush1.bf16.msra.mxu0 %v2899
          %3376 = vmatprep.subr.bf16.mxu0 %v2908
          %3377 = vmatpush1.bf16.msra.mxu0 %v2907
          %3378 = vmatprep.subr.bf16.mxu0 %v2916
          %3379 = vmatpush1.bf16.msra.mxu0 %v2915
          %3380 = vmatprep.subr.bf16.mxu0 %v2924
          %3381 = vmatpush1.bf16.msra.mxu0 %v2923
          %3382 = vmatprep.subr.bf16.mxu0 %v2932
          %3383 = vmatpush1.bf16.msra.mxu0 %v2931
          %3384 = vmatprep.subr.bf16.mxu0 %v2940
          %3385 = vmatpush1.bf16.msra.mxu0 %v2939
          %3386 = vmatprep.subr.bf16.mxu0 %v2948
          %3387 = vmatpush1.bf16.msra.mxu0 %v2947
          %3388 = vmatprep.subr.bf16.mxu0 %v2956
          %3389 = vmatpush1.bf16.msra.mxu0 %v2955
          %3390 = vmatprep.subr.bf16.mxu0 %v2964
          %3391 = vmatpush1.bf16.msra.mxu0 %v2963
          %3392 = vmatprep.subr.bf16.mxu0 %v2972
          %3393 = vmatpush1.bf16.msra.mxu0 %v2971
          %3394 = vmatprep.subr.bf16.mxu0 %v2980
          %3395 = vmatpush1.bf16.msra.mxu0 %v2979
          %3396 = vmatprep.mubr.bf16.mxu0 %v1704
          %3397 = vmatmul.mubr.bf16.gmra.mrb[0].mxu0 %v1703
          %v3398 = vpop.f32.mrb[0].mxu0
          %v3399 = vadd.f32 %v3358, %v3398
          %v3400 = vpop.f32.mrb[0].mxu0
          %v3401 = vadd.f32 %v3360, %v3400
          %v3402 = vpop.f32.mrb[0].mxu0
          %v3403 = vpop.f32.mrb[0].mxu0
          %3404 = vdwg.mxu0
          %3405 = vmatprep.subr.bf16.mxu0 %v2734
          %3406 = vmatpush1.bf16.msra.mxu0 %v2733
          %3407 = vmatprep.subr.bf16.mxu0 %v2742
          %3408 = vmatpush1.bf16.msra.mxu0 %v2741
          %3409 = vmatprep.subr.bf16.mxu0 %v2750
          %3410 = vmatpush1.bf16.msra.mxu0 %v2749
          %3411 = vmatprep.subr.bf16.mxu0 %v2758
          %3412 = vmatpush1.bf16.msra.mxu0 %v2757
          %3413 = vmatprep.subr.bf16.mxu0 %v2766
          %3414 = vmatpush1.bf16.msra.mxu0 %v2765
          %3415 = vmatprep.subr.bf16.mxu0 %v2774
          %3416 = vmatpush1.bf16.msra.mxu0 %v2773
          %3417 = vmatprep.subr.bf16.mxu0 %v2782
          %3418 = vmatpush1.bf16.msra.mxu0 %v2781
          %3419 = vmatprep.subr.bf16.mxu0 %v2790
          %3420 = vmatpush1.bf16.msra.mxu0 %v2789
          %3421 = vmatprep.subr.bf16.mxu0 %v2798
          %3422 = vmatpush1.bf16.msra.mxu0 %v2797
          %3423 = vmatprep.subr.bf16.mxu0 %v2806
          %3424 = vmatpush1.bf16.msra.mxu0 %v2805
          %3425 = vmatprep.subr.bf16.mxu0 %v2814
          %3426 = vmatpush1.bf16.msra.mxu0 %v2813
          %3427 = vmatprep.subr.bf16.mxu0 %v2822
          %3428 = vmatpush1.bf16.msra.mxu0 %v2821
          %3429 = vmatprep.subr.bf16.mxu0 %v2830
          %3430 = vmatpush1.bf16.msra.mxu0 %v2829
          %3431 = vmatprep.subr.bf16.mxu0 %v2838
          %3432 = vmatpush1.bf16.msra.mxu0 %v2837
          %3433 = vmatprep.subr.bf16.mxu0 %v2846
          %3434 = vmatpush1.bf16.msra.mxu0 %v2845
          %3435 = vmatprep.subr.bf16.mxu0 %v2854
          %3436 = vmatpush1.bf16.msra.mxu0 %v2853
          %3437 = vmatprep.mubr.bf16.mxu0 %v1702
          %3438 = vmatmul.mubr.bf16.gmra.mrb[0].mxu0 %v1701
          %v3439 = vpop.f32.mrb[0].mxu0
          %v3440 = vadd.f32 0.0, %v3439
          %v3441 = vpop.f32.mrb[0].mxu0
          %v3442 = vadd.f32 0.0, %v3441
          %v3443 = vpop.f32.mrb[0].mxu0
          %v3444 = vpop.f32.mrb[0].mxu0
          %3445 = vdwg.mxu0
          %3446 = vmatprep.subr.bf16.mxu0 %v2862
          %3447 = vmatpush1.bf16.msra.mxu0 %v2861
          %3448 = vmatprep.subr.bf16.mxu0 %v2870
          %3449 = vmatpush1.bf16.msra.mxu0 %v2869
          %3450 = vmatprep.subr.bf16.mxu0 %v2878
          %3451 = vmatpush1.bf16.msra.mxu0 %v2877
          %3452 = vmatprep.subr.bf16.mxu0 %v2886
          %3453 = vmatpush1.bf16.msra.mxu0 %v2885
          %3454 = vmatprep.subr.bf16.mxu0 %v2894
          %3455 = vmatpush1.bf16.msra.mxu0 %v2893
          %3456 = vmatprep.subr.bf16.mxu0 %v2902
          %3457 = vmatpush1.bf16.msra.mxu0 %v2901
          %3458 = vmatprep.subr.bf16.mxu0 %v2910
          %3459 = vmatpush1.bf16.msra.mxu0 %v2909
          %3460 = vmatprep.subr.bf16.mxu0 %v2918
          %3461 = vmatpush1.bf16.msra.mxu0 %v2917
          %3462 = vmatprep.subr.bf16.mxu0 %v2926
          %3463 = vmatpush1.bf16.msra.mxu0 %v2925
          %3464 = vmatprep.subr.bf16.mxu0 %v2934
          %3465 = vmatpush1.bf16.msra.mxu0 %v2933
          %3466 = vmatprep.subr.bf16.mxu0 %v2942
          %3467 = vmatpush1.bf16.msra.mxu0 %v2941
          %3468 = vmatprep.subr.bf16.mxu0 %v2950
          %3469 = vmatpush1.bf16.msra.mxu0 %v2949
          %3470 = vmatprep.subr.bf16.mxu0 %v2958
          %3471 = vmatpush1.bf16.msra.mxu0 %v2957
          %3472 = vmatprep.subr.bf16.mxu0 %v2966
          %3473 = vmatpush1.bf16.msra.mxu0 %v2965
          %3474 = vmatprep.subr.bf16.mxu0 %v2974
          %3475 = vmatpush1.bf16.msra.mxu0 %v2973
          %3476 = vmatprep.subr.bf16.mxu0 %v2982
          %3477 = vmatpush1.bf16.msra.mxu0 %v2981
          %3478 = vmatprep.mubr.bf16.mxu0 %v1704
          %3479 = vmatmul.mubr.bf16.gmra.mrb[0].mxu0 %v1703
          %v3480 = vpop.f32.mrb[0].mxu0
          %v3481 = vadd.f32 %v3440, %v3480
          %v3482 = vpop.f32.mrb[0].mxu0
          %v3483 = vadd.f32 %v3442, %v3482
          %v3484 = vpop.f32.mrb[0].mxu0
          %v3485 = vpop.f32.mrb[0].mxu0
          %3486 = vdwg.mxu0
          %3487 = vmatprep.subr.bf16.mxu0 %v2736
          %3488 = vmatpush1.bf16.msra.mxu0 %v2735
          %3489 = vmatprep.subr.bf16.mxu0 %v2744
          %3490 = vmatpush1.bf16.msra.mxu0 %v2743
          %3491 = vmatprep.subr.bf16.mxu0 %v2752
          %3492 = vmatpush1.bf16.msra.mxu0 %v2751
          %3493 = vmatprep.subr.bf16.mxu0 %v2760
          %3494 = vmatpush1.bf16.msra.mxu0 %v2759
          %3495 = vmatprep.subr.bf16.mxu0 %v2768
          %3496 = vmatpush1.bf16.msra.mxu0 %v2767
          %3497 = vmatprep.subr.bf16.mxu0 %v2776
          %3498 = vmatpush1.bf16.msra.mxu0 %v2775
          %3499 = vmatprep.subr.bf16.mxu0 %v2784
          %3500 = vmatpush1.bf16.msra.mxu0 %v2783
          %3501 = vmatprep.subr.bf16.mxu0 %v2792
          %3502 = vmatpush1.bf16.msra.mxu0 %v2791
          %3503 = vmatprep.subr.bf16.mxu0 %v2800
          %3504 = vmatpush1.bf16.msra.mxu0 %v2799
          %3505 = vmatprep.subr.bf16.mxu0 %v2808
          %3506 = vmatpush1.bf16.msra.mxu0 %v2807
          %3507 = vmatprep.subr.bf16.mxu0 %v2816
          %3508 = vmatpush1.bf16.msra.mxu0 %v2815
          %3509 = vmatprep.subr.bf16.mxu0 %v2824
          %3510 = vmatpush1.bf16.msra.mxu0 %v2823
          %3511 = vmatprep.subr.bf16.mxu0 %v2832
          %3512 = vmatpush1.bf16.msra.mxu0 %v2831
          %3513 = vmatprep.subr.bf16.mxu0 %v2840
          %3514 = vmatpush1.bf16.msra.mxu0 %v2839
          %3515 = vmatprep.subr.bf16.mxu0 %v2848
          %3516 = vmatpush1.bf16.msra.mxu0 %v2847
          %3517 = vmatprep.subr.bf16.mxu0 %v2856
          %3518 = vmatpush1.bf16.msra.mxu0 %v2855
          %3519 = vmatprep.mubr.bf16.mxu0 %v1702
          %3520 = vmatmul.mubr.bf16.gmra.mrb[0].mxu0 %v1701
          %v3521 = vpop.f32.mrb[0].mxu0
          %v3522 = vadd.f32 0.0, %v3521
          %v3523 = vpop.f32.mrb[0].mxu0
          %v3524 = vadd.f32 0.0, %v3523
          %v3525 = vpop.f32.mrb[0].mxu0
          %v3526 = vpop.f32.mrb[0].mxu0
          %3527 = vdwg.mxu0
          %3528 = vmatprep.subr.bf16.mxu0 %v2864
          %3529 = vmatpush1.bf16.msra.mxu0 %v2863
          %3530 = vmatprep.subr.bf16.mxu0 %v2872
          %3531 = vmatpush1.bf16.msra.mxu0 %v2871
          %3532 = vmatprep.subr.bf16.mxu0 %v2880
          %3533 = vmatpush1.bf16.msra.mxu0 %v2879
          %3534 = vmatprep.subr.bf16.mxu0 %v2888
          %3535 = vmatpush1.bf16.msra.mxu0 %v2887
          %3536 = vmatprep.subr.bf16.mxu0 %v2896
          %3537 = vmatpush1.bf16.msra.mxu0 %v2895
          %3538 = vmatprep.subr.bf16.mxu0 %v2904
          %3539 = vmatpush1.bf16.msra.mxu0 %v2903
          %3540 = vmatprep.subr.bf16.mxu0 %v2912
          %3541 = vmatpush1.bf16.msra.mxu0 %v2911
          %3542 = vmatprep.subr.bf16.mxu0 %v2920
          %3543 = vmatpush1.bf16.msra.mxu0 %v2919
          %3544 = vmatprep.subr.bf16.mxu0 %v2928
          %3545 = vmatpush1.bf16.msra.mxu0 %v2927
          %3546 = vmatprep.subr.bf16.mxu0 %v2936
          %3547 = vmatpush1.bf16.msra.mxu0 %v2935
          %3548 = vmatprep.subr.bf16.mxu0 %v2944
          %3549 = vmatpush1.bf16.msra.mxu0 %v2943
          %3550 = vmatprep.subr.bf16.mxu0 %v2952
          %3551 = vmatpush1.bf16.msra.mxu0 %v2951
          %3552 = vmatprep.subr.bf16.mxu0 %v2960
          %3553 = vmatpush1.bf16.msra.mxu0 %v2959
          %3554 = vmatprep.subr.bf16.mxu0 %v2968
          %3555 = vmatpush1.bf16.msra.mxu0 %v2967
          %3556 = vmatprep.subr.bf16.mxu0 %v2976
          %3557 = vmatpush1.bf16.msra.mxu0 %v2975
          %3558 = vmatprep.subr.bf16.mxu0 %v2984
          %3559 = vmatpush1.bf16.msra.mxu0 %v2983
          %3560 = vmatprep.mubr.bf16.mxu0 %v1704
          %3561 = vmatmul.mubr.bf16.gmra.mrb[0].mxu0 %v1703
          %v3562 = vpop.f32.mrb[0].mxu0
          %v3563 = vadd.f32 %v3522, %v3562
          %v3564 = vpop.f32.mrb[0].mxu0
          %v3565 = vadd.f32 %v3524, %v3564
          %v3566 = vpop.f32.mrb[0].mxu0
          %v3567 = vpop.f32.mrb[0].mxu0
          %3568 = vdwg.mxu0
          %v3569 = vmul.f32 %v3317, %v752
          %v3570 = vmul.f32 %v3319, %v752
          %v3571 = vmul.f32 %v3399, %v752
          %v3572 = vmul.f32 %v3401, %v752
          %v3573 = vmul.f32 %v3481, %v752
          %v3574 = vmul.f32 %v3483, %v752
          %v3575 = vmul.f32 %v3563, %v752
          %v3576 = vmul.f32 %v3565, %v752
          %v3577 = vrot.slane %v3569, 4
          %v3578 = vadd.f32 %v3569, %v3577
          %v3579 = vrot.slane %v3578, 2
          %v3580 = vadd.f32 %v3578, %v3579
          %v3581 = vrot.slane %v3580, 1
          %v3582 = vadd.f32 %v3580, %v3581
          %v3583 = vrot.slane %v3570, 4
          %v3584 = vadd.f32 %v3570, %v3583
          %v3585 = vrot.slane %v3584, 2
          %v3586 = vadd.f32 %v3584, %v3585
          %v3587 = vrot.slane %v3586, 1
          %v3588 = vadd.f32 %v3586, %v3587
          %v3589 = vrot.slane %v3571, 4
          %v3590 = vadd.f32 %v3571, %v3589
          %v3591 = vrot.slane %v3590, 2
          %v3592 = vadd.f32 %v3590, %v3591
          %v3593 = vrot.slane %v3592, 1
          %v3594 = vadd.f32 %v3592, %v3593
          %v3595 = vrot.slane %v3572, 4
          %v3596 = vadd.f32 %v3572, %v3595
          %v3597 = vrot.slane %v3596, 2
          %v3598 = vadd.f32 %v3596, %v3597
          %v3599 = vrot.slane %v3598, 1
          %v3600 = vadd.f32 %v3598, %v3599
          %v3601 = vrot.slane %v3573, 4
          %v3602 = vadd.f32 %v3573, %v3601
          %v3603 = vrot.slane %v3602, 2
          %v3604 = vadd.f32 %v3602, %v3603
          %v3605 = vrot.slane %v3604, 1
          %v3606 = vadd.f32 %v3604, %v3605
          %v3607 = vrot.slane %v3574, 4
          %v3608 = vadd.f32 %v3574, %v3607
          %v3609 = vrot.slane %v3608, 2
          %v3610 = vadd.f32 %v3608, %v3609
          %v3611 = vrot.slane %v3610, 1
          %v3612 = vadd.f32 %v3610, %v3611
          %v3613 = vrot.slane %v3575, 4
          %v3614 = vadd.f32 %v3575, %v3613
          %v3615 = vrot.slane %v3614, 2
          %v3616 = vadd.f32 %v3614, %v3615
          %v3617 = vrot.slane %v3616, 1
          %v3618 = vadd.f32 %v3616, %v3617
          %v3619 = vrot.slane %v3576, 4
          %v3620 = vadd.f32 %v3576, %v3619
          %v3621 = vrot.slane %v3620, 2
          %v3622 = vadd.f32 %v3620, %v3621
          %v3623 = vrot.slane %v3622, 1
          %v3624 = vadd.f32 %v3622, %v3623
          %v3625 = vmul.f32 %v3582, %v1022
          %v3626 = vmul.f32 %v3588, %v1022
          %v3627 = vmul.f32 %v3594, %v1022
          %v3628 = vmul.f32 %v3600, %v1022
          %v3629 = vmul.f32 %v3606, %v1022
          %v3630 = vmul.f32 %v3612, %v1022
          %v3631 = vmul.f32 %v3618, %v1022
          %v3632 = vmul.f32 %v3624, %v1022
          %v3633 = vsub.f32 %v3317, %v3625
          %v3634 = vsub.f32 %v3319, %v3626
          %v3635 = vsub.f32 %v3399, %v3627
          %v3636 = vsub.f32 %v3401, %v3628
          %v3637 = vsub.f32 %v3481, %v3629
          %v3638 = vsub.f32 %v3483, %v3630
          %v3639 = vsub.f32 %v3563, %v3631
          %v3640 = vsub.f32 %v3565, %v3632
          %v3641 = vmul.f32 %v3633, %v752
          %v3642 = vmul.f32 %v3634, %v752
          %v3643 = vmul.f32 %v3635, %v752
          %v3644 = vmul.f32 %v3636, %v752
          %v3645 = vmul.f32 %v3637, %v752
          %v3646 = vmul.f32 %v3638, %v752
          %v3647 = vmul.f32 %v3639, %v752
          %v3648 = vmul.f32 %v3640, %v752
          %v3649 = vmul.f32 %v3641, %v3641
          %v3650 = vmul.f32 %v3642, %v3642
          %v3651 = vmul.f32 %v3643, %v3643
          %v3652 = vmul.f32 %v3644, %v3644
          %v3653 = vmul.f32 %v3645, %v3645
          %v3654 = vmul.f32 %v3646, %v3646
          %v3655 = vmul.f32 %v3647, %v3647
          %v3656 = vmul.f32 %v3648, %v3648
          %v3657 = vrot.slane %v3649, 4
          %v3658 = vadd.f32 %v3649, %v3657
          %v3659 = vrot.slane %v3658, 2
          %v3660 = vadd.f32 %v3658, %v3659
          %v3661 = vrot.slane %v3660, 1
          %v3662 = vadd.f32 %v3660, %v3661
          %v3663 = vrot.slane %v3650, 4
          %v3664 = vadd.f32 %v3650, %v3663
          %v3665 = vrot.slane %v3664, 2
          %v3666 = vadd.f32 %v3664, %v3665
          %v3667 = vrot.slane %v3666, 1
          %v3668 = vadd.f32 %v3666, %v3667
          %v3669 = vrot.slane %v3651, 4
          %v3670 = vadd.f32 %v3651, %v3669
          %v3671 = vrot.slane %v3670, 2
          %v3672 = vadd.f32 %v3670, %v3671
          %v3673 = vrot.slane %v3672, 1
          %v3674 = vadd.f32 %v3672, %v3673
          %v3675 = vrot.slane %v3652, 4
          %v3676 = vadd.f32 %v3652, %v3675
          %v3677 = vrot.slane %v3676, 2
          %v3678 = vadd.f32 %v3676, %v3677
          %v3679 = vrot.slane %v3678, 1
          %v3680 = vadd.f32 %v3678, %v3679
          %v3681 = vrot.slane %v3653, 4
          %v3682 = vadd.f32 %v3653, %v3681
          %v3683 = vrot.slane %v3682, 2
          %v3684 = vadd.f32 %v3682, %v3683
          %v3685 = vrot.slane %v3684, 1
          %v3686 = vadd.f32 %v3684, %v3685
          %v3687 = vrot.slane %v3654, 4
          %v3688 = vadd.f32 %v3654, %v3687
          %v3689 = vrot.slane %v3688, 2
          %v3690 = vadd.f32 %v3688, %v3689
          %v3691 = vrot.slane %v3690, 1
          %v3692 = vadd.f32 %v3690, %v3691
          %v3693 = vrot.slane %v3655, 4
          %v3694 = vadd.f32 %v3655, %v3693
          %v3695 = vrot.slane %v3694, 2
          %v3696 = vadd.f32 %v3694, %v3695
          %v3697 = vrot.slane %v3696, 1
          %v3698 = vadd.f32 %v3696, %v3697
          %v3699 = vrot.slane %v3656, 4
          %v3700 = vadd.f32 %v3656, %v3699
          %v3701 = vrot.slane %v3700, 2
          %v3702 = vadd.f32 %v3700, %v3701
          %v3703 = vrot.slane %v3702, 1
          %v3704 = vadd.f32 %v3702, %v3703
          %v3705 = vmul.f32 %v3662, %v1022
          %v3706 = vmul.f32 %v3668, %v1022
          %v3707 = vmul.f32 %v3674, %v1022
          %v3708 = vmul.f32 %v3680, %v1022
          %v3709 = vmul.f32 %v3686, %v1022
          %v3710 = vmul.f32 %v3692, %v1022
          %v3711 = vmul.f32 %v3698, %v1022
          %v3712 = vmul.f32 %v3704, %v1022
          %v3713 = vadd.f32 %v3705, 0.8
          %v3714 = vadd.f32 %v3706, 0.8
          %v3715 = vadd.f32 %v3707, 0.8
          %v3716 = vadd.f32 %v3708, 0.8
          %v3717 = vadd.f32 %v3709, 0.8
          %v3718 = vadd.f32 %v3710, 0.8
          %v3719 = vadd.f32 %v3711, 0.8
          %v3720 = vadd.f32 %v3712, 0.8
          %v3721 = vrsqrt.pop %v3713
          %v3722 = vrsqrt.pop %v3714
          %v3723 = vrsqrt.pop %v3715
          %v3724 = vrsqrt.pop %v3716
          %v3725 = vrsqrt.pop %v3717
          %v3726 = vrsqrt.pop %v3718
          %v3727 = vrsqrt.pop %v3719
          %v3728 = vrsqrt.pop %v3720
          %v3729 = vmul.f32 %v3633, %v3721
          %v3730 = vmul.f32 %v3634, %v3722
          %v3731 = vmul.f32 %v3635, %v3723
          %v3732 = vmul.f32 %v3636, %v3724
          %v3733 = vmul.f32 %v3637, %v3725
          %v3734 = vmul.f32 %v3638, %v3726
          %v3735 = vmul.f32 %v3639, %v3727
          %v3736 = vmul.f32 %v3640, %v3728
          %v3737 = vld [vmem:[#allocation19] sm:$0xff]
          %v3739 = vlaneseq
          %v3740 = vshrl.u32 %v3739, 7
          %v3741 = vsub.s32 0, %v3740
          %v3742 = vrot.slane %v3737, %v3741
          %v3743 = vlaneseq
          %v3744 = vshrl.u32 %v3743, 7
          %v3745 = vsub.s32 1, %v3744
          %v3746 = vrot.slane %v3737, %v3745
          %v3747 = vlaneseq
          %v3748 = vshrl.u32 %v3747, 7
          %v3749 = vsub.s32 2, %v3748
          %v3750 = vrot.slane %v3737, %v3749
          %v3751 = vlaneseq
          %v3752 = vshrl.u32 %v3751, 7
          %v3753 = vsub.s32 3, %v3752
          %v3754 = vrot.slane %v3737, %v3753
          %v3755 = vlaneseq
          %v3756 = vshrl.u32 %v3755, 7
          %v3757 = vsub.s32 4, %v3756
          %v3758 = vrot.slane %v3737, %v3757
          %v3759 = vlaneseq
          %v3760 = vshrl.u32 %v3759, 7
          %v3761 = vsub.s32 5, %v3760
          %v3762 = vrot.slane %v3737, %v3761
          %v3763 = vlaneseq
          %v3764 = vshrl.u32 %v3763, 7
          %v3765 = vsub.s32 6, %v3764
          %v3766 = vrot.slane %v3737, %v3765
          %v3767 = vlaneseq
          %v3768 = vshrl.u32 %v3767, 7
          %v3769 = vsub.s32 7, %v3768
          %v3770 = vrot.slane %v3737, %v3769
          %v3779 = vmul.f32 %v3729, %v3742
          %v3780 = vmul.f32 %v3730, %v3746
          %v3781 = vmul.f32 %v3731, %v3750
          %v3782 = vmul.f32 %v3732, %v3754
          %v3783 = vmul.f32 %v3733, %v3758
          %v3784 = vmul.f32 %v3734, %v3762
          %v3785 = vmul.f32 %v3735, %v3766
          %v3786 = vmul.f32 %v3736, %v3770
          %v3787 = vld [vmem:[#allocation21] sm:$0xff]
          %v3789 = vlaneseq
          %v3790 = vshrl.u32 %v3789, 7
          %v3791 = vsub.s32 0, %v3790
          %v3792 = vrot.slane %v3787, %v3791
          %v3793 = vlaneseq
          %v3794 = vshrl.u32 %v3793, 7
          %v3795 = vsub.s32 1, %v3794
          %v3796 = vrot.slane %v3787, %v3795
          %v3797 = vlaneseq
          %v3798 = vshrl.u32 %v3797, 7
          %v3799 = vsub.s32 2, %v3798
          %v3800 = vrot.slane %v3787, %v3799
          %v3801 = vlaneseq
          %v3802 = vshrl.u32 %v3801, 7
          %v3803 = vsub.s32 3, %v3802
          %v3804 = vrot.slane %v3787, %v3803
          %v3805 = vlaneseq
          %v3806 = vshrl.u32 %v3805, 7
          %v3807 = vsub.s32 4, %v3806
          %v3808 = vrot.slane %v3787, %v3807
          %v3809 = vlaneseq
          %v3810 = vshrl.u32 %v3809, 7
          %v3811 = vsub.s32 5, %v3810
          %v3812 = vrot.slane %v3787, %v3811
          %v3813 = vlaneseq
          %v3814 = vshrl.u32 %v3813, 7
          %v3815 = vsub.s32 6, %v3814
          %v3816 = vrot.slane %v3787, %v3815
          %v3817 = vlaneseq
          %v3818 = vshrl.u32 %v3817, 7
          %v3819 = vsub.s32 7, %v3818
          %v3820 = vrot.slane %v3787, %v3819
          %v3829 = vadd.f32 %v3779, %v3792
          %v3830 = vadd.f32 %v3780, %v3796
          %v3831 = vadd.f32 %v3781, %v3800
          %v3832 = vadd.f32 %v3782, %v3804
          %v3833 = vadd.f32 %v3783, %v3808
          %v3834 = vadd.f32 %v3784, %v3812
          %v3835 = vadd.f32 %v3785, %v3816
          %v3836 = vadd.f32 %v3786, %v3820
          %vm3837 = vcmp.gt.f32.partialorder %v3829, 0.0
          %vm3838 = vcmp.gt.f32.partialorder %v3830, 0.0
          %vm3839 = vcmp.gt.f32.partialorder %v3831, 0.0
          %vm3840 = vcmp.gt.f32.partialorder %v3832, 0.0
          %vm3841 = vcmp.gt.f32.partialorder %v3833, 0.0
          %vm3842 = vcmp.gt.f32.partialorder %v3834, 0.0
          %vm3843 = vcmp.gt.f32.partialorder %v3835, 0.0
          %vm3844 = vcmp.gt.f32.partialorder %v3836, 0.0
          %v3845 = vmul.f32 %v3829, 0.2
          %v3846 = vmul.f32 %v3830, 0.2
          %v3847 = vmul.f32 %v3831, 0.2
          %v3848 = vmul.f32 %v3832, 0.2
          %v3849 = vmul.f32 %v3833, 0.2
          %v3850 = vmul.f32 %v3834, 0.2
          %v3851 = vmul.f32 %v3835, 0.2
          %v3852 = vmul.f32 %v3836, 0.2
          %v3853 = vsel %vm3837, %v3829, %v3845
          %v3854 = vsel %vm3838, %v3830, %v3846
          %v3855 = vsel %vm3839, %v3831, %v3847
          %v3856 = vsel %vm3840, %v3832, %v3848
          %v3857 = vsel %vm3841, %v3833, %v3849
          %v3858 = vsel %vm3842, %v3834, %v3850
          %v3859 = vsel %vm3843, %v3835, %v3851
          %v3860 = vsel %vm3844, %v3836, %v3852
          %v3861 = vpack.c.bf16 %v3853, %v3853
          %v3862 = vpack.c.bf16 %v3854, %v3854
          %v3863 = vpack.c.bf16 %v3855, %v3855
          %v3864 = vpack.c.bf16 %v3856, %v3856
          %v3865 = vpack.c.bf16 %v3857, %v3857
          %v3866 = vpack.c.bf16 %v3858, %v3858
          %v3867 = vpack.c.bf16 %v3859, %v3859
          %v3868 = vpack.c.bf16 %v3860, %v3860
          %v3877 = vunpack.c.l.b16 %v3861
          %v3878 = vunpack.c.l.b16 %v3862
          %v3879 = vunpack.c.l.b16 %v3863
          %v3880 = vunpack.c.l.b16 %v3864
          %v3881 = vunpack.c.l.b16 %v3865
          %v3882 = vunpack.c.l.b16 %v3866
          %v3883 = vunpack.c.l.b16 %v3867
          %v3884 = vunpack.c.l.b16 %v3868
          %v3885 = vpack.c.b16 %v3878, %v3877
          %v3886 = vpack.c.b16 %v3880, %v3879
          %v3887 = vpack.c.b16 %v3882, %v3881
          %v3888 = vpack.c.b16 %v3884, %v3883
          %3893 = vst [vmem:[#allocation2] sm:$0xff] %v3885
          %3894 = vst [vmem:[#allocation2 + $0x8] sm:$0xff] %v3886
          %3895 = vst [vmem:[#allocation2 + $0x10] sm:$0xff] %v3887
          %3896 = vst [vmem:[#allocation2 + $0x18] sm:$0xff] %v3888
        $region140: #{_generator_forward_jit.1} parent=79 // pred_fallthru
          _
        %v3897 = vld [vmem:[%s656] sm:$0xff]
        %v3898 = vld [vmem:[%s656 + $0x8] sm:$0xff]
        %v3899 = vld [vmem:[%s656 + $0x10] sm:$0xff]
        %v3900 = vld [vmem:[%s656 + $0x18] sm:$0xff]
        %v3901 = vld [vmem:[%s656 + $0x20] sm:$0xff]
        %v3902 = vld [vmem:[%s656 + $0x28] sm:$0xff]
        %v3903 = vld [vmem:[%s656 + $0x30] sm:$0xff]
        %v3904 = vld [vmem:[%s656 + $0x38] sm:$0xff]
        %v3905 = vld [vmem:[%s656 + $0x40] sm:$0xff]
        %v3906 = vld [vmem:[%s656 + $0x48] sm:$0xff]
        %v3907 = vld [vmem:[%s656 + $0x50] sm:$0xff]
        %v3908 = vld [vmem:[%s656 + $0x58] sm:$0xff]
        %v3909 = vld [vmem:[%s656 + $0x60] sm:$0xff]
        %v3910 = vld [vmem:[%s656 + $0x68] sm:$0xff]
        %v3911 = vld [vmem:[%s656 + $0x70] sm:$0xff]
        %v3912 = vld [vmem:[%s656 + $0x78] sm:$0xff]
        %v3913 = vld [vmem:[%s656 + $0x80] sm:$0xff]
        %v3914 = vld [vmem:[%s656 + $0x88] sm:$0xff]
        %v3915 = vld [vmem:[%s656 + $0x90] sm:$0xff]
        %v3916 = vld [vmem:[%s656 + $0x98] sm:$0xff]
        %v3917 = vld [vmem:[%s656 + $0xa0] sm:$0xff]
        %v3918 = vld [vmem:[%s656 + $0xa8] sm:$0xff]
        %v3919 = vld [vmem:[%s656 + $0xb0] sm:$0xff]
        %v3920 = vld [vmem:[%s656 + $0xb8] sm:$0xff]
        %v3921 = vld [vmem:[%s656 + $0xc0] sm:$0xff]
        %v3922 = vld [vmem:[%s656 + $0xc8] sm:$0xff]
        %v3923 = vld [vmem:[%s656 + $0xd0] sm:$0xff]
        %v3924 = vld [vmem:[%s656 + $0xd8] sm:$0xff]
        %v3925 = vld [vmem:[%s656 + $0xe0] sm:$0xff]
        %v3926 = vld [vmem:[%s656 + $0xe8] sm:$0xff]
        %v3927 = vld [vmem:[%s656 + $0xf0] sm:$0xff]
        %v3928 = vld [vmem:[%s656 + $0xf8] sm:$0xff]
        %v3929 = vld [vmem:[%s656 + $0x100] sm:$0xff]
        %v3930 = vld [vmem:[%s656 + $0x108] sm:$0xff]
        %v3931 = vld [vmem:[%s656 + $0x110] sm:$0xff]
        %v3932 = vld [vmem:[%s656 + $0x118] sm:$0xff]
        %v3933 = vld [vmem:[%s656 + $0x120] sm:$0xff]
        %v3934 = vld [vmem:[%s656 + $0x128] sm:$0xff]
        %v3935 = vld [vmem:[%s656 + $0x130] sm:$0xff]
        %v3936 = vld [vmem:[%s656 + $0x138] sm:$0xff]
        %v3937 = vld [vmem:[%s656 + $0x140] sm:$0xff]
        %v3938 = vld [vmem:[%s656 + $0x148] sm:$0xff]
        %v3939 = vld [vmem:[%s656 + $0x150] sm:$0xff]
        %v3940 = vld [vmem:[%s656 + $0x158] sm:$0xff]
        %v3941 = vld [vmem:[%s656 + $0x160] sm:$0xff]
        %v3942 = vld [vmem:[%s656 + $0x168] sm:$0xff]
        %v3943 = vld [vmem:[%s656 + $0x170] sm:$0xff]
        %v3944 = vld [vmem:[%s656 + $0x178] sm:$0xff]
        %v3945 = vld [vmem:[%s656 + $0x180] sm:$0xff]
        %v3946 = vld [vmem:[%s656 + $0x188] sm:$0xff]
        %v3947 = vld [vmem:[%s656 + $0x190] sm:$0xff]
        %v3948 = vld [vmem:[%s656 + $0x198] sm:$0xff]
        %v3949 = vld [vmem:[%s656 + $0x1a0] sm:$0xff]
        %v3950 = vld [vmem:[%s656 + $0x1a8] sm:$0xff]
        %v3951 = vld [vmem:[%s656 + $0x1b0] sm:$0xff]
        %v3952 = vld [vmem:[%s656 + $0x1b8] sm:$0xff]
        %v3953 = vld [vmem:[%s656 + $0x1c0] sm:$0xff]
        %v3954 = vld [vmem:[%s656 + $0x1c8] sm:$0xff]
        %v3955 = vld [vmem:[%s656 + $0x1d0] sm:$0xff]
        %v3956 = vld [vmem:[%s656 + $0x1d8] sm:$0xff]
        %v3957 = vld [vmem:[%s656 + $0x1e0] sm:$0xff]
        %v3958 = vld [vmem:[%s656 + $0x1e8] sm:$0xff]
        %v3959 = vld [vmem:[%s656 + $0x1f0] sm:$0xff]
        %v3960 = vld [vmem:[%s656 + $0x1f8] sm:$0xff]
        %v3961 = vld [vmem:[%s656 + $0x200] sm:$0xff]
        %v3962 = vld [vmem:[%s656 + $0x208] sm:$0xff]
        %v3963 = vld [vmem:[%s656 + $0x210] sm:$0xff]
        %v3964 = vld [vmem:[%s656 + $0x218] sm:$0xff]
        %v3965 = vld [vmem:[%s656 + $0x220] sm:$0xff]
        %v3966 = vld [vmem:[%s656 + $0x228] sm:$0xff]
        %v3967 = vld [vmem:[%s656 + $0x230] sm:$0xff]
        %v3968 = vld [vmem:[%s656 + $0x238] sm:$0xff]
        %v3969 = vld [vmem:[%s656 + $0x240] sm:$0xff]
        %v3970 = vld [vmem:[%s656 + $0x248] sm:$0xff]
        %v3971 = vld [vmem:[%s656 + $0x250] sm:$0xff]
        %v3972 = vld [vmem:[%s656 + $0x258] sm:$0xff]
        %v3973 = vld [vmem:[%s656 + $0x260] sm:$0xff]
        %v3974 = vld [vmem:[%s656 + $0x268] sm:$0xff]
        %v3975 = vld [vmem:[%s656 + $0x270] sm:$0xff]
        %v3976 = vld [vmem:[%s656 + $0x278] sm:$0xff]
        %v3977 = vld [vmem:[%s656 + $0x280] sm:$0xff]
        %v3978 = vld [vmem:[%s656 + $0x288] sm:$0xff]
        %v3979 = vld [vmem:[%s656 + $0x290] sm:$0xff]
        %v3980 = vld [vmem:[%s656 + $0x298] sm:$0xff]
        %v3981 = vld [vmem:[%s656 + $0x2a0] sm:$0xff]
        %v3982 = vld [vmem:[%s656 + $0x2a8] sm:$0xff]
        %v3983 = vld [vmem:[%s656 + $0x2b0] sm:$0xff]
        %v3984 = vld [vmem:[%s656 + $0x2b8] sm:$0xff]
        %v3985 = vld [vmem:[%s656 + $0x2c0] sm:$0xff]
        %v3986 = vld [vmem:[%s656 + $0x2c8] sm:$0xff]
        %v3987 = vld [vmem:[%s656 + $0x2d0] sm:$0xff]
        %v3988 = vld [vmem:[%s656 + $0x2d8] sm:$0xff]
        %v3989 = vld [vmem:[%s656 + $0x2e0] sm:$0xff]
        %v3990 = vld [vmem:[%s656 + $0x2e8] sm:$0xff]
        %v3991 = vld [vmem:[%s656 + $0x2f0] sm:$0xff]
        %v3992 = vld [vmem:[%s656 + $0x2f8] sm:$0xff]
        %v3993 = vld [vmem:[%s656 + $0x300] sm:$0xff]
        %v3994 = vld [vmem:[%s656 + $0x308] sm:$0xff]
        %v3995 = vld [vmem:[%s656 + $0x310] sm:$0xff]
        %v3996 = vld [vmem:[%s656 + $0x318] sm:$0xff]
        %v3997 = vld [vmem:[%s656 + $0x320] sm:$0xff]
        %v3998 = vld [vmem:[%s656 + $0x328] sm:$0xff]
        %v3999 = vld [vmem:[%s656 + $0x330] sm:$0xff]
        %v4000 = vld [vmem:[%s656 + $0x338] sm:$0xff]
        %v4001 = vld [vmem:[%s656 + $0x340] sm:$0xff]
        %v4002 = vld [vmem:[%s656 + $0x348] sm:$0xff]
        %v4003 = vld [vmem:[%s656 + $0x350] sm:$0xff]
        %v4004 = vld [vmem:[%s656 + $0x358] sm:$0xff]
        %v4005 = vld [vmem:[%s656 + $0x360] sm:$0xff]
        %v4006 = vld [vmem:[%s656 + $0x368] sm:$0xff]
        %v4007 = vld [vmem:[%s656 + $0x370] sm:$0xff]
        %v4008 = vld [vmem:[%s656 + $0x378] sm:$0xff]
        %v4009 = vld [vmem:[%s656 + $0x380] sm:$0xff]
        %v4010 = vld [vmem:[%s656 + $0x388] sm:$0xff]
        %v4011 = vld [vmem:[%s656 + $0x390] sm:$0xff]
        %v4012 = vld [vmem:[%s656 + $0x398] sm:$0xff]
        %v4013 = vld [vmem:[%s656 + $0x3a0] sm:$0xff]
        %v4014 = vld [vmem:[%s656 + $0x3a8] sm:$0xff]
        %v4015 = vld [vmem:[%s656 + $0x3b0] sm:$0xff]
        %v4016 = vld [vmem:[%s656 + $0x3b8] sm:$0xff]
        %v4017 = vld [vmem:[%s656 + $0x3c0] sm:$0xff]
        %v4018 = vld [vmem:[%s656 + $0x3c8] sm:$0xff]
        %v4019 = vld [vmem:[%s656 + $0x3d0] sm:$0xff]
        %v4020 = vld [vmem:[%s656 + $0x3d8] sm:$0xff]
        %v4021 = vld [vmem:[%s656 + $0x3e0] sm:$0xff]
        %v4022 = vld [vmem:[%s656 + $0x3e8] sm:$0xff]
        %v4023 = vld [vmem:[%s656 + $0x3f0] sm:$0xff]
        %v4024 = vld [vmem:[%s656 + $0x3f8] sm:$0xff]
        %v4025 = vld [vmem:[%s656 + $0x400] sm:$0xff]
        %v4026 = vld [vmem:[%s656 + $0x408] sm:$0xff]
        %v4027 = vld [vmem:[%s656 + $0x410] sm:$0xff]
        %v4028 = vld [vmem:[%s656 + $0x418] sm:$0xff]
        %v4029 = vld [vmem:[%s656 + $0x420] sm:$0xff]
        %v4030 = vld [vmem:[%s656 + $0x428] sm:$0xff]
        %v4031 = vld [vmem:[%s656 + $0x430] sm:$0xff]
        %v4032 = vld [vmem:[%s656 + $0x438] sm:$0xff]
        %v4033 = vld [vmem:[%s656 + $0x440] sm:$0xff]
        %v4034 = vld [vmem:[%s656 + $0x448] sm:$0xff]
        %v4035 = vld [vmem:[%s656 + $0x450] sm:$0xff]
        %v4036 = vld [vmem:[%s656 + $0x458] sm:$0xff]
        %v4037 = vld [vmem:[%s656 + $0x460] sm:$0xff]
        %v4038 = vld [vmem:[%s656 + $0x468] sm:$0xff]
        %v4039 = vld [vmem:[%s656 + $0x470] sm:$0xff]
        %v4040 = vld [vmem:[%s656 + $0x478] sm:$0xff]
        %v4041 = vld [vmem:[%s656 + $0x480] sm:$0xff]
        %v4042 = vld [vmem:[%s656 + $0x488] sm:$0xff]
        %v4043 = vld [vmem:[%s656 + $0x490] sm:$0xff]
        %v4044 = vld [vmem:[%s656 + $0x498] sm:$0xff]
        %v4045 = vld [vmem:[%s656 + $0x4a0] sm:$0xff]
        %v4046 = vld [vmem:[%s656 + $0x4a8] sm:$0xff]
        %v4047 = vld [vmem:[%s656 + $0x4b0] sm:$0xff]
        %v4048 = vld [vmem:[%s656 + $0x4b8] sm:$0xff]
        %v4049 = vld [vmem:[%s656 + $0x4c0] sm:$0xff]
        %v4050 = vld [vmem:[%s656 + $0x4c8] sm:$0xff]
        %v4051 = vld [vmem:[%s656 + $0x4d0] sm:$0xff]
        %v4052 = vld [vmem:[%s656 + $0x4d8] sm:$0xff]
        %v4053 = vld [vmem:[%s656 + $0x4e0] sm:$0xff]
        %v4054 = vld [vmem:[%s656 + $0x4e8] sm:$0xff]
        %v4055 = vld [vmem:[%s656 + $0x4f0] sm:$0xff]
        %v4056 = vld [vmem:[%s656 + $0x4f8] sm:$0xff]
        %v4057 = vld [vmem:[%s656 + $0x500] sm:$0xff]
        %v4058 = vld [vmem:[%s656 + $0x508] sm:$0xff]
        %v4059 = vld [vmem:[%s656 + $0x510] sm:$0xff]
        %v4060 = vld [vmem:[%s656 + $0x518] sm:$0xff]
        %v4061 = vld [vmem:[%s656 + $0x520] sm:$0xff]
        %v4062 = vld [vmem:[%s656 + $0x528] sm:$0xff]
        %v4063 = vld [vmem:[%s656 + $0x530] sm:$0xff]
        %v4064 = vld [vmem:[%s656 + $0x538] sm:$0xff]
        %v4065 = vld [vmem:[%s656 + $0x540] sm:$0xff]
        %v4066 = vld [vmem:[%s656 + $0x548] sm:$0xff]
        %v4067 = vld [vmem:[%s656 + $0x550] sm:$0xff]
        %v4068 = vld [vmem:[%s656 + $0x558] sm:$0xff]
        %v4069 = vld [vmem:[%s656 + $0x560] sm:$0xff]
        %v4070 = vld [vmem:[%s656 + $0x568] sm:$0xff]
        %v4071 = vld [vmem:[%s656 + $0x570] sm:$0xff]
        %v4072 = vld [vmem:[%s656 + $0x578] sm:$0xff]
        %v4073 = vld [vmem:[%s656 + $0x580] sm:$0xff]
        %v4074 = vld [vmem:[%s656 + $0x588] sm:$0xff]
        %v4075 = vld [vmem:[%s656 + $0x590] sm:$0xff]
        %v4076 = vld [vmem:[%s656 + $0x598] sm:$0xff]
        %v4077 = vld [vmem:[%s656 + $0x5a0] sm:$0xff]
        %v4078 = vld [vmem:[%s656 + $0x5a8] sm:$0xff]
        %v4079 = vld [vmem:[%s656 + $0x5b0] sm:$0xff]
        %v4080 = vld [vmem:[%s656 + $0x5b8] sm:$0xff]
        %v4081 = vld [vmem:[%s656 + $0x5c0] sm:$0xff]
        %v4082 = vld [vmem:[%s656 + $0x5c8] sm:$0xff]
        %v4083 = vld [vmem:[%s656 + $0x5d0] sm:$0xff]
        %v4084 = vld [vmem:[%s656 + $0x5d8] sm:$0xff]
        %v4085 = vld [vmem:[%s656 + $0x5e0] sm:$0xff]
        %v4086 = vld [vmem:[%s656 + $0x5e8] sm:$0xff]
        %v4087 = vld [vmem:[%s656 + $0x5f0] sm:$0xff]
        %v4088 = vld [vmem:[%s656 + $0x5f8] sm:$0xff]
        %v4089 = vld [vmem:[%s656 + $0x600] sm:$0xff]
        %v4090 = vld [vmem:[%s656 + $0x608] sm:$0xff]
        %v4091 = vld [vmem:[%s656 + $0x610] sm:$0xff]
        %v4092 = vld [vmem:[%s656 + $0x618] sm:$0xff]
        %v4093 = vld [vmem:[%s656 + $0x620] sm:$0xff]
        %v4094 = vld [vmem:[%s656 + $0x628] sm:$0xff]
        %v4095 = vld [vmem:[%s656 + $0x630] sm:$0xff]
        %v4096 = vld [vmem:[%s656 + $0x638] sm:$0xff]
        %v4097 = vld [vmem:[%s656 + $0x640] sm:$0xff]
        %v4098 = vld [vmem:[%s656 + $0x648] sm:$0xff]
        %v4099 = vld [vmem:[%s656 + $0x650] sm:$0xff]
        %v4100 = vld [vmem:[%s656 + $0x658] sm:$0xff]
        %v4101 = vld [vmem:[%s656 + $0x660] sm:$0xff]
        %v4102 = vld [vmem:[%s656 + $0x668] sm:$0xff]
        %v4103 = vld [vmem:[%s656 + $0x670] sm:$0xff]
        %v4104 = vld [vmem:[%s656 + $0x678] sm:$0xff]
        %v4105 = vld [vmem:[%s656 + $0x680] sm:$0xff]
        %v4106 = vld [vmem:[%s656 + $0x688] sm:$0xff]
        %v4107 = vld [vmem:[%s656 + $0x690] sm:$0xff]
        %v4108 = vld [vmem:[%s656 + $0x698] sm:$0xff]
        %v4109 = vld [vmem:[%s656 + $0x6a0] sm:$0xff]
        %v4110 = vld [vmem:[%s656 + $0x6a8] sm:$0xff]
        %v4111 = vld [vmem:[%s656 + $0x6b0] sm:$0xff]
        %v4112 = vld [vmem:[%s656 + $0x6b8] sm:$0xff]
        %v4113 = vld [vmem:[%s656 + $0x6c0] sm:$0xff]
        %v4114 = vld [vmem:[%s656 + $0x6c8] sm:$0xff]
        %v4115 = vld [vmem:[%s656 + $0x6d0] sm:$0xff]
        %v4116 = vld [vmem:[%s656 + $0x6d8] sm:$0xff]
        %v4117 = vld [vmem:[%s656 + $0x6e0] sm:$0xff]
        %v4118 = vld [vmem:[%s656 + $0x6e8] sm:$0xff]
        %v4119 = vld [vmem:[%s656 + $0x6f0] sm:$0xff]
        %v4120 = vld [vmem:[%s656 + $0x6f8] sm:$0xff]
        %v4121 = vld [vmem:[%s656 + $0x700] sm:$0xff]
        %v4122 = vld [vmem:[%s656 + $0x708] sm:$0xff]
        %v4123 = vld [vmem:[%s656 + $0x710] sm:$0xff]
        %v4124 = vld [vmem:[%s656 + $0x718] sm:$0xff]
        %v4125 = vld [vmem:[%s656 + $0x720] sm:$0xff]
        %v4126 = vld [vmem:[%s656 + $0x728] sm:$0xff]
        %v4127 = vld [vmem:[%s656 + $0x730] sm:$0xff]
        %v4128 = vld [vmem:[%s656 + $0x738] sm:$0xff]
        %v4129 = vld [vmem:[%s656 + $0x740] sm:$0xff]
        %v4130 = vld [vmem:[%s656 + $0x748] sm:$0xff]
        %v4131 = vld [vmem:[%s656 + $0x750] sm:$0xff]
        %v4132 = vld [vmem:[%s656 + $0x758] sm:$0xff]
        %v4133 = vld [vmem:[%s656 + $0x760] sm:$0xff]
        %v4134 = vld [vmem:[%s656 + $0x768] sm:$0xff]
        %v4135 = vld [vmem:[%s656 + $0x770] sm:$0xff]
        %v4136 = vld [vmem:[%s656 + $0x778] sm:$0xff]
        %v4137 = vld [vmem:[%s656 + $0x780] sm:$0xff]
        %v4138 = vld [vmem:[%s656 + $0x788] sm:$0xff]
        %v4139 = vld [vmem:[%s656 + $0x790] sm:$0xff]
        %v4140 = vld [vmem:[%s656 + $0x798] sm:$0xff]
        %v4141 = vld [vmem:[%s656 + $0x7a0] sm:$0xff]
        %v4142 = vld [vmem:[%s656 + $0x7a8] sm:$0xff]
        %v4143 = vld [vmem:[%s656 + $0x7b0] sm:$0xff]
        %v4144 = vld [vmem:[%s656 + $0x7b8] sm:$0xff]
        %v4145 = vld [vmem:[%s656 + $0x7c0] sm:$0xff]
        %v4146 = vld [vmem:[%s656 + $0x7c8] sm:$0xff]
        %v4147 = vld [vmem:[%s656 + $0x7d0] sm:$0xff]
        %v4148 = vld [vmem:[%s656 + $0x7d8] sm:$0xff]
        %v4149 = vld [vmem:[%s656 + $0x7e0] sm:$0xff]
        %v4150 = vld [vmem:[%s656 + $0x7e8] sm:$0xff]
        %v4151 = vld [vmem:[%s656 + $0x7f0] sm:$0xff]
        %v4152 = vld [vmem:[%s656 + $0x7f8] sm:$0xff]
        %v4153 = vld [vmem:[%s656 + $0x800] sm:$0xff]
        %v4154 = vld [vmem:[%s656 + $0x808] sm:$0xff]
        %v4155 = vld [vmem:[%s656 + $0x810] sm:$0xff]
        %v4156 = vld [vmem:[%s656 + $0x818] sm:$0xff]
        %v4157 = vld [vmem:[%s656 + $0x820] sm:$0xff]
        %v4158 = vld [vmem:[%s656 + $0x828] sm:$0xff]
        %v4159 = vld [vmem:[%s656 + $0x830] sm:$0xff]
        %v4160 = vld [vmem:[%s656 + $0x838] sm:$0xff]
        %v4161 = vld [vmem:[%s656 + $0x840] sm:$0xff]
        %v4162 = vld [vmem:[%s656 + $0x848] sm:$0xff]
        %v4163 = vld [vmem:[%s656 + $0x850] sm:$0xff]
        %v4164 = vld [vmem:[%s656 + $0x858] sm:$0xff]
        %v4165 = vld [vmem:[%s656 + $0x860] sm:$0xff]
        %v4166 = vld [vmem:[%s656 + $0x868] sm:$0xff]
        %v4167 = vld [vmem:[%s656 + $0x870] sm:$0xff]
        %v4168 = vld [vmem:[%s656 + $0x878] sm:$0xff]
        %v4169 = vld [vmem:[%s656 + $0x880] sm:$0xff]
        %v4170 = vld [vmem:[%s656 + $0x888] sm:$0xff]
        %v4171 = vld [vmem:[%s656 + $0x890] sm:$0xff]
        %v4172 = vld [vmem:[%s656 + $0x898] sm:$0xff]
        %v4173 = vld [vmem:[%s656 + $0x8a0] sm:$0xff]
        %v4174 = vld [vmem:[%s656 + $0x8a8] sm:$0xff]
        %v4175 = vld [vmem:[%s656 + $0x8b0] sm:$0xff]
        %v4176 = vld [vmem:[%s656 + $0x8b8] sm:$0xff]
        %v4177 = vld [vmem:[%s656 + $0x8c0] sm:$0xff]
        %v4178 = vld [vmem:[%s656 + $0x8c8] sm:$0xff]
        %v4179 = vld [vmem:[%s656 + $0x8d0] sm:$0xff]
        %v4180 = vld [vmem:[%s656 + $0x8d8] sm:$0xff]
        %v4181 = vld [vmem:[%s656 + $0x8e0] sm:$0xff]
        %v4182 = vld [vmem:[%s656 + $0x8e8] sm:$0xff]
        %v4183 = vld [vmem:[%s656 + $0x8f0] sm:$0xff]
        %v4184 = vld [vmem:[%s656 + $0x8f8] sm:$0xff]
        %v4185 = vld [vmem:[%s656 + $0x900] sm:$0xff]
        %v4186 = vld [vmem:[%s656 + $0x908] sm:$0xff]
        %v4187 = vld [vmem:[%s656 + $0x910] sm:$0xff]
        %v4188 = vld [vmem:[%s656 + $0x918] sm:$0xff]
        %v4189 = vld [vmem:[%s656 + $0x920] sm:$0xff]
        %v4190 = vld [vmem:[%s656 + $0x928] sm:$0xff]
        %v4191 = vld [vmem:[%s656 + $0x930] sm:$0xff]
        %v4192 = vld [vmem:[%s656 + $0x938] sm:$0xff]
        %v4193 = vld [vmem:[%s656 + $0x940] sm:$0xff]
        %v4194 = vld [vmem:[%s656 + $0x948] sm:$0xff]
        %v4195 = vld [vmem:[%s656 + $0x950] sm:$0xff]
        %v4196 = vld [vmem:[%s656 + $0x958] sm:$0xff]
        %v4197 = vld [vmem:[%s656 + $0x960] sm:$0xff]
        %v4198 = vld [vmem:[%s656 + $0x968] sm:$0xff]
        %v4199 = vld [vmem:[%s656 + $0x970] sm:$0xff]
        %v4200 = vld [vmem:[%s656 + $0x978] sm:$0xff]
        %v4201 = vld [vmem:[%s656 + $0x980] sm:$0xff]
        %v4202 = vld [vmem:[%s656 + $0x988] sm:$0xff]
        %v4203 = vld [vmem:[%s656 + $0x990] sm:$0xff]
        %v4204 = vld [vmem:[%s656 + $0x998] sm:$0xff]
        %v4205 = vld [vmem:[%s656 + $0x9a0] sm:$0xff]
        %v4206 = vld [vmem:[%s656 + $0x9a8] sm:$0xff]
        %v4207 = vld [vmem:[%s656 + $0x9b0] sm:$0xff]
        %v4208 = vld [vmem:[%s656 + $0x9b8] sm:$0xff]
        %v4209 = vld [vmem:[%s656 + $0x9c0] sm:$0xff]
        %v4210 = vld [vmem:[%s656 + $0x9c8] sm:$0xff]
        %v4211 = vld [vmem:[%s656 + $0x9d0] sm:$0xff]
        %v4212 = vld [vmem:[%s656 + $0x9d8] sm:$0xff]
        %v4213 = vld [vmem:[%s656 + $0x9e0] sm:$0xff]
        %v4214 = vld [vmem:[%s656 + $0x9e8] sm:$0xff]
        %v4215 = vld [vmem:[%s656 + $0x9f0] sm:$0xff]
        %v4216 = vld [vmem:[%s656 + $0x9f8] sm:$0xff]
        %v4217 = vld [vmem:[%s656 + $0xa00] sm:$0xff]
        %v4218 = vld [vmem:[%s656 + $0xa08] sm:$0xff]
        %v4219 = vld [vmem:[%s656 + $0xa10] sm:$0xff]
        %v4220 = vld [vmem:[%s656 + $0xa18] sm:$0xff]
        %v4221 = vld [vmem:[%s656 + $0xa20] sm:$0xff]
        %v4222 = vld [vmem:[%s656 + $0xa28] sm:$0xff]
        %v4223 = vld [vmem:[%s656 + $0xa30] sm:$0xff]
        %v4224 = vld [vmem:[%s656 + $0xa38] sm:$0xff]
        %v4225 = vld [vmem:[%s656 + $0xa40] sm:$0xff]
        %v4226 = vld [vmem:[%s656 + $0xa48] sm:$0xff]
        %v4227 = vld [vmem:[%s656 + $0xa50] sm:$0xff]
        %v4228 = vld [vmem:[%s656 + $0xa58] sm:$0xff]
        %v4229 = vld [vmem:[%s656 + $0xa60] sm:$0xff]
        %v4230 = vld [vmem:[%s656 + $0xa68] sm:$0xff]
        %v4231 = vld [vmem:[%s656 + $0xa70] sm:$0xff]
        %v4232 = vld [vmem:[%s656 + $0xa78] sm:$0xff]
        %v4233 = vld [vmem:[%s656 + $0xa80] sm:$0xff]
        %v4234 = vld [vmem:[%s656 + $0xa88] sm:$0xff]
        %v4235 = vld [vmem:[%s656 + $0xa90] sm:$0xff]
        %v4236 = vld [vmem:[%s656 + $0xa98] sm:$0xff]
        %v4237 = vld [vmem:[%s656 + $0xaa0] sm:$0xff]
        %v4238 = vld [vmem:[%s656 + $0xaa8] sm:$0xff]
        %v4239 = vld [vmem:[%s656 + $0xab0] sm:$0xff]
        %v4240 = vld [vmem:[%s656 + $0xab8] sm:$0xff]
        %v4241 = vld [vmem:[%s656 + $0xac0] sm:$0xff]
        %v4242 = vld [vmem:[%s656 + $0xac8] sm:$0xff]
        %v4243 = vld [vmem:[%s656 + $0xad0] sm:$0xff]
        %v4244 = vld [vmem:[%s656 + $0xad8] sm:$0xff]
        %v4245 = vld [vmem:[%s656 + $0xae0] sm:$0xff]
        %v4246 = vld [vmem:[%s656 + $0xae8] sm:$0xff]
        %v4247 = vld [vmem:[%s656 + $0xaf0] sm:$0xff]
        %v4248 = vld [vmem:[%s656 + $0xaf8] sm:$0xff]
        %v4249 = vld [vmem:[%s656 + $0xb00] sm:$0xff]
        %v4250 = vld [vmem:[%s656 + $0xb08] sm:$0xff]
        %v4251 = vld [vmem:[%s656 + $0xb10] sm:$0xff]
        %v4252 = vld [vmem:[%s656 + $0xb18] sm:$0xff]
        %v4253 = vld [vmem:[%s656 + $0xb20] sm:$0xff]
        %v4254 = vld [vmem:[%s656 + $0xb28] sm:$0xff]
        %v4255 = vld [vmem:[%s656 + $0xb30] sm:$0xff]
        %v4256 = vld [vmem:[%s656 + $0xb38] sm:$0xff]
        %v4257 = vld [vmem:[%s656 + $0xb40] sm:$0xff]
        %v4258 = vld [vmem:[%s656 + $0xb48] sm:$0xff]
        %v4259 = vld [vmem:[%s656 + $0xb50] sm:$0xff]
        %v4260 = vld [vmem:[%s656 + $0xb58] sm:$0xff]
        %v4261 = vld [vmem:[%s656 + $0xb60] sm:$0xff]
        %v4262 = vld [vmem:[%s656 + $0xb68] sm:$0xff]
        %v4263 = vld [vmem:[%s656 + $0xb70] sm:$0xff]
        %v4264 = vld [vmem:[%s656 + $0xb78] sm:$0xff]
        %v4265 = vld [vmem:[%s656 + $0xb80] sm:$0xff]
        %v4266 = vld [vmem:[%s656 + $0xb88] sm:$0xff]
        %v4267 = vld [vmem:[%s656 + $0xb90] sm:$0xff]
        %v4268 = vld [vmem:[%s656 + $0xb98] sm:$0xff]
        %v4269 = vld [vmem:[%s656 + $0xba0] sm:$0xff]
        %v4270 = vld [vmem:[%s656 + $0xba8] sm:$0xff]
        %v4271 = vld [vmem:[%s656 + $0xbb0] sm:$0xff]
        %v4272 = vld [vmem:[%s656 + $0xbb8] sm:$0xff]
        %v4273 = vld [vmem:[%s656 + $0xbc0] sm:$0xff]
        %v4274 = vld [vmem:[%s656 + $0xbc8] sm:$0xff]
        %v4275 = vld [vmem:[%s656 + $0xbd0] sm:$0xff]
        %v4276 = vld [vmem:[%s656 + $0xbd8] sm:$0xff]
        %v4277 = vld [vmem:[%s656 + $0xbe0] sm:$0xff]
        %v4278 = vld [vmem:[%s656 + $0xbe8] sm:$0xff]
        %v4279 = vld [vmem:[%s656 + $0xbf0] sm:$0xff]
        %v4280 = vld [vmem:[%s656 + $0xbf8] sm:$0xff]
        %v4281 = vld [vmem:[%s656 + $0xc00] sm:$0xff]
        %v4282 = vld [vmem:[%s656 + $0xc08] sm:$0xff]
        %v4283 = vld [vmem:[%s656 + $0xc10] sm:$0xff]
        %v4284 = vld [vmem:[%s656 + $0xc18] sm:$0xff]
        %v4285 = vld [vmem:[%s656 + $0xc20] sm:$0xff]
        %v4286 = vld [vmem:[%s656 + $0xc28] sm:$0xff]
        %v4287 = vld [vmem:[%s656 + $0xc30] sm:$0xff]
        %v4288 = vld [vmem:[%s656 + $0xc38] sm:$0xff]
        %v4289 = vld [vmem:[%s656 + $0xc40] sm:$0xff]
        %v4290 = vld [vmem:[%s656 + $0xc48] sm:$0xff]
        %v4291 = vld [vmem:[%s656 + $0xc50] sm:$0xff]
        %v4292 = vld [vmem:[%s656 + $0xc58] sm:$0xff]
        %v4293 = vld [vmem:[%s656 + $0xc60] sm:$0xff]
        %v4294 = vld [vmem:[%s656 + $0xc68] sm:$0xff]
        %v4295 = vld [vmem:[%s656 + $0xc70] sm:$0xff]
        %v4296 = vld [vmem:[%s656 + $0xc78] sm:$0xff]
        %v4297 = vld [vmem:[%s656 + $0xc80] sm:$0xff]
        %v4298 = vld [vmem:[%s656 + $0xc88] sm:$0xff]
        %v4299 = vld [vmem:[%s656 + $0xc90] sm:$0xff]
        %v4300 = vld [vmem:[%s656 + $0xc98] sm:$0xff]
        %v4301 = vld [vmem:[%s656 + $0xca0] sm:$0xff]
        %v4302 = vld [vmem:[%s656 + $0xca8] sm:$0xff]
        %v4303 = vld [vmem:[%s656 + $0xcb0] sm:$0xff]
        %v4304 = vld [vmem:[%s656 + $0xcb8] sm:$0xff]
        %v4305 = vld [vmem:[%s656 + $0xcc0] sm:$0xff]
        %v4306 = vld [vmem:[%s656 + $0xcc8] sm:$0xff]
        %v4307 = vld [vmem:[%s656 + $0xcd0] sm:$0xff]
        %v4308 = vld [vmem:[%s656 + $0xcd8] sm:$0xff]
        %v4309 = vld [vmem:[%s656 + $0xce0] sm:$0xff]
        %v4310 = vld [vmem:[%s656 + $0xce8] sm:$0xff]
        %v4311 = vld [vmem:[%s656 + $0xcf0] sm:$0xff]
        %v4312 = vld [vmem:[%s656 + $0xcf8] sm:$0xff]
        %v4313 = vld [vmem:[%s656 + $0xd00] sm:$0xff]
        %v4314 = vld [vmem:[%s656 + $0xd08] sm:$0xff]
        %v4315 = vld [vmem:[%s656 + $0xd10] sm:$0xff]
        %v4316 = vld [vmem:[%s656 + $0xd18] sm:$0xff]
        %v4317 = vld [vmem:[%s656 + $0xd20] sm:$0xff]
        %v4318 = vld [vmem:[%s656 + $0xd28] sm:$0xff]
        %v4319 = vld [vmem:[%s656 + $0xd30] sm:$0xff]
        %v4320 = vld [vmem:[%s656 + $0xd38] sm:$0xff]
        %v4321 = vld [vmem:[%s656 + $0xd40] sm:$0xff]
        %v4322 = vld [vmem:[%s656 + $0xd48] sm:$0xff]
        %v4323 = vld [vmem:[%s656 + $0xd50] sm:$0xff]
        %v4324 = vld [vmem:[%s656 + $0xd58] sm:$0xff]
        %v4325 = vld [vmem:[%s656 + $0xd60] sm:$0xff]
        %v4326 = vld [vmem:[%s656 + $0xd68] sm:$0xff]
        %v4327 = vld [vmem:[%s656 + $0xd70] sm:$0xff]
        %v4328 = vld [vmem:[%s656 + $0xd78] sm:$0xff]
        %v4329 = vld [vmem:[%s656 + $0xd80] sm:$0xff]
        %v4330 = vld [vmem:[%s656 + $0xd88] sm:$0xff]
        %v4331 = vld [vmem:[%s656 + $0xd90] sm:$0xff]
        %v4332 = vld [vmem:[%s656 + $0xd98] sm:$0xff]
        %v4333 = vld [vmem:[%s656 + $0xda0] sm:$0xff]
        %v4334 = vld [vmem:[%s656 + $0xda8] sm:$0xff]
        %v4335 = vld [vmem:[%s656 + $0xdb0] sm:$0xff]
        %v4336 = vld [vmem:[%s656 + $0xdb8] sm:$0xff]
        %v4337 = vld [vmem:[%s656 + $0xdc0] sm:$0xff]
        %v4338 = vld [vmem:[%s656 + $0xdc8] sm:$0xff]
        %v4339 = vld [vmem:[%s656 + $0xdd0] sm:$0xff]
        %v4340 = vld [vmem:[%s656 + $0xdd8] sm:$0xff]
        %v4341 = vld [vmem:[%s656 + $0xde0] sm:$0xff]
        %v4342 = vld [vmem:[%s656 + $0xde8] sm:$0xff]
        %v4343 = vld [vmem:[%s656 + $0xdf0] sm:$0xff]
        %v4344 = vld [vmem:[%s656 + $0xdf8] sm:$0xff]
        %v4345 = vld [vmem:[%s656 + $0xe00] sm:$0xff]
        %v4346 = vld [vmem:[%s656 + $0xe08] sm:$0xff]
        %v4347 = vld [vmem:[%s656 + $0xe10] sm:$0xff]
        %v4348 = vld [vmem:[%s656 + $0xe18] sm:$0xff]
        %v4349 = vld [vmem:[%s656 + $0xe20] sm:$0xff]
        %v4350 = vld [vmem:[%s656 + $0xe28] sm:$0xff]
        %v4351 = vld [vmem:[%s656 + $0xe30] sm:$0xff]
        %v4352 = vld [vmem:[%s656 + $0xe38] sm:$0xff]
        %v4353 = vld [vmem:[%s656 + $0xe40] sm:$0xff]
        %v4354 = vld [vmem:[%s656 + $0xe48] sm:$0xff]
        %v4355 = vld [vmem:[%s656 + $0xe50] sm:$0xff]
        %v4356 = vld [vmem:[%s656 + $0xe58] sm:$0xff]
        %v4357 = vld [vmem:[%s656 + $0xe60] sm:$0xff]
        %v4358 = vld [vmem:[%s656 + $0xe68] sm:$0xff]
        %v4359 = vld [vmem:[%s656 + $0xe70] sm:$0xff]
        %v4360 = vld [vmem:[%s656 + $0xe78] sm:$0xff]
        %v4361 = vld [vmem:[%s656 + $0xe80] sm:$0xff]
        %v4362 = vld [vmem:[%s656 + $0xe88] sm:$0xff]
        %v4363 = vld [vmem:[%s656 + $0xe90] sm:$0xff]
        %v4364 = vld [vmem:[%s656 + $0xe98] sm:$0xff]
        %v4365 = vld [vmem:[%s656 + $0xea0] sm:$0xff]
        %v4366 = vld [vmem:[%s656 + $0xea8] sm:$0xff]
        %v4367 = vld [vmem:[%s656 + $0xeb0] sm:$0xff]
        %v4368 = vld [vmem:[%s656 + $0xeb8] sm:$0xff]
        %v4369 = vld [vmem:[%s656 + $0xec0] sm:$0xff]
        %v4370 = vld [vmem:[%s656 + $0xec8] sm:$0xff]
        %v4371 = vld [vmem:[%s656 + $0xed0] sm:$0xff]
        %v4372 = vld [vmem:[%s656 + $0xed8] sm:$0xff]
        %v4373 = vld [vmem:[%s656 + $0xee0] sm:$0xff]
        %v4374 = vld [vmem:[%s656 + $0xee8] sm:$0xff]
        %v4375 = vld [vmem:[%s656 + $0xef0] sm:$0xff]
        %v4376 = vld [vmem:[%s656 + $0xef8] sm:$0xff]
        %v4377 = vld [vmem:[%s656 + $0xf00] sm:$0xff]
        %v4378 = vld [vmem:[%s656 + $0xf08] sm:$0xff]
        %v4379 = vld [vmem:[%s656 + $0xf10] sm:$0xff]
        %v4380 = vld [vmem:[%s656 + $0xf18] sm:$0xff]
        %v4381 = vld [vmem:[%s656 + $0xf20] sm:$0xff]
        %v4382 = vld [vmem:[%s656 + $0xf28] sm:$0xff]
        %v4383 = vld [vmem:[%s656 + $0xf30] sm:$0xff]
        %v4384 = vld [vmem:[%s656 + $0xf38] sm:$0xff]
        %v4385 = vld [vmem:[%s656 + $0xf40] sm:$0xff]
        %v4386 = vld [vmem:[%s656 + $0xf48] sm:$0xff]
        %v4387 = vld [vmem:[%s656 + $0xf50] sm:$0xff]
        %v4388 = vld [vmem:[%s656 + $0xf58] sm:$0xff]
        %v4389 = vld [vmem:[%s656 + $0xf60] sm:$0xff]
        %v4390 = vld [vmem:[%s656 + $0xf68] sm:$0xff]
        %v4391 = vld [vmem:[%s656 + $0xf70] sm:$0xff]
        %v4392 = vld [vmem:[%s656 + $0xf78] sm:$0xff]
        %v4393 = vld [vmem:[%s656 + $0xf80] sm:$0xff]
        %v4394 = vld [vmem:[%s656 + $0xf88] sm:$0xff]
        %v4395 = vld [vmem:[%s656 + $0xf90] sm:$0xff]
        %v4396 = vld [vmem:[%s656 + $0xf98] sm:$0xff]
        %v4397 = vld [vmem:[%s656 + $0xfa0] sm:$0xff]
        %v4398 = vld [vmem:[%s656 + $0xfa8] sm:$0xff]
        %v4399 = vld [vmem:[%s656 + $0xfb0] sm:$0xff]
        %v4400 = vld [vmem:[%s656 + $0xfb8] sm:$0xff]
        %v4401 = vld [vmem:[%s656 + $0xfc0] sm:$0xff]
        %v4402 = vld [vmem:[%s656 + $0xfc8] sm:$0xff]
        %v4403 = vld [vmem:[%s656 + $0xfd0] sm:$0xff]
        %v4404 = vld [vmem:[%s656 + $0xfd8] sm:$0xff]
        %v4405 = vld [vmem:[%s656 + $0xfe0] sm:$0xff]
        %v4406 = vld [vmem:[%s656 + $0xfe8] sm:$0xff]
        %v4407 = vld [vmem:[%s656 + $0xff0] sm:$0xff]
        %v4408 = vld [vmem:[%s656 + $0xff8] sm:$0xff]
        %v4409 = vunpack.c.l.s8.bf16 %v3897
        %v4410 = vunpack.c.l.s8.bf16 %v3898
        %v4411 = vunpack.c.l.s8.bf16 %v3899
        %v4412 = vunpack.c.l.s8.bf16 %v3900
        %v4413 = vunpack.c.l.s8.bf16 %v3901
        %v4414 = vunpack.c.l.s8.bf16 %v3902
        %v4415 = vunpack.c.l.s8.bf16 %v3903
        %v4416 = vunpack.c.l.s8.bf16 %v3904
        %v4417 = vunpack.c.l.s8.bf16 %v3905
        %v4418 = vunpack.c.l.s8.bf16 %v3906
        %v4419 = vunpack.c.l.s8.bf16 %v3907
        %v4420 = vunpack.c.l.s8.bf16 %v3908
        %v4421 = vunpack.c.l.s8.bf16 %v3909
        %v4422 = vunpack.c.l.s8.bf16 %v3910
        %v4423 = vunpack.c.l.s8.bf16 %v3911
        %v4424 = vunpack.c.l.s8.bf16 %v3912
        %v4425 = vunpack.c.h.s8.bf16 %v3897
        %v4426 = vunpack.c.h.s8.bf16 %v3898
        %v4427 = vunpack.c.h.s8.bf16 %v3899
        %v4428 = vunpack.c.h.s8.bf16 %v3900
        %v4429 = vunpack.c.h.s8.bf16 %v3901
        %v4430 = vunpack.c.h.s8.bf16 %v3902
        %v4431 = vunpack.c.h.s8.bf16 %v3903
        %v4432 = vunpack.c.h.s8.bf16 %v3904
        %v4433 = vunpack.c.h.s8.bf16 %v3905
        %v4434 = vunpack.c.h.s8.bf16 %v3906
        %v4435 = vunpack.c.h.s8.bf16 %v3907
        %v4436 = vunpack.c.h.s8.bf16 %v3908
        %v4437 = vunpack.c.h.s8.bf16 %v3909
        %v4438 = vunpack.c.h.s8.bf16 %v3910
        %v4439 = vunpack.c.h.s8.bf16 %v3911
        %v4440 = vunpack.c.h.s8.bf16 %v3912
        %v4441 = vunpack.c.l.s8.bf16 %v3913
        %v4442 = vunpack.c.l.s8.bf16 %v3914
        %v4443 = vunpack.c.l.s8.bf16 %v3915
        %v4444 = vunpack.c.l.s8.bf16 %v3916
        %v4445 = vunpack.c.l.s8.bf16 %v3917
        %v4446 = vunpack.c.l.s8.bf16 %v3918
        %v4447 = vunpack.c.l.s8.bf16 %v3919
        %v4448 = vunpack.c.l.s8.bf16 %v3920
        %v4449 = vunpack.c.l.s8.bf16 %v3921
        %v4450 = vunpack.c.l.s8.bf16 %v3922
        %v4451 = vunpack.c.l.s8.bf16 %v3923
        %v4452 = vunpack.c.l.s8.bf16 %v3924
        %v4453 = vunpack.c.l.s8.bf16 %v3925
        %v4454 = vunpack.c.l.s8.bf16 %v3926
        %v4455 = vunpack.c.l.s8.bf16 %v3927
        %v4456 = vunpack.c.l.s8.bf16 %v3928
        %v4457 = vunpack.c.h.s8.bf16 %v3913
        %v4458 = vunpack.c.h.s8.bf16 %v3914
        %v4459 = vunpack.c.h.s8.bf16 %v3915
        %v4460 = vunpack.c.h.s8.bf16 %v3916
        %v4461 = vunpack.c.h.s8.bf16 %v3917
        %v4462 = vunpack.c.h.s8.bf16 %v3918
        %v4463 = vunpack.c.h.s8.bf16 %v3919
        %v4464 = vunpack.c.h.s8.bf16 %v3920
        %v4465 = vunpack.c.h.s8.bf16 %v3921
        %v4466 = vunpack.c.h.s8.bf16 %v3922
        %v4467 = vunpack.c.h.s8.bf16 %v3923
        %v4468 = vunpack.c.h.s8.bf16 %v3924
        %v4469 = vunpack.c.h.s8.bf16 %v3925
        %v4470 = vunpack.c.h.s8.bf16 %v3926
        %v4471 = vunpack.c.h.s8.bf16 %v3927
        %v4472 = vunpack.c.h.s8.bf16 %v3928
        %v4473 = vunpack.c.l.s8.bf16 %v3929
        %v4474 = vunpack.c.l.s8.bf16 %v3930
        %v4475 = vunpack.c.l.s8.bf16 %v3931
        %v4476 = vunpack.c.l.s8.bf16 %v3932
        %v4477 = vunpack.c.l.s8.bf16 %v3933
        %v4478 = vunpack.c.l.s8.bf16 %v3934
        %v4479 = vunpack.c.l.s8.bf16 %v3935
        %v4480 = vunpack.c.l.s8.bf16 %v3936
        %v4481 = vunpack.c.l.s8.bf16 %v3937
        %v4482 = vunpack.c.l.s8.bf16 %v3938
        %v4483 = vunpack.c.l.s8.bf16 %v3939
        %v4484 = vunpack.c.l.s8.bf16 %v3940
        %v4485 = vunpack.c.l.s8.bf16 %v3941
        %v4486 = vunpack.c.l.s8.bf16 %v3942
        %v4487 = vunpack.c.l.s8.bf16 %v3943
        %v4488 = vunpack.c.l.s8.bf16 %v3944
        %v4489 = vunpack.c.h.s8.bf16 %v3929
        %v4490 = vunpack.c.h.s8.bf16 %v3930
        %v4491 = vunpack.c.h.s8.bf16 %v3931
        %v4492 = vunpack.c.h.s8.bf16 %v3932
        %v4493 = vunpack.c.h.s8.bf16 %v3933
        %v4494 = vunpack.c.h.s8.bf16 %v3934
        %v4495 = vunpack.c.h.s8.bf16 %v3935
        %v4496 = vunpack.c.h.s8.bf16 %v3936
        %v4497 = vunpack.c.h.s8.bf16 %v3937
        %v4498 = vunpack.c.h.s8.bf16 %v3938
        %v4499 = vunpack.c.h.s8.bf16 %v3939
        %v4500 = vunpack.c.h.s8.bf16 %v3940
        %v4501 = vunpack.c.h.s8.bf16 %v3941
        %v4502 = vunpack.c.h.s8.bf16 %v3942
        %v4503 = vunpack.c.h.s8.bf16 %v3943
        %v4504 = vunpack.c.h.s8.bf16 %v3944
        %v4505 = vunpack.c.l.s8.bf16 %v3945
        %v4506 = vunpack.c.l.s8.bf16 %v3946
        %v4507 = vunpack.c.l.s8.bf16 %v3947
        %v4508 = vunpack.c.l.s8.bf16 %v3948
        %v4509 = vunpack.c.l.s8.bf16 %v3949
        %v4510 = vunpack.c.l.s8.bf16 %v3950
        %v4511 = vunpack.c.l.s8.bf16 %v3951
        %v4512 = vunpack.c.l.s8.bf16 %v3952
        %v4513 = vunpack.c.l.s8.bf16 %v3953
        %v4514 = vunpack.c.l.s8.bf16 %v3954
        %v4515 = vunpack.c.l.s8.bf16 %v3955
        %v4516 = vunpack.c.l.s8.bf16 %v3956
        %v4517 = vunpack.c.l.s8.bf16 %v3957
        %v4518 = vunpack.c.l.s8.bf16 %v3958
        %v4519 = vunpack.c.l.s8.bf16 %v3959
        %v4520 = vunpack.c.l.s8.bf16 %v3960
        %v4521 = vunpack.c.h.s8.bf16 %v3945
        %v4522 = vunpack.c.h.s8.bf16 %v3946
        %v4523 = vunpack.c.h.s8.bf16 %v3947
        %v4524 = vunpack.c.h.s8.bf16 %v3948
        %v4525 = vunpack.c.h.s8.bf16 %v3949
        %v4526 = vunpack.c.h.s8.bf16 %v3950
        %v4527 = vunpack.c.h.s8.bf16 %v3951
        %v4528 = vunpack.c.h.s8.bf16 %v3952
        %v4529 = vunpack.c.h.s8.bf16 %v3953
        %v4530 = vunpack.c.h.s8.bf16 %v3954
        %v4531 = vunpack.c.h.s8.bf16 %v3955
        %v4532 = vunpack.c.h.s8.bf16 %v3956
        %v4533 = vunpack.c.h.s8.bf16 %v3957
        %v4534 = vunpack.c.h.s8.bf16 %v3958
        %v4535 = vunpack.c.h.s8.bf16 %v3959
        %v4536 = vunpack.c.h.s8.bf16 %v3960
        %v4537 = vunpack.c.l.s8.bf16 %v3961
        %v4538 = vunpack.c.l.s8.bf16 %v3962
        %v4539 = vunpack.c.l.s8.bf16 %v3963
        %v4540 = vunpack.c.l.s8.bf16 %v3964
        %v4541 = vunpack.c.l.s8.bf16 %v3965
        %v4542 = vunpack.c.l.s8.bf16 %v3966
        %v4543 = vunpack.c.l.s8.bf16 %v3967
        %v4544 = vunpack.c.l.s8.bf16 %v3968
        %v4545 = vunpack.c.l.s8.bf16 %v3969
        %v4546 = vunpack.c.l.s8.bf16 %v3970
        %v4547 = vunpack.c.l.s8.bf16 %v3971
        %v4548 = vunpack.c.l.s8.bf16 %v3972
        %v4549 = vunpack.c.l.s8.bf16 %v3973
        %v4550 = vunpack.c.l.s8.bf16 %v3974
        %v4551 = vunpack.c.l.s8.bf16 %v3975
        %v4552 = vunpack.c.l.s8.bf16 %v3976
        %v4553 = vunpack.c.h.s8.bf16 %v3961
        %v4554 = vunpack.c.h.s8.bf16 %v3962
        %v4555 = vunpack.c.h.s8.bf16 %v3963
        %v4556 = vunpack.c.h.s8.bf16 %v3964
        %v4557 = vunpack.c.h.s8.bf16 %v3965
        %v4558 = vunpack.c.h.s8.bf16 %v3966
        %v4559 = vunpack.c.h.s8.bf16 %v3967
        %v4560 = vunpack.c.h.s8.bf16 %v3968
        %v4561 = vunpack.c.h.s8.bf16 %v3969
        %v4562 = vunpack.c.h.s8.bf16 %v3970
        %v4563 = vunpack.c.h.s8.bf16 %v3971
        %v4564 = vunpack.c.h.s8.bf16 %v3972
        %v4565 = vunpack.c.h.s8.bf16 %v3973
        %v4566 = vunpack.c.h.s8.bf16 %v3974
        %v4567 = vunpack.c.h.s8.bf16 %v3975
        %v4568 = vunpack.c.h.s8.bf16 %v3976
        %v4569 = vunpack.c.l.s8.bf16 %v3977
        %v4570 = vunpack.c.l.s8.bf16 %v3978
        %v4571 = vunpack.c.l.s8.bf16 %v3979
        %v4572 = vunpack.c.l.s8.bf16 %v3980
        %v4573 = vunpack.c.l.s8.bf16 %v3981
        %v4574 = vunpack.c.l.s8.bf16 %v3982
        %v4575 = vunpack.c.l.s8.bf16 %v3983
        %v4576 = vunpack.c.l.s8.bf16 %v3984
        %v4577 = vunpack.c.l.s8.bf16 %v3985
        %v4578 = vunpack.c.l.s8.bf16 %v3986
        %v4579 = vunpack.c.l.s8.bf16 %v3987
        %v4580 = vunpack.c.l.s8.bf16 %v3988
        %v4581 = vunpack.c.l.s8.bf16 %v3989
        %v4582 = vunpack.c.l.s8.bf16 %v3990
        %v4583 = vunpack.c.l.s8.bf16 %v3991
        %v4584 = vunpack.c.l.s8.bf16 %v3992
        %v4585 = vunpack.c.h.s8.bf16 %v3977
        %v4586 = vunpack.c.h.s8.bf16 %v3978
        %v4587 = vunpack.c.h.s8.bf16 %v3979
        %v4588 = vunpack.c.h.s8.bf16 %v3980
        %v4589 = vunpack.c.h.s8.bf16 %v3981
        %v4590 = vunpack.c.h.s8.bf16 %v3982
        %v4591 = vunpack.c.h.s8.bf16 %v3983
        %v4592 = vunpack.c.h.s8.bf16 %v3984
        %v4593 = vunpack.c.h.s8.bf16 %v3985
        %v4594 = vunpack.c.h.s8.bf16 %v3986
        %v4595 = vunpack.c.h.s8.bf16 %v3987
        %v4596 = vunpack.c.h.s8.bf16 %v3988
        %v4597 = vunpack.c.h.s8.bf16 %v3989
        %v4598 = vunpack.c.h.s8.bf16 %v3990
        %v4599 = vunpack.c.h.s8.bf16 %v3991
        %v4600 = vunpack.c.h.s8.bf16 %v3992
        %v4601 = vunpack.c.l.s8.bf16 %v3993
        %v4602 = vunpack.c.l.s8.bf16 %v3994
        %v4603 = vunpack.c.l.s8.bf16 %v3995
        %v4604 = vunpack.c.l.s8.bf16 %v3996
        %v4605 = vunpack.c.l.s8.bf16 %v3997
        %v4606 = vunpack.c.l.s8.bf16 %v3998
        %v4607 = vunpack.c.l.s8.bf16 %v3999
        %v4608 = vunpack.c.l.s8.bf16 %v4000
        %v4609 = vunpack.c.l.s8.bf16 %v4001
        %v4610 = vunpack.c.l.s8.bf16 %v4002
        %v4611 = vunpack.c.l.s8.bf16 %v4003
        %v4612 = vunpack.c.l.s8.bf16 %v4004
        %v4613 = vunpack.c.l.s8.bf16 %v4005
        %v4614 = vunpack.c.l.s8.bf16 %v4006
        %v4615 = vunpack.c.l.s8.bf16 %v4007
        %v4616 = vunpack.c.l.s8.bf16 %v4008
        %v4617 = vunpack.c.h.s8.bf16 %v3993
        %v4618 = vunpack.c.h.s8.bf16 %v3994
        %v4619 = vunpack.c.h.s8.bf16 %v3995
        %v4620 = vunpack.c.h.s8.bf16 %v3996
        %v4621 = vunpack.c.h.s8.bf16 %v3997
        %v4622 = vunpack.c.h.s8.bf16 %v3998
        %v4623 = vunpack.c.h.s8.bf16 %v3999
        %v4624 = vunpack.c.h.s8.bf16 %v4000
        %v4625 = vunpack.c.h.s8.bf16 %v4001
        %v4626 = vunpack.c.h.s8.bf16 %v4002
        %v4627 = vunpack.c.h.s8.bf16 %v4003
        %v4628 = vunpack.c.h.s8.bf16 %v4004
        %v4629 = vunpack.c.h.s8.bf16 %v4005
        %v4630 = vunpack.c.h.s8.bf16 %v4006
        %v4631 = vunpack.c.h.s8.bf16 %v4007
        %v4632 = vunpack.c.h.s8.bf16 %v4008
        %v4633 = vunpack.c.l.s8.bf16 %v4009
        %v4634 = vunpack.c.l.s8.bf16 %v4010
        %v4635 = vunpack.c.l.s8.bf16 %v4011
        %v4636 = vunpack.c.l.s8.bf16 %v4012
        %v4637 = vunpack.c.l.s8.bf16 %v4013
        %v4638 = vunpack.c.l.s8.bf16 %v4014
        %v4639 = vunpack.c.l.s8.bf16 %v4015
        %v4640 = vunpack.c.l.s8.bf16 %v4016
        %v4641 = vunpack.c.l.s8.bf16 %v4017
        %v4642 = vunpack.c.l.s8.bf16 %v4018
        %v4643 = vunpack.c.l.s8.bf16 %v4019
        %v4644 = vunpack.c.l.s8.bf16 %v4020
        %v4645 = vunpack.c.l.s8.bf16 %v4021
        %v4646 = vunpack.c.l.s8.bf16 %v4022
        %v4647 = vunpack.c.l.s8.bf16 %v4023
        %v4648 = vunpack.c.l.s8.bf16 %v4024
        %v4649 = vunpack.c.h.s8.bf16 %v4009
        %v4650 = vunpack.c.h.s8.bf16 %v4010
        %v4651 = vunpack.c.h.s8.bf16 %v4011
        %v4652 = vunpack.c.h.s8.bf16 %v4012
        %v4653 = vunpack.c.h.s8.bf16 %v4013
        %v4654 = vunpack.c.h.s8.bf16 %v4014
        %v4655 = vunpack.c.h.s8.bf16 %v4015
        %v4656 = vunpack.c.h.s8.bf16 %v4016
        %v4657 = vunpack.c.h.s8.bf16 %v4017
        %v4658 = vunpack.c.h.s8.bf16 %v4018
        %v4659 = vunpack.c.h.s8.bf16 %v4019
        %v4660 = vunpack.c.h.s8.bf16 %v4020
        %v4661 = vunpack.c.h.s8.bf16 %v4021
        %v4662 = vunpack.c.h.s8.bf16 %v4022
        %v4663 = vunpack.c.h.s8.bf16 %v4023
        %v4664 = vunpack.c.h.s8.bf16 %v4024
        %v4665 = vunpack.c.l.s8.bf16 %v4025
        %v4666 = vunpack.c.l.s8.bf16 %v4026
        %v4667 = vunpack.c.l.s8.bf16 %v4027
        %v4668 = vunpack.c.l.s8.bf16 %v4028
        %v4669 = vunpack.c.l.s8.bf16 %v4029
        %v4670 = vunpack.c.l.s8.bf16 %v4030
        %v4671 = vunpack.c.l.s8.bf16 %v4031
        %v4672 = vunpack.c.l.s8.bf16 %v4032
        %v4673 = vunpack.c.l.s8.bf16 %v4033
        %v4674 = vunpack.c.l.s8.bf16 %v4034
        %v4675 = vunpack.c.l.s8.bf16 %v4035
        %v4676 = vunpack.c.l.s8.bf16 %v4036
        %v4677 = vunpack.c.l.s8.bf16 %v4037
        %v4678 = vunpack.c.l.s8.bf16 %v4038
        %v4679 = vunpack.c.l.s8.bf16 %v4039
        %v4680 = vunpack.c.l.s8.bf16 %v4040
        %v4681 = vunpack.c.h.s8.bf16 %v4025
        %v4682 = vunpack.c.h.s8.bf16 %v4026
        %v4683 = vunpack.c.h.s8.bf16 %v4027
        %v4684 = vunpack.c.h.s8.bf16 %v4028
        %v4685 = vunpack.c.h.s8.bf16 %v4029
        %v4686 = vunpack.c.h.s8.bf16 %v4030
        %v4687 = vunpack.c.h.s8.bf16 %v4031
        %v4688 = vunpack.c.h.s8.bf16 %v4032
        %v4689 = vunpack.c.h.s8.bf16 %v4033
        %v4690 = vunpack.c.h.s8.bf16 %v4034
        %v4691 = vunpack.c.h.s8.bf16 %v4035
        %v4692 = vunpack.c.h.s8.bf16 %v4036
        %v4693 = vunpack.c.h.s8.bf16 %v4037
        %v4694 = vunpack.c.h.s8.bf16 %v4038
        %v4695 = vunpack.c.h.s8.bf16 %v4039
        %v4696 = vunpack.c.h.s8.bf16 %v4040
        %v4697 = vunpack.c.l.s8.bf16 %v4041
        %v4698 = vunpack.c.l.s8.bf16 %v4042
        %v4699 = vunpack.c.l.s8.bf16 %v4043
        %v4700 = vunpack.c.l.s8.bf16 %v4044
        %v4701 = vunpack.c.l.s8.bf16 %v4045
        %v4702 = vunpack.c.l.s8.bf16 %v4046
        %v4703 = vunpack.c.l.s8.bf16 %v4047
        %v4704 = vunpack.c.l.s8.bf16 %v4048
        %v4705 = vunpack.c.l.s8.bf16 %v4049
        %v4706 = vunpack.c.l.s8.bf16 %v4050
        %v4707 = vunpack.c.l.s8.bf16 %v4051
        %v4708 = vunpack.c.l.s8.bf16 %v4052
        %v4709 = vunpack.c.l.s8.bf16 %v4053
        %v4710 = vunpack.c.l.s8.bf16 %v4054
        %v4711 = vunpack.c.l.s8.bf16 %v4055
        %v4712 = vunpack.c.l.s8.bf16 %v4056
        %v4713 = vunpack.c.h.s8.bf16 %v4041
        %v4714 = vunpack.c.h.s8.bf16 %v4042
        %v4715 = vunpack.c.h.s8.bf16 %v4043
        %v4716 = vunpack.c.h.s8.bf16 %v4044
        %v4717 = vunpack.c.h.s8.bf16 %v4045
        %v4718 = vunpack.c.h.s8.bf16 %v4046
        %v4719 = vunpack.c.h.s8.bf16 %v4047
        %v4720 = vunpack.c.h.s8.bf16 %v4048
        %v4721 = vunpack.c.h.s8.bf16 %v4049
        %v4722 = vunpack.c.h.s8.bf16 %v4050
        %v4723 = vunpack.c.h.s8.bf16 %v4051
        %v4724 = vunpack.c.h.s8.bf16 %v4052
        %v4725 = vunpack.c.h.s8.bf16 %v4053
        %v4726 = vunpack.c.h.s8.bf16 %v4054
        %v4727 = vunpack.c.h.s8.bf16 %v4055
        %v4728 = vunpack.c.h.s8.bf16 %v4056
        %v4729 = vunpack.c.l.s8.bf16 %v4057
        %v4730 = vunpack.c.l.s8.bf16 %v4058
        %v4731 = vunpack.c.l.s8.bf16 %v4059
        %v4732 = vunpack.c.l.s8.bf16 %v4060
        %v4733 = vunpack.c.l.s8.bf16 %v4061
        %v4734 = vunpack.c.l.s8.bf16 %v4062
        %v4735 = vunpack.c.l.s8.bf16 %v4063
        %v4736 = vunpack.c.l.s8.bf16 %v4064
        %v4737 = vunpack.c.l.s8.bf16 %v4065
        %v4738 = vunpack.c.l.s8.bf16 %v4066
        %v4739 = vunpack.c.l.s8.bf16 %v4067
        %v4740 = vunpack.c.l.s8.bf16 %v4068
        %v4741 = vunpack.c.l.s8.bf16 %v4069
        %v4742 = vunpack.c.l.s8.bf16 %v4070
        %v4743 = vunpack.c.l.s8.bf16 %v4071
        %v4744 = vunpack.c.l.s8.bf16 %v4072
        %v4745 = vunpack.c.h.s8.bf16 %v4057
        %v4746 = vunpack.c.h.s8.bf16 %v4058
        %v4747 = vunpack.c.h.s8.bf16 %v4059
        %v4748 = vunpack.c.h.s8.bf16 %v4060
        %v4749 = vunpack.c.h.s8.bf16 %v4061
        %v4750 = vunpack.c.h.s8.bf16 %v4062
        %v4751 = vunpack.c.h.s8.bf16 %v4063
        %v4752 = vunpack.c.h.s8.bf16 %v4064
        %v4753 = vunpack.c.h.s8.bf16 %v4065
        %v4754 = vunpack.c.h.s8.bf16 %v4066
        %v4755 = vunpack.c.h.s8.bf16 %v4067
        %v4756 = vunpack.c.h.s8.bf16 %v4068
        %v4757 = vunpack.c.h.s8.bf16 %v4069
        %v4758 = vunpack.c.h.s8.bf16 %v4070
        %v4759 = vunpack.c.h.s8.bf16 %v4071
        %v4760 = vunpack.c.h.s8.bf16 %v4072
        %v4761 = vunpack.c.l.s8.bf16 %v4073
        %v4762 = vunpack.c.l.s8.bf16 %v4074
        %v4763 = vunpack.c.l.s8.bf16 %v4075
        %v4764 = vunpack.c.l.s8.bf16 %v4076
        %v4765 = vunpack.c.l.s8.bf16 %v4077
        %v4766 = vunpack.c.l.s8.bf16 %v4078
        %v4767 = vunpack.c.l.s8.bf16 %v4079
        %v4768 = vunpack.c.l.s8.bf16 %v4080
        %v4769 = vunpack.c.l.s8.bf16 %v4081
        %v4770 = vunpack.c.l.s8.bf16 %v4082
        %v4771 = vunpack.c.l.s8.bf16 %v4083
        %v4772 = vunpack.c.l.s8.bf16 %v4084
        %v4773 = vunpack.c.l.s8.bf16 %v4085
        %v4774 = vunpack.c.l.s8.bf16 %v4086
        %v4775 = vunpack.c.l.s8.bf16 %v4087
        %v4776 = vunpack.c.l.s8.bf16 %v4088
        %v4777 = vunpack.c.h.s8.bf16 %v4073
        %v4778 = vunpack.c.h.s8.bf16 %v4074
        %v4779 = vunpack.c.h.s8.bf16 %v4075
        %v4780 = vunpack.c.h.s8.bf16 %v4076
        %v4781 = vunpack.c.h.s8.bf16 %v4077
        %v4782 = vunpack.c.h.s8.bf16 %v4078
        %v4783 = vunpack.c.h.s8.bf16 %v4079
        %v4784 = vunpack.c.h.s8.bf16 %v4080
        %v4785 = vunpack.c.h.s8.bf16 %v4081
        %v4786 = vunpack.c.h.s8.bf16 %v4082
        %v4787 = vunpack.c.h.s8.bf16 %v4083
        %v4788 = vunpack.c.h.s8.bf16 %v4084
        %v4789 = vunpack.c.h.s8.bf16 %v4085
        %v4790 = vunpack.c.h.s8.bf16 %v4086
        %v4791 = vunpack.c.h.s8.bf16 %v4087
        %v4792 = vunpack.c.h.s8.bf16 %v4088
        %v4793 = vunpack.c.l.s8.bf16 %v4089
        %v4794 = vunpack.c.l.s8.bf16 %v4090
        %v4795 = vunpack.c.l.s8.bf16 %v4091
        %v4796 = vunpack.c.l.s8.bf16 %v4092
        %v4797 = vunpack.c.l.s8.bf16 %v4093
        %v4798 = vunpack.c.l.s8.bf16 %v4094
        %v4799 = vunpack.c.l.s8.bf16 %v4095
        %v4800 = vunpack.c.l.s8.bf16 %v4096
        %v4801 = vunpack.c.l.s8.bf16 %v4097
        %v4802 = vunpack.c.l.s8.bf16 %v4098
        %v4803 = vunpack.c.l.s8.bf16 %v4099
        %v4804 = vunpack.c.l.s8.bf16 %v4100
        %v4805 = vunpack.c.l.s8.bf16 %v4101
        %v4806 = vunpack.c.l.s8.bf16 %v4102
        %v4807 = vunpack.c.l.s8.bf16 %v4103
        %v4808 = vunpack.c.l.s8.bf16 %v4104
        %v4809 = vunpack.c.h.s8.bf16 %v4089
        %v4810 = vunpack.c.h.s8.bf16 %v4090
        %v4811 = vunpack.c.h.s8.bf16 %v4091
        %v4812 = vunpack.c.h.s8.bf16 %v4092
        %v4813 = vunpack.c.h.s8.bf16 %v4093
        %v4814 = vunpack.c.h.s8.bf16 %v4094
        %v4815 = vunpack.c.h.s8.bf16 %v4095
        %v4816 = vunpack.c.h.s8.bf16 %v4096
        %v4817 = vunpack.c.h.s8.bf16 %v4097
        %v4818 = vunpack.c.h.s8.bf16 %v4098
        %v4819 = vunpack.c.h.s8.bf16 %v4099
        %v4820 = vunpack.c.h.s8.bf16 %v4100
        %v4821 = vunpack.c.h.s8.bf16 %v4101
        %v4822 = vunpack.c.h.s8.bf16 %v4102
        %v4823 = vunpack.c.h.s8.bf16 %v4103
        %v4824 = vunpack.c.h.s8.bf16 %v4104
        %v4825 = vunpack.c.l.s8.bf16 %v4105
        %v4826 = vunpack.c.l.s8.bf16 %v4106
        %v4827 = vunpack.c.l.s8.bf16 %v4107
        %v4828 = vunpack.c.l.s8.bf16 %v4108
        %v4829 = vunpack.c.l.s8.bf16 %v4109
        %v4830 = vunpack.c.l.s8.bf16 %v4110
        %v4831 = vunpack.c.l.s8.bf16 %v4111
        %v4832 = vunpack.c.l.s8.bf16 %v4112
        %v4833 = vunpack.c.l.s8.bf16 %v4113
        %v4834 = vunpack.c.l.s8.bf16 %v4114
        %v4835 = vunpack.c.l.s8.bf16 %v4115
        %v4836 = vunpack.c.l.s8.bf16 %v4116
        %v4837 = vunpack.c.l.s8.bf16 %v4117
        %v4838 = vunpack.c.l.s8.bf16 %v4118
        %v4839 = vunpack.c.l.s8.bf16 %v4119
        %v4840 = vunpack.c.l.s8.bf16 %v4120
        %v4841 = vunpack.c.h.s8.bf16 %v4105
        %v4842 = vunpack.c.h.s8.bf16 %v4106
        %v4843 = vunpack.c.h.s8.bf16 %v4107
        %v4844 = vunpack.c.h.s8.bf16 %v4108
        %v4845 = vunpack.c.h.s8.bf16 %v4109
        %v4846 = vunpack.c.h.s8.bf16 %v4110
        %v4847 = vunpack.c.h.s8.bf16 %v4111
        %v4848 = vunpack.c.h.s8.bf16 %v4112
        %v4849 = vunpack.c.h.s8.bf16 %v4113
        %v4850 = vunpack.c.h.s8.bf16 %v4114
        %v4851 = vunpack.c.h.s8.bf16 %v4115
        %v4852 = vunpack.c.h.s8.bf16 %v4116
        %v4853 = vunpack.c.h.s8.bf16 %v4117
        %v4854 = vunpack.c.h.s8.bf16 %v4118
        %v4855 = vunpack.c.h.s8.bf16 %v4119
        %v4856 = vunpack.c.h.s8.bf16 %v4120
        %v4857 = vunpack.c.l.s8.bf16 %v4121
        %v4858 = vunpack.c.l.s8.bf16 %v4122
        %v4859 = vunpack.c.l.s8.bf16 %v4123
        %v4860 = vunpack.c.l.s8.bf16 %v4124
        %v4861 = vunpack.c.l.s8.bf16 %v4125
        %v4862 = vunpack.c.l.s8.bf16 %v4126
        %v4863 = vunpack.c.l.s8.bf16 %v4127
        %v4864 = vunpack.c.l.s8.bf16 %v4128
        %v4865 = vunpack.c.l.s8.bf16 %v4129
        %v4866 = vunpack.c.l.s8.bf16 %v4130
        %v4867 = vunpack.c.l.s8.bf16 %v4131
        %v4868 = vunpack.c.l.s8.bf16 %v4132
        %v4869 = vunpack.c.l.s8.bf16 %v4133
        %v4870 = vunpack.c.l.s8.bf16 %v4134
        %v4871 = vunpack.c.l.s8.bf16 %v4135
        %v4872 = vunpack.c.l.s8.bf16 %v4136
        %v4873 = vunpack.c.h.s8.bf16 %v4121
        %v4874 = vunpack.c.h.s8.bf16 %v4122
        %v4875 = vunpack.c.h.s8.bf16 %v4123
        %v4876 = vunpack.c.h.s8.bf16 %v4124
        %v4877 = vunpack.c.h.s8.bf16 %v4125
        %v4878 = vunpack.c.h.s8.bf16 %v4126
        %v4879 = vunpack.c.h.s8.bf16 %v4127
        %v4880 = vunpack.c.h.s8.bf16 %v4128
        %v4881 = vunpack.c.h.s8.bf16 %v4129
        %v4882 = vunpack.c.h.s8.bf16 %v4130
        %v4883 = vunpack.c.h.s8.bf16 %v4131
        %v4884 = vunpack.c.h.s8.bf16 %v4132
        %v4885 = vunpack.c.h.s8.bf16 %v4133
        %v4886 = vunpack.c.h.s8.bf16 %v4134
        %v4887 = vunpack.c.h.s8.bf16 %v4135
        %v4888 = vunpack.c.h.s8.bf16 %v4136
        %v4889 = vunpack.c.l.s8.bf16 %v4137
        %v4890 = vunpack.c.l.s8.bf16 %v4138
        %v4891 = vunpack.c.l.s8.bf16 %v4139
        %v4892 = vunpack.c.l.s8.bf16 %v4140
        %v4893 = vunpack.c.l.s8.bf16 %v4141
        %v4894 = vunpack.c.l.s8.bf16 %v4142
        %v4895 = vunpack.c.l.s8.bf16 %v4143
        %v4896 = vunpack.c.l.s8.bf16 %v4144
        %v4897 = vunpack.c.l.s8.bf16 %v4145
        %v4898 = vunpack.c.l.s8.bf16 %v4146
        %v4899 = vunpack.c.l.s8.bf16 %v4147
        %v4900 = vunpack.c.l.s8.bf16 %v4148
        %v4901 = vunpack.c.l.s8.bf16 %v4149
        %v4902 = vunpack.c.l.s8.bf16 %v4150
        %v4903 = vunpack.c.l.s8.bf16 %v4151
        %v4904 = vunpack.c.l.s8.bf16 %v4152
        %v4905 = vunpack.c.h.s8.bf16 %v4137
        %v4906 = vunpack.c.h.s8.bf16 %v4138
        %v4907 = vunpack.c.h.s8.bf16 %v4139
        %v4908 = vunpack.c.h.s8.bf16 %v4140
        %v4909 = vunpack.c.h.s8.bf16 %v4141
        %v4910 = vunpack.c.h.s8.bf16 %v4142
        %v4911 = vunpack.c.h.s8.bf16 %v4143
        %v4912 = vunpack.c.h.s8.bf16 %v4144
        %v4913 = vunpack.c.h.s8.bf16 %v4145
        %v4914 = vunpack.c.h.s8.bf16 %v4146
        %v4915 = vunpack.c.h.s8.bf16 %v4147
        %v4916 = vunpack.c.h.s8.bf16 %v4148
        %v4917 = vunpack.c.h.s8.bf16 %v4149
        %v4918 = vunpack.c.h.s8.bf16 %v4150
        %v4919 = vunpack.c.h.s8.bf16 %v4151
        %v4920 = vunpack.c.h.s8.bf16 %v4152
        %v4921 = vunpack.c.l.s8.bf16 %v4153
        %v4922 = vunpack.c.l.s8.bf16 %v4154
        %v4923 = vunpack.c.l.s8.bf16 %v4155
        %v4924 = vunpack.c.l.s8.bf16 %v4156
        %v4925 = vunpack.c.l.s8.bf16 %v4157
        %v4926 = vunpack.c.l.s8.bf16 %v4158
        %v4927 = vunpack.c.l.s8.bf16 %v4159
        %v4928 = vunpack.c.l.s8.bf16 %v4160
        %v4929 = vunpack.c.l.s8.bf16 %v4161
        %v4930 = vunpack.c.l.s8.bf16 %v4162
        %v4931 = vunpack.c.l.s8.bf16 %v4163
        %v4932 = vunpack.c.l.s8.bf16 %v4164
        %v4933 = vunpack.c.l.s8.bf16 %v4165
        %v4934 = vunpack.c.l.s8.bf16 %v4166
        %v4935 = vunpack.c.l.s8.bf16 %v4167
        %v4936 = vunpack.c.l.s8.bf16 %v4168
        %v4937 = vunpack.c.h.s8.bf16 %v4153
        %v4938 = vunpack.c.h.s8.bf16 %v4154
        %v4939 = vunpack.c.h.s8.bf16 %v4155
        %v4940 = vunpack.c.h.s8.bf16 %v4156
        %v4941 = vunpack.c.h.s8.bf16 %v4157
        %v4942 = vunpack.c.h.s8.bf16 %v4158
        %v4943 = vunpack.c.h.s8.bf16 %v4159
        %v4944 = vunpack.c.h.s8.bf16 %v4160
        %v4945 = vunpack.c.h.s8.bf16 %v4161
        %v4946 = vunpack.c.h.s8.bf16 %v4162
        %v4947 = vunpack.c.h.s8.bf16 %v4163
        %v4948 = vunpack.c.h.s8.bf16 %v4164
        %v4949 = vunpack.c.h.s8.bf16 %v4165
        %v4950 = vunpack.c.h.s8.bf16 %v4166
        %v4951 = vunpack.c.h.s8.bf16 %v4167
        %v4952 = vunpack.c.h.s8.bf16 %v4168
        %v4953 = vunpack.c.l.s8.bf16 %v4169
        %v4954 = vunpack.c.l.s8.bf16 %v4170
        %v4955 = vunpack.c.l.s8.bf16 %v4171
        %v4956 = vunpack.c.l.s8.bf16 %v4172
        %v4957 = vunpack.c.l.s8.bf16 %v4173
        %v4958 = vunpack.c.l.s8.bf16 %v4174
        %v4959 = vunpack.c.l.s8.bf16 %v4175
        %v4960 = vunpack.c.l.s8.bf16 %v4176
        %v4961 = vunpack.c.l.s8.bf16 %v4177
        %v4962 = vunpack.c.l.s8.bf16 %v4178
        %v4963 = vunpack.c.l.s8.bf16 %v4179
        %v4964 = vunpack.c.l.s8.bf16 %v4180
        %v4965 = vunpack.c.l.s8.bf16 %v4181
        %v4966 = vunpack.c.l.s8.bf16 %v4182
        %v4967 = vunpack.c.l.s8.bf16 %v4183
        %v4968 = vunpack.c.l.s8.bf16 %v4184
        %v4969 = vunpack.c.h.s8.bf16 %v4169
        %v4970 = vunpack.c.h.s8.bf16 %v4170
        %v4971 = vunpack.c.h.s8.bf16 %v4171
        %v4972 = vunpack.c.h.s8.bf16 %v4172
        %v4973 = vunpack.c.h.s8.bf16 %v4173
        %v4974 = vunpack.c.h.s8.bf16 %v4174
        %v4975 = vunpack.c.h.s8.bf16 %v4175
        %v4976 = vunpack.c.h.s8.bf16 %v4176
        %v4977 = vunpack.c.h.s8.bf16 %v4177
        %v4978 = vunpack.c.h.s8.bf16 %v4178
        %v4979 = vunpack.c.h.s8.bf16 %v4179
        %v4980 = vunpack.c.h.s8.bf16 %v4180
        %v4981 = vunpack.c.h.s8.bf16 %v4181
        %v4982 = vunpack.c.h.s8.bf16 %v4182
        %v4983 = vunpack.c.h.s8.bf16 %v4183
        %v4984 = vunpack.c.h.s8.bf16 %v4184
        %v4985 = vunpack.c.l.s8.bf16 %v4185
        %v4986 = vunpack.c.l.s8.bf16 %v4186
        %v4987 = vunpack.c.l.s8.bf16 %v4187
        %v4988 = vunpack.c.l.s8.bf16 %v4188
        %v4989 = vunpack.c.l.s8.bf16 %v4189
        %v4990 = vunpack.c.l.s8.bf16 %v4190
        %v4991 = vunpack.c.l.s8.bf16 %v4191
        %v4992 = vunpack.c.l.s8.bf16 %v4192
        %v4993 = vunpack.c.l.s8.bf16 %v4193
        %v4994 = vunpack.c.l.s8.bf16 %v4194
        %v4995 = vunpack.c.l.s8.bf16 %v4195
        %v4996 = vunpack.c.l.s8.bf16 %v4196
        %v4997 = vunpack.c.l.s8.bf16 %v4197
        %v4998 = vunpack.c.l.s8.bf16 %v4198
        %v4999 = vunpack.c.l.s8.bf16 %v4199
        %v5000 = vunpack.c.l.s8.bf16 %v4200
        %v5001 = vunpack.c.h.s8.bf16 %v4185
        %v5002 = vunpack.c.h.s8.bf16 %v4186
        %v5003 = vunpack.c.h.s8.bf16 %v4187
        %v5004 = vunpack.c.h.s8.bf16 %v4188
        %v5005 = vunpack.c.h.s8.bf16 %v4189
        %v5006 = vunpack.c.h.s8.bf16 %v4190
        %v5007 = vunpack.c.h.s8.bf16 %v4191
        %v5008 = vunpack.c.h.s8.bf16 %v4192
        %v5009 = vunpack.c.h.s8.bf16 %v4193
        %v5010 = vunpack.c.h.s8.bf16 %v4194
        %v5011 = vunpack.c.h.s8.bf16 %v4195
        %v5012 = vunpack.c.h.s8.bf16 %v4196
        %v5013 = vunpack.c.h.s8.bf16 %v4197
        %v5014 = vunpack.c.h.s8.bf16 %v4198
        %v5015 = vunpack.c.h.s8.bf16 %v4199
        %v5016 = vunpack.c.h.s8.bf16 %v4200
        %v5017 = vunpack.c.l.s8.bf16 %v4201
        %v5018 = vunpack.c.l.s8.bf16 %v4202
        %v5019 = vunpack.c.l.s8.bf16 %v4203
        %v5020 = vunpack.c.l.s8.bf16 %v4204
        %v5021 = vunpack.c.l.s8.bf16 %v4205
        %v5022 = vunpack.c.l.s8.bf16 %v4206
        %v5023 = vunpack.c.l.s8.bf16 %v4207
        %v5024 = vunpack.c.l.s8.bf16 %v4208
        %v5025 = vunpack.c.l.s8.bf16 %v4209
        %v5026 = vunpack.c.l.s8.bf16 %v4210
        %v5027 = vunpack.c.l.s8.bf16 %v4211
        %v5028 = vunpack.c.l.s8.bf16 %v4212
        %v5029 = vunpack.c.l.s8.bf16 %v4213
        %v5030 = vunpack.c.l.s8.bf16 %v4214
        %v5031 = vunpack.c.l.s8.bf16 %v4215
        %v5032 = vunpack.c.l.s8.bf16 %v4216
        %v5033 = vunpack.c.h.s8.bf16 %v4201
        %v5034 = vunpack.c.h.s8.bf16 %v4202
        %v5035 = vunpack.c.h.s8.bf16 %v4203
        %v5036 = vunpack.c.h.s8.bf16 %v4204
        %v5037 = vunpack.c.h.s8.bf16 %v4205
        %v5038 = vunpack.c.h.s8.bf16 %v4206
        %v5039 = vunpack.c.h.s8.bf16 %v4207
        %v5040 = vunpack.c.h.s8.bf16 %v4208
        %v5041 = vunpack.c.h.s8.bf16 %v4209
        %v5042 = vunpack.c.h.s8.bf16 %v4210
        %v5043 = vunpack.c.h.s8.bf16 %v4211
        %v5044 = vunpack.c.h.s8.bf16 %v4212
        %v5045 = vunpack.c.h.s8.bf16 %v4213
        %v5046 = vunpack.c.h.s8.bf16 %v4214
        %v5047 = vunpack.c.h.s8.bf16 %v4215
        %v5048 = vunpack.c.h.s8.bf16 %v4216
        %v5049 = vunpack.c.l.s8.bf16 %v4217
        %v5050 = vunpack.c.l.s8.bf16 %v4218
        %v5051 = vunpack.c.l.s8.bf16 %v4219
        %v5052 = vunpack.c.l.s8.bf16 %v4220
        %v5053 = vunpack.c.l.s8.bf16 %v4221
        %v5054 = vunpack.c.l.s8.bf16 %v4222
        %v5055 = vunpack.c.l.s8.bf16 %v4223
        %v5056 = vunpack.c.l.s8.bf16 %v4224
        %v5057 = vunpack.c.l.s8.bf16 %v4225
        %v5058 = vunpack.c.l.s8.bf16 %v4226
        %v5059 = vunpack.c.l.s8.bf16 %v4227
        %v5060 = vunpack.c.l.s8.bf16 %v4228
        %v5061 = vunpack.c.l.s8.bf16 %v4229
        %v5062 = vunpack.c.l.s8.bf16 %v4230
        %v5063 = vunpack.c.l.s8.bf16 %v4231
        %v5064 = vunpack.c.l.s8.bf16 %v4232
        %v5065 = vunpack.c.h.s8.bf16 %v4217
        %v5066 = vunpack.c.h.s8.bf16 %v4218
        %v5067 = vunpack.c.h.s8.bf16 %v4219
        %v5068 = vunpack.c.h.s8.bf16 %v4220
        %v5069 = vunpack.c.h.s8.bf16 %v4221
        %v5070 = vunpack.c.h.s8.bf16 %v4222
        %v5071 = vunpack.c.h.s8.bf16 %v4223
        %v5072 = vunpack.c.h.s8.bf16 %v4224
        %v5073 = vunpack.c.h.s8.bf16 %v4225
        %v5074 = vunpack.c.h.s8.bf16 %v4226
        %v5075 = vunpack.c.h.s8.bf16 %v4227
        %v5076 = vunpack.c.h.s8.bf16 %v4228
        %v5077 = vunpack.c.h.s8.bf16 %v4229
        %v5078 = vunpack.c.h.s8.bf16 %v4230
        %v5079 = vunpack.c.h.s8.bf16 %v4231
        %v5080 = vunpack.c.h.s8.bf16 %v4232
        %v5081 = vunpack.c.l.s8.bf16 %v4233
        %v5082 = vunpack.c.l.s8.bf16 %v4234
        %v5083 = vunpack.c.l.s8.bf16 %v4235
        %v5084 = vunpack.c.l.s8.bf16 %v4236
        %v5085 = vunpack.c.l.s8.bf16 %v4237
        %v5086 = vunpack.c.l.s8.bf16 %v4238
        %v5087 = vunpack.c.l.s8.bf16 %v4239
        %v5088 = vunpack.c.l.s8.bf16 %v4240
        %v5089 = vunpack.c.l.s8.bf16 %v4241
        %v5090 = vunpack.c.l.s8.bf16 %v4242
        %v5091 = vunpack.c.l.s8.bf16 %v4243
        %v5092 = vunpack.c.l.s8.bf16 %v4244
        %v5093 = vunpack.c.l.s8.bf16 %v4245
        %v5094 = vunpack.c.l.s8.bf16 %v4246
        %v5095 = vunpack.c.l.s8.bf16 %v4247
        %v5096 = vunpack.c.l.s8.bf16 %v4248
        %v5097 = vunpack.c.h.s8.bf16 %v4233
        %v5098 = vunpack.c.h.s8.bf16 %v4234
        %v5099 = vunpack.c.h.s8.bf16 %v4235
        %v5100 = vunpack.c.h.s8.bf16 %v4236
        %v5101 = vunpack.c.h.s8.bf16 %v4237
        %v5102 = vunpack.c.h.s8.bf16 %v4238
        %v5103 = vunpack.c.h.s8.bf16 %v4239
        %v5104 = vunpack.c.h.s8.bf16 %v4240
        %v5105 = vunpack.c.h.s8.bf16 %v4241
        %v5106 = vunpack.c.h.s8.bf16 %v4242
        %v5107 = vunpack.c.h.s8.bf16 %v4243
        %v5108 = vunpack.c.h.s8.bf16 %v4244
        %v5109 = vunpack.c.h.s8.bf16 %v4245
        %v5110 = vunpack.c.h.s8.bf16 %v4246
        %v5111 = vunpack.c.h.s8.bf16 %v4247
        %v5112 = vunpack.c.h.s8.bf16 %v4248
        %v5113 = vunpack.c.l.s8.bf16 %v4249
        %v5114 = vunpack.c.l.s8.bf16 %v4250
        %v5115 = vunpack.c.l.s8.bf16 %v4251
        %v5116 = vunpack.c.l.s8.bf16 %v4252
        %v5117 = vunpack.c.l.s8.bf16 %v4253
        %v5118 = vunpack.c.l.s8.bf16 %v4254
        %v5119 = vunpack.c.l.s8.bf16 %v4255
        %v5120 = vunpack.c.l.s8.bf16 %v4256
        %v5121 = vunpack.c.l.s8.bf16 %v4257
        %v5122 = vunpack.c.l.s8.bf16 %v4258
        %v5123 = vunpack.c.l.s8.bf16 %v4259
        %v5124 = vunpack.c.l.s8.bf16 %v4260
        %v5125 = vunpack.c.l.s8.bf16 %v4261
        %v5126 = vunpack.c.l.s8.bf16 %v4262
        %v5127 = vunpack.c.l.s8.bf16 %v4263
        %v5128 = vunpack.c.l.s8.bf16 %v4264
        %v5129 = vunpack.c.h.s8.bf16 %v4249
        %v5130 = vunpack.c.h.s8.bf16 %v4250
        %v5131 = vunpack.c.h.s8.bf16 %v4251
        %v5132 = vunpack.c.h.s8.bf16 %v4252
        %v5133 = vunpack.c.h.s8.bf16 %v4253
        %v5134 = vunpack.c.h.s8.bf16 %v4254
        %v5135 = vunpack.c.h.s8.bf16 %v4255
        %v5136 = vunpack.c.h.s8.bf16 %v4256
        %v5137 = vunpack.c.h.s8.bf16 %v4257
        %v5138 = vunpack.c.h.s8.bf16 %v4258
        %v5139 = vunpack.c.h.s8.bf16 %v4259
        %v5140 = vunpack.c.h.s8.bf16 %v4260
        %v5141 = vunpack.c.h.s8.bf16 %v4261
        %v5142 = vunpack.c.h.s8.bf16 %v4262
        %v5143 = vunpack.c.h.s8.bf16 %v4263
        %v5144 = vunpack.c.h.s8.bf16 %v4264
        %v5145 = vunpack.c.l.s8.bf16 %v4265
        %v5146 = vunpack.c.l.s8.bf16 %v4266
        %v5147 = vunpack.c.l.s8.bf16 %v4267
        %v5148 = vunpack.c.l.s8.bf16 %v4268
        %v5149 = vunpack.c.l.s8.bf16 %v4269
        %v5150 = vunpack.c.l.s8.bf16 %v4270
        %v5151 = vunpack.c.l.s8.bf16 %v4271
        %v5152 = vunpack.c.l.s8.bf16 %v4272
        %v5153 = vunpack.c.l.s8.bf16 %v4273
        %v5154 = vunpack.c.l.s8.bf16 %v4274
        %v5155 = vunpack.c.l.s8.bf16 %v4275
        %v5156 = vunpack.c.l.s8.bf16 %v4276
        %v5157 = vunpack.c.l.s8.bf16 %v4277
        %v5158 = vunpack.c.l.s8.bf16 %v4278
        %v5159 = vunpack.c.l.s8.bf16 %v4279
        %v5160 = vunpack.c.l.s8.bf16 %v4280
        %v5161 = vunpack.c.h.s8.bf16 %v4265
        %v5162 = vunpack.c.h.s8.bf16 %v4266
        %v5163 = vunpack.c.h.s8.bf16 %v4267
        %v5164 = vunpack.c.h.s8.bf16 %v4268
        %v5165 = vunpack.c.h.s8.bf16 %v4269
        %v5166 = vunpack.c.h.s8.bf16 %v4270
        %v5167 = vunpack.c.h.s8.bf16 %v4271
        %v5168 = vunpack.c.h.s8.bf16 %v4272
        %v5169 = vunpack.c.h.s8.bf16 %v4273
        %v5170 = vunpack.c.h.s8.bf16 %v4274
        %v5171 = vunpack.c.h.s8.bf16 %v4275
        %v5172 = vunpack.c.h.s8.bf16 %v4276
        %v5173 = vunpack.c.h.s8.bf16 %v4277
        %v5174 = vunpack.c.h.s8.bf16 %v4278
        %v5175 = vunpack.c.h.s8.bf16 %v4279
        %v5176 = vunpack.c.h.s8.bf16 %v4280
        %v5177 = vunpack.c.l.s8.bf16 %v4281
        %v5178 = vunpack.c.l.s8.bf16 %v4282
        %v5179 = vunpack.c.l.s8.bf16 %v4283
        %v5180 = vunpack.c.l.s8.bf16 %v4284
        %v5181 = vunpack.c.l.s8.bf16 %v4285
        %v5182 = vunpack.c.l.s8.bf16 %v4286
        %v5183 = vunpack.c.l.s8.bf16 %v4287
        %v5184 = vunpack.c.l.s8.bf16 %v4288
        %v5185 = vunpack.c.l.s8.bf16 %v4289
        %v5186 = vunpack.c.l.s8.bf16 %v4290
        %v5187 = vunpack.c.l.s8.bf16 %v4291
        %v5188 = vunpack.c.l.s8.bf16 %v4292
        %v5189 = vunpack.c.l.s8.bf16 %v4293
        %v5190 = vunpack.c.l.s8.bf16 %v4294
        %v5191 = vunpack.c.l.s8.bf16 %v4295
        %v5192 = vunpack.c.l.s8.bf16 %v4296
        %v5193 = vunpack.c.h.s8.bf16 %v4281
        %v5194 = vunpack.c.h.s8.bf16 %v4282
        %v5195 = vunpack.c.h.s8.bf16 %v4283
        %v5196 = vunpack.c.h.s8.bf16 %v4284
        %v5197 = vunpack.c.h.s8.bf16 %v4285
        %v5198 = vunpack.c.h.s8.bf16 %v4286
        %v5199 = vunpack.c.h.s8.bf16 %v4287
        %v5200 = vunpack.c.h.s8.bf16 %v4288
        %v5201 = vunpack.c.h.s8.bf16 %v4289
        %v5202 = vunpack.c.h.s8.bf16 %v4290
        %v5203 = vunpack.c.h.s8.bf16 %v4291
        %v5204 = vunpack.c.h.s8.bf16 %v4292
        %v5205 = vunpack.c.h.s8.bf16 %v4293
        %v5206 = vunpack.c.h.s8.bf16 %v4294
        %v5207 = vunpack.c.h.s8.bf16 %v4295
        %v5208 = vunpack.c.h.s8.bf16 %v4296
        %v5209 = vunpack.c.l.s8.bf16 %v4297
        %v5210 = vunpack.c.l.s8.bf16 %v4298
        %v5211 = vunpack.c.l.s8.bf16 %v4299
        %v5212 = vunpack.c.l.s8.bf16 %v4300
        %v5213 = vunpack.c.l.s8.bf16 %v4301
        %v5214 = vunpack.c.l.s8.bf16 %v4302
        %v5215 = vunpack.c.l.s8.bf16 %v4303
        %v5216 = vunpack.c.l.s8.bf16 %v4304
        %v5217 = vunpack.c.l.s8.bf16 %v4305
        %v5218 = vunpack.c.l.s8.bf16 %v4306
        %v5219 = vunpack.c.l.s8.bf16 %v4307
        %v5220 = vunpack.c.l.s8.bf16 %v4308
        %v5221 = vunpack.c.l.s8.bf16 %v4309
        %v5222 = vunpack.c.l.s8.bf16 %v4310
        %v5223 = vunpack.c.l.s8.bf16 %v4311
        %v5224 = vunpack.c.l.s8.bf16 %v4312
        %v5225 = vunpack.c.h.s8.bf16 %v4297
        %v5226 = vunpack.c.h.s8.bf16 %v4298
        %v5227 = vunpack.c.h.s8.bf16 %v4299
        %v5228 = vunpack.c.h.s8.bf16 %v4300
        %v5229 = vunpack.c.h.s8.bf16 %v4301
        %v5230 = vunpack.c.h.s8.bf16 %v4302
        %v5231 = vunpack.c.h.s8.bf16 %v4303
        %v5232 = vunpack.c.h.s8.bf16 %v4304
        %v5233 = vunpack.c.h.s8.bf16 %v4305
        %v5234 = vunpack.c.h.s8.bf16 %v4306
        %v5235 = vunpack.c.h.s8.bf16 %v4307
        %v5236 = vunpack.c.h.s8.bf16 %v4308
        %v5237 = vunpack.c.h.s8.bf16 %v4309
        %v5238 = vunpack.c.h.s8.bf16 %v4310
        %v5239 = vunpack.c.h.s8.bf16 %v4311
        %v5240 = vunpack.c.h.s8.bf16 %v4312
        %v5241 = vunpack.c.l.s8.bf16 %v4313
        %v5242 = vunpack.c.l.s8.bf16 %v4314
        %v5243 = vunpack.c.l.s8.bf16 %v4315
        %v5244 = vunpack.c.l.s8.bf16 %v4316
        %v5245 = vunpack.c.l.s8.bf16 %v4317
        %v5246 = vunpack.c.l.s8.bf16 %v4318
        %v5247 = vunpack.c.l.s8.bf16 %v4319
        %v5248 = vunpack.c.l.s8.bf16 %v4320
        %v5249 = vunpack.c.l.s8.bf16 %v4321
        %v5250 = vunpack.c.l.s8.bf16 %v4322
        %v5251 = vunpack.c.l.s8.bf16 %v4323
        %v5252 = vunpack.c.l.s8.bf16 %v4324
        %v5253 = vunpack.c.l.s8.bf16 %v4325
        %v5254 = vunpack.c.l.s8.bf16 %v4326
        %v5255 = vunpack.c.l.s8.bf16 %v4327
        %v5256 = vunpack.c.l.s8.bf16 %v4328
        %v5257 = vunpack.c.h.s8.bf16 %v4313
        %v5258 = vunpack.c.h.s8.bf16 %v4314
        %v5259 = vunpack.c.h.s8.bf16 %v4315
        %v5260 = vunpack.c.h.s8.bf16 %v4316
        %v5261 = vunpack.c.h.s8.bf16 %v4317
        %v5262 = vunpack.c.h.s8.bf16 %v4318
        %v5263 = vunpack.c.h.s8.bf16 %v4319
        %v5264 = vunpack.c.h.s8.bf16 %v4320
        %v5265 = vunpack.c.h.s8.bf16 %v4321
        %v5266 = vunpack.c.h.s8.bf16 %v4322
        %v5267 = vunpack.c.h.s8.bf16 %v4323
        %v5268 = vunpack.c.h.s8.bf16 %v4324
        %v5269 = vunpack.c.h.s8.bf16 %v4325
        %v5270 = vunpack.c.h.s8.bf16 %v4326
        %v5271 = vunpack.c.h.s8.bf16 %v4327
        %v5272 = vunpack.c.h.s8.bf16 %v4328
        %v5273 = vunpack.c.l.s8.bf16 %v4329
        %v5274 = vunpack.c.l.s8.bf16 %v4330
        %v5275 = vunpack.c.l.s8.bf16 %v4331
        %v5276 = vunpack.c.l.s8.bf16 %v4332
        %v5277 = vunpack.c.l.s8.bf16 %v4333
        %v5278 = vunpack.c.l.s8.bf16 %v4334
        %v5279 = vunpack.c.l.s8.bf16 %v4335
        %v5280 = vunpack.c.l.s8.bf16 %v4336
        %v5281 = vunpack.c.l.s8.bf16 %v4337
        %v5282 = vunpack.c.l.s8.bf16 %v4338
        %v5283 = vunpack.c.l.s8.bf16 %v4339
        %v5284 = vunpack.c.l.s8.bf16 %v4340
        %v5285 = vunpack.c.l.s8.bf16 %v4341
        %v5286 = vunpack.c.l.s8.bf16 %v4342
        %v5287 = vunpack.c.l.s8.bf16 %v4343
        %v5288 = vunpack.c.l.s8.bf16 %v4344
        %v5289 = vunpack.c.h.s8.bf16 %v4329
        %v5290 = vunpack.c.h.s8.bf16 %v4330
        %v5291 = vunpack.c.h.s8.bf16 %v4331
        %v5292 = vunpack.c.h.s8.bf16 %v4332
        %v5293 = vunpack.c.h.s8.bf16 %v4333
        %v5294 = vunpack.c.h.s8.bf16 %v4334
        %v5295 = vunpack.c.h.s8.bf16 %v4335
        %v5296 = vunpack.c.h.s8.bf16 %v4336
        %v5297 = vunpack.c.h.s8.bf16 %v4337
        %v5298 = vunpack.c.h.s8.bf16 %v4338
        %v5299 = vunpack.c.h.s8.bf16 %v4339
        %v5300 = vunpack.c.h.s8.bf16 %v4340
        %v5301 = vunpack.c.h.s8.bf16 %v4341
        %v5302 = vunpack.c.h.s8.bf16 %v4342
        %v5303 = vunpack.c.h.s8.bf16 %v4343
        %v5304 = vunpack.c.h.s8.bf16 %v4344
        %v5305 = vunpack.c.l.s8.bf16 %v4345
        %v5306 = vunpack.c.l.s8.bf16 %v4346
        %v5307 = vunpack.c.l.s8.bf16 %v4347
        %v5308 = vunpack.c.l.s8.bf16 %v4348
        %v5309 = vunpack.c.l.s8.bf16 %v4349
        %v5310 = vunpack.c.l.s8.bf16 %v4350
        %v5311 = vunpack.c.l.s8.bf16 %v4351
        %v5312 = vunpack.c.l.s8.bf16 %v4352
        %v5313 = vunpack.c.l.s8.bf16 %v4353
        %v5314 = vunpack.c.l.s8.bf16 %v4354
        %v5315 = vunpack.c.l.s8.bf16 %v4355
        %v5316 = vunpack.c.l.s8.bf16 %v4356
        %v5317 = vunpack.c.l.s8.bf16 %v4357
        %v5318 = vunpack.c.l.s8.bf16 %v4358
        %v5319 = vunpack.c.l.s8.bf16 %v4359
        %v5320 = vunpack.c.l.s8.bf16 %v4360
        %v5321 = vunpack.c.h.s8.bf16 %v4345
        %v5322 = vunpack.c.h.s8.bf16 %v4346
        %v5323 = vunpack.c.h.s8.bf16 %v4347
        %v5324 = vunpack.c.h.s8.bf16 %v4348
        %v5325 = vunpack.c.h.s8.bf16 %v4349
        %v5326 = vunpack.c.h.s8.bf16 %v4350
        %v5327 = vunpack.c.h.s8.bf16 %v4351
        %v5328 = vunpack.c.h.s8.bf16 %v4352
        %v5329 = vunpack.c.h.s8.bf16 %v4353
        %v5330 = vunpack.c.h.s8.bf16 %v4354
        %v5331 = vunpack.c.h.s8.bf16 %v4355
        %v5332 = vunpack.c.h.s8.bf16 %v4356
        %v5333 = vunpack.c.h.s8.bf16 %v4357
        %v5334 = vunpack.c.h.s8.bf16 %v4358
        %v5335 = vunpack.c.h.s8.bf16 %v4359
        %v5336 = vunpack.c.h.s8.bf16 %v4360
        %v5337 = vunpack.c.l.s8.bf16 %v4361
        %v5338 = vunpack.c.l.s8.bf16 %v4362
        %v5339 = vunpack.c.l.s8.bf16 %v4363
        %v5340 = vunpack.c.l.s8.bf16 %v4364
        %v5341 = vunpack.c.l.s8.bf16 %v4365
        %v5342 = vunpack.c.l.s8.bf16 %v4366
        %v5343 = vunpack.c.l.s8.bf16 %v4367
        %v5344 = vunpack.c.l.s8.bf16 %v4368
        %v5345 = vunpack.c.l.s8.bf16 %v4369
        %v5346 = vunpack.c.l.s8.bf16 %v4370
        %v5347 = vunpack.c.l.s8.bf16 %v4371
        %v5348 = vunpack.c.l.s8.bf16 %v4372
        %v5349 = vunpack.c.l.s8.bf16 %v4373
        %v5350 = vunpack.c.l.s8.bf16 %v4374
        %v5351 = vunpack.c.l.s8.bf16 %v4375
        %v5352 = vunpack.c.l.s8.bf16 %v4376
        %v5353 = vunpack.c.h.s8.bf16 %v4361
        %v5354 = vunpack.c.h.s8.bf16 %v4362
        %v5355 = vunpack.c.h.s8.bf16 %v4363
        %v5356 = vunpack.c.h.s8.bf16 %v4364
        %v5357 = vunpack.c.h.s8.bf16 %v4365
        %v5358 = vunpack.c.h.s8.bf16 %v4366
        %v5359 = vunpack.c.h.s8.bf16 %v4367
        %v5360 = vunpack.c.h.s8.bf16 %v4368
        %v5361 = vunpack.c.h.s8.bf16 %v4369
        %v5362 = vunpack.c.h.s8.bf16 %v4370
        %v5363 = vunpack.c.h.s8.bf16 %v4371
        %v5364 = vunpack.c.h.s8.bf16 %v4372
        %v5365 = vunpack.c.h.s8.bf16 %v4373
        %v5366 = vunpack.c.h.s8.bf16 %v4374
        %v5367 = vunpack.c.h.s8.bf16 %v4375
        %v5368 = vunpack.c.h.s8.bf16 %v4376
        %v5369 = vunpack.c.l.s8.bf16 %v4377
        %v5370 = vunpack.c.l.s8.bf16 %v4378
        %v5371 = vunpack.c.l.s8.bf16 %v4379
        %v5372 = vunpack.c.l.s8.bf16 %v4380
        %v5373 = vunpack.c.l.s8.bf16 %v4381
        %v5374 = vunpack.c.l.s8.bf16 %v4382
        %v5375 = vunpack.c.l.s8.bf16 %v4383
        %v5376 = vunpack.c.l.s8.bf16 %v4384
        %v5377 = vunpack.c.l.s8.bf16 %v4385
        %v5378 = vunpack.c.l.s8.bf16 %v4386
        %v5379 = vunpack.c.l.s8.bf16 %v4387
        %v5380 = vunpack.c.l.s8.bf16 %v4388
        %v5381 = vunpack.c.l.s8.bf16 %v4389
        %v5382 = vunpack.c.l.s8.bf16 %v4390
        %v5383 = vunpack.c.l.s8.bf16 %v4391
        %v5384 = vunpack.c.l.s8.bf16 %v4392
        %v5385 = vunpack.c.h.s8.bf16 %v4377
        %v5386 = vunpack.c.h.s8.bf16 %v4378
        %v5387 = vunpack.c.h.s8.bf16 %v4379
        %v5388 = vunpack.c.h.s8.bf16 %v4380
        %v5389 = vunpack.c.h.s8.bf16 %v4381
        %v5390 = vunpack.c.h.s8.bf16 %v4382
        %v5391 = vunpack.c.h.s8.bf16 %v4383
        %v5392 = vunpack.c.h.s8.bf16 %v4384
        %v5393 = vunpack.c.h.s8.bf16 %v4385
        %v5394 = vunpack.c.h.s8.bf16 %v4386
        %v5395 = vunpack.c.h.s8.bf16 %v4387
        %v5396 = vunpack.c.h.s8.bf16 %v4388
        %v5397 = vunpack.c.h.s8.bf16 %v4389
        %v5398 = vunpack.c.h.s8.bf16 %v4390
        %v5399 = vunpack.c.h.s8.bf16 %v4391
        %v5400 = vunpack.c.h.s8.bf16 %v4392
        %v5401 = vunpack.c.l.s8.bf16 %v4393
        %v5402 = vunpack.c.l.s8.bf16 %v4394
        %v5403 = vunpack.c.l.s8.bf16 %v4395
        %v5404 = vunpack.c.l.s8.bf16 %v4396
        %v5405 = vunpack.c.l.s8.bf16 %v4397
        %v5406 = vunpack.c.l.s8.bf16 %v4398
        %v5407 = vunpack.c.l.s8.bf16 %v4399
        %v5408 = vunpack.c.l.s8.bf16 %v4400
        %v5409 = vunpack.c.l.s8.bf16 %v4401
        %v5410 = vunpack.c.l.s8.bf16 %v4402
        %v5411 = vunpack.c.l.s8.bf16 %v4403
        %v5412 = vunpack.c.l.s8.bf16 %v4404
        %v5413 = vunpack.c.l.s8.bf16 %v4405
        %v5414 = vunpack.c.l.s8.bf16 %v4406
        %v5415 = vunpack.c.l.s8.bf16 %v4407
        %v5416 = vunpack.c.l.s8.bf16 %v4408
        %v5417 = vunpack.c.h.s8.bf16 %v4393
        %v5418 = vunpack.c.h.s8.bf16 %v4394
        %v5419 = vunpack.c.h.s8.bf16 %v4395
        %v5420 = vunpack.c.h.s8.bf16 %v4396
        %v5421 = vunpack.c.h.s8.bf16 %v4397
        %v5422 = vunpack.c.h.s8.bf16 %v4398
        %v5423 = vunpack.c.h.s8.bf16 %v4399
        %v5424 = vunpack.c.h.s8.bf16 %v4400
        %v5425 = vunpack.c.h.s8.bf16 %v4401
        %v5426 = vunpack.c.h.s8.bf16 %v4402
        %v5427 = vunpack.c.h.s8.bf16 %v4403
        %v5428 = vunpack.c.h.s8.bf16 %v4404
        %v5429 = vunpack.c.h.s8.bf16 %v4405
        %v5430 = vunpack.c.h.s8.bf16 %v4406
        %v5431 = vunpack.c.h.s8.bf16 %v4407
        %v5432 = vunpack.c.h.s8.bf16 %v4408
        %v5433 = vld [vmem:[#allocation2] sm:$0xff]
        %v5434 = vld [vmem:[#allocation2 + $0x8] sm:$0xff]
        %v5435 = vld [vmem:[#allocation2 + $0x10] sm:$0xff]
        %v5436 = vld [vmem:[#allocation2 + $0x18] sm:$0xff]
        %v5441 = vunpack.c.l.b16 %v5433
        %v5442 = vunpack.c.h.b16 %v5433
        %v5443 = vunpack.c.l.b16 %v5434
        %v5444 = vunpack.c.h.b16 %v5434
        %v5445 = vunpack.c.l.b16 %v5435
        %v5446 = vunpack.c.h.b16 %v5435
        %v5447 = vunpack.c.l.b16 %v5436
        %v5448 = vunpack.c.h.b16 %v5436
        %v5449 = vpack.c.b16 %v5441, %v5441
        %v5450 = vpack.c.b16 %v5442, %v5442
        %v5451 = vpack.c.b16 %v5443, %v5443
        %v5452 = vpack.c.b16 %v5444, %v5444
        %v5453 = vpack.c.b16 %v5445, %v5445
        %v5454 = vpack.c.b16 %v5446, %v5446
        %v5455 = vpack.c.b16 %v5447, %v5447
        %v5456 = vpack.c.b16 %v5448, %v5448
        %5465 = vmatprep.subr.bf16.mxu0 %v4410
        %5466 = vmatpush1.bf16.msra.mxu0 %v4409
        %5467 = vmatprep.subr.bf16.mxu0 %v4426
        %5468 = vmatpush1.bf16.msra.mxu0 %v4425
        %5469 = vmatprep.subr.bf16.mxu0 %v4442
        %5470 = vmatpush1.bf16.msra.mxu0 %v4441
        %5471 = vmatprep.subr.bf16.mxu0 %v4458
        %5472 = vmatpush1.bf16.msra.mxu0 %v4457
        %5473 = vmatprep.subr.bf16.mxu0 %v4474
        %5474 = vmatpush1.bf16.msra.mxu0 %v4473
        %5475 = vmatprep.subr.bf16.mxu0 %v4490
        %5476 = vmatpush1.bf16.msra.mxu0 %v4489
        %5477 = vmatprep.subr.bf16.mxu0 %v4506
        %5478 = vmatpush1.bf16.msra.mxu0 %v4505
        %5479 = vmatprep.subr.bf16.mxu0 %v4522
        %5480 = vmatpush1.bf16.msra.mxu0 %v4521
        %5481 = vmatprep.subr.bf16.mxu0 %v4538
        %5482 = vmatpush1.bf16.msra.mxu0 %v4537
        %5483 = vmatprep.subr.bf16.mxu0 %v4554
        %5484 = vmatpush1.bf16.msra.mxu0 %v4553
        %5485 = vmatprep.subr.bf16.mxu0 %v4570
        %5486 = vmatpush1.bf16.msra.mxu0 %v4569
        %5487 = vmatprep.subr.bf16.mxu0 %v4586
        %5488 = vmatpush1.bf16.msra.mxu0 %v4585
        %5489 = vmatprep.subr.bf16.mxu0 %v4602
        %5490 = vmatpush1.bf16.msra.mxu0 %v4601
        %5491 = vmatprep.subr.bf16.mxu0 %v4618
        %5492 = vmatpush1.bf16.msra.mxu0 %v4617
        %5493 = vmatprep.subr.bf16.mxu0 %v4634
        %5494 = vmatpush1.bf16.msra.mxu0 %v4633
        %5495 = vmatprep.subr.bf16.mxu0 %v4650
        %5496 = vmatpush1.bf16.msra.mxu0 %v4649
        %5497 = vmatprep.mubr.bf16.mxu0 %v5450
        %5498 = vmatmul.mubr.bf16.gmra.mrb[0].mxu0 %v5449
        %v5499 = vpop.f32.mrb[0].mxu0
        %v5500 = vadd.f32 0.0, %v5499
        %v5501 = vpop.f32.mrb[0].mxu0
        %v5502 = vadd.f32 0.0, %v5501
        %v5503 = vpop.f32.mrb[0].mxu0
        %v5504 = vpop.f32.mrb[0].mxu0
        %5505 = vdwg.mxu0
        %5506 = vmatprep.subr.bf16.mxu0 %v4666
        %5507 = vmatpush1.bf16.msra.mxu0 %v4665
        %5508 = vmatprep.subr.bf16.mxu0 %v4682
        %5509 = vmatpush1.bf16.msra.mxu0 %v4681
        %5510 = vmatprep.subr.bf16.mxu0 %v4698
        %5511 = vmatpush1.bf16.msra.mxu0 %v4697
        %5512 = vmatprep.subr.bf16.mxu0 %v4714
        %5513 = vmatpush1.bf16.msra.mxu0 %v4713
        %5514 = vmatprep.subr.bf16.mxu0 %v4730
        %5515 = vmatpush1.bf16.msra.mxu0 %v4729
        %5516 = vmatprep.subr.bf16.mxu0 %v4746
        %5517 = vmatpush1.bf16.msra.mxu0 %v4745
        %5518 = vmatprep.subr.bf16.mxu0 %v4762
        %5519 = vmatpush1.bf16.msra.mxu0 %v4761
        %5520 = vmatprep.subr.bf16.mxu0 %v4778
        %5521 = vmatpush1.bf16.msra.mxu0 %v4777
        %5522 = vmatprep.subr.bf16.mxu0 %v4794
        %5523 = vmatpush1.bf16.msra.mxu0 %v4793
        %5524 = vmatprep.subr.bf16.mxu0 %v4810
        %5525 = vmatpush1.bf16.msra.mxu0 %v4809
        %5526 = vmatprep.subr.bf16.mxu0 %v4826
        %5527 = vmatpush1.bf16.msra.mxu0 %v4825
        %5528 = vmatprep.subr.bf16.mxu0 %v4842
        %5529 = vmatpush1.bf16.msra.mxu0 %v4841
        %5530 = vmatprep.subr.bf16.mxu0 %v4858
        %5531 = vmatpush1.bf16.msra.mxu0 %v4857
        %5532 = vmatprep.subr.bf16.mxu0 %v4874
        %5533 = vmatpush1.bf16.msra.mxu0 %v4873
        %5534 = vmatprep.subr.bf16.mxu0 %v4890
        %5535 = vmatpush1.bf16.msra.mxu0 %v4889
        %5536 = vmatprep.subr.bf16.mxu0 %v4906
        %5537 = vmatpush1.bf16.msra.mxu0 %v4905
        %5538 = vmatprep.mubr.bf16.mxu0 %v5452
        %5539 = vmatmul.mubr.bf16.gmra.mrb[0].mxu0 %v5451
        %v5540 = vpop.f32.mrb[0].mxu0
        %v5541 = vadd.f32 %v5500, %v5540
        %v5542 = vpop.f32.mrb[0].mxu0
        %v5543 = vadd.f32 %v5502, %v5542
        %v5544 = vpop.f32.mrb[0].mxu0
        %v5545 = vpop.f32.mrb[0].mxu0
        %5546 = vdwg.mxu0
        %5547 = vmatprep.subr.bf16.mxu0 %v4922
        %5548 = vmatpush1.bf16.msra.mxu0 %v4921
        %5549 = vmatprep.subr.bf16.mxu0 %v4938
        %5550 = vmatpush1.bf16.msra.mxu0 %v4937
        %5551 = vmatprep.subr.bf16.mxu0 %v4954
        %5552 = vmatpush1.bf16.msra.mxu0 %v4953
        %5553 = vmatprep.subr.bf16.mxu0 %v4970
        %5554 = vmatpush1.bf16.msra.mxu0 %v4969
        %5555 = vmatprep.subr.bf16.mxu0 %v4986
        %5556 = vmatpush1.bf16.msra.mxu0 %v4985
        %5557 = vmatprep.subr.bf16.mxu0 %v5002
        %5558 = vmatpush1.bf16.msra.mxu0 %v5001
        %5559 = vmatprep.subr.bf16.mxu0 %v5018
        %5560 = vmatpush1.bf16.msra.mxu0 %v5017
        %5561 = vmatprep.subr.bf16.mxu0 %v5034
        %5562 = vmatpush1.bf16.msra.mxu0 %v5033
        %5563 = vmatprep.subr.bf16.mxu0 %v5050
        %5564 = vmatpush1.bf16.msra.mxu0 %v5049
        %5565 = vmatprep.subr.bf16.mxu0 %v5066
        %5566 = vmatpush1.bf16.msra.mxu0 %v5065
        %5567 = vmatprep.subr.bf16.mxu0 %v5082
        %5568 = vmatpush1.bf16.msra.mxu0 %v5081
        %5569 = vmatprep.subr.bf16.mxu0 %v5098
        %5570 = vmatpush1.bf16.msra.mxu0 %v5097
        %5571 = vmatprep.subr.bf16.mxu0 %v5114
        %5572 = vmatpush1.bf16.msra.mxu0 %v5113
        %5573 = vmatprep.subr.bf16.mxu0 %v5130
        %5574 = vmatpush1.bf16.msra.mxu0 %v5129
        %5575 = vmatprep.subr.bf16.mxu0 %v5146
        %5576 = vmatpush1.bf16.msra.mxu0 %v5145
        %5577 = vmatprep.subr.bf16.mxu0 %v5162
        %5578 = vmatpush1.bf16.msra.mxu0 %v5161
        %5579 = vmatprep.mubr.bf16.mxu0 %v5454
        %5580 = vmatmul.mubr.bf16.gmra.mrb[0].mxu0 %v5453
        %v5581 = vpop.f32.mrb[0].mxu0
        %v5582 = vadd.f32 %v5541, %v5581
        %v5583 = vpop.f32.mrb[0].mxu0
        %v5584 = vadd.f32 %v5543, %v5583
        %v5585 = vpop.f32.mrb[0].mxu0
        %v5586 = vpop.f32.mrb[0].mxu0
        %5587 = vdwg.mxu0
        %5588 = vmatprep.subr.bf16.mxu0 %v5178
        %5589 = vmatpush1.bf16.msra.mxu0 %v5177
        %5590 = vmatprep.subr.bf16.mxu0 %v5194
        %5591 = vmatpush1.bf16.msra.mxu0 %v5193
        %5592 = vmatprep.subr.bf16.mxu0 %v5210
        %5593 = vmatpush1.bf16.msra.mxu0 %v5209
        %5594 = vmatprep.subr.bf16.mxu0 %v5226
        %5595 = vmatpush1.bf16.msra.mxu0 %v5225
        %5596 = vmatprep.subr.bf16.mxu0 %v5242
        %5597 = vmatpush1.bf16.msra.mxu0 %v5241
        %5598 = vmatprep.subr.bf16.mxu0 %v5258
        %5599 = vmatpush1.bf16.msra.mxu0 %v5257
        %5600 = vmatprep.subr.bf16.mxu0 %v5274
        %5601 = vmatpush1.bf16.msra.mxu0 %v5273
        %5602 = vmatprep.subr.bf16.mxu0 %v5290
        %5603 = vmatpush1.bf16.msra.mxu0 %v5289
        %5604 = vmatprep.subr.bf16.mxu0 %v5306
        %5605 = vmatpush1.bf16.msra.mxu0 %v5305
        %5606 = vmatprep.subr.bf16.mxu0 %v5322
        %5607 = vmatpush1.bf16.msra.mxu0 %v5321
        %5608 = vmatprep.subr.bf16.mxu0 %v5338
        %5609 = vmatpush1.bf16.msra.mxu0 %v5337
        %5610 = vmatprep.subr.bf16.mxu0 %v5354
        %5611 = vmatpush1.bf16.msra.mxu0 %v5353
        %5612 = vmatprep.subr.bf16.mxu0 %v5370
        %5613 = vmatpush1.bf16.msra.mxu0 %v5369
        %5614 = vmatprep.subr.bf16.mxu0 %v5386
        %5615 = vmatpush1.bf16.msra.mxu0 %v5385
        %5616 = vmatprep.subr.bf16.mxu0 %v5402
        %5617 = vmatpush1.bf16.msra.mxu0 %v5401
        %5618 = vmatprep.subr.bf16.mxu0 %v5418
        %5619 = vmatpush1.bf16.msra.mxu0 %v5417
        %5620 = vmatprep.mubr.bf16.mxu0 %v5456
        %5621 = vmatmul.mubr.bf16.gmra.mrb[0].mxu0 %v5455
        %v5622 = vpop.f32.mrb[0].mxu0
        %v5623 = vadd.f32 %v5582, %v5622
        %v5624 = vpop.f32.mrb[0].mxu0
        %v5625 = vadd.f32 %v5584, %v5624
        %v5626 = vpop.f32.mrb[0].mxu0
        %v5627 = vpop.f32.mrb[0].mxu0
        %5628 = vdwg.mxu0
        %5629 = vmatprep.subr.bf16.mxu0 %v4412
        %5630 = vmatpush1.bf16.msra.mxu0 %v4411
        %5631 = vmatprep.subr.bf16.mxu0 %v4428
        %5632 = vmatpush1.bf16.msra.mxu0 %v4427
        %5633 = vmatprep.subr.bf16.mxu0 %v4444
        %5634 = vmatpush1.bf16.msra.mxu0 %v4443
        %5635 = vmatprep.subr.bf16.mxu0 %v4460
        %5636 = vmatpush1.bf16.msra.mxu0 %v4459
        %5637 = vmatprep.subr.bf16.mxu0 %v4476
        %5638 = vmatpush1.bf16.msra.mxu0 %v4475
        %5639 = vmatprep.subr.bf16.mxu0 %v4492
        %5640 = vmatpush1.bf16.msra.mxu0 %v4491
        %5641 = vmatprep.subr.bf16.mxu0 %v4508
        %5642 = vmatpush1.bf16.msra.mxu0 %v4507
        %5643 = vmatprep.subr.bf16.mxu0 %v4524
        %5644 = vmatpush1.bf16.msra.mxu0 %v4523
        %5645 = vmatprep.subr.bf16.mxu0 %v4540
        %5646 = vmatpush1.bf16.msra.mxu0 %v4539
        %5647 = vmatprep.subr.bf16.mxu0 %v4556
        %5648 = vmatpush1.bf16.msra.mxu0 %v4555
        %5649 = vmatprep.subr.bf16.mxu0 %v4572
        %5650 = vmatpush1.bf16.msra.mxu0 %v4571
        %5651 = vmatprep.subr.bf16.mxu0 %v4588
        %5652 = vmatpush1.bf16.msra.mxu0 %v4587
        %5653 = vmatprep.subr.bf16.mxu0 %v4604
        %5654 = vmatpush1.bf16.msra.mxu0 %v4603
        %5655 = vmatprep.subr.bf16.mxu0 %v4620
        %5656 = vmatpush1.bf16.msra.mxu0 %v4619
        %5657 = vmatprep.subr.bf16.mxu0 %v4636
        %5658 = vmatpush1.bf16.msra.mxu0 %v4635
        %5659 = vmatprep.subr.bf16.mxu0 %v4652
        %5660 = vmatpush1.bf16.msra.mxu0 %v4651
        %5661 = vmatprep.mubr.bf16.mxu0 %v5450
        %5662 = vmatmul.mubr.bf16.gmra.mrb[0].mxu0 %v5449
        %v5663 = vpop.f32.mrb[0].mxu0
        %v5664 = vadd.f32 0.0, %v5663
        %v5665 = vpop.f32.mrb[0].mxu0
        %v5666 = vadd.f32 0.0, %v5665
        %v5667 = vpop.f32.mrb[0].mxu0
        %v5668 = vpop.f32.mrb[0].mxu0
        %5669 = vdwg.mxu0
        %5670 = vmatprep.subr.bf16.mxu0 %v4668
        %5671 = vmatpush1.bf16.msra.mxu0 %v4667
        %5672 = vmatprep.subr.bf16.mxu0 %v4684
        %5673 = vmatpush1.bf16.msra.mxu0 %v4683
        %5674 = vmatprep.subr.bf16.mxu0 %v4700
        %5675 = vmatpush1.bf16.msra.mxu0 %v4699
        %5676 = vmatprep.subr.bf16.mxu0 %v4716
        %5677 = vmatpush1.bf16.msra.mxu0 %v4715
        %5678 = vmatprep.subr.bf16.mxu0 %v4732
        %5679 = vmatpush1.bf16.msra.mxu0 %v4731
        %5680 = vmatprep.subr.bf16.mxu0 %v4748
        %5681 = vmatpush1.bf16.msra.mxu0 %v4747
        %5682 = vmatprep.subr.bf16.mxu0 %v4764
        %5683 = vmatpush1.bf16.msra.mxu0 %v4763
        %5684 = vmatprep.subr.bf16.mxu0 %v4780
        %5685 = vmatpush1.bf16.msra.mxu0 %v4779
        %5686 = vmatprep.subr.bf16.mxu0 %v4796
        %5687 = vmatpush1.bf16.msra.mxu0 %v4795
        %5688 = vmatprep.subr.bf16.mxu0 %v4812
        %5689 = vmatpush1.bf16.msra.mxu0 %v4811
        %5690 = vmatprep.subr.bf16.mxu0 %v4828
        %5691 = vmatpush1.bf16.msra.mxu0 %v4827
        %5692 = vmatprep.subr.bf16.mxu0 %v4844
        %5693 = vmatpush1.bf16.msra.mxu0 %v4843
        %5694 = vmatprep.subr.bf16.mxu0 %v4860
        %5695 = vmatpush1.bf16.msra.mxu0 %v4859
        %5696 = vmatprep.subr.bf16.mxu0 %v4876
        %5697 = vmatpush1.bf16.msra.mxu0 %v4875
        %5698 = vmatprep.subr.bf16.mxu0 %v4892
        %5699 = vmatpush1.bf16.msra.mxu0 %v4891
        %5700 = vmatprep.subr.bf16.mxu0 %v4908
        %5701 = vmatpush1.bf16.msra.mxu0 %v4907
        %5702 = vmatprep.mubr.bf16.mxu0 %v5452
        %5703 = vmatmul.mubr.bf16.gmra.mrb[0].mxu0 %v5451
        %v5704 = vpop.f32.mrb[0].mxu0
        %v5705 = vadd.f32 %v5664, %v5704
        %v5706 = vpop.f32.mrb[0].mxu0
        %v5707 = vadd.f32 %v5666, %v5706
        %v5708 = vpop.f32.mrb[0].mxu0
        %v5709 = vpop.f32.mrb[0].mxu0
        %5710 = vdwg.mxu0
        %5711 = vmatprep.subr.bf16.mxu0 %v4924
        %5712 = vmatpush1.bf16.msra.mxu0 %v4923
        %5713 = vmatprep.subr.bf16.mxu0 %v4940
        %5714 = vmatpush1.bf16.msra.mxu0 %v4939
        %5715 = vmatprep.subr.bf16.mxu0 %v4956
        %5716 = vmatpush1.bf16.msra.mxu0 %v4955
        %5717 = vmatprep.subr.bf16.mxu0 %v4972
        %5718 = vmatpush1.bf16.msra.mxu0 %v4971
        %5719 = vmatprep.subr.bf16.mxu0 %v4988
        %5720 = vmatpush1.bf16.msra.mxu0 %v4987
        %5721 = vmatprep.subr.bf16.mxu0 %v5004
        %5722 = vmatpush1.bf16.msra.mxu0 %v5003
        %5723 = vmatprep.subr.bf16.mxu0 %v5020
        %5724 = vmatpush1.bf16.msra.mxu0 %v5019
        %5725 = vmatprep.subr.bf16.mxu0 %v5036
        %5726 = vmatpush1.bf16.msra.mxu0 %v5035
        %5727 = vmatprep.subr.bf16.mxu0 %v5052
        %5728 = vmatpush1.bf16.msra.mxu0 %v5051
        %5729 = vmatprep.subr.bf16.mxu0 %v5068
        %5730 = vmatpush1.bf16.msra.mxu0 %v5067
        %5731 = vmatprep.subr.bf16.mxu0 %v5084
        %5732 = vmatpush1.bf16.msra.mxu0 %v5083
        %5733 = vmatprep.subr.bf16.mxu0 %v5100
        %5734 = vmatpush1.bf16.msra.mxu0 %v5099
        %5735 = vmatprep.subr.bf16.mxu0 %v5116
        %5736 = vmatpush1.bf16.msra.mxu0 %v5115
        %5737 = vmatprep.subr.bf16.mxu0 %v5132
        %5738 = vmatpush1.bf16.msra.mxu0 %v5131
        %5739 = vmatprep.subr.bf16.mxu0 %v5148
        %5740 = vmatpush1.bf16.msra.mxu0 %v5147
        %5741 = vmatprep.subr.bf16.mxu0 %v5164
        %5742 = vmatpush1.bf16.msra.mxu0 %v5163
        %5743 = vmatprep.mubr.bf16.mxu0 %v5454
        %5744 = vmatmul.mubr.bf16.gmra.mrb[0].mxu0 %v5453
        %v5745 = vpop.f32.mrb[0].mxu0
        %v5746 = vadd.f32 %v5705, %v5745
        %v5747 = vpop.f32.mrb[0].mxu0
        %v5748 = vadd.f32 %v5707, %v5747
        %v5749 = vpop.f32.mrb[0].mxu0
        %v5750 = vpop.f32.mrb[0].mxu0
        %5751 = vdwg.mxu0
        %5752 = vmatprep.subr.bf16.mxu0 %v5180
        %5753 = vmatpush1.bf16.msra.mxu0 %v5179
        %5754 = vmatprep.subr.bf16.mxu0 %v5196
        %5755 = vmatpush1.bf16.msra.mxu0 %v5195
        %5756 = vmatprep.subr.bf16.mxu0 %v5212
        %5757 = vmatpush1.bf16.msra.mxu0 %v5211
        %5758 = vmatprep.subr.bf16.mxu0 %v5228
        %5759 = vmatpush1.bf16.msra.mxu0 %v5227
        %5760 = vmatprep.subr.bf16.mxu0 %v5244
        %5761 = vmatpush1.bf16.msra.mxu0 %v5243
        %5762 = vmatprep.subr.bf16.mxu0 %v5260
        %5763 = vmatpush1.bf16.msra.mxu0 %v5259
        %5764 = vmatprep.subr.bf16.mxu0 %v5276
        %5765 = vmatpush1.bf16.msra.mxu0 %v5275
        %5766 = vmatprep.subr.bf16.mxu0 %v5292
        %5767 = vmatpush1.bf16.msra.mxu0 %v5291
        %5768 = vmatprep.subr.bf16.mxu0 %v5308
        %5769 = vmatpush1.bf16.msra.mxu0 %v5307
        %5770 = vmatprep.subr.bf16.mxu0 %v5324
        %5771 = vmatpush1.bf16.msra.mxu0 %v5323
        %5772 = vmatprep.subr.bf16.mxu0 %v5340
        %5773 = vmatpush1.bf16.msra.mxu0 %v5339
        %5774 = vmatprep.subr.bf16.mxu0 %v5356
        %5775 = vmatpush1.bf16.msra.mxu0 %v5355
        %5776 = vmatprep.subr.bf16.mxu0 %v5372
        %5777 = vmatpush1.bf16.msra.mxu0 %v5371
        %5778 = vmatprep.subr.bf16.mxu0 %v5388
        %5779 = vmatpush1.bf16.msra.mxu0 %v5387
        %5780 = vmatprep.subr.bf16.mxu0 %v5404
        %5781 = vmatpush1.bf16.msra.mxu0 %v5403
        %5782 = vmatprep.subr.bf16.mxu0 %v5420
        %5783 = vmatpush1.bf16.msra.mxu0 %v5419
        %5784 = vmatprep.mubr.bf16.mxu0 %v5456
        %5785 = vmatmul.mubr.bf16.gmra.mrb[0].mxu0 %v5455
        %v5786 = vpop.f32.mrb[0].mxu0
        %v5787 = vadd.f32 %v5746, %v5786
        %v5788 = vpop.f32.mrb[0].mxu0
        %v5789 = vadd.f32 %v5748, %v5788
        %v5790 = vpop.f32.mrb[0].mxu0
        %v5791 = vpop.f32.mrb[0].mxu0
        %5792 = vdwg.mxu0
        %5793 = vmatprep.subr.bf16.mxu0 %v4414
        %5794 = vmatpush1.bf16.msra.mxu0 %v4413
        %5795 = vmatprep.subr.bf16.mxu0 %v4430
        %5796 = vmatpush1.bf16.msra.mxu0 %v4429
        %5797 = vmatprep.subr.bf16.mxu0 %v4446
        %5798 = vmatpush1.bf16.msra.mxu0 %v4445
        %5799 = vmatprep.subr.bf16.mxu0 %v4462
        %5800 = vmatpush1.bf16.msra.mxu0 %v4461
        %5801 = vmatprep.subr.bf16.mxu0 %v4478
        %5802 = vmatpush1.bf16.msra.mxu0 %v4477
        %5803 = vmatprep.subr.bf16.mxu0 %v4494
        %5804 = vmatpush1.bf16.msra.mxu0 %v4493
        %5805 = vmatprep.subr.bf16.mxu0 %v4510
        %5806 = vmatpush1.bf16.msra.mxu0 %v4509
        %5807 = vmatprep.subr.bf16.mxu0 %v4526
        %5808 = vmatpush1.bf16.msra.mxu0 %v4525
        %5809 = vmatprep.subr.bf16.mxu0 %v4542
        %5810 = vmatpush1.bf16.msra.mxu0 %v4541
        %5811 = vmatprep.subr.bf16.mxu0 %v4558
        %5812 = vmatpush1.bf16.msra.mxu0 %v4557
        %5813 = vmatprep.subr.bf16.mxu0 %v4574
        %5814 = vmatpush1.bf16.msra.mxu0 %v4573
        %5815 = vmatprep.subr.bf16.mxu0 %v4590
        %5816 = vmatpush1.bf16.msra.mxu0 %v4589
        %5817 = vmatprep.subr.bf16.mxu0 %v4606
        %5818 = vmatpush1.bf16.msra.mxu0 %v4605
        %5819 = vmatprep.subr.bf16.mxu0 %v4622
        %5820 = vmatpush1.bf16.msra.mxu0 %v4621
        %5821 = vmatprep.subr.bf16.mxu0 %v4638
        %5822 = vmatpush1.bf16.msra.mxu0 %v4637
        %5823 = vmatprep.subr.bf16.mxu0 %v4654
        %5824 = vmatpush1.bf16.msra.mxu0 %v4653
        %5825 = vmatprep.mubr.bf16.mxu0 %v5450
        %5826 = vmatmul.mubr.bf16.gmra.mrb[0].mxu0 %v5449
        %v5827 = vpop.f32.mrb[0].mxu0
        %v5828 = vadd.f32 0.0, %v5827
        %v5829 = vpop.f32.mrb[0].mxu0
        %v5830 = vadd.f32 0.0, %v5829
        %v5831 = vpop.f32.mrb[0].mxu0
        %v5832 = vpop.f32.mrb[0].mxu0
        %5833 = vdwg.mxu0
        %5834 = vmatprep.subr.bf16.mxu0 %v4670
        %5835 = vmatpush1.bf16.msra.mxu0 %v4669
        %5836 = vmatprep.subr.bf16.mxu0 %v4686
        %5837 = vmatpush1.bf16.msra.mxu0 %v4685
        %5838 = vmatprep.subr.bf16.mxu0 %v4702
        %5839 = vmatpush1.bf16.msra.mxu0 %v4701
        %5840 = vmatprep.subr.bf16.mxu0 %v4718
        %5841 = vmatpush1.bf16.msra.mxu0 %v4717
        %5842 = vmatprep.subr.bf16.mxu0 %v4734
        %5843 = vmatpush1.bf16.msra.mxu0 %v4733
        %5844 = vmatprep.subr.bf16.mxu0 %v4750
        %5845 = vmatpush1.bf16.msra.mxu0 %v4749
        %5846 = vmatprep.subr.bf16.mxu0 %v4766
        %5847 = vmatpush1.bf16.msra.mxu0 %v4765
        %5848 = vmatprep.subr.bf16.mxu0 %v4782
        %5849 = vmatpush1.bf16.msra.mxu0 %v4781
        %5850 = vmatprep.subr.bf16.mxu0 %v4798
        %5851 = vmatpush1.bf16.msra.mxu0 %v4797
        %5852 = vmatprep.subr.bf16.mxu0 %v4814
        %5853 = vmatpush1.bf16.msra.mxu0 %v4813
        %5854 = vmatprep.subr.bf16.mxu0 %v4830
        %5855 = vmatpush1.bf16.msra.mxu0 %v4829
        %5856 = vmatprep.subr.bf16.mxu0 %v4846
        %5857 = vmatpush1.bf16.msra.mxu0 %v4845
        %5858 = vmatprep.subr.bf16.mxu0 %v4862
        %5859 = vmatpush1.bf16.msra.mxu0 %v4861
        %5860 = vmatprep.subr.bf16.mxu0 %v4878
        %5861 = vmatpush1.bf16.msra.mxu0 %v4877
        %5862 = vmatprep.subr.bf16.mxu0 %v4894
        %5863 = vmatpush1.bf16.msra.mxu0 %v4893
        %5864 = vmatprep.subr.bf16.mxu0 %v4910
        %5865 = vmatpush1.bf16.msra.mxu0 %v4909
        %5866 = vmatprep.mubr.bf16.mxu0 %v5452
        %5867 = vmatmul.mubr.bf16.gmra.mrb[0].mxu0 %v5451
        %v5868 = vpop.f32.mrb[0].mxu0
        %v5869 = vadd.f32 %v5828, %v5868
        %v5870 = vpop.f32.mrb[0].mxu0
        %v5871 = vadd.f32 %v5830, %v5870
        %v5872 = vpop.f32.mrb[0].mxu0
        %v5873 = vpop.f32.mrb[0].mxu0
        %5874 = vdwg.mxu0
        %5875 = vmatprep.subr.bf16.mxu0 %v4926
        %5876 = vmatpush1.bf16.msra.mxu0 %v4925
        %5877 = vmatprep.subr.bf16.mxu0 %v4942
        %5878 = vmatpush1.bf16.msra.mxu0 %v4941
        %5879 = vmatprep.subr.bf16.mxu0 %v4958
        %5880 = vmatpush1.bf16.msra.mxu0 %v4957
        %5881 = vmatprep.subr.bf16.mxu0 %v4974
        %5882 = vmatpush1.bf16.msra.mxu0 %v4973
        %5883 = vmatprep.subr.bf16.mxu0 %v4990
        %5884 = vmatpush1.bf16.msra.mxu0 %v4989
        %5885 = vmatprep.subr.bf16.mxu0 %v5006
        %5886 = vmatpush1.bf16.msra.mxu0 %v5005
        %5887 = vmatprep.subr.bf16.mxu0 %v5022
        %5888 = vmatpush1.bf16.msra.mxu0 %v5021
        %5889 = vmatprep.subr.bf16.mxu0 %v5038
        %5890 = vmatpush1.bf16.msra.mxu0 %v5037
        %5891 = vmatprep.subr.bf16.mxu0 %v5054
        %5892 = vmatpush1.bf16.msra.mxu0 %v5053
        %5893 = vmatprep.subr.bf16.mxu0 %v5070
        %5894 = vmatpush1.bf16.msra.mxu0 %v5069
        %5895 = vmatprep.subr.bf16.mxu0 %v5086
        %5896 = vmatpush1.bf16.msra.mxu0 %v5085
        %5897 = vmatprep.subr.bf16.mxu0 %v5102
        %5898 = vmatpush1.bf16.msra.mxu0 %v5101
        %5899 = vmatprep.subr.bf16.mxu0 %v5118
        %5900 = vmatpush1.bf16.msra.mxu0 %v5117
        %5901 = vmatprep.subr.bf16.mxu0 %v5134
        %5902 = vmatpush1.bf16.msra.mxu0 %v5133
        %5903 = vmatprep.subr.bf16.mxu0 %v5150
        %5904 = vmatpush1.bf16.msra.mxu0 %v5149
        %5905 = vmatprep.subr.bf16.mxu0 %v5166
        %5906 = vmatpush1.bf16.msra.mxu0 %v5165
        %5907 = vmatprep.mubr.bf16.mxu0 %v5454
        %5908 = vmatmul.mubr.bf16.gmra.mrb[0].mxu0 %v5453
        %v5909 = vpop.f32.mrb[0].mxu0
        %v5910 = vadd.f32 %v5869, %v5909
        %v5911 = vpop.f32.mrb[0].mxu0
        %v5912 = vadd.f32 %v5871, %v5911
        %v5913 = vpop.f32.mrb[0].mxu0
        %v5914 = vpop.f32.mrb[0].mxu0
        %5915 = vdwg.mxu0
        %5916 = vmatprep.subr.bf16.mxu0 %v5182
        %5917 = vmatpush1.bf16.msra.mxu0 %v5181
        %5918 = vmatprep.subr.bf16.mxu0 %v5198
        %5919 = vmatpush1.bf16.msra.mxu0 %v5197
        %5920 = vmatprep.subr.bf16.mxu0 %v5214
        %5921 = vmatpush1.bf16.msra.mxu0 %v5213
        %5922 = vmatprep.subr.bf16.mxu0 %v5230
        %5923 = vmatpush1.bf16.msra.mxu0 %v5229
        %5924 = vmatprep.subr.bf16.mxu0 %v5246
        %5925 = vmatpush1.bf16.msra.mxu0 %v5245
        %5926 = vmatprep.subr.bf16.mxu0 %v5262
        %5927 = vmatpush1.bf16.msra.mxu0 %v5261
        %5928 = vmatprep.subr.bf16.mxu0 %v5278
        %5929 = vmatpush1.bf16.msra.mxu0 %v5277
        %5930 = vmatprep.subr.bf16.mxu0 %v5294
        %5931 = vmatpush1.bf16.msra.mxu0 %v5293
        %5932 = vmatprep.subr.bf16.mxu0 %v5310
        %5933 = vmatpush1.bf16.msra.mxu0 %v5309
        %5934 = vmatprep.subr.bf16.mxu0 %v5326
        %5935 = vmatpush1.bf16.msra.mxu0 %v5325
        %5936 = vmatprep.subr.bf16.mxu0 %v5342
        %5937 = vmatpush1.bf16.msra.mxu0 %v5341
        %5938 = vmatprep.subr.bf16.mxu0 %v5358
        %5939 = vmatpush1.bf16.msra.mxu0 %v5357
        %5940 = vmatprep.subr.bf16.mxu0 %v5374
        %5941 = vmatpush1.bf16.msra.mxu0 %v5373
        %5942 = vmatprep.subr.bf16.mxu0 %v5390
        %5943 = vmatpush1.bf16.msra.mxu0 %v5389
        %5944 = vmatprep.subr.bf16.mxu0 %v5406
        %5945 = vmatpush1.bf16.msra.mxu0 %v5405
        %5946 = vmatprep.subr.bf16.mxu0 %v5422
        %5947 = vmatpush1.bf16.msra.mxu0 %v5421
        %5948 = vmatprep.mubr.bf16.mxu0 %v5456
        %5949 = vmatmul.mubr.bf16.gmra.mrb[0].mxu0 %v5455
        %v5950 = vpop.f32.mrb[0].mxu0
        %v5951 = vadd.f32 %v5910, %v5950
        %v5952 = vpop.f32.mrb[0].mxu0
        %v5953 = vadd.f32 %v5912, %v5952
        %v5954 = vpop.f32.mrb[0].mxu0
        %v5955 = vpop.f32.mrb[0].mxu0
        %5956 = vdwg.mxu0
        %5957 = vmatprep.subr.bf16.mxu0 %v4416
        %5958 = vmatpush1.bf16.msra.mxu0 %v4415
        %5959 = vmatprep.subr.bf16.mxu0 %v4432
        %5960 = vmatpush1.bf16.msra.mxu0 %v4431
        %5961 = vmatprep.subr.bf16.mxu0 %v4448
        %5962 = vmatpush1.bf16.msra.mxu0 %v4447
        %5963 = vmatprep.subr.bf16.mxu0 %v4464
        %5964 = vmatpush1.bf16.msra.mxu0 %v4463
        %5965 = vmatprep.subr.bf16.mxu0 %v4480
        %5966 = vmatpush1.bf16.msra.mxu0 %v4479
        %5967 = vmatprep.subr.bf16.mxu0 %v4496
        %5968 = vmatpush1.bf16.msra.mxu0 %v4495
        %5969 = vmatprep.subr.bf16.mxu0 %v4512
        %5970 = vmatpush1.bf16.msra.mxu0 %v4511
        %5971 = vmatprep.subr.bf16.mxu0 %v4528
        %5972 = vmatpush1.bf16.msra.mxu0 %v4527
        %5973 = vmatprep.subr.bf16.mxu0 %v4544
        %5974 = vmatpush1.bf16.msra.mxu0 %v4543
        %5975 = vmatprep.subr.bf16.mxu0 %v4560
        %5976 = vmatpush1.bf16.msra.mxu0 %v4559
        %5977 = vmatprep.subr.bf16.mxu0 %v4576
        %5978 = vmatpush1.bf16.msra.mxu0 %v4575
        %5979 = vmatprep.subr.bf16.mxu0 %v4592
        %5980 = vmatpush1.bf16.msra.mxu0 %v4591
        %5981 = vmatprep.subr.bf16.mxu0 %v4608
        %5982 = vmatpush1.bf16.msra.mxu0 %v4607
        %5983 = vmatprep.subr.bf16.mxu0 %v4624
        %5984 = vmatpush1.bf16.msra.mxu0 %v4623
        %5985 = vmatprep.subr.bf16.mxu0 %v4640
        %5986 = vmatpush1.bf16.msra.mxu0 %v4639
        %5987 = vmatprep.subr.bf16.mxu0 %v4656
        %5988 = vmatpush1.bf16.msra.mxu0 %v4655
        %5989 = vmatprep.mubr.bf16.mxu0 %v5450
        %5990 = vmatmul.mubr.bf16.gmra.mrb[0].mxu0 %v5449
        %v5991 = vpop.f32.mrb[0].mxu0
        %v5992 = vadd.f32 0.0, %v5991
        %v5993 = vpop.f32.mrb[0].mxu0
        %v5994 = vadd.f32 0.0, %v5993
        %v5995 = vpop.f32.mrb[0].mxu0
        %v5996 = vpop.f32.mrb[0].mxu0
        %5997 = vdwg.mxu0
        %5998 = vmatprep.subr.bf16.mxu0 %v4672
        %5999 = vmatpush1.bf16.msra.mxu0 %v4671
        %6000 = vmatprep.subr.bf16.mxu0 %v4688
        %6001 = vmatpush1.bf16.msra.mxu0 %v4687
        %6002 = vmatprep.subr.bf16.mxu0 %v4704
        %6003 = vmatpush1.bf16.msra.mxu0 %v4703
        %6004 = vmatprep.subr.bf16.mxu0 %v4720
        %6005 = vmatpush1.bf16.msra.mxu0 %v4719
        %6006 = vmatprep.subr.bf16.mxu0 %v4736
        %6007 = vmatpush1.bf16.msra.mxu0 %v4735
        %6008 = vmatprep.subr.bf16.mxu0 %v4752
        %6009 = vmatpush1.bf16.msra.mxu0 %v4751
        %6010 = vmatprep.subr.bf16.mxu0 %v4768
        %6011 = vmatpush1.bf16.msra.mxu0 %v4767
        %6012 = vmatprep.subr.bf16.mxu0 %v4784
        %6013 = vmatpush1.bf16.msra.mxu0 %v4783
        %6014 = vmatprep.subr.bf16.mxu0 %v4800
        %6015 = vmatpush1.bf16.msra.mxu0 %v4799
        %6016 = vmatprep.subr.bf16.mxu0 %v4816
        %6017 = vmatpush1.bf16.msra.mxu0 %v4815
        %6018 = vmatprep.subr.bf16.mxu0 %v4832
        %6019 = vmatpush1.bf16.msra.mxu0 %v4831
        %6020 = vmatprep.subr.bf16.mxu0 %v4848
        %6021 = vmatpush1.bf16.msra.mxu0 %v4847
        %6022 = vmatprep.subr.bf16.mxu0 %v4864
        %6023 = vmatpush1.bf16.msra.mxu0 %v4863
        %6024 = vmatprep.subr.bf16.mxu0 %v4880
        %6025 = vmatpush1.bf16.msra.mxu0 %v4879
        %6026 = vmatprep.subr.bf16.mxu0 %v4896
        %6027 = vmatpush1.bf16.msra.mxu0 %v4895
        %6028 = vmatprep.subr.bf16.mxu0 %v4912
        %6029 = vmatpush1.bf16.msra.mxu0 %v4911
        %6030 = vmatprep.mubr.bf16.mxu0 %v5452
        %6031 = vmatmul.mubr.bf16.gmra.mrb[0].mxu0 %v5451
        %v6032 = vpop.f32.mrb[0].mxu0
        %v6033 = vadd.f32 %v5992, %v6032
        %v6034 = vpop.f32.mrb[0].mxu0
        %v6035 = vadd.f32 %v5994, %v6034
        %v6036 = vpop.f32.mrb[0].mxu0
        %v6037 = vpop.f32.mrb[0].mxu0
        %6038 = vdwg.mxu0
        %6039 = vmatprep.subr.bf16.mxu0 %v4928
        %6040 = vmatpush1.bf16.msra.mxu0 %v4927
        %6041 = vmatprep.subr.bf16.mxu0 %v4944
        %6042 = vmatpush1.bf16.msra.mxu0 %v4943
        %6043 = vmatprep.subr.bf16.mxu0 %v4960
        %6044 = vmatpush1.bf16.msra.mxu0 %v4959
        %6045 = vmatprep.subr.bf16.mxu0 %v4976
        %6046 = vmatpush1.bf16.msra.mxu0 %v4975
        %6047 = vmatprep.subr.bf16.mxu0 %v4992
        %6048 = vmatpush1.bf16.msra.mxu0 %v4991
        %6049 = vmatprep.subr.bf16.mxu0 %v5008
        %6050 = vmatpush1.bf16.msra.mxu0 %v5007
        %6051 = vmatprep.subr.bf16.mxu0 %v5024
        %6052 = vmatpush1.bf16.msra.mxu0 %v5023
        %6053 = vmatprep.subr.bf16.mxu0 %v5040
        %6054 = vmatpush1.bf16.msra.mxu0 %v5039
        %6055 = vmatprep.subr.bf16.mxu0 %v5056
        %6056 = vmatpush1.bf16.msra.mxu0 %v5055
        %6057 = vmatprep.subr.bf16.mxu0 %v5072
        %6058 = vmatpush1.bf16.msra.mxu0 %v5071
        %6059 = vmatprep.subr.bf16.mxu0 %v5088
        %6060 = vmatpush1.bf16.msra.mxu0 %v5087
        %6061 = vmatprep.subr.bf16.mxu0 %v5104
        %6062 = vmatpush1.bf16.msra.mxu0 %v5103
        %6063 = vmatprep.subr.bf16.mxu0 %v5120
        %6064 = vmatpush1.bf16.msra.mxu0 %v5119
        %6065 = vmatprep.subr.bf16.mxu0 %v5136
        %6066 = vmatpush1.bf16.msra.mxu0 %v5135
        %6067 = vmatprep.subr.bf16.mxu0 %v5152
        %6068 = vmatpush1.bf16.msra.mxu0 %v5151
        %6069 = vmatprep.subr.bf16.mxu0 %v5168
        %6070 = vmatpush1.bf16.msra.mxu0 %v5167
        %6071 = vmatprep.mubr.bf16.mxu0 %v5454
        %6072 = vmatmul.mubr.bf16.gmra.mrb[0].mxu0 %v5453
        %v6073 = vpop.f32.mrb[0].mxu0
        %v6074 = vadd.f32 %v6033, %v6073
        %v6075 = vpop.f32.mrb[0].mxu0
        %v6076 = vadd.f32 %v6035, %v6075
        %v6077 = vpop.f32.mrb[0].mxu0
        %v6078 = vpop.f32.mrb[0].mxu0
        %6079 = vdwg.mxu0
        %6080 = vmatprep.subr.bf16.mxu0 %v5184
        %6081 = vmatpush1.bf16.msra.mxu0 %v5183
        %6082 = vmatprep.subr.bf16.mxu0 %v5200
        %6083 = vmatpush1.bf16.msra.mxu0 %v5199
        %6084 = vmatprep.subr.bf16.mxu0 %v5216
        %6085 = vmatpush1.bf16.msra.mxu0 %v5215
        %6086 = vmatprep.subr.bf16.mxu0 %v5232
        %6087 = vmatpush1.bf16.msra.mxu0 %v5231
        %6088 = vmatprep.subr.bf16.mxu0 %v5248
        %6089 = vmatpush1.bf16.msra.mxu0 %v5247
        %6090 = vmatprep.subr.bf16.mxu0 %v5264
        %6091 = vmatpush1.bf16.msra.mxu0 %v5263
        %6092 = vmatprep.subr.bf16.mxu0 %v5280
        %6093 = vmatpush1.bf16.msra.mxu0 %v5279
        %6094 = vmatprep.subr.bf16.mxu0 %v5296
        %6095 = vmatpush1.bf16.msra.mxu0 %v5295
        %6096 = vmatprep.subr.bf16.mxu0 %v5312
        %6097 = vmatpush1.bf16.msra.mxu0 %v5311
        %6098 = vmatprep.subr.bf16.mxu0 %v5328
        %6099 = vmatpush1.bf16.msra.mxu0 %v5327
        %6100 = vmatprep.subr.bf16.mxu0 %v5344
        %6101 = vmatpush1.bf16.msra.mxu0 %v5343
        %6102 = vmatprep.subr.bf16.mxu0 %v5360
        %6103 = vmatpush1.bf16.msra.mxu0 %v5359
        %6104 = vmatprep.subr.bf16.mxu0 %v5376
        %6105 = vmatpush1.bf16.msra.mxu0 %v5375
        %6106 = vmatprep.subr.bf16.mxu0 %v5392
        %6107 = vmatpush1.bf16.msra.mxu0 %v5391
        %6108 = vmatprep.subr.bf16.mxu0 %v5408
        %6109 = vmatpush1.bf16.msra.mxu0 %v5407
        %6110 = vmatprep.subr.bf16.mxu0 %v5424
        %6111 = vmatpush1.bf16.msra.mxu0 %v5423
        %6112 = vmatprep.mubr.bf16.mxu0 %v5456
        %6113 = vmatmul.mubr.bf16.gmra.mrb[0].mxu0 %v5455
        %v6114 = vpop.f32.mrb[0].mxu0
        %v6115 = vadd.f32 %v6074, %v6114
        %v6116 = vpop.f32.mrb[0].mxu0
        %v6117 = vadd.f32 %v6076, %v6116
        %v6118 = vpop.f32.mrb[0].mxu0
        %v6119 = vpop.f32.mrb[0].mxu0
        %6120 = vdwg.mxu0
        %6121 = vmatprep.subr.bf16.mxu0 %v4418
        %6122 = vmatpush1.bf16.msra.mxu0 %v4417
        %6123 = vmatprep.subr.bf16.mxu0 %v4434
        %6124 = vmatpush1.bf16.msra.mxu0 %v4433
        %6125 = vmatprep.subr.bf16.mxu0 %v4450
        %6126 = vmatpush1.bf16.msra.mxu0 %v4449
        %6127 = vmatprep.subr.bf16.mxu0 %v4466
        %6128 = vmatpush1.bf16.msra.mxu0 %v4465
        %6129 = vmatprep.subr.bf16.mxu0 %v4482
        %6130 = vmatpush1.bf16.msra.mxu0 %v4481
        %6131 = vmatprep.subr.bf16.mxu0 %v4498
        %6132 = vmatpush1.bf16.msra.mxu0 %v4497
        %6133 = vmatprep.subr.bf16.mxu0 %v4514
        %6134 = vmatpush1.bf16.msra.mxu0 %v4513
        %6135 = vmatprep.subr.bf16.mxu0 %v4530
        %6136 = vmatpush1.bf16.msra.mxu0 %v4529
        %6137 = vmatprep.subr.bf16.mxu0 %v4546
        %6138 = vmatpush1.bf16.msra.mxu0 %v4545
        %6139 = vmatprep.subr.bf16.mxu0 %v4562
        %6140 = vmatpush1.bf16.msra.mxu0 %v4561
        %6141 = vmatprep.subr.bf16.mxu0 %v4578
        %6142 = vmatpush1.bf16.msra.mxu0 %v4577
        %6143 = vmatprep.subr.bf16.mxu0 %v4594
        %6144 = vmatpush1.bf16.msra.mxu0 %v4593
        %6145 = vmatprep.subr.bf16.mxu0 %v4610
        %6146 = vmatpush1.bf16.msra.mxu0 %v4609
        %6147 = vmatprep.subr.bf16.mxu0 %v4626
        %6148 = vmatpush1.bf16.msra.mxu0 %v4625
        %6149 = vmatprep.subr.bf16.mxu0 %v4642
        %6150 = vmatpush1.bf16.msra.mxu0 %v4641
        %6151 = vmatprep.subr.bf16.mxu0 %v4658
        %6152 = vmatpush1.bf16.msra.mxu0 %v4657
        %6153 = vmatprep.mubr.bf16.mxu0 %v5450
        %6154 = vmatmul.mubr.bf16.gmra.mrb[0].mxu0 %v5449
        %v6155 = vpop.f32.mrb[0].mxu0
        %v6156 = vadd.f32 0.0, %v6155
        %v6157 = vpop.f32.mrb[0].mxu0
        %v6158 = vadd.f32 0.0, %v6157
        %v6159 = vpop.f32.mrb[0].mxu0
        %v6160 = vpop.f32.mrb[0].mxu0
        %6161 = vdwg.mxu0
        %6162 = vmatprep.subr.bf16.mxu0 %v4674
        %6163 = vmatpush1.bf16.msra.mxu0 %v4673
        %6164 = vmatprep.subr.bf16.mxu0 %v4690
        %6165 = vmatpush1.bf16.msra.mxu0 %v4689
        %6166 = vmatprep.subr.bf16.mxu0 %v4706
        %6167 = vmatpush1.bf16.msra.mxu0 %v4705
        %6168 = vmatprep.subr.bf16.mxu0 %v4722
        %6169 = vmatpush1.bf16.msra.mxu0 %v4721
        %6170 = vmatprep.subr.bf16.mxu0 %v4738
        %6171 = vmatpush1.bf16.msra.mxu0 %v4737
        %6172 = vmatprep.subr.bf16.mxu0 %v4754
        %6173 = vmatpush1.bf16.msra.mxu0 %v4753
        %6174 = vmatprep.subr.bf16.mxu0 %v4770
        %6175 = vmatpush1.bf16.msra.mxu0 %v4769
        %6176 = vmatprep.subr.bf16.mxu0 %v4786
        %6177 = vmatpush1.bf16.msra.mxu0 %v4785
        %6178 = vmatprep.subr.bf16.mxu0 %v4802
        %6179 = vmatpush1.bf16.msra.mxu0 %v4801
        %6180 = vmatprep.subr.bf16.mxu0 %v4818
        %6181 = vmatpush1.bf16.msra.mxu0 %v4817
        %6182 = vmatprep.subr.bf16.mxu0 %v4834
        %6183 = vmatpush1.bf16.msra.mxu0 %v4833
        %6184 = vmatprep.subr.bf16.mxu0 %v4850
        %6185 = vmatpush1.bf16.msra.mxu0 %v4849
        %6186 = vmatprep.subr.bf16.mxu0 %v4866
        %6187 = vmatpush1.bf16.msra.mxu0 %v4865
        %6188 = vmatprep.subr.bf16.mxu0 %v4882
        %6189 = vmatpush1.bf16.msra.mxu0 %v4881
        %6190 = vmatprep.subr.bf16.mxu0 %v4898
        %6191 = vmatpush1.bf16.msra.mxu0 %v4897
        %6192 = vmatprep.subr.bf16.mxu0 %v4914
        %6193 = vmatpush1.bf16.msra.mxu0 %v4913
        %6194 = vmatprep.mubr.bf16.mxu0 %v5452
        %6195 = vmatmul.mubr.bf16.gmra.mrb[0].mxu0 %v5451
        %v6196 = vpop.f32.mrb[0].mxu0
        %v6197 = vadd.f32 %v6156, %v6196
        %v6198 = vpop.f32.mrb[0].mxu0
        %v6199 = vadd.f32 %v6158, %v6198
        %v6200 = vpop.f32.mrb[0].mxu0
        %v6201 = vpop.f32.mrb[0].mxu0
        %6202 = vdwg.mxu0
        %6203 = vmatprep.subr.bf16.mxu0 %v4930
        %6204 = vmatpush1.bf16.msra.mxu0 %v4929
        %6205 = vmatprep.subr.bf16.mxu0 %v4946
        %6206 = vmatpush1.bf16.msra.mxu0 %v4945
        %6207 = vmatprep.subr.bf16.mxu0 %v4962
        %6208 = vmatpush1.bf16.msra.mxu0 %v4961
        %6209 = vmatprep.subr.bf16.mxu0 %v4978
        %6210 = vmatpush1.bf16.msra.mxu0 %v4977
        %6211 = vmatprep.subr.bf16.mxu0 %v4994
        %6212 = vmatpush1.bf16.msra.mxu0 %v4993
        %6213 = vmatprep.subr.bf16.mxu0 %v5010
        %6214 = vmatpush1.bf16.msra.mxu0 %v5009
        %6215 = vmatprep.subr.bf16.mxu0 %v5026
        %6216 = vmatpush1.bf16.msra.mxu0 %v5025
        %6217 = vmatprep.subr.bf16.mxu0 %v5042
        %6218 = vmatpush1.bf16.msra.mxu0 %v5041
        %6219 = vmatprep.subr.bf16.mxu0 %v5058
        %6220 = vmatpush1.bf16.msra.mxu0 %v5057
        %6221 = vmatprep.subr.bf16.mxu0 %v5074
        %6222 = vmatpush1.bf16.msra.mxu0 %v5073
        %6223 = vmatprep.subr.bf16.mxu0 %v5090
        %6224 = vmatpush1.bf16.msra.mxu0 %v5089
        %6225 = vmatprep.subr.bf16.mxu0 %v5106
        %6226 = vmatpush1.bf16.msra.mxu0 %v5105
        %6227 = vmatprep.subr.bf16.mxu0 %v5122
        %6228 = vmatpush1.bf16.msra.mxu0 %v5121
        %6229 = vmatprep.subr.bf16.mxu0 %v5138
        %6230 = vmatpush1.bf16.msra.mxu0 %v5137
        %6231 = vmatprep.subr.bf16.mxu0 %v5154
        %6232 = vmatpush1.bf16.msra.mxu0 %v5153
        %6233 = vmatprep.subr.bf16.mxu0 %v5170
        %6234 = vmatpush1.bf16.msra.mxu0 %v5169
        %6235 = vmatprep.mubr.bf16.mxu0 %v5454
        %6236 = vmatmul.mubr.bf16.gmra.mrb[0].mxu0 %v5453
        %v6237 = vpop.f32.mrb[0].mxu0
        %v6238 = vadd.f32 %v6197, %v6237
        %v6239 = vpop.f32.mrb[0].mxu0
        %v6240 = vadd.f32 %v6199, %v6239
        %v6241 = vpop.f32.mrb[0].mxu0
        %v6242 = vpop.f32.mrb[0].mxu0
        %6243 = vdwg.mxu0
        %6244 = vmatprep.subr.bf16.mxu0 %v5186
        %6245 = vmatpush1.bf16.msra.mxu0 %v5185
        %6246 = vmatprep.subr.bf16.mxu0 %v5202
        %6247 = vmatpush1.bf16.msra.mxu0 %v5201
        %6248 = vmatprep.subr.bf16.mxu0 %v5218
        %6249 = vmatpush1.bf16.msra.mxu0 %v5217
        %6250 = vmatprep.subr.bf16.mxu0 %v5234
        %6251 = vmatpush1.bf16.msra.mxu0 %v5233
        %6252 = vmatprep.subr.bf16.mxu0 %v5250
        %6253 = vmatpush1.bf16.msra.mxu0 %v5249
        %6254 = vmatprep.subr.bf16.mxu0 %v5266
        %6255 = vmatpush1.bf16.msra.mxu0 %v5265
        %6256 = vmatprep.subr.bf16.mxu0 %v5282
        %6257 = vmatpush1.bf16.msra.mxu0 %v5281
        %6258 = vmatprep.subr.bf16.mxu0 %v5298
        %6259 = vmatpush1.bf16.msra.mxu0 %v5297
        %6260 = vmatprep.subr.bf16.mxu0 %v5314
        %6261 = vmatpush1.bf16.msra.mxu0 %v5313
        %6262 = vmatprep.subr.bf16.mxu0 %v5330
        %6263 = vmatpush1.bf16.msra.mxu0 %v5329
        %6264 = vmatprep.subr.bf16.mxu0 %v5346
        %6265 = vmatpush1.bf16.msra.mxu0 %v5345
        %6266 = vmatprep.subr.bf16.mxu0 %v5362
        %6267 = vmatpush1.bf16.msra.mxu0 %v5361
        %6268 = vmatprep.subr.bf16.mxu0 %v5378
        %6269 = vmatpush1.bf16.msra.mxu0 %v5377
        %6270 = vmatprep.subr.bf16.mxu0 %v5394
        %6271 = vmatpush1.bf16.msra.mxu0 %v5393
        %6272 = vmatprep.subr.bf16.mxu0 %v5410
        %6273 = vmatpush1.bf16.msra.mxu0 %v5409
        %6274 = vmatprep.subr.bf16.mxu0 %v5426
        %6275 = vmatpush1.bf16.msra.mxu0 %v5425
        %6276 = vmatprep.mubr.bf16.mxu0 %v5456
        %6277 = vmatmul.mubr.bf16.gmra.mrb[0].mxu0 %v5455
        %v6278 = vpop.f32.mrb[0].mxu0
        %v6279 = vadd.f32 %v6238, %v6278
        %v6280 = vpop.f32.mrb[0].mxu0
        %v6281 = vadd.f32 %v6240, %v6280
        %v6282 = vpop.f32.mrb[0].mxu0
        %v6283 = vpop.f32.mrb[0].mxu0
        %6284 = vdwg.mxu0
        %6285 = vmatprep.subr.bf16.mxu0 %v4420
        %6286 = vmatpush1.bf16.msra.mxu0 %v4419
        %6287 = vmatprep.subr.bf16.mxu0 %v4436
        %6288 = vmatpush1.bf16.msra.mxu0 %v4435
        %6289 = vmatprep.subr.bf16.mxu0 %v4452
        %6290 = vmatpush1.bf16.msra.mxu0 %v4451
        %6291 = vmatprep.subr.bf16.mxu0 %v4468
        %6292 = vmatpush1.bf16.msra.mxu0 %v4467
        %6293 = vmatprep.subr.bf16.mxu0 %v4484
        %6294 = vmatpush1.bf16.msra.mxu0 %v4483
        %6295 = vmatprep.subr.bf16.mxu0 %v4500
        %6296 = vmatpush1.bf16.msra.mxu0 %v4499
        %6297 = vmatprep.subr.bf16.mxu0 %v4516
        %6298 = vmatpush1.bf16.msra.mxu0 %v4515
        %6299 = vmatprep.subr.bf16.mxu0 %v4532
        %6300 = vmatpush1.bf16.msra.mxu0 %v4531
        %6301 = vmatprep.subr.bf16.mxu0 %v4548
        %6302 = vmatpush1.bf16.msra.mxu0 %v4547
        %6303 = vmatprep.subr.bf16.mxu0 %v4564
        %6304 = vmatpush1.bf16.msra.mxu0 %v4563
        %6305 = vmatprep.subr.bf16.mxu0 %v4580
        %6306 = vmatpush1.bf16.msra.mxu0 %v4579
        %6307 = vmatprep.subr.bf16.mxu0 %v4596
        %6308 = vmatpush1.bf16.msra.mxu0 %v4595
        %6309 = vmatprep.subr.bf16.mxu0 %v4612
        %6310 = vmatpush1.bf16.msra.mxu0 %v4611
        %6311 = vmatprep.subr.bf16.mxu0 %v4628
        %6312 = vmatpush1.bf16.msra.mxu0 %v4627
        %6313 = vmatprep.subr.bf16.mxu0 %v4644
        %6314 = vmatpush1.bf16.msra.mxu0 %v4643
        %6315 = vmatprep.subr.bf16.mxu0 %v4660
        %6316 = vmatpush1.bf16.msra.mxu0 %v4659
        %6317 = vmatprep.mubr.bf16.mxu0 %v5450
        %6318 = vmatmul.mubr.bf16.gmra.mrb[0].mxu0 %v5449
        %v6319 = vpop.f32.mrb[0].mxu0
        %v6320 = vadd.f32 0.0, %v6319
        %v6321 = vpop.f32.mrb[0].mxu0
        %v6322 = vadd.f32 0.0, %v6321
        %v6323 = vpop.f32.mrb[0].mxu0
        %v6324 = vpop.f32.mrb[0].mxu0
        %6325 = vdwg.mxu0
        %6326 = vmatprep.subr.bf16.mxu0 %v4676
        %6327 = vmatpush1.bf16.msra.mxu0 %v4675
        %6328 = vmatprep.subr.bf16.mxu0 %v4692
        %6329 = vmatpush1.bf16.msra.mxu0 %v4691
        %6330 = vmatprep.subr.bf16.mxu0 %v4708
        %6331 = vmatpush1.bf16.msra.mxu0 %v4707
        %6332 = vmatprep.subr.bf16.mxu0 %v4724
        %6333 = vmatpush1.bf16.msra.mxu0 %v4723
        %6334 = vmatprep.subr.bf16.mxu0 %v4740
        %6335 = vmatpush1.bf16.msra.mxu0 %v4739
        %6336 = vmatprep.subr.bf16.mxu0 %v4756
        %6337 = vmatpush1.bf16.msra.mxu0 %v4755
        %6338 = vmatprep.subr.bf16.mxu0 %v4772
        %6339 = vmatpush1.bf16.msra.mxu0 %v4771
        %6340 = vmatprep.subr.bf16.mxu0 %v4788
        %6341 = vmatpush1.bf16.msra.mxu0 %v4787
        %6342 = vmatprep.subr.bf16.mxu0 %v4804
        %6343 = vmatpush1.bf16.msra.mxu0 %v4803
        %6344 = vmatprep.subr.bf16.mxu0 %v4820
        %6345 = vmatpush1.bf16.msra.mxu0 %v4819
        %6346 = vmatprep.subr.bf16.mxu0 %v4836
        %6347 = vmatpush1.bf16.msra.mxu0 %v4835
        %6348 = vmatprep.subr.bf16.mxu0 %v4852
        %6349 = vmatpush1.bf16.msra.mxu0 %v4851
        %6350 = vmatprep.subr.bf16.mxu0 %v4868
        %6351 = vmatpush1.bf16.msra.mxu0 %v4867
        %6352 = vmatprep.subr.bf16.mxu0 %v4884
        %6353 = vmatpush1.bf16.msra.mxu0 %v4883
        %6354 = vmatprep.subr.bf16.mxu0 %v4900
        %6355 = vmatpush1.bf16.msra.mxu0 %v4899
        %6356 = vmatprep.subr.bf16.mxu0 %v4916
        %6357 = vmatpush1.bf16.msra.mxu0 %v4915
        %6358 = vmatprep.mubr.bf16.mxu0 %v5452
        %6359 = vmatmul.mubr.bf16.gmra.mrb[0].mxu0 %v5451
        %v6360 = vpop.f32.mrb[0].mxu0
        %v6361 = vadd.f32 %v6320, %v6360
        %v6362 = vpop.f32.mrb[0].mxu0
        %v6363 = vadd.f32 %v6322, %v6362
        %v6364 = vpop.f32.mrb[0].mxu0
        %v6365 = vpop.f32.mrb[0].mxu0
        %6366 = vdwg.mxu0
        %6367 = vmatprep.subr.bf16.mxu0 %v4932
        %6368 = vmatpush1.bf16.msra.mxu0 %v4931
        %6369 = vmatprep.subr.bf16.mxu0 %v4948
        %6370 = vmatpush1.bf16.msra.mxu0 %v4947
        %6371 = vmatprep.subr.bf16.mxu0 %v4964
        %6372 = vmatpush1.bf16.msra.mxu0 %v4963
        %6373 = vmatprep.subr.bf16.mxu0 %v4980
        %6374 = vmatpush1.bf16.msra.mxu0 %v4979
        %6375 = vmatprep.subr.bf16.mxu0 %v4996
        %6376 = vmatpush1.bf16.msra.mxu0 %v4995
        %6377 = vmatprep.subr.bf16.mxu0 %v5012
        %6378 = vmatpush1.bf16.msra.mxu0 %v5011
        %6379 = vmatprep.subr.bf16.mxu0 %v5028
        %6380 = vmatpush1.bf16.msra.mxu0 %v5027
        %6381 = vmatprep.subr.bf16.mxu0 %v5044
        %6382 = vmatpush1.bf16.msra.mxu0 %v5043
        %6383 = vmatprep.subr.bf16.mxu0 %v5060
        %6384 = vmatpush1.bf16.msra.mxu0 %v5059
        %6385 = vmatprep.subr.bf16.mxu0 %v5076
        %6386 = vmatpush1.bf16.msra.mxu0 %v5075
        %6387 = vmatprep.subr.bf16.mxu0 %v5092
        %6388 = vmatpush1.bf16.msra.mxu0 %v5091
        %6389 = vmatprep.subr.bf16.mxu0 %v5108
        %6390 = vmatpush1.bf16.msra.mxu0 %v5107
        %6391 = vmatprep.subr.bf16.mxu0 %v5124
        %6392 = vmatpush1.bf16.msra.mxu0 %v5123
        %6393 = vmatprep.subr.bf16.mxu0 %v5140
        %6394 = vmatpush1.bf16.msra.mxu0 %v5139
        %6395 = vmatprep.subr.bf16.mxu0 %v5156
        %6396 = vmatpush1.bf16.msra.mxu0 %v5155
        %6397 = vmatprep.subr.bf16.mxu0 %v5172
        %6398 = vmatpush1.bf16.msra.mxu0 %v5171
        %6399 = vmatprep.mubr.bf16.mxu0 %v5454
        %6400 = vmatmul.mubr.bf16.gmra.mrb[0].mxu0 %v5453
        %v6401 = vpop.f32.mrb[0].mxu0
        %v6402 = vadd.f32 %v6361, %v6401
        %v6403 = vpop.f32.mrb[0].mxu0
        %v6404 = vadd.f32 %v6363, %v6403
        %v6405 = vpop.f32.mrb[0].mxu0
        %v6406 = vpop.f32.mrb[0].mxu0
        %6407 = vdwg.mxu0
        %6408 = vmatprep.subr.bf16.mxu0 %v5188
        %6409 = vmatpush1.bf16.msra.mxu0 %v5187
        %6410 = vmatprep.subr.bf16.mxu0 %v5204
        %6411 = vmatpush1.bf16.msra.mxu0 %v5203
        %6412 = vmatprep.subr.bf16.mxu0 %v5220
        %6413 = vmatpush1.bf16.msra.mxu0 %v5219
        %6414 = vmatprep.subr.bf16.mxu0 %v5236
        %6415 = vmatpush1.bf16.msra.mxu0 %v5235
        %6416 = vmatprep.subr.bf16.mxu0 %v5252
        %6417 = vmatpush1.bf16.msra.mxu0 %v5251
        %6418 = vmatprep.subr.bf16.mxu0 %v5268
        %6419 = vmatpush1.bf16.msra.mxu0 %v5267
        %6420 = vmatprep.subr.bf16.mxu0 %v5284
        %6421 = vmatpush1.bf16.msra.mxu0 %v5283
        %6422 = vmatprep.subr.bf16.mxu0 %v5300
        %6423 = vmatpush1.bf16.msra.mxu0 %v5299
        %6424 = vmatprep.subr.bf16.mxu0 %v5316
        %6425 = vmatpush1.bf16.msra.mxu0 %v5315
        %6426 = vmatprep.subr.bf16.mxu0 %v5332
        %6427 = vmatpush1.bf16.msra.mxu0 %v5331
        %6428 = vmatprep.subr.bf16.mxu0 %v5348
        %6429 = vmatpush1.bf16.msra.mxu0 %v5347
        %6430 = vmatprep.subr.bf16.mxu0 %v5364
        %6431 = vmatpush1.bf16.msra.mxu0 %v5363
        %6432 = vmatprep.subr.bf16.mxu0 %v5380
        %6433 = vmatpush1.bf16.msra.mxu0 %v5379
        %6434 = vmatprep.subr.bf16.mxu0 %v5396
        %6435 = vmatpush1.bf16.msra.mxu0 %v5395
        %6436 = vmatprep.subr.bf16.mxu0 %v5412
        %6437 = vmatpush1.bf16.msra.mxu0 %v5411
        %6438 = vmatprep.subr.bf16.mxu0 %v5428
        %6439 = vmatpush1.bf16.msra.mxu0 %v5427
        %6440 = vmatprep.mubr.bf16.mxu0 %v5456
        %6441 = vmatmul.mubr.bf16.gmra.mrb[0].mxu0 %v5455
        %v6442 = vpop.f32.mrb[0].mxu0
        %v6443 = vadd.f32 %v6402, %v6442
        %v6444 = vpop.f32.mrb[0].mxu0
        %v6445 = vadd.f32 %v6404, %v6444
        %v6446 = vpop.f32.mrb[0].mxu0
        %v6447 = vpop.f32.mrb[0].mxu0
        %6448 = vdwg.mxu0
        %6449 = vmatprep.subr.bf16.mxu0 %v4422
        %6450 = vmatpush1.bf16.msra.mxu0 %v4421
        %6451 = vmatprep.subr.bf16.mxu0 %v4438
        %6452 = vmatpush1.bf16.msra.mxu0 %v4437
        %6453 = vmatprep.subr.bf16.mxu0 %v4454
        %6454 = vmatpush1.bf16.msra.mxu0 %v4453
        %6455 = vmatprep.subr.bf16.mxu0 %v4470
        %6456 = vmatpush1.bf16.msra.mxu0 %v4469
        %6457 = vmatprep.subr.bf16.mxu0 %v4486
        %6458 = vmatpush1.bf16.msra.mxu0 %v4485
        %6459 = vmatprep.subr.bf16.mxu0 %v4502
        %6460 = vmatpush1.bf16.msra.mxu0 %v4501
        %6461 = vmatprep.subr.bf16.mxu0 %v4518
        %6462 = vmatpush1.bf16.msra.mxu0 %v4517
        %6463 = vmatprep.subr.bf16.mxu0 %v4534
        %6464 = vmatpush1.bf16.msra.mxu0 %v4533
        %6465 = vmatprep.subr.bf16.mxu0 %v4550
        %6466 = vmatpush1.bf16.msra.mxu0 %v4549
        %6467 = vmatprep.subr.bf16.mxu0 %v4566
        %6468 = vmatpush1.bf16.msra.mxu0 %v4565
        %6469 = vmatprep.subr.bf16.mxu0 %v4582
        %6470 = vmatpush1.bf16.msra.mxu0 %v4581
        %6471 = vmatprep.subr.bf16.mxu0 %v4598
        %6472 = vmatpush1.bf16.msra.mxu0 %v4597
        %6473 = vmatprep.subr.bf16.mxu0 %v4614
        %6474 = vmatpush1.bf16.msra.mxu0 %v4613
        %6475 = vmatprep.subr.bf16.mxu0 %v4630
        %6476 = vmatpush1.bf16.msra.mxu0 %v4629
        %6477 = vmatprep.subr.bf16.mxu0 %v4646
        %6478 = vmatpush1.bf16.msra.mxu0 %v4645
        %6479 = vmatprep.subr.bf16.mxu0 %v4662
        %6480 = vmatpush1.bf16.msra.mxu0 %v4661
        %6481 = vmatprep.mubr.bf16.mxu0 %v5450
        %6482 = vmatmul.mubr.bf16.gmra.mrb[0].mxu0 %v5449
        %v6483 = vpop.f32.mrb[0].mxu0
        %v6484 = vadd.f32 0.0, %v6483
        %v6485 = vpop.f32.mrb[0].mxu0
        %v6486 = vadd.f32 0.0, %v6485
        %v6487 = vpop.f32.mrb[0].mxu0
        %v6488 = vpop.f32.mrb[0].mxu0
        %6489 = vdwg.mxu0
        %6490 = vmatprep.subr.bf16.mxu0 %v4678
        %6491 = vmatpush1.bf16.msra.mxu0 %v4677
        %6492 = vmatprep.subr.bf16.mxu0 %v4694
        %6493 = vmatpush1.bf16.msra.mxu0 %v4693
        %6494 = vmatprep.subr.bf16.mxu0 %v4710
        %6495 = vmatpush1.bf16.msra.mxu0 %v4709
        %6496 = vmatprep.subr.bf16.mxu0 %v4726
        %6497 = vmatpush1.bf16.msra.mxu0 %v4725
        %6498 = vmatprep.subr.bf16.mxu0 %v4742
        %6499 = vmatpush1.bf16.msra.mxu0 %v4741
        %6500 = vmatprep.subr.bf16.mxu0 %v4758
        %6501 = vmatpush1.bf16.msra.mxu0 %v4757
        %6502 = vmatprep.subr.bf16.mxu0 %v4774
        %6503 = vmatpush1.bf16.msra.mxu0 %v4773
        %6504 = vmatprep.subr.bf16.mxu0 %v4790
        %6505 = vmatpush1.bf16.msra.mxu0 %v4789
        %6506 = vmatprep.subr.bf16.mxu0 %v4806
        %6507 = vmatpush1.bf16.msra.mxu0 %v4805
        %6508 = vmatprep.subr.bf16.mxu0 %v4822
        %6509 = vmatpush1.bf16.msra.mxu0 %v4821
        %6510 = vmatprep.subr.bf16.mxu0 %v4838
        %6511 = vmatpush1.bf16.msra.mxu0 %v4837
        %6512 = vmatprep.subr.bf16.mxu0 %v4854
        %6513 = vmatpush1.bf16.msra.mxu0 %v4853
        %6514 = vmatprep.subr.bf16.mxu0 %v4870
        %6515 = vmatpush1.bf16.msra.mxu0 %v4869
        %6516 = vmatprep.subr.bf16.mxu0 %v4886
        %6517 = vmatpush1.bf16.msra.mxu0 %v4885
        %6518 = vmatprep.subr.bf16.mxu0 %v4902
        %6519 = vmatpush1.bf16.msra.mxu0 %v4901
        %6520 = vmatprep.subr.bf16.mxu0 %v4918
        %6521 = vmatpush1.bf16.msra.mxu0 %v4917
        %6522 = vmatprep.mubr.bf16.mxu0 %v5452
        %6523 = vmatmul.mubr.bf16.gmra.mrb[0].mxu0 %v5451
        %v6524 = vpop.f32.mrb[0].mxu0
        %v6525 = vadd.f32 %v6484, %v6524
        %v6526 = vpop.f32.mrb[0].mxu0
        %v6527 = vadd.f32 %v6486, %v6526
        %v6528 = vpop.f32.mrb[0].mxu0
        %v6529 = vpop.f32.mrb[0].mxu0
        %6530 = vdwg.mxu0
        %6531 = vmatprep.subr.bf16.mxu0 %v4934
        %6532 = vmatpush1.bf16.msra.mxu0 %v4933
        %6533 = vmatprep.subr.bf16.mxu0 %v4950
        %6534 = vmatpush1.bf16.msra.mxu0 %v4949
        %6535 = vmatprep.subr.bf16.mxu0 %v4966
        %6536 = vmatpush1.bf16.msra.mxu0 %v4965
        %6537 = vmatprep.subr.bf16.mxu0 %v4982
        %6538 = vmatpush1.bf16.msra.mxu0 %v4981
        %6539 = vmatprep.subr.bf16.mxu0 %v4998
        %6540 = vmatpush1.bf16.msra.mxu0 %v4997
        %6541 = vmatprep.subr.bf16.mxu0 %v5014
        %6542 = vmatpush1.bf16.msra.mxu0 %v5013
        %6543 = vmatprep.subr.bf16.mxu0 %v5030
        %6544 = vmatpush1.bf16.msra.mxu0 %v5029
        %6545 = vmatprep.subr.bf16.mxu0 %v5046
        %6546 = vmatpush1.bf16.msra.mxu0 %v5045
        %6547 = vmatprep.subr.bf16.mxu0 %v5062
        %6548 = vmatpush1.bf16.msra.mxu0 %v5061
        %6549 = vmatprep.subr.bf16.mxu0 %v5078
        %6550 = vmatpush1.bf16.msra.mxu0 %v5077
        %6551 = vmatprep.subr.bf16.mxu0 %v5094
        %6552 = vmatpush1.bf16.msra.mxu0 %v5093
        %6553 = vmatprep.subr.bf16.mxu0 %v5110
        %6554 = vmatpush1.bf16.msra.mxu0 %v5109
        %6555 = vmatprep.subr.bf16.mxu0 %v5126
        %6556 = vmatpush1.bf16.msra.mxu0 %v5125
        %6557 = vmatprep.subr.bf16.mxu0 %v5142
        %6558 = vmatpush1.bf16.msra.mxu0 %v5141
        %6559 = vmatprep.subr.bf16.mxu0 %v5158
        %6560 = vmatpush1.bf16.msra.mxu0 %v5157
        %6561 = vmatprep.subr.bf16.mxu0 %v5174
        %6562 = vmatpush1.bf16.msra.mxu0 %v5173
        %6563 = vmatprep.mubr.bf16.mxu0 %v5454
        %6564 = vmatmul.mubr.bf16.gmra.mrb[0].mxu0 %v5453
        %v6565 = vpop.f32.mrb[0].mxu0
        %v6566 = vadd.f32 %v6525, %v6565
        %v6567 = vpop.f32.mrb[0].mxu0
        %v6568 = vadd.f32 %v6527, %v6567
        %v6569 = vpop.f32.mrb[0].mxu0
        %v6570 = vpop.f32.mrb[0].mxu0
        %6571 = vdwg.mxu0
        %6572 = vmatprep.subr.bf16.mxu0 %v5190
        %6573 = vmatpush1.bf16.msra.mxu0 %v5189
        %6574 = vmatprep.subr.bf16.mxu0 %v5206
        %6575 = vmatpush1.bf16.msra.mxu0 %v5205
        %6576 = vmatprep.subr.bf16.mxu0 %v5222
        %6577 = vmatpush1.bf16.msra.mxu0 %v5221
        %6578 = vmatprep.subr.bf16.mxu0 %v5238
        %6579 = vmatpush1.bf16.msra.mxu0 %v5237
        %6580 = vmatprep.subr.bf16.mxu0 %v5254
        %6581 = vmatpush1.bf16.msra.mxu0 %v5253
        %6582 = vmatprep.subr.bf16.mxu0 %v5270
        %6583 = vmatpush1.bf16.msra.mxu0 %v5269
        %6584 = vmatprep.subr.bf16.mxu0 %v5286
        %6585 = vmatpush1.bf16.msra.mxu0 %v5285
        %6586 = vmatprep.subr.bf16.mxu0 %v5302
        %6587 = vmatpush1.bf16.msra.mxu0 %v5301
        %6588 = vmatprep.subr.bf16.mxu0 %v5318
        %6589 = vmatpush1.bf16.msra.mxu0 %v5317
        %6590 = vmatprep.subr.bf16.mxu0 %v5334
        %6591 = vmatpush1.bf16.msra.mxu0 %v5333
        %6592 = vmatprep.subr.bf16.mxu0 %v5350
        %6593 = vmatpush1.bf16.msra.mxu0 %v5349
        %6594 = vmatprep.subr.bf16.mxu0 %v5366
        %6595 = vmatpush1.bf16.msra.mxu0 %v5365
        %6596 = vmatprep.subr.bf16.mxu0 %v5382
        %6597 = vmatpush1.bf16.msra.mxu0 %v5381
        %6598 = vmatprep.subr.bf16.mxu0 %v5398
        %6599 = vmatpush1.bf16.msra.mxu0 %v5397
        %6600 = vmatprep.subr.bf16.mxu0 %v5414
        %6601 = vmatpush1.bf16.msra.mxu0 %v5413
        %6602 = vmatprep.subr.bf16.mxu0 %v5430
        %6603 = vmatpush1.bf16.msra.mxu0 %v5429
        %6604 = vmatprep.mubr.bf16.mxu0 %v5456
        %6605 = vmatmul.mubr.bf16.gmra.mrb[0].mxu0 %v5455
        %v6606 = vpop.f32.mrb[0].mxu0
        %v6607 = vadd.f32 %v6566, %v6606
        %v6608 = vpop.f32.mrb[0].mxu0
        %v6609 = vadd.f32 %v6568, %v6608
        %v6610 = vpop.f32.mrb[0].mxu0
        %v6611 = vpop.f32.mrb[0].mxu0
        %6612 = vdwg.mxu0
        %6613 = vmatprep.subr.bf16.mxu0 %v4424
        %6614 = vmatpush1.bf16.msra.mxu0 %v4423
        %6615 = vmatprep.subr.bf16.mxu0 %v4440
        %6616 = vmatpush1.bf16.msra.mxu0 %v4439
        %6617 = vmatprep.subr.bf16.mxu0 %v4456
        %6618 = vmatpush1.bf16.msra.mxu0 %v4455
        %6619 = vmatprep.subr.bf16.mxu0 %v4472
        %6620 = vmatpush1.bf16.msra.mxu0 %v4471
        %6621 = vmatprep.subr.bf16.mxu0 %v4488
        %6622 = vmatpush1.bf16.msra.mxu0 %v4487
        %6623 = vmatprep.subr.bf16.mxu0 %v4504
        %6624 = vmatpush1.bf16.msra.mxu0 %v4503
        %6625 = vmatprep.subr.bf16.mxu0 %v4520
        %6626 = vmatpush1.bf16.msra.mxu0 %v4519
        %6627 = vmatprep.subr.bf16.mxu0 %v4536
        %6628 = vmatpush1.bf16.msra.mxu0 %v4535
        %6629 = vmatprep.subr.bf16.mxu0 %v4552
        %6630 = vmatpush1.bf16.msra.mxu0 %v4551
        %6631 = vmatprep.subr.bf16.mxu0 %v4568
        %6632 = vmatpush1.bf16.msra.mxu0 %v4567
        %6633 = vmatprep.subr.bf16.mxu0 %v4584
        %6634 = vmatpush1.bf16.msra.mxu0 %v4583
        %6635 = vmatprep.subr.bf16.mxu0 %v4600
        %6636 = vmatpush1.bf16.msra.mxu0 %v4599
        %6637 = vmatprep.subr.bf16.mxu0 %v4616
        %6638 = vmatpush1.bf16.msra.mxu0 %v4615
        %6639 = vmatprep.subr.bf16.mxu0 %v4632
        %6640 = vmatpush1.bf16.msra.mxu0 %v4631
        %6641 = vmatprep.subr.bf16.mxu0 %v4648
        %6642 = vmatpush1.bf16.msra.mxu0 %v4647
        %6643 = vmatprep.subr.bf16.mxu0 %v4664
        %6644 = vmatpush1.bf16.msra.mxu0 %v4663
        %6645 = vmatprep.mubr.bf16.mxu0 %v5450
        %6646 = vmatmul.mubr.bf16.gmra.mrb[0].mxu0 %v5449
        %v6647 = vpop.f32.mrb[0].mxu0
        %v6648 = vadd.f32 0.0, %v6647
        %v6649 = vpop.f32.mrb[0].mxu0
        %v6650 = vadd.f32 0.0, %v6649
        %v6651 = vpop.f32.mrb[0].mxu0
        %v6652 = vpop.f32.mrb[0].mxu0
        %6653 = vdwg.mxu0
        %6654 = vmatprep.subr.bf16.mxu0 %v4680
        %6655 = vmatpush1.bf16.msra.mxu0 %v4679
        %6656 = vmatprep.subr.bf16.mxu0 %v4696
        %6657 = vmatpush1.bf16.msra.mxu0 %v4695
        %6658 = vmatprep.subr.bf16.mxu0 %v4712
        %6659 = vmatpush1.bf16.msra.mxu0 %v4711
        %6660 = vmatprep.subr.bf16.mxu0 %v4728
        %6661 = vmatpush1.bf16.msra.mxu0 %v4727
        %6662 = vmatprep.subr.bf16.mxu0 %v4744
        %6663 = vmatpush1.bf16.msra.mxu0 %v4743
        %6664 = vmatprep.subr.bf16.mxu0 %v4760
        %6665 = vmatpush1.bf16.msra.mxu0 %v4759
        %6666 = vmatprep.subr.bf16.mxu0 %v4776
        %6667 = vmatpush1.bf16.msra.mxu0 %v4775
        %6668 = vmatprep.subr.bf16.mxu0 %v4792
        %6669 = vmatpush1.bf16.msra.mxu0 %v4791
        %6670 = vmatprep.subr.bf16.mxu0 %v4808
        %6671 = vmatpush1.bf16.msra.mxu0 %v4807
        %6672 = vmatprep.subr.bf16.mxu0 %v4824
        %6673 = vmatpush1.bf16.msra.mxu0 %v4823
        %6674 = vmatprep.subr.bf16.mxu0 %v4840
        %6675 = vmatpush1.bf16.msra.mxu0 %v4839
        %6676 = vmatprep.subr.bf16.mxu0 %v4856
        %6677 = vmatpush1.bf16.msra.mxu0 %v4855
        %6678 = vmatprep.subr.bf16.mxu0 %v4872
        %6679 = vmatpush1.bf16.msra.mxu0 %v4871
        %6680 = vmatprep.subr.bf16.mxu0 %v4888
        %6681 = vmatpush1.bf16.msra.mxu0 %v4887
        %6682 = vmatprep.subr.bf16.mxu0 %v4904
        %6683 = vmatpush1.bf16.msra.mxu0 %v4903
        %6684 = vmatprep.subr.bf16.mxu0 %v4920
        %6685 = vmatpush1.bf16.msra.mxu0 %v4919
        %6686 = vmatprep.mubr.bf16.mxu0 %v5452
        %6687 = vmatmul.mubr.bf16.gmra.mrb[0].mxu0 %v5451
        %v6688 = vpop.f32.mrb[0].mxu0
        %v6689 = vadd.f32 %v6648, %v6688
        %v6690 = vpop.f32.mrb[0].mxu0
        %v6691 = vadd.f32 %v6650, %v6690
        %v6692 = vpop.f32.mrb[0].mxu0
        %v6693 = vpop.f32.mrb[0].mxu0
        %6694 = vdwg.mxu0
        %6695 = vmatprep.subr.bf16.mxu0 %v4936
        %6696 = vmatpush1.bf16.msra.mxu0 %v4935
        %6697 = vmatprep.subr.bf16.mxu0 %v4952
        %6698 = vmatpush1.bf16.msra.mxu0 %v4951
        %6699 = vmatprep.subr.bf16.mxu0 %v4968
        %6700 = vmatpush1.bf16.msra.mxu0 %v4967
        %6701 = vmatprep.subr.bf16.mxu0 %v4984
        %6702 = vmatpush1.bf16.msra.mxu0 %v4983
        %6703 = vmatprep.subr.bf16.mxu0 %v5000
        %6704 = vmatpush1.bf16.msra.mxu0 %v4999
        %6705 = vmatprep.subr.bf16.mxu0 %v5016
        %6706 = vmatpush1.bf16.msra.mxu0 %v5015
        %6707 = vmatprep.subr.bf16.mxu0 %v5032
        %6708 = vmatpush1.bf16.msra.mxu0 %v5031
        %6709 = vmatprep.subr.bf16.mxu0 %v5048
        %6710 = vmatpush1.bf16.msra.mxu0 %v5047
        %6711 = vmatprep.subr.bf16.mxu0 %v5064
        %6712 = vmatpush1.bf16.msra.mxu0 %v5063
        %6713 = vmatprep.subr.bf16.mxu0 %v5080
        %6714 = vmatpush1.bf16.msra.mxu0 %v5079
        %6715 = vmatprep.subr.bf16.mxu0 %v5096
        %6716 = vmatpush1.bf16.msra.mxu0 %v5095
        %6717 = vmatprep.subr.bf16.mxu0 %v5112
        %6718 = vmatpush1.bf16.msra.mxu0 %v5111
        %6719 = vmatprep.subr.bf16.mxu0 %v5128
        %6720 = vmatpush1.bf16.msra.mxu0 %v5127
        %6721 = vmatprep.subr.bf16.mxu0 %v5144
        %6722 = vmatpush1.bf16.msra.mxu0 %v5143
        %6723 = vmatprep.subr.bf16.mxu0 %v5160
        %6724 = vmatpush1.bf16.msra.mxu0 %v5159
        %6725 = vmatprep.subr.bf16.mxu0 %v5176
        %6726 = vmatpush1.bf16.msra.mxu0 %v5175
        %6727 = vmatprep.mubr.bf16.mxu0 %v5454
        %6728 = vmatmul.mubr.bf16.gmra.mrb[0].mxu0 %v5453
        %v6729 = vpop.f32.mrb[0].mxu0
        %v6730 = vadd.f32 %v6689, %v6729
        %v6731 = vpop.f32.mrb[0].mxu0
        %v6732 = vadd.f32 %v6691, %v6731
        %v6733 = vpop.f32.mrb[0].mxu0
        %v6734 = vpop.f32.mrb[0].mxu0
        %6735 = vdwg.mxu0
        %6736 = vmatprep.subr.bf16.mxu0 %v5192
        %6737 = vmatpush1.bf16.msra.mxu0 %v5191
        %6738 = vmatprep.subr.bf16.mxu0 %v5208
        %6739 = vmatpush1.bf16.msra.mxu0 %v5207
        %6740 = vmatprep.subr.bf16.mxu0 %v5224
        %6741 = vmatpush1.bf16.msra.mxu0 %v5223
        %6742 = vmatprep.subr.bf16.mxu0 %v5240
        %6743 = vmatpush1.bf16.msra.mxu0 %v5239
        %6744 = vmatprep.subr.bf16.mxu0 %v5256
        %6745 = vmatpush1.bf16.msra.mxu0 %v5255
        %6746 = vmatprep.subr.bf16.mxu0 %v5272
        %6747 = vmatpush1.bf16.msra.mxu0 %v5271
        %6748 = vmatprep.subr.bf16.mxu0 %v5288
        %6749 = vmatpush1.bf16.msra.mxu0 %v5287
        %6750 = vmatprep.subr.bf16.mxu0 %v5304
        %6751 = vmatpush1.bf16.msra.mxu0 %v5303
        %6752 = vmatprep.subr.bf16.mxu0 %v5320
        %6753 = vmatpush1.bf16.msra.mxu0 %v5319
        %6754 = vmatprep.subr.bf16.mxu0 %v5336
        %6755 = vmatpush1.bf16.msra.mxu0 %v5335
        %6756 = vmatprep.subr.bf16.mxu0 %v5352
        %6757 = vmatpush1.bf16.msra.mxu0 %v5351
        %6758 = vmatprep.subr.bf16.mxu0 %v5368
        %6759 = vmatpush1.bf16.msra.mxu0 %v5367
        %6760 = vmatprep.subr.bf16.mxu0 %v5384
        %6761 = vmatpush1.bf16.msra.mxu0 %v5383
        %6762 = vmatprep.subr.bf16.mxu0 %v5400
        %6763 = vmatpush1.bf16.msra.mxu0 %v5399
        %6764 = vmatprep.subr.bf16.mxu0 %v5416
        %6765 = vmatpush1.bf16.msra.mxu0 %v5415
        %6766 = vmatprep.subr.bf16.mxu0 %v5432
        %6767 = vmatpush1.bf16.msra.mxu0 %v5431
        %6768 = vmatprep.mubr.bf16.mxu0 %v5456
        %6769 = vmatmul.mubr.bf16.gmra.mrb[0].mxu0 %v5455
        %v6770 = vpop.f32.mrb[0].mxu0
        %v6771 = vadd.f32 %v6730, %v6770
        %v6772 = vpop.f32.mrb[0].mxu0
        %v6773 = vadd.f32 %v6732, %v6772
        %v6774 = vpop.f32.mrb[0].mxu0
        %v6775 = vpop.f32.mrb[0].mxu0
        %6776 = vdwg.mxu0
        %v6777 = vld [vmem:[%s665] sm:$0xff]
        %v6778 = vld [vmem:[%s665 + $0x8] sm:$0xff]
        %v6781 = vlaneseq
        %v6782 = vshrl.u32 %v6781, 7
        %v6783 = vsub.s32 0, %v6782
        %v6784 = vrot.slane %v6777, %v6783
        %v6785 = vlaneseq
        %v6786 = vshrl.u32 %v6785, 7
        %v6787 = vsub.s32 1, %v6786
        %v6788 = vrot.slane %v6777, %v6787
        %v6789 = vlaneseq
        %v6790 = vshrl.u32 %v6789, 7
        %v6791 = vsub.s32 2, %v6790
        %v6792 = vrot.slane %v6777, %v6791
        %v6793 = vlaneseq
        %v6794 = vshrl.u32 %v6793, 7
        %v6795 = vsub.s32 3, %v6794
        %v6796 = vrot.slane %v6777, %v6795
        %v6797 = vlaneseq
        %v6798 = vshrl.u32 %v6797, 7
        %v6799 = vsub.s32 4, %v6798
        %v6800 = vrot.slane %v6777, %v6799
        %v6801 = vlaneseq
        %v6802 = vshrl.u32 %v6801, 7
        %v6803 = vsub.s32 5, %v6802
        %v6804 = vrot.slane %v6777, %v6803
        %v6805 = vlaneseq
        %v6806 = vshrl.u32 %v6805, 7
        %v6807 = vsub.s32 6, %v6806
        %v6808 = vrot.slane %v6777, %v6807
        %v6809 = vlaneseq
        %v6810 = vshrl.u32 %v6809, 7
        %v6811 = vsub.s32 7, %v6810
        %v6812 = vrot.slane %v6777, %v6811
        %v6813 = vlaneseq
        %v6814 = vshrl.u32 %v6813, 7
        %v6815 = vsub.s32 0, %v6814
        %v6816 = vrot.slane %v6778, %v6815
        %v6817 = vlaneseq
        %v6818 = vshrl.u32 %v6817, 7
        %v6819 = vsub.s32 1, %v6818
        %v6820 = vrot.slane %v6778, %v6819
        %v6821 = vlaneseq
        %v6822 = vshrl.u32 %v6821, 7
        %v6823 = vsub.s32 2, %v6822
        %v6824 = vrot.slane %v6778, %v6823
        %v6825 = vlaneseq
        %v6826 = vshrl.u32 %v6825, 7
        %v6827 = vsub.s32 3, %v6826
        %v6828 = vrot.slane %v6778, %v6827
        %v6829 = vlaneseq
        %v6830 = vshrl.u32 %v6829, 7
        %v6831 = vsub.s32 4, %v6830
        %v6832 = vrot.slane %v6778, %v6831
        %v6833 = vlaneseq
        %v6834 = vshrl.u32 %v6833, 7
        %v6835 = vsub.s32 5, %v6834
        %v6836 = vrot.slane %v6778, %v6835
        %v6837 = vlaneseq
        %v6838 = vshrl.u32 %v6837, 7
        %v6839 = vsub.s32 6, %v6838
        %v6840 = vrot.slane %v6778, %v6839
        %v6841 = vlaneseq
        %v6842 = vshrl.u32 %v6841, 7
        %v6843 = vsub.s32 7, %v6842
        %v6844 = vrot.slane %v6778, %v6843
        %v6861 = vmul.f32 %v5623, %v6784
        %v6862 = vmul.f32 %v5625, %v6788
        %v6863 = vmul.f32 %v5787, %v6792
        %v6864 = vmul.f32 %v5789, %v6796
        %v6865 = vmul.f32 %v5951, %v6800
        %v6866 = vmul.f32 %v5953, %v6804
        %v6867 = vmul.f32 %v6115, %v6808
        %v6868 = vmul.f32 %v6117, %v6812
        %v6869 = vmul.f32 %v6279, %v6816
        %v6870 = vmul.f32 %v6281, %v6820
        %v6871 = vmul.f32 %v6443, %v6824
        %v6872 = vmul.f32 %v6445, %v6828
        %v6873 = vmul.f32 %v6607, %v6832
        %v6874 = vmul.f32 %v6609, %v6836
        %v6875 = vmul.f32 %v6771, %v6840
        %v6876 = vmul.f32 %v6773, %v6844
        %v6877 = vld [vmem:[%s674] sm:$0xff]
        %v6878 = vld [vmem:[%s674 + $0x8] sm:$0xff]
        %v6881 = vlaneseq
        %v6882 = vshrl.u32 %v6881, 7
        %v6883 = vsub.s32 0, %v6882
        %v6884 = vrot.slane %v6877, %v6883
        %v6885 = vlaneseq
        %v6886 = vshrl.u32 %v6885, 7
        %v6887 = vsub.s32 1, %v6886
        %v6888 = vrot.slane %v6877, %v6887
        %v6889 = vlaneseq
        %v6890 = vshrl.u32 %v6889, 7
        %v6891 = vsub.s32 2, %v6890
        %v6892 = vrot.slane %v6877, %v6891
        %v6893 = vlaneseq
        %v6894 = vshrl.u32 %v6893, 7
        %v6895 = vsub.s32 3, %v6894
        %v6896 = vrot.slane %v6877, %v6895
        %v6897 = vlaneseq
        %v6898 = vshrl.u32 %v6897, 7
        %v6899 = vsub.s32 4, %v6898
        %v6900 = vrot.slane %v6877, %v6899
        %v6901 = vlaneseq
        %v6902 = vshrl.u32 %v6901, 7
        %v6903 = vsub.s32 5, %v6902
        %v6904 = vrot.slane %v6877, %v6903
        %v6905 = vlaneseq
        %v6906 = vshrl.u32 %v6905, 7
        %v6907 = vsub.s32 6, %v6906
        %v6908 = vrot.slane %v6877, %v6907
        %v6909 = vlaneseq
        %v6910 = vshrl.u32 %v6909, 7
        %v6911 = vsub.s32 7, %v6910
        %v6912 = vrot.slane %v6877, %v6911
        %v6913 = vlaneseq
        %v6914 = vshrl.u32 %v6913, 7
        %v6915 = vsub.s32 0, %v6914
        %v6916 = vrot.slane %v6878, %v6915
        %v6917 = vlaneseq
        %v6918 = vshrl.u32 %v6917, 7
        %v6919 = vsub.s32 1, %v6918
        %v6920 = vrot.slane %v6878, %v6919
        %v6921 = vlaneseq
        %v6922 = vshrl.u32 %v6921, 7
        %v6923 = vsub.s32 2, %v6922
        %v6924 = vrot.slane %v6878, %v6923
        %v6925 = vlaneseq
        %v6926 = vshrl.u32 %v6925, 7
        %v6927 = vsub.s32 3, %v6926
        %v6928 = vrot.slane %v6878, %v6927
        %v6929 = vlaneseq
        %v6930 = vshrl.u32 %v6929, 7
        %v6931 = vsub.s32 4, %v6930
        %v6932 = vrot.slane %v6878, %v6931
        %v6933 = vlaneseq
        %v6934 = vshrl.u32 %v6933, 7
        %v6935 = vsub.s32 5, %v6934
        %v6936 = vrot.slane %v6878, %v6935
        %v6937 = vlaneseq
        %v6938 = vshrl.u32 %v6937, 7
        %v6939 = vsub.s32 6, %v6938
        %v6940 = vrot.slane %v6878, %v6939
        %v6941 = vlaneseq
        %v6942 = vshrl.u32 %v6941, 7
        %v6943 = vsub.s32 7, %v6942
        %v6944 = vrot.slane %v6878, %v6943
        %v6961 = vadd.f32 %v6861, %v6884
        %v6962 = vadd.f32 %v6862, %v6888
        %v6963 = vadd.f32 %v6863, %v6892
        %v6964 = vadd.f32 %v6864, %v6896
        %v6965 = vadd.f32 %v6865, %v6900
        %v6966 = vadd.f32 %v6866, %v6904
        %v6967 = vadd.f32 %v6867, %v6908
        %v6968 = vadd.f32 %v6868, %v6912
        %v6969 = vadd.f32 %v6869, %v6916
        %v6970 = vadd.f32 %v6870, %v6920
        %v6971 = vadd.f32 %v6871, %v6924
        %v6972 = vadd.f32 %v6872, %v6928
        %v6973 = vadd.f32 %v6873, %v6932
        %v6974 = vadd.f32 %v6874, %v6936
        %v6975 = vadd.f32 %v6875, %v6940
        %v6976 = vadd.f32 %v6876, %v6944
        %v6977 = vtanh.pop %v6961
        %v6978 = vtanh.pop %v6962
        %v6979 = vtanh.pop %v6963
        %v6980 = vtanh.pop %v6964
        %v6981 = vtanh.pop %v6965
        %v6982 = vtanh.pop %v6966
        %v6983 = vtanh.pop %v6967
        %v6984 = vtanh.pop %v6968
        %v6985 = vtanh.pop %v6969
        %v6986 = vtanh.pop %v6970
        %v6987 = vtanh.pop %v6971
        %v6988 = vtanh.pop %v6972
        %v6989 = vtanh.pop %v6973
        %v6990 = vtanh.pop %v6974
        %v6991 = vtanh.pop %v6975
        %v6992 = vtanh.pop %v6976
        %6993 = vst [vmem:[%s738] sm:$0xff] %v6977
        %6994 = vst [vmem:[%s738 + $0x8] sm:$0xff] %v6978
        %6995 = vst [vmem:[%s738 + $0x10] sm:$0xff] %v6979
        %6996 = vst [vmem:[%s738 + $0x18] sm:$0xff] %v6980
        %6997 = vst [vmem:[%s738 + $0x20] sm:$0xff] %v6981
        %6998 = vst [vmem:[%s738 + $0x28] sm:$0xff] %v6982
        %6999 = vst [vmem:[%s738 + $0x30] sm:$0xff] %v6983
        %7000 = vst [vmem:[%s738 + $0x38] sm:$0xff] %v6984
        %7001 = vst [vmem:[%s738 + $0x40] sm:$0xff] %v6985
        %7002 = vst [vmem:[%s738 + $0x48] sm:$0xff] %v6986
        %7003 = vst [vmem:[%s738 + $0x50] sm:$0xff] %v6987
        %7004 = vst [vmem:[%s738 + $0x58] sm:$0xff] %v6988
        %7005 = vst [vmem:[%s738 + $0x60] sm:$0xff] %v6989
        %7006 = vst [vmem:[%s738 + $0x68] sm:$0xff] %v6990
        %7007 = vst [vmem:[%s738 + $0x70] sm:$0xff] %v6991
        %7008 = vst [vmem:[%s738 + $0x78] sm:$0xff] %v6992
        %s7009 = smul.u32 16, %s40
        %p7010 = scmp.lt.s32.totalorder %s7009, 95
        %s7011 = scalar_select %p7010, %s7009, 95
        %s7012 = smul.addr %s7011, 8
        %s7013 = scalar_lea.vmem %s16, %s7012
        // Predicated region
        $region141: #{_generator_forward_jit.1} parent=79 // pred_check
          %p7014 = pneg %p388
        $region142: #{_generator_forward_jit.1} parent=79 // pred_check_branch
          %7016 = sbr.rel (%p7014) target = $region144
        $region143: #{_generator_forward_jit.1} parent=79 // pred_region
          %s7017 = smul.u32 16, %s40
        $region144: #{_generator_forward_jit.1} parent=79 // pred_fallthru
          _
      $region80: #{_generator_forward_jit.1} parent=5 // pred_fallthru
        _
      %p7018 = scmp.le.s32.totalorder 2, %s35
      // Predicated region
      $region145: #{_generator_forward_jit.1} parent=5 // pred_check
        %p7019 = pneg %p7018
      $region146: #{_generator_forward_jit.1} parent=5 // pred_check_branch
        %7021 = sbr.rel (%p7019) target = $region148
      $region147: #{_generator_forward_jit.1} parent=5 // pred_region
        %s7022 = ssub.s32 %s35, 2
        // Predicated region
        $region149: #{_generator_forward_jit.1} parent=147 // pred_check
          %p7023 = pneg %p394
        $region150: #{_generator_forward_jit.1} parent=147 // pred_check_branch
          %7025 = sbr.rel (%p7023) target = $region152
        $region151: #{_generator_forward_jit.1} parent=147 // pred_region
          %s7026 = smul.u32 16, %s41
          %p7027 = scmp.lt.s32.totalorder %s7026, 95
          %s7028 = scalar_select %p7027, %s7026, 95
          %s7029 = smul.addr %s7028, 8
          %s7030 = scalar_lea.vmem %s16, %s7029
        $region152: #{_generator_forward_jit.1} parent=147 // pred_fallthru
          _
      $region148: #{_generator_forward_jit.1} parent=5 // pred_fallthru
        _
    $region6: #{_generator_forward_jit.1} parent=1 // loop_footer
      %s39 = sadd.s32 1, %s35
    $region7: #{_generator_forward_jit.1} parent=1 // loop_footer_branch
      %34 = sbr.rel target = $region3
    $region8: #{_generator_forward_jit.1} parent=1 // loop_exit
      _
    %7031 = vsyncpa [#allocation6], 1
    %s7032 = scalar_lea.sflag [#allocation6], 1
    %7033 = vsyncpa %s7032, 1
    %7034 = vsyncpa [#allocation8], 1
    %7035 = vsyncpa [#allocation11], 1
    %7036 = vsyncpa [#allocation14], 1
    %7037 = vsyncpa [#allocation17], 1
    %7038 = vsyncpa [#allocation20], 1
    %7039 = vsyncpa [#allocation23], 1
    %s7040 = scalar_lea.sflag [#allocation23], 1
    %7041 = vsyncpa %s7040, 1
    %7042 = vsyncpa [#allocation26], 1
    %s7043 = scalar_lea.sflag [#allocation26], 1
    %7044 = vsyncpa %s7043, 1

</llo_original>
